<compile_context>
chip_gen: v6e
topology: v6e:2x2x1
jax: 0.10.0
libtpu: 0.0.40
codegen_flags: <defaults>
</compile_context>

<pallas_src>
import math
import functools

import jax
import jax.numpy as jnp
from jax.experimental import pallas as pl
from jax.experimental.pallas import tpu as pltpu

LANE = 128
_BN_EPS = 1e-5


def _round_up(x, m):
    return (x + m - 1) // m * m


def _pick_tn(cout_p):
    """cout_p is a multiple of 128; pick the largest out-channel tile <= 512 dividing it."""
    if cout_p <= 512:
        return cout_p
    for tn in (512, 256, 128):
        if cout_p % tn == 0:
            return tn
    return 128


# ----------------------------------------------------------------------------
# Pallas kernel: fused Conv2d(stride=1) + folded BN [+ residual] [+ ReLU]
# ----------------------------------------------------------------------------
def _conv_bn_kernel(*refs, kh, kw, Hp, Wp, Ho, Wo, relu, has_residual):
    if has_residual:
        x_ref, w_ref, b_ref, r_ref, o_ref, acc_ref = refs
    else:
        x_ref, w_ref, b_ref, o_ref, acc_ref = refs
        r_ref = None

    L = (Ho - 1) * Wp + Wo
    # Implicit im2col: tap (dy, dx) of a stride-1 conv contributes the contiguous slab
    # x_flat[dy*Wp+dx : dy*Wp+dx+L, :] to rows {i*Wp + j} of the "wide" accumulator.
    t = 0
    for dy in range(kh):
        for dx in range(kw):
            a = x_ref[0, pl.ds(dy * Wp + dx, L), :]            # (L, Cin) bf16
            p = jnp.dot(a, w_ref[t], preferred_element_type=jnp.float32)
            if t == 0:
                acc_ref[...] = p
            else:
                acc_ref[...] += p
            t += 1

    bias = b_ref[...]                                          # (1, tn) f32
    # Rows i*Wp .. i*Wp+Wo-1 of acc hold output row i; the Wp-Wo "wide row" tail
    # entries of each stride are garbage and are simply never read.
    for i in range(Ho):
        row = acc_ref[pl.ds(i * Wp, Wo), :] + bias             # (Wo, tn) f32
        if has_residual:
            row = row + r_ref[0, i, :, :].astype(jnp.float32)
        if relu:
            row = jnp.maximum(row, 0.0)
        o_ref[0, i, :, :] = row.astype(o_ref.dtype)


def conv_bn_act(x, w, b, *, kh, kw, pad, relu, residual=None, out_dtype=jnp.bfloat16):
    """Conv2d(kh x kw, stride=1, pad) + folded-BN bias [+ residual] [+ ReLU].

    x:        (N, H, W, Cin_p)        bf16, Cin_p % 128 == 0 (zero-padded channels)
    w:        (kh*kw, Cin_p, Cout_p)  bf16, BN scale folded in
    b:        (1, Cout_p)             f32, conv bias + BN shift folded in
    residual: (N, Ho, Wo, Cout_p)     bf16 or None
    returns   (N, Ho, Wo, Cout_p)     out_dtype
    """
    N, H, W, Cin = x.shape
    Cout = w.shape[2]
    if pad > 0:
        x = jnp.pad(x, ((0, 0), (pad, pad), (pad, pad), (0, 0)))
    Hp, Wp = H + 2 * pad, W + 2 * pad
    Ho, Wo = Hp - kh + 1, Wp - kw + 1
    L = (Ho - 1) * Wp + Wo

    xf = x.reshape(N, Hp * Wp, Cin)                            # free row-major collapse
    tn = _pick_tn(Cout)
    nj = Cout // tn

    kernel = functools.partial(
        _conv_bn_kernel, kh=kh, kw=kw, Hp=Hp, Wp=Wp, Ho=Ho, Wo=Wo,
        relu=relu, has_residual=residual is not None)

    in_specs = [
        pl.BlockSpec((1, Hp * Wp, Cin), lambda n, j: (n, 0, 0)),
        pl.BlockSpec((kh * kw, Cin, tn), lambda n, j: (0, 0, j)),
        pl.BlockSpec((1, tn), lambda n, j: (0, j)),
    ]
    args = [xf, w, b]
    if residual is not None:
        in_specs.append(pl.BlockSpec((1, Ho, Wo, tn), lambda n, j: (n, 0, 0, j)))
        args.append(residual)

    return pl.pallas_call(
        kernel,
        out_shape=jax.ShapeDtypeStruct((N, Ho, Wo, Cout), out_dtype),
        grid=(N, nj),
        in_specs=in_specs,
        out_specs=pl.BlockSpec((1, Ho, Wo, tn), lambda n, j: (n, 0, 0, j)),
        scratch_shapes=[pltpu.VMEM((L, tn), jnp.float32)],
        compiler_params=pltpu.CompilerParams(
            dimension_semantics=("parallel", "parallel")),
    )(*args)


# ----------------------------------------------------------------------------
# Parameters (mirror ExtraBottleneck2.__init__ + weight_init), BN folded at build time
# ----------------------------------------------------------------------------
def _fold_bn_into_conv(w_hwio, conv_bias, gamma, beta, mean, var, cin_p, cout_p):
    """Fold eval-mode BN into conv weights/bias; pad channels to 128; bf16 weights."""
    kh, kw, cin, cout = w_hwio.shape
    scale = gamma / jnp.sqrt(var + _BN_EPS)                    # (cout,)
    w = w_hwio * scale                                         # per-out-channel scale
    bias = (conv_bias - mean) * scale + beta
    w_p = jnp.zeros((kh, kw, cin_p, cout_p), jnp.float32).at[:, :, :cin, :cout].set(w)
    b_p = jnp.zeros((1, cout_p), jnp.float32).at[0, :cout].set(bias)
    return w_p.reshape(kh * kw, cin_p, cout_p).astype(jnp.bfloat16), b_p


def make_params(key, inplanes, planes):
    c4 = planes * 4
    cin_p, cp, c4_p = (_round_up(c, LANE) for c in (inplanes, planes, c4))
    ks = jax.random.split(key, 8)

    def conv_w(k, kh, kw, cin, cout):
        # weight_init: normal(0, sqrt(2 / (kh*kw*out_channels)))
        return math.sqrt(2.0 / (kh * kw * cout)) * jax.random.normal(
            k, (kh, kw, cin, cout), jnp.float32)

    def conv_b(k, kh, kw, cin, cout):
        # PyTorch Conv2d default bias init: U(-1/sqrt(fan_in), 1/sqrt(fan_in))
        bound = 1.0 / math.sqrt(kh * kw * cin)
        return jax.random.uniform(k, (cout,), jnp.float32, -bound, bound)

    def bn(c):
        # weight_init: gamma=1, beta=0; PyTorch defaults: running_mean=0, running_var=1
        return (jnp.ones((c,), jnp.float32), jnp.zeros((c,), jnp.float32),
                jnp.zeros((c,), jnp.float32), jnp.ones((c,), jnp.float32))

    p = {}
    p["conv1_w"], p["conv1_b"] = _fold_bn_into_conv(
        conv_w(ks[0], 3, 3, inplanes, planes), conv_b(ks[1], 3, 3, inplanes, planes),
        *bn(planes), cin_p, cp)
    p["conv2_w"], p["conv2_b"] = _fold_bn_into_conv(
        conv_w(ks[2], 3, 3, planes, planes), conv_b(ks[3], 3, 3, planes, planes),
        *bn(planes), cp, cp)
    p["conv3_w"], p["conv3_b"] = _fold_bn_into_conv(
        conv_w(ks[4], 1, 1, planes, c4), conv_b(ks[5], 1, 1, planes, c4),
        *bn(c4), cp, c4_p)
    # downsample: Conv2d(3x3, stride=1, pad=0, bias=False) + BatchNorm2d
    p["ds_w"], p["ds_b"] = _fold_bn_into_conv(
        conv_w(ks[6], 3, 3, inplanes, c4), jnp.zeros((c4,), jnp.float32),
        *bn(c4), cin_p, c4_p)
    return p


# ----------------------------------------------------------------------------
# Forward pass (matches ExtraBottleneck2.forward, eval-mode BN)
# ----------------------------------------------------------------------------
def extra_bottleneck2_forward(x_nchw, params, planes):
    cin_p = params["conv1_w"].shape[1]
    _, cin, _, _ = x_nchw.shape
    x = jnp.transpose(x_nchw, (0, 2, 3, 1)).astype(jnp.bfloat16)     # NCHW -> NHWC
    if cin_p > cin:
        x = jnp.pad(x, ((0, 0), (0, 0), (0, 0), (0, cin_p - cin)))

    # residual = downsample(x): Conv2d(3x3, pad=0, bias=False) + BN
    residual = conv_bn_act(x, params["ds_w"], params["ds_b"], kh=3, kw=3, pad=0,
                           relu=False, out_dtype=jnp.bfloat16)
    # main branch
    out = conv_bn_act(x, params["conv1_w"], params["conv1_b"], kh=3, kw=3, pad=0,
                      relu=True, out_dtype=jnp.bfloat16)
    out = conv_bn_act(out, params["conv2_w"], params["conv2_b"], kh=3, kw=3, pad=1,
                      relu=True, out_dtype=jnp.bfloat16)
    # conv3 + bn3 + residual add + final ReLU fused in a single kernel epilogue
    out = conv_bn_act(out, params["conv3_w"], params["conv3_b"], kh=1, kw=1, pad=0,
                      relu=True, residual=residual, out_dtype=jnp.float32)
    out = out[:, :, :, :planes * 4]                                  # drop channel pad
    return jnp.transpose(out, (0, 3, 1, 2))                          # NHWC -> NCHW


# ----------------------------------------------------------------------------
# Pure-JAX reference (same folded/padded bf16 parameters) for validation
# ----------------------------------------------------------------------------
def reference_forward(x_nchw, params, inplanes, planes):
    cin_p = params["conv1_w"].shape[1]

    def conv(inp, w_flat, b, kh, kw, pad):
        cin, cout = w_flat.shape[1], w_flat.shape[2]
        w = w_flat.astype(jnp.float32).reshape(kh, kw, cin, cout)
        y = jax.lax.conv_general_dilated(
            inp, w, (1, 1), [(pad, pad), (pad, pad)],
            dimension_numbers=("NHWC", "HWIO", "NHWC"))
        return y + b[0]

    def to_bf16(v):
        return v.astype(jnp.bfloat16).astype(jnp.float32)

    x = jnp.transpose(x_nchw, (0, 2, 3, 1)).astype(jnp.bfloat16)
    x = jnp.pad(x, ((0, 0), (0, 0), (0, 0), (0, cin_p - inplanes))).astype(jnp.float32)

    residual = to_bf16(conv(x, params["ds_w"], params["ds_b"], 3, 3, 0))
    h = to_bf16(jnp.maximum(conv(x, params["conv1_w"], params["conv1_b"], 3, 3, 0), 0.0))
    h = to_bf16(jnp.maximum(conv(h, params["conv2_w"], params["conv2_b"], 3, 3, 1), 0.0))
    out = jnp.maximum(conv(h, params["conv3_w"], params["conv3_b"], 1, 1, 0) + residual, 0.0)
    out = out[:, :, :, :planes * 4]
    return jnp.transpose(out, (0, 3, 1, 2))


if __name__ == "__main__":
    key = jax.random.PRNGKey(0)
    k_params, k_x = jax.random.split(key)

    # The real module uses inplanes=1024, planes=256; use small shapes here.
    inplanes, planes = 64, 32
    N, H, W = 2, 16, 16

    params = make_params(k_params, inplanes, planes)
    x = jax.random.normal(k_x, (N, inplanes, H, W), jnp.float32)     # NCHW like PyTorch

    fwd = jax.jit(lambda inp: extra_bottleneck2_forward(inp, params, planes))
    out = jax.block_until_ready(fwd(x))

    assert out.shape == (N, planes * 4, H - 2, W - 2)
    assert bool(jnp.all(jnp.isfinite(out)))

    ref = reference_forward(x, params, inplanes, planes)
    assert bool(jnp.allclose(out, ref, rtol=1e-2, atol=1e-2)), \
        float(jnp.max(jnp.abs(out - ref)))
    print("KERNEL_OK")
</pallas_src>

<mosaic_0001>
module attributes {stable_mosaic.version = 11 : i64} {
  func.func @_conv_bn_kernel(%arg0: i32, %arg1: i32, %arg2: memref<1x256x128xbf16, #tpu.memory_space<vmem>>, %arg3: memref<9x128x128xbf16, #tpu.memory_space<vmem>>, %arg4: memref<1x128xf32, #tpu.memory_space<vmem>>, %arg5: memref<1x14x14x128xbf16, #tpu.memory_space<vmem>>, %arg6: memref<222x128xf32, #tpu.memory_space<vmem>>) attributes {dimension_semantics = [#tpu.dimension_semantics<parallel>, #tpu.dimension_semantics<parallel>], iteration_bounds = array<i64: 2, 1>, scalar_prefetch = 0 : i64, scratch_operands = 1 : i64, tpu.core_type = #tpu.core_type<tc>, window_params = [{transform_indices = @transform_0, window_bounds = array<i64: 1, 256, 128>}, {transform_indices = @transform_1, window_bounds = array<i64: 9, 128, 128>}, {transform_indices = @transform_2, window_bounds = array<i64: 1, 128>}, {transform_indices = @transform_3, window_bounds = array<i64: 1, 14, 14, 128>}]} {
    %c0 = arith.constant 0 : index
    %c0_0 = arith.constant 0 : index
    %c0_1 = arith.constant 0 : index
    %0 = vector.load %arg2[%c0, %c0_0, %c0_1] : memref<1x256x128xbf16, #tpu.memory_space<vmem>>, vector<1x222x128xbf16>
    %1 = vector.shape_cast %0 : vector<1x222x128xbf16> to vector<222x128xbf16>
    %c0_2 = arith.constant 0 : index
    %c0_3 = arith.constant 0 : index
    %c0_4 = arith.constant 0 : index
    %2 = vector.load %arg3[%c0_2, %c0_3, %c0_4] : memref<9x128x128xbf16, #tpu.memory_space<vmem>>, vector<1x128x128xbf16>
    %3 = vector.shape_cast %2 : vector<1x128x128xbf16> to vector<128x128xbf16>
    %cst = arith.constant dense<0.000000e+00> : vector<222x128xf32>
    %4 = tpu.matmul %1, %3, %cst {dimension_numbers = #tpu.dot_dimension_numbers<[1], [0], [0], [1], [0, 0, 1, 1], [], []>} : vector<222x128xbf16>, vector<128x128xbf16>, vector<222x128xf32> -> vector<222x128xf32>
    %c0_5 = arith.constant 0 : index
    %c0_6 = arith.constant 0 : index
    %5 = vector.load %arg6[%c0_5, %c0_6] : memref<222x128xf32, #tpu.memory_space<vmem>>, vector<222x128xf32>
    tpu.vector_store %arg6[%c0_5, %c0_6], %4 {strides = array<i32>} : memref<222x128xf32, #tpu.memory_space<vmem>>, vector<222x128xf32>,
    %c0_7 = arith.constant 0 : index
    %c1 = arith.constant 1 : index
    %c0_8 = arith.constant 0 : index
    %6 = vector.load %arg2[%c0_7, %c1, %c0_8] : memref<1x256x128xbf16, #tpu.memory_space<vmem>>, vector<1x222x128xbf16>
    %7 = vector.shape_cast %6 : vector<1x222x128xbf16> to vector<222x128xbf16>
    %c1_9 = arith.constant 1 : index
    %c0_10 = arith.constant 0 : index
    %c0_11 = arith.constant 0 : index
    %8 = vector.load %arg3[%c1_9, %c0_10, %c0_11] : memref<9x128x128xbf16, #tpu.memory_space<vmem>>, vector<1x128x128xbf16>
    %9 = vector.shape_cast %8 : vector<1x128x128xbf16> to vector<128x128xbf16>
    %cst_12 = arith.constant dense<0.000000e+00> : vector<222x128xf32>
    %10 = tpu.matmul %7, %9, %cst_12 {dimension_numbers = #tpu.dot_dimension_numbers<[1], [0], [0], [1], [0, 0, 1, 1], [], []>} : vector<222x128xbf16>, vector<128x128xbf16>, vector<222x128xf32> -> vector<222x128xf32>
    %c0_13 = arith.constant 0 : index
    %c0_14 = arith.constant 0 : index
    %11 = vector.load %arg6[%c0_13, %c0_14] : memref<222x128xf32, #tpu.memory_space<vmem>>, vector<222x128xf32>
    %12 = arith.addf %11, %10 : vector<222x128xf32>
    %c0_15 = arith.constant 0 : index
    %c0_16 = arith.constant 0 : index
    %13 = vector.load %arg6[%c0_15, %c0_16] : memref<222x128xf32, #tpu.memory_space<vmem>>, vector<222x128xf32>
    tpu.vector_store %arg6[%c0_15, %c0_16], %12 {strides = array<i32>} : memref<222x128xf32, #tpu.memory_space<vmem>>, vector<222x128xf32>,
    %c0_17 = arith.constant 0 : index
    %c2 = arith.constant 2 : index
    %c0_18 = arith.constant 0 : index
    %14 = vector.load %arg2[%c0_17, %c2, %c0_18] : memref<1x256x128xbf16, #tpu.memory_space<vmem>>, vector<1x222x128xbf16>
    %15 = vector.shape_cast %14 : vector<1x222x128xbf16> to vector<222x128xbf16>
    %c2_19 = arith.constant 2 : index
    %c0_20 = arith.constant 0 : index
    %c0_21 = arith.constant 0 : index
    %16 = vector.load %arg3[%c2_19, %c0_20, %c0_21] : memref<9x128x128xbf16, #tpu.memory_space<vmem>>, vector<1x128x128xbf16>
    %17 = vector.shape_cast %16 : vector<1x128x128xbf16> to vector<128x128xbf16>
    %cst_22 = arith.constant dense<0.000000e+00> : vector<222x128xf32>
    %18 = tpu.matmul %15, %17, %cst_22 {dimension_numbers = #tpu.dot_dimension_numbers<[1], [0], [0], [1], [0, 0, 1, 1], [], []>} : vector<222x128xbf16>, vector<128x128xbf16>, vector<222x128xf32> -> vector<222x128xf32>
    %c0_23 = arith.constant 0 : index
    %c0_24 = arith.constant 0 : index
    %19 = vector.load %arg6[%c0_23, %c0_24] : memref<222x128xf32, #tpu.memory_space<vmem>>, vector<222x128xf32>
    %20 = arith.addf %19, %18 : vector<222x128xf32>
    %c0_25 = arith.constant 0 : index
    %c0_26 = arith.constant 0 : index
    %21 = vector.load %arg6[%c0_25, %c0_26] : memref<222x128xf32, #tpu.memory_space<vmem>>, vector<222x128xf32>
    tpu.vector_store %arg6[%c0_25, %c0_26], %20 {strides = array<i32>} : memref<222x128xf32, #tpu.memory_space<vmem>>, vector<222x128xf32>,
    %c0_27 = arith.constant 0 : index
    %c16 = arith.constant 16 : index
    %c0_28 = arith.constant 0 : index
    %22 = vector.load %arg2[%c0_27, %c16, %c0_28] : memref<1x256x128xbf16, #tpu.memory_space<vmem>>, vector<1x222x128xbf16>
    %23 = vector.shape_cast %22 : vector<1x222x128xbf16> to vector<222x128xbf16>
    %c3 = arith.constant 3 : index
    %c0_29 = arith.constant 0 : index
    %c0_30 = arith.constant 0 : index
    %24 = vector.load %arg3[%c3, %c0_29, %c0_30] : memref<9x128x128xbf16, #tpu.memory_space<vmem>>, vector<1x128x128xbf16>
    %25 = vector.shape_cast %24 : vector<1x128x128xbf16> to vector<128x128xbf16>
    %cst_31 = arith.constant dense<0.000000e+00> : vector<222x128xf32>
    %26 = tpu.matmul %23, %25, %cst_31 {dimension_numbers = #tpu.dot_dimension_numbers<[1], [0], [0], [1], [0, 0, 1, 1], [], []>} : vector<222x128xbf16>, vector<128x128xbf16>, vector<222x128xf32> -> vector<222x128xf32>
    %c0_32 = arith.constant 0 : index
    %c0_33 = arith.constant 0 : index
    %27 = vector.load %arg6[%c0_32, %c0_33] : memref<222x128xf32, #tpu.memory_space<vmem>>, vector<222x128xf32>
    %28 = arith.addf %27, %26 : vector<222x128xf32>
    %c0_34 = arith.constant 0 : index
    %c0_35 = arith.constant 0 : index
    %29 = vector.load %arg6[%c0_34, %c0_35] : memref<222x128xf32, #tpu.memory_space<vmem>>, vector<222x128xf32>
    tpu.vector_store %arg6[%c0_34, %c0_35], %28 {strides = array<i32>} : memref<222x128xf32, #tpu.memory_space<vmem>>, vector<222x128xf32>,
    %c0_36 = arith.constant 0 : index
    %c17 = arith.constant 17 : index
    %c0_37 = arith.constant 0 : index
    %30 = vector.load %arg2[%c0_36, %c17, %c0_37] : memref<1x256x128xbf16, #tpu.memory_space<vmem>>, vector<1x222x128xbf16>
    %31 = vector.shape_cast %30 : vector<1x222x128xbf16> to vector<222x128xbf16>
    %c4 = arith.constant 4 : index
    %c0_38 = arith.constant 0 : index
    %c0_39 = arith.constant 0 : index
    %32 = vector.load %arg3[%c4, %c0_38, %c0_39] : memref<9x128x128xbf16, #tpu.memory_space<vmem>>, vector<1x128x128xbf16>
    %33 = vector.shape_cast %32 : vector<1x128x128xbf16> to vector<128x128xbf16>
    %cst_40 = arith.constant dense<0.000000e+00> : vector<222x128xf32>
    %34 = tpu.matmul %31, %33, %cst_40 {dimension_numbers = #tpu.dot_dimension_numbers<[1], [0], [0], [1], [0, 0, 1, 1], [], []>} : vector<222x128xbf16>, vector<128x128xbf16>, vector<222x128xf32> -> vector<222x128xf32>
    %c0_41 = arith.constant 0 : index
    %c0_42 = arith.constant 0 : index
    %35 = vector.load %arg6[%c0_41, %c0_42] : memref<222x128xf32, #tpu.memory_space<vmem>>, vector<222x128xf32>
    %36 = arith.addf %35, %34 : vector<222x128xf32>
    %c0_43 = arith.constant 0 : index
    %c0_44 = arith.constant 0 : index
    %37 = vector.load %arg6[%c0_43, %c0_44] : memref<222x128xf32, #tpu.memory_space<vmem>>, vector<222x128xf32>
    tpu.vector_store %arg6[%c0_43, %c0_44], %36 {strides = array<i32>} : memref<222x128xf32, #tpu.memory_space<vmem>>, vector<222x128xf32>,
    %c0_45 = arith.constant 0 : index
    %c18 = arith.constant 18 : index
    %c0_46 = arith.constant 0 : index
    %38 = vector.load %arg2[%c0_45, %c18, %c0_46] : memref<1x256x128xbf16, #tpu.memory_space<vmem>>, vector<1x222x128xbf16>
    %39 = vector.shape_cast %38 : vector<1x222x128xbf16> to vector<222x128xbf16>
    %c5 = arith.constant 5 : index
    %c0_47 = arith.constant 0 : index
    %c0_48 = arith.constant 0 : index
    %40 = vector.load %arg3[%c5, %c0_47, %c0_48] : memref<9x128x128xbf16, #tpu.memory_space<vmem>>, vector<1x128x128xbf16>
    %41 = vector.shape_cast %40 : vector<1x128x128xbf16> to vector<128x128xbf16>
    %cst_49 = arith.constant dense<0.000000e+00> : vector<222x128xf32>
    %42 = tpu.matmul %39, %41, %cst_49 {dimension_numbers = #tpu.dot_dimension_numbers<[1], [0], [0], [1], [0, 0, 1, 1], [], []>} : vector<222x128xbf16>, vector<128x128xbf16>, vector<222x128xf32> -> vector<222x128xf32>
    %c0_50 = arith.constant 0 : index
    %c0_51 = arith.constant 0 : index
    %43 = vector.load %arg6[%c0_50, %c0_51] : memref<222x128xf32, #tpu.memory_space<vmem>>, vector<222x128xf32>
    %44 = arith.addf %43, %42 : vector<222x128xf32>
    %c0_52 = arith.constant 0 : index
    %c0_53 = arith.constant 0 : index
    %45 = vector.load %arg6[%c0_52, %c0_53] : memref<222x128xf32, #tpu.memory_space<vmem>>, vector<222x128xf32>
    tpu.vector_store %arg6[%c0_52, %c0_53], %44 {strides = array<i32>} : memref<222x128xf32, #tpu.memory_space<vmem>>, vector<222x128xf32>,
    %c0_54 = arith.constant 0 : index
    %c32 = arith.constant 32 : index
    %c0_55 = arith.constant 0 : index
    %46 = vector.load %arg2[%c0_54, %c32, %c0_55] : memref<1x256x128xbf16, #tpu.memory_space<vmem>>, vector<1x222x128xbf16>
    %47 = vector.shape_cast %46 : vector<1x222x128xbf16> to vector<222x128xbf16>
    %c6 = arith.constant 6 : index
    %c0_56 = arith.constant 0 : index
    %c0_57 = arith.constant 0 : index
    %48 = vector.load %arg3[%c6, %c0_56, %c0_57] : memref<9x128x128xbf16, #tpu.memory_space<vmem>>, vector<1x128x128xbf16>
    %49 = vector.shape_cast %48 : vector<1x128x128xbf16> to vector<128x128xbf16>
    %cst_58 = arith.constant dense<0.000000e+00> : vector<222x128xf32>
    %50 = tpu.matmul %47, %49, %cst_58 {dimension_numbers = #tpu.dot_dimension_numbers<[1], [0], [0], [1], [0, 0, 1, 1], [], []>} : vector<222x128xbf16>, vector<128x128xbf16>, vector<222x128xf32> -> vector<222x128xf32>
    %c0_59 = arith.constant 0 : index
    %c0_60 = arith.constant 0 : index
    %51 = vector.load %arg6[%c0_59, %c0_60] : memref<222x128xf32, #tpu.memory_space<vmem>>, vector<222x128xf32>
    %52 = arith.addf %51, %50 : vector<222x128xf32>
    %c0_61 = arith.constant 0 : index
    %c0_62 = arith.constant 0 : index
    %53 = vector.load %arg6[%c0_61, %c0_62] : memref<222x128xf32, #tpu.memory_space<vmem>>, vector<222x128xf32>
    tpu.vector_store %arg6[%c0_61, %c0_62], %52 {strides = array<i32>} : memref<222x128xf32, #tpu.memory_space<vmem>>, vector<222x128xf32>,
    %c0_63 = arith.constant 0 : index
    %c33 = arith.constant 33 : index
    %c0_64 = arith.constant 0 : index
    %54 = vector.load %arg2[%c0_63, %c33, %c0_64] : memref<1x256x128xbf16, #tpu.memory_space<vmem>>, vector<1x222x128xbf16>
    %55 = vector.shape_cast %54 : vector<1x222x128xbf16> to vector<222x128xbf16>
    %c7 = arith.constant 7 : index
    %c0_65 = arith.constant 0 : index
    %c0_66 = arith.constant 0 : index
    %56 = vector.load %arg3[%c7, %c0_65, %c0_66] : memref<9x128x128xbf16, #tpu.memory_space<vmem>>, vector<1x128x128xbf16>
    %57 = vector.shape_cast %56 : vector<1x128x128xbf16> to vector<128x128xbf16>
    %cst_67 = arith.constant dense<0.000000e+00> : vector<222x128xf32>
    %58 = tpu.matmul %55, %57, %cst_67 {dimension_numbers = #tpu.dot_dimension_numbers<[1], [0], [0], [1], [0, 0, 1, 1], [], []>} : vector<222x128xbf16>, vector<128x128xbf16>, vector<222x128xf32> -> vector<222x128xf32>
    %c0_68 = arith.constant 0 : index
    %c0_69 = arith.constant 0 : index
    %59 = vector.load %arg6[%c0_68, %c0_69] : memref<222x128xf32, #tpu.memory_space<vmem>>, vector<222x128xf32>
    %60 = arith.addf %59, %58 : vector<222x128xf32>
    %c0_70 = arith.constant 0 : index
    %c0_71 = arith.constant 0 : index
    %61 = vector.load %arg6[%c0_70, %c0_71] : memref<222x128xf32, #tpu.memory_space<vmem>>, vector<222x128xf32>
    tpu.vector_store %arg6[%c0_70, %c0_71], %60 {strides = array<i32>} : memref<222x128xf32, #tpu.memory_space<vmem>>, vector<222x128xf32>,
    %c0_72 = arith.constant 0 : index
    %c34 = arith.constant 34 : index
    %c0_73 = arith.constant 0 : index
    %62 = vector.load %arg2[%c0_72, %c34, %c0_73] : memref<1x256x128xbf16, #tpu.memory_space<vmem>>, vector<1x222x128xbf16>
    %63 = vector.shape_cast %62 : vector<1x222x128xbf16> to vector<222x128xbf16>
    %c8 = arith.constant 8 : index
    %c0_74 = arith.constant 0 : index
    %c0_75 = arith.constant 0 : index
    %64 = vector.load %arg3[%c8, %c0_74, %c0_75] : memref<9x128x128xbf16, #tpu.memory_space<vmem>>, vector<1x128x128xbf16>
    %65 = vector.shape_cast %64 : vector<1x128x128xbf16> to vector<128x128xbf16>
    %cst_76 = arith.constant dense<0.000000e+00> : vector<222x128xf32>
    %66 = tpu.matmul %63, %65, %cst_76 {dimension_numbers = #tpu.dot_dimension_numbers<[1], [0], [0], [1], [0, 0, 1, 1], [], []>} : vector<222x128xbf16>, vector<128x128xbf16>, vector<222x128xf32> -> vector<222x128xf32>
    %c0_77 = arith.constant 0 : index
    %c0_78 = arith.constant 0 : index
    %67 = vector.load %arg6[%c0_77, %c0_78] : memref<222x128xf32, #tpu.memory_space<vmem>>, vector<222x128xf32>
    %68 = arith.addf %67, %66 : vector<222x128xf32>
    %c0_79 = arith.constant 0 : index
    %c0_80 = arith.constant 0 : index
    %69 = vector.load %arg6[%c0_79, %c0_80] : memref<222x128xf32, #tpu.memory_space<vmem>>, vector<222x128xf32>
    tpu.vector_store %arg6[%c0_79, %c0_80], %68 {strides = array<i32>} : memref<222x128xf32, #tpu.memory_space<vmem>>, vector<222x128xf32>,
    %c0_81 = arith.constant 0 : index
    %c0_82 = arith.constant 0 : index
    %70 = vector.load %arg4[%c0_81, %c0_82] : memref<1x128xf32, #tpu.memory_space<vmem>>, vector<1x128xf32>
    %c0_83 = arith.constant 0 : index
    %c0_84 = arith.constant 0 : index
    %71 = vector.load %arg6[%c0_83, %c0_84] : memref<222x128xf32, #tpu.memory_space<vmem>>, vector<14x128xf32>
    %72 = vector.broadcast %70 : vector<1x128xf32> to vector<14x128xf32>
    %73 = arith.addf %71, %72 : vector<14x128xf32>
    %74 = arith.truncf %73 : vector<14x128xf32> to vector<14x128xbf16>
    %c0_85 = arith.constant 0 : index
    %c0_86 = arith.constant 0 : index
    %c0_87 = arith.constant 0 : index
    %c0_88 = arith.constant 0 : index
    %75 = vector.load %arg5[%c0_85, %c0_86, %c0_87, %c0_88] : memref<1x14x14x128xbf16, #tpu.memory_space<vmem>>, vector<1x1x14x128xbf16>
    %76 = vector.shape_cast %75 : vector<1x1x14x128xbf16> to vector<14x128xbf16>
    %77 = vector.shape_cast %74 : vector<14x128xbf16> to vector<1x1x14x128xbf16>
    tpu.vector_store %arg5[%c0_85, %c0_86, %c0_87, %c0_88], %77 {strides = array<i32>} : memref<1x14x14x128xbf16, #tpu.memory_space<vmem>>, vector<1x1x14x128xbf16>,
    %c16_89 = arith.constant 16 : index
    %c0_90 = arith.constant 0 : index
    %78 = vector.load %arg6[%c16_89, %c0_90] : memref<222x128xf32, #tpu.memory_space<vmem>>, vector<14x128xf32>
    %79 = vector.broadcast %70 : vector<1x128xf32> to vector<14x128xf32>
    %80 = arith.addf %78, %79 : vector<14x128xf32>
    %81 = arith.truncf %80 : vector<14x128xf32> to vector<14x128xbf16>
    %c0_91 = arith.constant 0 : index
    %c1_92 = arith.constant 1 : index
    %c0_93 = arith.constant 0 : index
    %c0_94 = arith.constant 0 : index
    %82 = vector.load %arg5[%c0_91, %c1_92, %c0_93, %c0_94] : memref<1x14x14x128xbf16, #tpu.memory_space<vmem>>, vector<1x1x14x128xbf16>
    %83 = vector.shape_cast %82 : vector<1x1x14x128xbf16> to vector<14x128xbf16>
    %84 = vector.shape_cast %81 : vector<14x128xbf16> to vector<1x1x14x128xbf16>
    tpu.vector_store %arg5[%c0_91, %c1_92, %c0_93, %c0_94], %84 {strides = array<i32>} : memref<1x14x14x128xbf16, #tpu.memory_space<vmem>>, vector<1x1x14x128xbf16>,
    %c32_95 = arith.constant 32 : index
    %c0_96 = arith.constant 0 : index
    %85 = vector.load %arg6[%c32_95, %c0_96] : memref<222x128xf32, #tpu.memory_space<vmem>>, vector<14x128xf32>
    %86 = vector.broadcast %70 : vector<1x128xf32> to vector<14x128xf32>
    %87 = arith.addf %85, %86 : vector<14x128xf32>
    %88 = arith.truncf %87 : vector<14x128xf32> to vector<14x128xbf16>
    %c0_97 = arith.constant 0 : index
    %c2_98 = arith.constant 2 : index
    %c0_99 = arith.constant 0 : index
    %c0_100 = arith.constant 0 : index
    %89 = vector.load %arg5[%c0_97, %c2_98, %c0_99, %c0_100] : memref<1x14x14x128xbf16, #tpu.memory_space<vmem>>, vector<1x1x14x128xbf16>
    %90 = vector.shape_cast %89 : vector<1x1x14x128xbf16> to vector<14x128xbf16>
    %91 = vector.shape_cast %88 : vector<14x128xbf16> to vector<1x1x14x128xbf16>
    tpu.vector_store %arg5[%c0_97, %c2_98, %c0_99, %c0_100], %91 {strides = array<i32>} : memref<1x14x14x128xbf16, #tpu.memory_space<vmem>>, vector<1x1x14x128xbf16>,
    %c48 = arith.constant 48 : index
    %c0_101 = arith.constant 0 : index
    %92 = vector.load %arg6[%c48, %c0_101] : memref<222x128xf32, #tpu.memory_space<vmem>>, vector<14x128xf32>
    %93 = vector.broadcast %70 : vector<1x128xf32> to vector<14x128xf32>
    %94 = arith.addf %92, %93 : vector<14x128xf32>
    %95 = arith.truncf %94 : vector<14x128xf32> to vector<14x128xbf16>
    %c0_102 = arith.constant 0 : index
    %c3_103 = arith.constant 3 : index
    %c0_104 = arith.constant 0 : index
    %c0_105 = arith.constant 0 : index
    %96 = vector.load %arg5[%c0_102, %c3_103, %c0_104, %c0_105] : memref<1x14x14x128xbf16, #tpu.memory_space<vmem>>, vector<1x1x14x128xbf16>
    %97 = vector.shape_cast %96 : vector<1x1x14x128xbf16> to vector<14x128xbf16>
    %98 = vector.shape_cast %95 : vector<14x128xbf16> to vector<1x1x14x128xbf16>
    tpu.vector_store %arg5[%c0_102, %c3_103, %c0_104, %c0_105], %98 {strides = array<i32>} : memref<1x14x14x128xbf16, #tpu.memory_space<vmem>>, vector<1x1x14x128xbf16>,
    %c64 = arith.constant 64 : index
    %c0_106 = arith.constant 0 : index
    %99 = vector.load %arg6[%c64, %c0_106] : memref<222x128xf32, #tpu.memory_space<vmem>>, vector<14x128xf32>
    %100 = vector.broadcast %70 : vector<1x128xf32> to vector<14x128xf32>
    %101 = arith.addf %99, %100 : vector<14x128xf32>
    %102 = arith.truncf %101 : vector<14x128xf32> to vector<14x128xbf16>
    %c0_107 = arith.constant 0 : index
    %c4_108 = arith.constant 4 : index
    %c0_109 = arith.constant 0 : index
    %c0_110 = arith.constant 0 : index
    %103 = vector.load %arg5[%c0_107, %c4_108, %c0_109, %c0_110] : memref<1x14x14x128xbf16, #tpu.memory_space<vmem>>, vector<1x1x14x128xbf16>
    %104 = vector.shape_cast %103 : vector<1x1x14x128xbf16> to vector<14x128xbf16>
    %105 = vector.shape_cast %102 : vector<14x128xbf16> to vector<1x1x14x128xbf16>
    tpu.vector_store %arg5[%c0_107, %c4_108, %c0_109, %c0_110], %105 {strides = array<i32>} : memref<1x14x14x128xbf16, #tpu.memory_space<vmem>>, vector<1x1x14x128xbf16>,
    %c80 = arith.constant 80 : index
    %c0_111 = arith.constant 0 : index
    %106 = vector.load %arg6[%c80, %c0_111] : memref<222x128xf32, #tpu.memory_space<vmem>>, vector<14x128xf32>
    %107 = vector.broadcast %70 : vector<1x128xf32> to vector<14x128xf32>
    %108 = arith.addf %106, %107 : vector<14x128xf32>
    %109 = arith.truncf %108 : vector<14x128xf32> to vector<14x128xbf16>
    %c0_112 = arith.constant 0 : index
    %c5_113 = arith.constant 5 : index
    %c0_114 = arith.constant 0 : index
    %c0_115 = arith.constant 0 : index
    %110 = vector.load %arg5[%c0_112, %c5_113, %c0_114, %c0_115] : memref<1x14x14x128xbf16, #tpu.memory_space<vmem>>, vector<1x1x14x128xbf16>
    %111 = vector.shape_cast %110 : vector<1x1x14x128xbf16> to vector<14x128xbf16>
    %112 = vector.shape_cast %109 : vector<14x128xbf16> to vector<1x1x14x128xbf16>
    tpu.vector_store %arg5[%c0_112, %c5_113, %c0_114, %c0_115], %112 {strides = array<i32>} : memref<1x14x14x128xbf16, #tpu.memory_space<vmem>>, vector<1x1x14x128xbf16>,
    %c96 = arith.constant 96 : index
    %c0_116 = arith.constant 0 : index
    %113 = vector.load %arg6[%c96, %c0_116] : memref<222x128xf32, #tpu.memory_space<vmem>>, vector<14x128xf32>
    %114 = vector.broadcast %70 : vector<1x128xf32> to vector<14x128xf32>
    %115 = arith.addf %113, %114 : vector<14x128xf32>
    %116 = arith.truncf %115 : vector<14x128xf32> to vector<14x128xbf16>
    %c0_117 = arith.constant 0 : index
    %c6_118 = arith.constant 6 : index
    %c0_119 = arith.constant 0 : index
    %c0_120 = arith.constant 0 : index
    %117 = vector.load %arg5[%c0_117, %c6_118, %c0_119, %c0_120] : memref<1x14x14x128xbf16, #tpu.memory_space<vmem>>, vector<1x1x14x128xbf16>
    %118 = vector.shape_cast %117 : vector<1x1x14x128xbf16> to vector<14x128xbf16>
    %119 = vector.shape_cast %116 : vector<14x128xbf16> to vector<1x1x14x128xbf16>
    tpu.vector_store %arg5[%c0_117, %c6_118, %c0_119, %c0_120], %119 {strides = array<i32>} : memref<1x14x14x128xbf16, #tpu.memory_space<vmem>>, vector<1x1x14x128xbf16>,
    %c112 = arith.constant 112 : index
    %c0_121 = arith.constant 0 : index
    %120 = vector.load %arg6[%c112, %c0_121] : memref<222x128xf32, #tpu.memory_space<vmem>>, vector<14x128xf32>
    %121 = vector.broadcast %70 : vector<1x128xf32> to vector<14x128xf32>
    %122 = arith.addf %120, %121 : vector<14x128xf32>
    %123 = arith.truncf %122 : vector<14x128xf32> to vector<14x128xbf16>
    %c0_122 = arith.constant 0 : index
    %c7_123 = arith.constant 7 : index
    %c0_124 = arith.constant 0 : index
    %c0_125 = arith.constant 0 : index
    %124 = vector.load %arg5[%c0_122, %c7_123, %c0_124, %c0_125] : memref<1x14x14x128xbf16, #tpu.memory_space<vmem>>, vector<1x1x14x128xbf16>
    %125 = vector.shape_cast %124 : vector<1x1x14x128xbf16> to vector<14x128xbf16>
    %126 = vector.shape_cast %123 : vector<14x128xbf16> to vector<1x1x14x128xbf16>
    tpu.vector_store %arg5[%c0_122, %c7_123, %c0_124, %c0_125], %126 {strides = array<i32>} : memref<1x14x14x128xbf16, #tpu.memory_space<vmem>>, vector<1x1x14x128xbf16>,
    %c128 = arith.constant 128 : index
    %c0_126 = arith.constant 0 : index
    %127 = vector.load %arg6[%c128, %c0_126] : memref<222x128xf32, #tpu.memory_space<vmem>>, vector<14x128xf32>
    %128 = vector.broadcast %70 : vector<1x128xf32> to vector<14x128xf32>
    %129 = arith.addf %127, %128 : vector<14x128xf32>
    %130 = arith.truncf %129 : vector<14x128xf32> to vector<14x128xbf16>
    %c0_127 = arith.constant 0 : index
    %c8_128 = arith.constant 8 : index
    %c0_129 = arith.constant 0 : index
    %c0_130 = arith.constant 0 : index
    %131 = vector.load %arg5[%c0_127, %c8_128, %c0_129, %c0_130] : memref<1x14x14x128xbf16, #tpu.memory_space<vmem>>, vector<1x1x14x128xbf16>
    %132 = vector.shape_cast %131 : vector<1x1x14x128xbf16> to vector<14x128xbf16>
    %133 = vector.shape_cast %130 : vector<14x128xbf16> to vector<1x1x14x128xbf16>
    tpu.vector_store %arg5[%c0_127, %c8_128, %c0_129, %c0_130], %133 {strides = array<i32>} : memref<1x14x14x128xbf16, #tpu.memory_space<vmem>>, vector<1x1x14x128xbf16>,
    %c144 = arith.constant 144 : index
    %c0_131 = arith.constant 0 : index
    %134 = vector.load %arg6[%c144, %c0_131] : memref<222x128xf32, #tpu.memory_space<vmem>>, vector<14x128xf32>
    %135 = vector.broadcast %70 : vector<1x128xf32> to vector<14x128xf32>
    %136 = arith.addf %134, %135 : vector<14x128xf32>
    %137 = arith.truncf %136 : vector<14x128xf32> to vector<14x128xbf16>
    %c0_132 = arith.constant 0 : index
    %c9 = arith.constant 9 : index
    %c0_133 = arith.constant 0 : index
    %c0_134 = arith.constant 0 : index
    %138 = vector.load %arg5[%c0_132, %c9, %c0_133, %c0_134] : memref<1x14x14x128xbf16, #tpu.memory_space<vmem>>, vector<1x1x14x128xbf16>
    %139 = vector.shape_cast %138 : vector<1x1x14x128xbf16> to vector<14x128xbf16>
    %140 = vector.shape_cast %137 : vector<14x128xbf16> to vector<1x1x14x128xbf16>
    tpu.vector_store %arg5[%c0_132, %c9, %c0_133, %c0_134], %140 {strides = array<i32>} : memref<1x14x14x128xbf16, #tpu.memory_space<vmem>>, vector<1x1x14x128xbf16>,
    %c160 = arith.constant 160 : index
    %c0_135 = arith.constant 0 : index
    %141 = vector.load %arg6[%c160, %c0_135] : memref<222x128xf32, #tpu.memory_space<vmem>>, vector<14x128xf32>
    %142 = vector.broadcast %70 : vector<1x128xf32> to vector<14x128xf32>
    %143 = arith.addf %141, %142 : vector<14x128xf32>
    %144 = arith.truncf %143 : vector<14x128xf32> to vector<14x128xbf16>
    %c0_136 = arith.constant 0 : index
    %c10 = arith.constant 10 : index
    %c0_137 = arith.constant 0 : index
    %c0_138 = arith.constant 0 : index
    %145 = vector.load %arg5[%c0_136, %c10, %c0_137, %c0_138] : memref<1x14x14x128xbf16, #tpu.memory_space<vmem>>, vector<1x1x14x128xbf16>
    %146 = vector.shape_cast %145 : vector<1x1x14x128xbf16> to vector<14x128xbf16>
    %147 = vector.shape_cast %144 : vector<14x128xbf16> to vector<1x1x14x128xbf16>
    tpu.vector_store %arg5[%c0_136, %c10, %c0_137, %c0_138], %147 {strides = array<i32>} : memref<1x14x14x128xbf16, #tpu.memory_space<vmem>>, vector<1x1x14x128xbf16>,
    %c176 = arith.constant 176 : index
    %c0_139 = arith.constant 0 : index
    %148 = vector.load %arg6[%c176, %c0_139] : memref<222x128xf32, #tpu.memory_space<vmem>>, vector<14x128xf32>
    %149 = vector.broadcast %70 : vector<1x128xf32> to vector<14x128xf32>
    %150 = arith.addf %148, %149 : vector<14x128xf32>
    %151 = arith.truncf %150 : vector<14x128xf32> to vector<14x128xbf16>
    %c0_140 = arith.constant 0 : index
    %c11 = arith.constant 11 : index
    %c0_141 = arith.constant 0 : index
    %c0_142 = arith.constant 0 : index
    %152 = vector.load %arg5[%c0_140, %c11, %c0_141, %c0_142] : memref<1x14x14x128xbf16, #tpu.memory_space<vmem>>, vector<1x1x14x128xbf16>
    %153 = vector.shape_cast %152 : vector<1x1x14x128xbf16> to vector<14x128xbf16>
    %154 = vector.shape_cast %151 : vector<14x128xbf16> to vector<1x1x14x128xbf16>
    tpu.vector_store %arg5[%c0_140, %c11, %c0_141, %c0_142], %154 {strides = array<i32>} : memref<1x14x14x128xbf16, #tpu.memory_space<vmem>>, vector<1x1x14x128xbf16>,
    %c192 = arith.constant 192 : index
    %c0_143 = arith.constant 0 : index
    %155 = vector.load %arg6[%c192, %c0_143] : memref<222x128xf32, #tpu.memory_space<vmem>>, vector<14x128xf32>
    %156 = vector.broadcast %70 : vector<1x128xf32> to vector<14x128xf32>
    %157 = arith.addf %155, %156 : vector<14x128xf32>
    %158 = arith.truncf %157 : vector<14x128xf32> to vector<14x128xbf16>
    %c0_144 = arith.constant 0 : index
    %c12 = arith.constant 12 : index
    %c0_145 = arith.constant 0 : index
    %c0_146 = arith.constant 0 : index
    %159 = vector.load %arg5[%c0_144, %c12, %c0_145, %c0_146] : memref<1x14x14x128xbf16, #tpu.memory_space<vmem>>, vector<1x1x14x128xbf16>
    %160 = vector.shape_cast %159 : vector<1x1x14x128xbf16> to vector<14x128xbf16>
    %161 = vector.shape_cast %158 : vector<14x128xbf16> to vector<1x1x14x128xbf16>
    tpu.vector_store %arg5[%c0_144, %c12, %c0_145, %c0_146], %161 {strides = array<i32>} : memref<1x14x14x128xbf16, #tpu.memory_space<vmem>>, vector<1x1x14x128xbf16>,
    %c208 = arith.constant 208 : index
    %c0_147 = arith.constant 0 : index
    %162 = vector.load %arg6[%c208, %c0_147] : memref<222x128xf32, #tpu.memory_space<vmem>>, vector<14x128xf32>
    %163 = vector.broadcast %70 : vector<1x128xf32> to vector<14x128xf32>
    %164 = arith.addf %162, %163 : vector<14x128xf32>
    %165 = arith.truncf %164 : vector<14x128xf32> to vector<14x128xbf16>
    %c0_148 = arith.constant 0 : index
    %c13 = arith.constant 13 : index
    %c0_149 = arith.constant 0 : index
    %c0_150 = arith.constant 0 : index
    %166 = vector.load %arg5[%c0_148, %c13, %c0_149, %c0_150] : memref<1x14x14x128xbf16, #tpu.memory_space<vmem>>, vector<1x1x14x128xbf16>
    %167 = vector.shape_cast %166 : vector<1x1x14x128xbf16> to vector<14x128xbf16>
    %168 = vector.shape_cast %165 : vector<14x128xbf16> to vector<1x1x14x128xbf16>
    tpu.vector_store %arg5[%c0_148, %c13, %c0_149, %c0_150], %168 {strides = array<i32>} : memref<1x14x14x128xbf16, #tpu.memory_space<vmem>>, vector<1x1x14x128xbf16>,
    return
  }
  func.func @transform_0(%arg0: i32, %arg1: i32) -> (i32, i32, i32) {
    %c0_i32 = arith.constant 0 : i32
    %c0_i32_0 = arith.constant 0 : i32
    %c0_i32_1 = arith.constant 0 : i32
    return %arg0, %c0_i32, %c0_i32_0 : i32, i32, i32
  }
  func.func @transform_1(%arg0: i32, %arg1: i32) -> (i32, i32, i32) {
    %c0_i32 = arith.constant 0 : i32
    %c0_i32_0 = arith.constant 0 : i32
    %c0_i32_1 = arith.constant 0 : i32
    return %c0_i32, %c0_i32_0, %arg1 : i32, i32, i32
  }
  func.func @transform_2(%arg0: i32, %arg1: i32) -> (i32, i32) {
    %c0_i32 = arith.constant 0 : i32
    %c0_i32_0 = arith.constant 0 : i32
    return %c0_i32, %arg1 : i32, i32
  }
  func.func @transform_3(%arg0: i32, %arg1: i32) -> (i32, i32, i32, i32) {
    %c0_i32 = arith.constant 0 : i32
    %c0_i32_0 = arith.constant 0 : i32
    %c0_i32_1 = arith.constant 0 : i32
    return %arg0, %c0_i32, %c0_i32_0, %arg1 : i32, i32, i32, i32
  }
}

module attributes {stable_mosaic.version = 11 : i64} {
  func.func @_conv_bn_kernel(%arg0: i32, %arg1: i32, %arg2: memref<1x256x128xbf16, #tpu.memory_space<vmem>>, %arg3: memref<9x128x128xbf16, #tpu.memory_space<vmem>>, %arg4: memref<1x128xf32, #tpu.memory_space<vmem>>, %arg5: memref<1x14x14x128xbf16, #tpu.memory_space<vmem>>, %arg6: memref<222x128xf32, #tpu.memory_space<vmem>>) attributes {dimension_semantics = [#tpu.dimension_semantics<parallel>, #tpu.dimension_semantics<parallel>], iteration_bounds = array<i64: 2, 1>, scalar_prefetch = 0 : i64, scratch_operands = 1 : i64, tpu.core_type = #tpu.core_type<tc>, window_params = [{transform_indices = @transform_0, window_bounds = array<i64: 1, 256, 128>}, {transform_indices = @transform_1, window_bounds = array<i64: 9, 128, 128>}, {transform_indices = @transform_2, window_bounds = array<i64: 1, 128>}, {transform_indices = @transform_3, window_bounds = array<i64: 1, 14, 14, 128>}]} {
    %c0 = arith.constant 0 : index
    %c0_0 = arith.constant 0 : index
    %c0_1 = arith.constant 0 : index
    %0 = vector.load %arg2[%c0, %c0_0, %c0_1] : memref<1x256x128xbf16, #tpu.memory_space<vmem>>, vector<1x222x128xbf16>
    %1 = vector.shape_cast %0 : vector<1x222x128xbf16> to vector<222x128xbf16>
    %c0_2 = arith.constant 0 : index
    %c0_3 = arith.constant 0 : index
    %c0_4 = arith.constant 0 : index
    %2 = vector.load %arg3[%c0_2, %c0_3, %c0_4] : memref<9x128x128xbf16, #tpu.memory_space<vmem>>, vector<1x128x128xbf16>
    %3 = vector.shape_cast %2 : vector<1x128x128xbf16> to vector<128x128xbf16>
    %cst = arith.constant dense<0.000000e+00> : vector<222x128xf32>
    %4 = tpu.matmul %1, %3, %cst {dimension_numbers = #tpu.dot_dimension_numbers<[1], [0], [0], [1], [0, 0, 1, 1], [], []>} : vector<222x128xbf16>, vector<128x128xbf16>, vector<222x128xf32> -> vector<222x128xf32>
    %c0_5 = arith.constant 0 : index
    %c0_6 = arith.constant 0 : index
    %5 = vector.load %arg6[%c0_5, %c0_6] : memref<222x128xf32, #tpu.memory_space<vmem>>, vector<222x128xf32>
    tpu.vector_store %arg6[%c0_5, %c0_6], %4 {strides = array<i32>} : memref<222x128xf32, #tpu.memory_space<vmem>>, vector<222x128xf32>,
    %c0_7 = arith.constant 0 : index
    %c1 = arith.constant 1 : index
    %c0_8 = arith.constant 0 : index
    %6 = vector.load %arg2[%c0_7, %c1, %c0_8] : memref<1x256x128xbf16, #tpu.memory_space<vmem>>, vector<1x222x128xbf16>
    %7 = vector.shape_cast %6 : vector<1x222x128xbf16> to vector<222x128xbf16>
    %c1_9 = arith.constant 1 : index
    %c0_10 = arith.constant 0 : index
    %c0_11 = arith.constant 0 : index
    %8 = vector.load %arg3[%c1_9, %c0_10, %c0_11] : memref<9x128x128xbf16, #tpu.memory_space<vmem>>, vector<1x128x128xbf16>
    %9 = vector.shape_cast %8 : vector<1x128x128xbf16> to vector<128x128xbf16>
    %cst_12 = arith.constant dense<0.000000e+00> : vector<222x128xf32>
    %10 = tpu.matmul %7, %9, %cst_12 {dimension_numbers = #tpu.dot_dimension_numbers<[1], [0], [0], [1], [0, 0, 1, 1], [], []>} : vector<222x128xbf16>, vector<128x128xbf16>, vector<222x128xf32> -> vector<222x128xf32>
    %c0_13 = arith.constant 0 : index
    %c0_14 = arith.constant 0 : index
    %11 = vector.load %arg6[%c0_13, %c0_14] : memref<222x128xf32, #tpu.memory_space<vmem>>, vector<222x128xf32>
    %12 = arith.addf %11, %10 : vector<222x128xf32>
    %c0_15 = arith.constant 0 : index
    %c0_16 = arith.constant 0 : index
    %13 = vector.load %arg6[%c0_15, %c0_16] : memref<222x128xf32, #tpu.memory_space<vmem>>, vector<222x128xf32>
    tpu.vector_store %arg6[%c0_15, %c0_16], %12 {strides = array<i32>} : memref<222x128xf32, #tpu.memory_space<vmem>>, vector<222x128xf32>,
    %c0_17 = arith.constant 0 : index
    %c2 = arith.constant 2 : index
    %c0_18 = arith.constant 0 : index
    %14 = vector.load %arg2[%c0_17, %c2, %c0_18] : memref<1x256x128xbf16, #tpu.memory_space<vmem>>, vector<1x222x128xbf16>
    %15 = vector.shape_cast %14 : vector<1x222x128xbf16> to vector<222x128xbf16>
    %c2_19 = arith.constant 2 : index
    %c0_20 = arith.constant 0 : index
    %c0_21 = arith.constant 0 : index
    %16 = vector.load %arg3[%c2_19, %c0_20, %c0_21] : memref<9x128x128xbf16, #tpu.memory_space<vmem>>, vector<1x128x128xbf16>
    %17 = vector.shape_cast %16 : vector<1x128x128xbf16> to vector<128x128xbf16>
    %cst_22 = arith.constant dense<0.000000e+00> : vector<222x128xf32>
    %18 = tpu.matmul %15, %17, %cst_22 {dimension_numbers = #tpu.dot_dimension_numbers<[1], [0], [0], [1], [0, 0, 1, 1], [], []>} : vector<222x128xbf16>, vector<128x128xbf16>, vector<222x128xf32> -> vector<222x128xf32>
    %c0_23 = arith.constant 0 : index
    %c0_24 = arith.constant 0 : index
    %19 = vector.load %arg6[%c0_23, %c0_24] : memref<222x128xf32, #tpu.memory_space<vmem>>, vector<222x128xf32>
    %20 = arith.addf %19, %18 : vector<222x128xf32>
    %c0_25 = arith.constant 0 : index
    %c0_26 = arith.constant 0 : index
    %21 = vector.load %arg6[%c0_25, %c0_26] : memref<222x128xf32, #tpu.memory_space<vmem>>, vector<222x128xf32>
    tpu.vector_store %arg6[%c0_25, %c0_26], %20 {strides = array<i32>} : memref<222x128xf32, #tpu.memory_space<vmem>>, vector<222x128xf32>,
    %c0_27 = arith.constant 0 : index
    %c16 = arith.constant 16 : index
    %c0_28 = arith.constant 0 : index
    %22 = vector.load %arg2[%c0_27, %c16, %c0_28] : memref<1x256x128xbf16, #tpu.memory_space<vmem>>, vector<1x222x128xbf16>
    %23 = vector.shape_cast %22 : vector<1x222x128xbf16> to vector<222x128xbf16>
    %c3 = arith.constant 3 : index
    %c0_29 = arith.constant 0 : index
    %c0_30 = arith.constant 0 : index
    %24 = vector.load %arg3[%c3, %c0_29, %c0_30] : memref<9x128x128xbf16, #tpu.memory_space<vmem>>, vector<1x128x128xbf16>
    %25 = vector.shape_cast %24 : vector<1x128x128xbf16> to vector<128x128xbf16>
    %cst_31 = arith.constant dense<0.000000e+00> : vector<222x128xf32>
    %26 = tpu.matmul %23, %25, %cst_31 {dimension_numbers = #tpu.dot_dimension_numbers<[1], [0], [0], [1], [0, 0, 1, 1], [], []>} : vector<222x128xbf16>, vector<128x128xbf16>, vector<222x128xf32> -> vector<222x128xf32>
    %c0_32 = arith.constant 0 : index
    %c0_33 = arith.constant 0 : index
    %27 = vector.load %arg6[%c0_32, %c0_33] : memref<222x128xf32, #tpu.memory_space<vmem>>, vector<222x128xf32>
    %28 = arith.addf %27, %26 : vector<222x128xf32>
    %c0_34 = arith.constant 0 : index
    %c0_35 = arith.constant 0 : index
    %29 = vector.load %arg6[%c0_34, %c0_35] : memref<222x128xf32, #tpu.memory_space<vmem>>, vector<222x128xf32>
    tpu.vector_store %arg6[%c0_34, %c0_35], %28 {strides = array<i32>} : memref<222x128xf32, #tpu.memory_space<vmem>>, vector<222x128xf32>,
    %c0_36 = arith.constant 0 : index
    %c17 = arith.constant 17 : index
    %c0_37 = arith.constant 0 : index
    %30 = vector.load %arg2[%c0_36, %c17, %c0_37] : memref<1x256x128xbf16, #tpu.memory_space<vmem>>, vector<1x222x128xbf16>
    %31 = vector.shape_cast %30 : vector<1x222x128xbf16> to vector<222x128xbf16>
    %c4 = arith.constant 4 : index
    %c0_38 = arith.constant 0 : index
    %c0_39 = arith.constant 0 : index
    %32 = vector.load %arg3[%c4, %c0_38, %c0_39] : memref<9x128x128xbf16, #tpu.memory_space<vmem>>, vector<1x128x128xbf16>
    %33 = vector.shape_cast %32 : vector<1x128x128xbf16> to vector<128x128xbf16>
    %cst_40 = arith.constant dense<0.000000e+00> : vector<222x128xf32>
    %34 = tpu.matmul %31, %33, %cst_40 {dimension_numbers = #tpu.dot_dimension_numbers<[1], [0], [0], [1], [0, 0, 1, 1], [], []>} : vector<222x128xbf16>, vector<128x128xbf16>, vector<222x128xf32> -> vector<222x128xf32>
    %c0_41 = arith.constant 0 : index
    %c0_42 = arith.constant 0 : index
    %35 = vector.load %arg6[%c0_41, %c0_42] : memref<222x128xf32, #tpu.memory_space<vmem>>, vector<222x128xf32>
    %36 = arith.addf %35, %34 : vector<222x128xf32>
    %c0_43 = arith.constant 0 : index
    %c0_44 = arith.constant 0 : index
    %37 = vector.load %arg6[%c0_43, %c0_44] : memref<222x128xf32, #tpu.memory_space<vmem>>, vector<222x128xf32>
    tpu.vector_store %arg6[%c0_43, %c0_44], %36 {strides = array<i32>} : memref<222x128xf32, #tpu.memory_space<vmem>>, vector<222x128xf32>,
    %c0_45 = arith.constant 0 : index
    %c18 = arith.constant 18 : index
    %c0_46 = arith.constant 0 : index
    %38 = vector.load %arg2[%c0_45, %c18, %c0_46] : memref<1x256x128xbf16, #tpu.memory_space<vmem>>, vector<1x222x128xbf16>
    %39 = vector.shape_cast %38 : vector<1x222x128xbf16> to vector<222x128xbf16>
    %c5 = arith.constant 5 : index
    %c0_47 = arith.constant 0 : index
    %c0_48 = arith.constant 0 : index
    %40 = vector.load %arg3[%c5, %c0_47, %c0_48] : memref<9x128x128xbf16, #tpu.memory_space<vmem>>, vector<1x128x128xbf16>
    %41 = vector.shape_cast %40 : vector<1x128x128xbf16> to vector<128x128xbf16>
    %cst_49 = arith.constant dense<0.000000e+00> : vector<222x128xf32>
    %42 = tpu.matmul %39, %41, %cst_49 {dimension_numbers = #tpu.dot_dimension_numbers<[1], [0], [0], [1], [0, 0, 1, 1], [], []>} : vector<222x128xbf16>, vector<128x128xbf16>, vector<222x128xf32> -> vector<222x128xf32>
    %c0_50 = arith.constant 0 : index
    %c0_51 = arith.constant 0 : index
    %43 = vector.load %arg6[%c0_50, %c0_51] : memref<222x128xf32, #tpu.memory_space<vmem>>, vector<222x128xf32>
    %44 = arith.addf %43, %42 : vector<222x128xf32>
    %c0_52 = arith.constant 0 : index
    %c0_53 = arith.constant 0 : index
    %45 = vector.load %arg6[%c0_52, %c0_53] : memref<222x128xf32, #tpu.memory_space<vmem>>, vector<222x128xf32>
    tpu.vector_store %arg6[%c0_52, %c0_53], %44 {strides = array<i32>} : memref<222x128xf32, #tpu.memory_space<vmem>>, vector<222x128xf32>,
    %c0_54 = arith.constant 0 : index
    %c32 = arith.constant 32 : index
    %c0_55 = arith.constant 0 : index
    %46 = vector.load %arg2[%c0_54, %c32, %c0_55] : memref<1x256x128xbf16, #tpu.memory_space<vmem>>, vector<1x222x128xbf16>
    %47 = vector.shape_cast %46 : vector<1x222x128xbf16> to vector<222x128xbf16>
    %c6 = arith.constant 6 : index
    %c0_56 = arith.constant 0 : index
    %c0_57 = arith.constant 0 : index
    %48 = vector.load %arg3[%c6, %c0_56, %c0_57] : memref<9x128x128xbf16, #tpu.memory_space<vmem>>, vector<1x128x128xbf16>
    %49 = vector.shape_cast %48 : vector<1x128x128xbf16> to vector<128x128xbf16>
    %cst_58 = arith.constant dense<0.000000e+00> : vector<222x128xf32>
    %50 = tpu.matmul %47, %49, %cst_58 {dimension_numbers = #tpu.dot_dimension_numbers<[1], [0], [0], [1], [0, 0, 1, 1], [], []>} : vector<222x128xbf16>, vector<128x128xbf16>, vector<222x128xf32> -> vector<222x128xf32>
    %c0_59 = arith.constant 0 : index
    %c0_60 = arith.constant 0 : index
    %51 = vector.load %arg6[%c0_59, %c0_60] : memref<222x128xf32, #tpu.memory_space<vmem>>, vector<222x128xf32>
    %52 = arith.addf %51, %50 : vector<222x128xf32>
    %c0_61 = arith.constant 0 : index
    %c0_62 = arith.constant 0 : index
    %53 = vector.load %arg6[%c0_61, %c0_62] : memref<222x128xf32, #tpu.memory_space<vmem>>, vector<222x128xf32>
    tpu.vector_store %arg6[%c0_61, %c0_62], %52 {strides = array<i32>} : memref<222x128xf32, #tpu.memory_space<vmem>>, vector<222x128xf32>,
    %c0_63 = arith.constant 0 : index
    %c33 = arith.constant 33 : index
    %c0_64 = arith.constant 0 : index
    %54 = vector.load %arg2[%c0_63, %c33, %c0_64] : memref<1x256x128xbf16, #tpu.memory_space<vmem>>, vector<1x222x128xbf16>
    %55 = vector.shape_cast %54 : vector<1x222x128xbf16> to vector<222x128xbf16>
    %c7 = arith.constant 7 : index
    %c0_65 = arith.constant 0 : index
    %c0_66 = arith.constant 0 : index
    %56 = vector.load %arg3[%c7, %c0_65, %c0_66] : memref<9x128x128xbf16, #tpu.memory_space<vmem>>, vector<1x128x128xbf16>
    %57 = vector.shape_cast %56 : vector<1x128x128xbf16> to vector<128x128xbf16>
    %cst_67 = arith.constant dense<0.000000e+00> : vector<222x128xf32>
    %58 = tpu.matmul %55, %57, %cst_67 {dimension_numbers = #tpu.dot_dimension_numbers<[1], [0], [0], [1], [0, 0, 1, 1], [], []>} : vector<222x128xbf16>, vector<128x128xbf16>, vector<222x128xf32> -> vector<222x128xf32>
    %c0_68 = arith.constant 0 : index
    %c0_69 = arith.constant 0 : index
    %59 = vector.load %arg6[%c0_68, %c0_69] : memref<222x128xf32, #tpu.memory_space<vmem>>, vector<222x128xf32>
    %60 = arith.addf %59, %58 : vector<222x128xf32>
    %c0_70 = arith.constant 0 : index
    %c0_71 = arith.constant 0 : index
    %61 = vector.load %arg6[%c0_70, %c0_71] : memref<222x128xf32, #tpu.memory_space<vmem>>, vector<222x128xf32>
    tpu.vector_store %arg6[%c0_70, %c0_71], %60 {strides = array<i32>} : memref<222x128xf32, #tpu.memory_space<vmem>>, vector<222x128xf32>,
    %c0_72 = arith.constant 0 : index
    %c34 = arith.constant 34 : index
    %c0_73 = arith.constant 0 : index
    %62 = vector.load %arg2[%c0_72, %c34, %c0_73] : memref<1x256x128xbf16, #tpu.memory_space<vmem>>, vector<1x222x128xbf16>
    %63 = vector.shape_cast %62 : vector<1x222x128xbf16> to vector<222x128xbf16>
    %c8 = arith.constant 8 : index
    %c0_74 = arith.constant 0 : index
    %c0_75 = arith.constant 0 : index
    %64 = vector.load %arg3[%c8, %c0_74, %c0_75] : memref<9x128x128xbf16, #tpu.memory_space<vmem>>, vector<1x128x128xbf16>
    %65 = vector.shape_cast %64 : vector<1x128x128xbf16> to vector<128x128xbf16>
    %cst_76 = arith.constant dense<0.000000e+00> : vector<222x128xf32>
    %66 = tpu.matmul %63, %65, %cst_76 {dimension_numbers = #tpu.dot_dimension_numbers<[1], [0], [0], [1], [0, 0, 1, 1], [], []>} : vector<222x128xbf16>, vector<128x128xbf16>, vector<222x128xf32> -> vector<222x128xf32>
    %c0_77 = arith.constant 0 : index
    %c0_78 = arith.constant 0 : index
    %67 = vector.load %arg6[%c0_77, %c0_78] : memref<222x128xf32, #tpu.memory_space<vmem>>, vector<222x128xf32>
    %68 = arith.addf %67, %66 : vector<222x128xf32>
    %c0_79 = arith.constant 0 : index
    %c0_80 = arith.constant 0 : index
    %69 = vector.load %arg6[%c0_79, %c0_80] : memref<222x128xf32, #tpu.memory_space<vmem>>, vector<222x128xf32>
    tpu.vector_store %arg6[%c0_79, %c0_80], %68 {strides = array<i32>} : memref<222x128xf32, #tpu.memory_space<vmem>>, vector<222x128xf32>,
    %c0_81 = arith.constant 0 : index
    %c0_82 = arith.constant 0 : index
    %70 = vector.load %arg4[%c0_81, %c0_82] : memref<1x128xf32, #tpu.memory_space<vmem>>, vector<1x128xf32>
    %c0_83 = arith.constant 0 : index
    %c0_84 = arith.constant 0 : index
    %71 = vector.load %arg6[%c0_83, %c0_84] : memref<222x128xf32, #tpu.memory_space<vmem>>, vector<14x128xf32>
    %72 = vector.broadcast %70 : vector<1x128xf32> to vector<14x128xf32>
    %73 = arith.addf %71, %72 : vector<14x128xf32>
    %cst_85 = arith.constant 0.000000e+00 : f32
    %74 = vector.broadcast %cst_85 : f32 to vector<14x128xf32>
    %75 = arith.maximumf %73, %74 : vector<14x128xf32>
    %76 = arith.truncf %75 : vector<14x128xf32> to vector<14x128xbf16>
    %c0_86 = arith.constant 0 : index
    %c0_87 = arith.constant 0 : index
    %c0_88 = arith.constant 0 : index
    %c0_89 = arith.constant 0 : index
    %77 = vector.load %arg5[%c0_86, %c0_87, %c0_88, %c0_89] : memref<1x14x14x128xbf16, #tpu.memory_space<vmem>>, vector<1x1x14x128xbf16>
    %78 = vector.shape_cast %77 : vector<1x1x14x128xbf16> to vector<14x128xbf16>
    %79 = vector.shape_cast %76 : vector<14x128xbf16> to vector<1x1x14x128xbf16>
    tpu.vector_store %arg5[%c0_86, %c0_87, %c0_88, %c0_89], %79 {strides = array<i32>} : memref<1x14x14x128xbf16, #tpu.memory_space<vmem>>, vector<1x1x14x128xbf16>,
    %c16_90 = arith.constant 16 : index
    %c0_91 = arith.constant 0 : index
    %80 = vector.load %arg6[%c16_90, %c0_91] : memref<222x128xf32, #tpu.memory_space<vmem>>, vector<14x128xf32>
    %81 = vector.broadcast %70 : vector<1x128xf32> to vector<14x128xf32>
    %82 = arith.addf %80, %81 : vector<14x128xf32>
    %cst_92 = arith.constant 0.000000e+00 : f32
    %83 = vector.broadcast %cst_92 : f32 to vector<14x128xf32>
    %84 = arith.maximumf %82, %83 : vector<14x128xf32>
    %85 = arith.truncf %84 : vector<14x128xf32> to vector<14x128xbf16>
    %c0_93 = arith.constant 0 : index
    %c1_94 = arith.constant 1 : index
    %c0_95 = arith.constant 0 : index
    %c0_96 = arith.constant 0 : index
    %86 = vector.load %arg5[%c0_93, %c1_94, %c0_95, %c0_96] : memref<1x14x14x128xbf16, #tpu.memory_space<vmem>>, vector<1x1x14x128xbf16>
    %87 = vector.shape_cast %86 : vector<1x1x14x128xbf16> to vector<14x128xbf16>
    %88 = vector.shape_cast %85 : vector<14x128xbf16> to vector<1x1x14x128xbf16>
    tpu.vector_store %arg5[%c0_93, %c1_94, %c0_95, %c0_96], %88 {strides = array<i32>} : memref<1x14x14x128xbf16, #tpu.memory_space<vmem>>, vector<1x1x14x128xbf16>,
    %c32_97 = arith.constant 32 : index
    %c0_98 = arith.constant 0 : index
    %89 = vector.load %arg6[%c32_97, %c0_98] : memref<222x128xf32, #tpu.memory_space<vmem>>, vector<14x128xf32>
    %90 = vector.broadcast %70 : vector<1x128xf32> to vector<14x128xf32>
    %91 = arith.addf %89, %90 : vector<14x128xf32>
    %cst_99 = arith.constant 0.000000e+00 : f32
    %92 = vector.broadcast %cst_99 : f32 to vector<14x128xf32>
    %93 = arith.maximumf %91, %92 : vector<14x128xf32>
    %94 = arith.truncf %93 : vector<14x128xf32> to vector<14x128xbf16>
    %c0_100 = arith.constant 0 : index
    %c2_101 = arith.constant 2 : index
    %c0_102 = arith.constant 0 : index
    %c0_103 = arith.constant 0 : index
    %95 = vector.load %arg5[%c0_100, %c2_101, %c0_102, %c0_103] : memref<1x14x14x128xbf16, #tpu.memory_space<vmem>>, vector<1x1x14x128xbf16>
    %96 = vector.shape_cast %95 : vector<1x1x14x128xbf16> to vector<14x128xbf16>
    %97 = vector.shape_cast %94 : vector<14x128xbf16> to vector<1x1x14x128xbf16>
    tpu.vector_store %arg5[%c0_100, %c2_101, %c0_102, %c0_103], %97 {strides = array<i32>} : memref<1x14x14x128xbf16, #tpu.memory_space<vmem>>, vector<1x1x14x128xbf16>,
    %c48 = arith.constant 48 : index
    %c0_104 = arith.constant 0 : index
    %98 = vector.load %arg6[%c48, %c0_104] : memref<222x128xf32, #tpu.memory_space<vmem>>, vector<14x128xf32>
    %99 = vector.broadcast %70 : vector<1x128xf32> to vector<14x128xf32>
    %100 = arith.addf %98, %99 : vector<14x128xf32>
    %cst_105 = arith.constant 0.000000e+00 : f32
    %101 = vector.broadcast %cst_105 : f32 to vector<14x128xf32>
    %102 = arith.maximumf %100, %101 : vector<14x128xf32>
    %103 = arith.truncf %102 : vector<14x128xf32> to vector<14x128xbf16>
    %c0_106 = arith.constant 0 : index
    %c3_107 = arith.constant 3 : index
    %c0_108 = arith.constant 0 : index
    %c0_109 = arith.constant 0 : index
    %104 = vector.load %arg5[%c0_106, %c3_107, %c0_108, %c0_109] : memref<1x14x14x128xbf16, #tpu.memory_space<vmem>>, vector<1x1x14x128xbf16>
    %105 = vector.shape_cast %104 : vector<1x1x14x128xbf16> to vector<14x128xbf16>
    %106 = vector.shape_cast %103 : vector<14x128xbf16> to vector<1x1x14x128xbf16>
    tpu.vector_store %arg5[%c0_106, %c3_107, %c0_108, %c0_109], %106 {strides = array<i32>} : memref<1x14x14x128xbf16, #tpu.memory_space<vmem>>, vector<1x1x14x128xbf16>,
    %c64 = arith.constant 64 : index
    %c0_110 = arith.constant 0 : index
    %107 = vector.load %arg6[%c64, %c0_110] : memref<222x128xf32, #tpu.memory_space<vmem>>, vector<14x128xf32>
    %108 = vector.broadcast %70 : vector<1x128xf32> to vector<14x128xf32>
    %109 = arith.addf %107, %108 : vector<14x128xf32>
    %cst_111 = arith.constant 0.000000e+00 : f32
    %110 = vector.broadcast %cst_111 : f32 to vector<14x128xf32>
    %111 = arith.maximumf %109, %110 : vector<14x128xf32>
    %112 = arith.truncf %111 : vector<14x128xf32> to vector<14x128xbf16>
    %c0_112 = arith.constant 0 : index
    %c4_113 = arith.constant 4 : index
    %c0_114 = arith.constant 0 : index
    %c0_115 = arith.constant 0 : index
    %113 = vector.load %arg5[%c0_112, %c4_113, %c0_114, %c0_115] : memref<1x14x14x128xbf16, #tpu.memory_space<vmem>>, vector<1x1x14x128xbf16>
    %114 = vector.shape_cast %113 : vector<1x1x14x128xbf16> to vector<14x128xbf16>
    %115 = vector.shape_cast %112 : vector<14x128xbf16> to vector<1x1x14x128xbf16>
    tpu.vector_store %arg5[%c0_112, %c4_113, %c0_114, %c0_115], %115 {strides = array<i32>} : memref<1x14x14x128xbf16, #tpu.memory_space<vmem>>, vector<1x1x14x128xbf16>,
    %c80 = arith.constant 80 : index
    %c0_116 = arith.constant 0 : index
    %116 = vector.load %arg6[%c80, %c0_116] : memref<222x128xf32, #tpu.memory_space<vmem>>, vector<14x128xf32>
    %117 = vector.broadcast %70 : vector<1x128xf32> to vector<14x128xf32>
    %118 = arith.addf %116, %117 : vector<14x128xf32>
    %cst_117 = arith.constant 0.000000e+00 : f32
    %119 = vector.broadcast %cst_117 : f32 to vector<14x128xf32>
    %120 = arith.maximumf %118, %119 : vector<14x128xf32>
    %121 = arith.truncf %120 : vector<14x128xf32> to vector<14x128xbf16>
    %c0_118 = arith.constant 0 : index
    %c5_119 = arith.constant 5 : index
    %c0_120 = arith.constant 0 : index
    %c0_121 = arith.constant 0 : index
    %122 = vector.load %arg5[%c0_118, %c5_119, %c0_120, %c0_121] : memref<1x14x14x128xbf16, #tpu.memory_space<vmem>>, vector<1x1x14x128xbf16>
    %123 = vector.shape_cast %122 : vector<1x1x14x128xbf16> to vector<14x128xbf16>
    %124 = vector.shape_cast %121 : vector<14x128xbf16> to vector<1x1x14x128xbf16>
    tpu.vector_store %arg5[%c0_118, %c5_119, %c0_120, %c0_121], %124 {strides = array<i32>} : memref<1x14x14x128xbf16, #tpu.memory_space<vmem>>, vector<1x1x14x128xbf16>,
    %c96 = arith.constant 96 : index
    %c0_122 = arith.constant 0 : index
    %125 = vector.load %arg6[%c96, %c0_122] : memref<222x128xf32, #tpu.memory_space<vmem>>, vector<14x128xf32>
    %126 = vector.broadcast %70 : vector<1x128xf32> to vector<14x128xf32>
    %127 = arith.addf %125, %126 : vector<14x128xf32>
    %cst_123 = arith.constant 0.000000e+00 : f32
    %128 = vector.broadcast %cst_123 : f32 to vector<14x128xf32>
    %129 = arith.maximumf %127, %128 : vector<14x128xf32>
    %130 = arith.truncf %129 : vector<14x128xf32> to vector<14x128xbf16>
    %c0_124 = arith.constant 0 : index
    %c6_125 = arith.constant 6 : index
    %c0_126 = arith.constant 0 : index
    %c0_127 = arith.constant 0 : index
    %131 = vector.load %arg5[%c0_124, %c6_125, %c0_126, %c0_127] : memref<1x14x14x128xbf16, #tpu.memory_space<vmem>>, vector<1x1x14x128xbf16>
    %132 = vector.shape_cast %131 : vector<1x1x14x128xbf16> to vector<14x128xbf16>
    %133 = vector.shape_cast %130 : vector<14x128xbf16> to vector<1x1x14x128xbf16>
    tpu.vector_store %arg5[%c0_124, %c6_125, %c0_126, %c0_127], %133 {strides = array<i32>} : memref<1x14x14x128xbf16, #tpu.memory_space<vmem>>, vector<1x1x14x128xbf16>,
    %c112 = arith.constant 112 : index
    %c0_128 = arith.constant 0 : index
    %134 = vector.load %arg6[%c112, %c0_128] : memref<222x128xf32, #tpu.memory_space<vmem>>, vector<14x128xf32>
    %135 = vector.broadcast %70 : vector<1x128xf32> to vector<14x128xf32>
    %136 = arith.addf %134, %135 : vector<14x128xf32>
    %cst_129 = arith.constant 0.000000e+00 : f32
    %137 = vector.broadcast %cst_129 : f32 to vector<14x128xf32>
    %138 = arith.maximumf %136, %137 : vector<14x128xf32>
    %139 = arith.truncf %138 : vector<14x128xf32> to vector<14x128xbf16>
    %c0_130 = arith.constant 0 : index
    %c7_131 = arith.constant 7 : index
    %c0_132 = arith.constant 0 : index
    %c0_133 = arith.constant 0 : index
    %140 = vector.load %arg5[%c0_130, %c7_131, %c0_132, %c0_133] : memref<1x14x14x128xbf16, #tpu.memory_space<vmem>>, vector<1x1x14x128xbf16>
    %141 = vector.shape_cast %140 : vector<1x1x14x128xbf16> to vector<14x128xbf16>
    %142 = vector.shape_cast %139 : vector<14x128xbf16> to vector<1x1x14x128xbf16>
    tpu.vector_store %arg5[%c0_130, %c7_131, %c0_132, %c0_133], %142 {strides = array<i32>} : memref<1x14x14x128xbf16, #tpu.memory_space<vmem>>, vector<1x1x14x128xbf16>,
    %c128 = arith.constant 128 : index
    %c0_134 = arith.constant 0 : index
    %143 = vector.load %arg6[%c128, %c0_134] : memref<222x128xf32, #tpu.memory_space<vmem>>, vector<14x128xf32>
    %144 = vector.broadcast %70 : vector<1x128xf32> to vector<14x128xf32>
    %145 = arith.addf %143, %144 : vector<14x128xf32>
    %cst_135 = arith.constant 0.000000e+00 : f32
    %146 = vector.broadcast %cst_135 : f32 to vector<14x128xf32>
    %147 = arith.maximumf %145, %146 : vector<14x128xf32>
    %148 = arith.truncf %147 : vector<14x128xf32> to vector<14x128xbf16>
    %c0_136 = arith.constant 0 : index
    %c8_137 = arith.constant 8 : index
    %c0_138 = arith.constant 0 : index
    %c0_139 = arith.constant 0 : index
    %149 = vector.load %arg5[%c0_136, %c8_137, %c0_138, %c0_139] : memref<1x14x14x128xbf16, #tpu.memory_space<vmem>>, vector<1x1x14x128xbf16>
    %150 = vector.shape_cast %149 : vector<1x1x14x128xbf16> to vector<14x128xbf16>
    %151 = vector.shape_cast %148 : vector<14x128xbf16> to vector<1x1x14x128xbf16>
    tpu.vector_store %arg5[%c0_136, %c8_137, %c0_138, %c0_139], %151 {strides = array<i32>} : memref<1x14x14x128xbf16, #tpu.memory_space<vmem>>, vector<1x1x14x128xbf16>,
    %c144 = arith.constant 144 : index
    %c0_140 = arith.constant 0 : index
    %152 = vector.load %arg6[%c144, %c0_140] : memref<222x128xf32, #tpu.memory_space<vmem>>, vector<14x128xf32>
    %153 = vector.broadcast %70 : vector<1x128xf32> to vector<14x128xf32>
    %154 = arith.addf %152, %153 : vector<14x128xf32>
    %cst_141 = arith.constant 0.000000e+00 : f32
    %155 = vector.broadcast %cst_141 : f32 to vector<14x128xf32>
    %156 = arith.maximumf %154, %155 : vector<14x128xf32>
    %157 = arith.truncf %156 : vector<14x128xf32> to vector<14x128xbf16>
    %c0_142 = arith.constant 0 : index
    %c9 = arith.constant 9 : index
    %c0_143 = arith.constant 0 : index
    %c0_144 = arith.constant 0 : index
    %158 = vector.load %arg5[%c0_142, %c9, %c0_143, %c0_144] : memref<1x14x14x128xbf16, #tpu.memory_space<vmem>>, vector<1x1x14x128xbf16>
    %159 = vector.shape_cast %158 : vector<1x1x14x128xbf16> to vector<14x128xbf16>
    %160 = vector.shape_cast %157 : vector<14x128xbf16> to vector<1x1x14x128xbf16>
    tpu.vector_store %arg5[%c0_142, %c9, %c0_143, %c0_144], %160 {strides = array<i32>} : memref<1x14x14x128xbf16, #tpu.memory_space<vmem>>, vector<1x1x14x128xbf16>,
    %c160 = arith.constant 160 : index
    %c0_145 = arith.constant 0 : index
    %161 = vector.load %arg6[%c160, %c0_145] : memref<222x128xf32, #tpu.memory_space<vmem>>, vector<14x128xf32>
    %162 = vector.broadcast %70 : vector<1x128xf32> to vector<14x128xf32>
    %163 = arith.addf %161, %162 : vector<14x128xf32>
    %cst_146 = arith.constant 0.000000e+00 : f32
    %164 = vector.broadcast %cst_146 : f32 to vector<14x128xf32>
    %165 = arith.maximumf %163, %164 : vector<14x128xf32>
    %166 = arith.truncf %165 : vector<14x128xf32> to vector<14x128xbf16>
    %c0_147 = arith.constant 0 : index
    %c10 = arith.constant 10 : index
    %c0_148 = arith.constant 0 : index
    %c0_149 = arith.constant 0 : index
    %167 = vector.load %arg5[%c0_147, %c10, %c0_148, %c0_149] : memref<1x14x14x128xbf16, #tpu.memory_space<vmem>>, vector<1x1x14x128xbf16>
    %168 = vector.shape_cast %167 : vector<1x1x14x128xbf16> to vector<14x128xbf16>
    %169 = vector.shape_cast %166 : vector<14x128xbf16> to vector<1x1x14x128xbf16>
    tpu.vector_store %arg5[%c0_147, %c10, %c0_148, %c0_149], %169 {strides = array<i32>} : memref<1x14x14x128xbf16, #tpu.memory_space<vmem>>, vector<1x1x14x128xbf16>,
    %c176 = arith.constant 176 : index
    %c0_150 = arith.constant 0 : index
    %170 = vector.load %arg6[%c176, %c0_150] : memref<222x128xf32, #tpu.memory_space<vmem>>, vector<14x128xf32>
    %171 = vector.broadcast %70 : vector<1x128xf32> to vector<14x128xf32>
    %172 = arith.addf %170, %171 : vector<14x128xf32>
    %cst_151 = arith.constant 0.000000e+00 : f32
    %173 = vector.broadcast %cst_151 : f32 to vector<14x128xf32>
    %174 = arith.maximumf %172, %173 : vector<14x128xf32>
    %175 = arith.truncf %174 : vector<14x128xf32> to vector<14x128xbf16>
    %c0_152 = arith.constant 0 : index
    %c11 = arith.constant 11 : index
    %c0_153 = arith.constant 0 : index
    %c0_154 = arith.constant 0 : index
    %176 = vector.load %arg5[%c0_152, %c11, %c0_153, %c0_154] : memref<1x14x14x128xbf16, #tpu.memory_space<vmem>>, vector<1x1x14x128xbf16>
    %177 = vector.shape_cast %176 : vector<1x1x14x128xbf16> to vector<14x128xbf16>
    %178 = vector.shape_cast %175 : vector<14x128xbf16> to vector<1x1x14x128xbf16>
    tpu.vector_store %arg5[%c0_152, %c11, %c0_153, %c0_154], %178 {strides = array<i32>} : memref<1x14x14x128xbf16, #tpu.memory_space<vmem>>, vector<1x1x14x128xbf16>,
    %c192 = arith.constant 192 : index
    %c0_155 = arith.constant 0 : index
    %179 = vector.load %arg6[%c192, %c0_155] : memref<222x128xf32, #tpu.memory_space<vmem>>, vector<14x128xf32>
    %180 = vector.broadcast %70 : vector<1x128xf32> to vector<14x128xf32>
    %181 = arith.addf %179, %180 : vector<14x128xf32>
    %cst_156 = arith.constant 0.000000e+00 : f32
    %182 = vector.broadcast %cst_156 : f32 to vector<14x128xf32>
    %183 = arith.maximumf %181, %182 : vector<14x128xf32>
    %184 = arith.truncf %183 : vector<14x128xf32> to vector<14x128xbf16>
    %c0_157 = arith.constant 0 : index
    %c12 = arith.constant 12 : index
    %c0_158 = arith.constant 0 : index
    %c0_159 = arith.constant 0 : index
    %185 = vector.load %arg5[%c0_157, %c12, %c0_158, %c0_159] : memref<1x14x14x128xbf16, #tpu.memory_space<vmem>>, vector<1x1x14x128xbf16>
    %186 = vector.shape_cast %185 : vector<1x1x14x128xbf16> to vector<14x128xbf16>
    %187 = vector.shape_cast %184 : vector<14x128xbf16> to vector<1x1x14x128xbf16>
    tpu.vector_store %arg5[%c0_157, %c12, %c0_158, %c0_159], %187 {strides = array<i32>} : memref<1x14x14x128xbf16, #tpu.memory_space<vmem>>, vector<1x1x14x128xbf16>,
    %c208 = arith.constant 208 : index
    %c0_160 = arith.constant 0 : index
    %188 = vector.load %arg6[%c208, %c0_160] : memref<222x128xf32, #tpu.memory_space<vmem>>, vector<14x128xf32>
    %189 = vector.broadcast %70 : vector<1x128xf32> to vector<14x128xf32>
    %190 = arith.addf %188, %189 : vector<14x128xf32>
    %cst_161 = arith.constant 0.000000e+00 : f32
    %191 = vector.broadcast %cst_161 : f32 to vector<14x128xf32>
    %192 = arith.maximumf %190, %191 : vector<14x128xf32>
    %193 = arith.truncf %192 : vector<14x128xf32> to vector<14x128xbf16>
    %c0_162 = arith.constant 0 : index
    %c13 = arith.constant 13 : index
    %c0_163 = arith.constant 0 : index
    %c0_164 = arith.constant 0 : index
    %194 = vector.load %arg5[%c0_162, %c13, %c0_163, %c0_164] : memref<1x14x14x128xbf16, #tpu.memory_space<vmem>>, vector<1x1x14x128xbf16>
    %195 = vector.shape_cast %194 : vector<1x1x14x128xbf16> to vector<14x128xbf16>
    %196 = vector.shape_cast %193 : vector<14x128xbf16> to vector<1x1x14x128xbf16>
    tpu.vector_store %arg5[%c0_162, %c13, %c0_163, %c0_164], %196 {strides = array<i32>} : memref<1x14x14x128xbf16, #tpu.memory_space<vmem>>, vector<1x1x14x128xbf16>,
    return
  }
  func.func @transform_0(%arg0: i32, %arg1: i32) -> (i32, i32, i32) {
    %c0_i32 = arith.constant 0 : i32
    %c0_i32_0 = arith.constant 0 : i32
    %c0_i32_1 = arith.constant 0 : i32
    return %arg0, %c0_i32, %c0_i32_0 : i32, i32, i32
  }
  func.func @transform_1(%arg0: i32, %arg1: i32) -> (i32, i32, i32) {
    %c0_i32 = arith.constant 0 : i32
    %c0_i32_0 = arith.constant 0 : i32
    %c0_i32_1 = arith.constant 0 : i32
    return %c0_i32, %c0_i32_0, %arg1 : i32, i32, i32
  }
  func.func @transform_2(%arg0: i32, %arg1: i32) -> (i32, i32) {
    %c0_i32 = arith.constant 0 : i32
    %c0_i32_0 = arith.constant 0 : i32
    return %c0_i32, %arg1 : i32, i32
  }
  func.func @transform_3(%arg0: i32, %arg1: i32) -> (i32, i32, i32, i32) {
    %c0_i32 = arith.constant 0 : i32
    %c0_i32_0 = arith.constant 0 : i32
    %c0_i32_1 = arith.constant 0 : i32
    return %arg0, %c0_i32, %c0_i32_0, %arg1 : i32, i32, i32, i32
  }
}

module attributes {stable_mosaic.version = 11 : i64} {
  func.func @_conv_bn_kernel(%arg0: i32, %arg1: i32, %arg2: memref<1x196x128xbf16, #tpu.memory_space<vmem>>, %arg3: memref<1x128x128xbf16, #tpu.memory_space<vmem>>, %arg4: memref<1x128xf32, #tpu.memory_space<vmem>>, %arg5: memref<1x14x14x128xbf16, #tpu.memory_space<vmem>>, %arg6: memref<1x14x14x128xf32, #tpu.memory_space<vmem>>, %arg7: memref<196x128xf32, #tpu.memory_space<vmem>>) attributes {dimension_semantics = [#tpu.dimension_semantics<parallel>, #tpu.dimension_semantics<parallel>], iteration_bounds = array<i64: 2, 1>, scalar_prefetch = 0 : i64, scratch_operands = 1 : i64, tpu.core_type = #tpu.core_type<tc>, window_params = [{transform_indices = @transform_0, window_bounds = array<i64: 1, 196, 128>}, {transform_indices = @transform_1, window_bounds = array<i64: 1, 128, 128>}, {transform_indices = @transform_2, window_bounds = array<i64: 1, 128>}, {transform_indices = @transform_3, window_bounds = array<i64: 1, 14, 14, 128>}, {transform_indices = @transform_4, window_bounds = array<i64: 1, 14, 14, 128>}]} {
    %c0 = arith.constant 0 : index
    %c0_0 = arith.constant 0 : index
    %c0_1 = arith.constant 0 : index
    %0 = vector.load %arg2[%c0, %c0_0, %c0_1] : memref<1x196x128xbf16, #tpu.memory_space<vmem>>, vector<1x196x128xbf16>
    %1 = vector.shape_cast %0 : vector<1x196x128xbf16> to vector<196x128xbf16>
    %c0_2 = arith.constant 0 : index
    %c0_3 = arith.constant 0 : index
    %c0_4 = arith.constant 0 : index
    %2 = vector.load %arg3[%c0_2, %c0_3, %c0_4] : memref<1x128x128xbf16, #tpu.memory_space<vmem>>, vector<1x128x128xbf16>
    %3 = vector.shape_cast %2 : vector<1x128x128xbf16> to vector<128x128xbf16>
    %cst = arith.constant dense<0.000000e+00> : vector<196x128xf32>
    %4 = tpu.matmul %1, %3, %cst {dimension_numbers = #tpu.dot_dimension_numbers<[1], [0], [0], [1], [0, 0, 1, 1], [], []>} : vector<196x128xbf16>, vector<128x128xbf16>, vector<196x128xf32> -> vector<196x128xf32>
    %c0_5 = arith.constant 0 : index
    %c0_6 = arith.constant 0 : index
    %5 = vector.load %arg7[%c0_5, %c0_6] : memref<196x128xf32, #tpu.memory_space<vmem>>, vector<196x128xf32>
    tpu.vector_store %arg7[%c0_5, %c0_6], %4 {strides = array<i32>} : memref<196x128xf32, #tpu.memory_space<vmem>>, vector<196x128xf32>,
    %c0_7 = arith.constant 0 : index
    %c0_8 = arith.constant 0 : index
    %6 = vector.load %arg4[%c0_7, %c0_8] : memref<1x128xf32, #tpu.memory_space<vmem>>, vector<1x128xf32>
    %c0_9 = arith.constant 0 : index
    %c0_10 = arith.constant 0 : index
    %7 = vector.load %arg7[%c0_9, %c0_10] : memref<196x128xf32, #tpu.memory_space<vmem>>, vector<14x128xf32>
    %8 = vector.broadcast %6 : vector<1x128xf32> to vector<14x128xf32>
    %9 = arith.addf %7, %8 : vector<14x128xf32>
    %c0_11 = arith.constant 0 : index
    %c0_12 = arith.constant 0 : index
    %c0_13 = arith.constant 0 : index
    %c0_14 = arith.constant 0 : index
    %10 = vector.load %arg5[%c0_11, %c0_12, %c0_13, %c0_14] : memref<1x14x14x128xbf16, #tpu.memory_space<vmem>>, vector<1x1x14x128xbf16>
    %11 = vector.shape_cast %10 : vector<1x1x14x128xbf16> to vector<14x128xbf16>
    %12 = arith.extf %11 : vector<14x128xbf16> to vector<14x128xf32>
    %13 = arith.addf %9, %12 : vector<14x128xf32>
    %cst_15 = arith.constant 0.000000e+00 : f32
    %14 = vector.broadcast %cst_15 : f32 to vector<14x128xf32>
    %15 = arith.maximumf %13, %14 : vector<14x128xf32>
    %c0_16 = arith.constant 0 : index
    %c0_17 = arith.constant 0 : index
    %c0_18 = arith.constant 0 : index
    %c0_19 = arith.constant 0 : index
    %16 = vector.load %arg6[%c0_16, %c0_17, %c0_18, %c0_19] : memref<1x14x14x128xf32, #tpu.memory_space<vmem>>, vector<1x1x14x128xf32>
    %17 = vector.shape_cast %16 : vector<1x1x14x128xf32> to vector<14x128xf32>
    %18 = vector.shape_cast %15 : vector<14x128xf32> to vector<1x1x14x128xf32>
    tpu.vector_store %arg6[%c0_16, %c0_17, %c0_18, %c0_19], %18 {strides = array<i32>} : memref<1x14x14x128xf32, #tpu.memory_space<vmem>>, vector<1x1x14x128xf32>,
    %c14 = arith.constant 14 : index
    %c0_20 = arith.constant 0 : index
    %19 = vector.load %arg7[%c14, %c0_20] : memref<196x128xf32, #tpu.memory_space<vmem>>, vector<14x128xf32>
    %20 = vector.broadcast %6 : vector<1x128xf32> to vector<14x128xf32>
    %21 = arith.addf %19, %20 : vector<14x128xf32>
    %c0_21 = arith.constant 0 : index
    %c1 = arith.constant 1 : index
    %c0_22 = arith.constant 0 : index
    %c0_23 = arith.constant 0 : index
    %22 = vector.load %arg5[%c0_21, %c1, %c0_22, %c0_23] : memref<1x14x14x128xbf16, #tpu.memory_space<vmem>>, vector<1x1x14x128xbf16>
    %23 = vector.shape_cast %22 : vector<1x1x14x128xbf16> to vector<14x128xbf16>
    %24 = arith.extf %23 : vector<14x128xbf16> to vector<14x128xf32>
    %25 = arith.addf %21, %24 : vector<14x128xf32>
    %cst_24 = arith.constant 0.000000e+00 : f32
    %26 = vector.broadcast %cst_24 : f32 to vector<14x128xf32>
    %27 = arith.maximumf %25, %26 : vector<14x128xf32>
    %c0_25 = arith.constant 0 : index
    %c1_26 = arith.constant 1 : index
    %c0_27 = arith.constant 0 : index
    %c0_28 = arith.constant 0 : index
    %28 = vector.load %arg6[%c0_25, %c1_26, %c0_27, %c0_28] : memref<1x14x14x128xf32, #tpu.memory_space<vmem>>, vector<1x1x14x128xf32>
    %29 = vector.shape_cast %28 : vector<1x1x14x128xf32> to vector<14x128xf32>
    %30 = vector.shape_cast %27 : vector<14x128xf32> to vector<1x1x14x128xf32>
    tpu.vector_store %arg6[%c0_25, %c1_26, %c0_27, %c0_28], %30 {strides = array<i32>} : memref<1x14x14x128xf32, #tpu.memory_space<vmem>>, vector<1x1x14x128xf32>,
    %c28 = arith.constant 28 : index
    %c0_29 = arith.constant 0 : index
    %31 = vector.load %arg7[%c28, %c0_29] : memref<196x128xf32, #tpu.memory_space<vmem>>, vector<14x128xf32>
    %32 = vector.broadcast %6 : vector<1x128xf32> to vector<14x128xf32>
    %33 = arith.addf %31, %32 : vector<14x128xf32>
    %c0_30 = arith.constant 0 : index
    %c2 = arith.constant 2 : index
    %c0_31 = arith.constant 0 : index
    %c0_32 = arith.constant 0 : index
    %34 = vector.load %arg5[%c0_30, %c2, %c0_31, %c0_32] : memref<1x14x14x128xbf16, #tpu.memory_space<vmem>>, vector<1x1x14x128xbf16>
    %35 = vector.shape_cast %34 : vector<1x1x14x128xbf16> to vector<14x128xbf16>
    %36 = arith.extf %35 : vector<14x128xbf16> to vector<14x128xf32>
    %37 = arith.addf %33, %36 : vector<14x128xf32>
    %cst_33 = arith.constant 0.000000e+00 : f32
    %38 = vector.broadcast %cst_33 : f32 to vector<14x128xf32>
    %39 = arith.maximumf %37, %38 : vector<14x128xf32>
    %c0_34 = arith.constant 0 : index
    %c2_35 = arith.constant 2 : index
    %c0_36 = arith.constant 0 : index
    %c0_37 = arith.constant 0 : index
    %40 = vector.load %arg6[%c0_34, %c2_35, %c0_36, %c0_37] : memref<1x14x14x128xf32, #tpu.memory_space<vmem>>, vector<1x1x14x128xf32>
    %41 = vector.shape_cast %40 : vector<1x1x14x128xf32> to vector<14x128xf32>
    %42 = vector.shape_cast %39 : vector<14x128xf32> to vector<1x1x14x128xf32>
    tpu.vector_store %arg6[%c0_34, %c2_35, %c0_36, %c0_37], %42 {strides = array<i32>} : memref<1x14x14x128xf32, #tpu.memory_space<vmem>>, vector<1x1x14x128xf32>,
    %c42 = arith.constant 42 : index
    %c0_38 = arith.constant 0 : index
    %43 = vector.load %arg7[%c42, %c0_38] : memref<196x128xf32, #tpu.memory_space<vmem>>, vector<14x128xf32>
    %44 = vector.broadcast %6 : vector<1x128xf32> to vector<14x128xf32>
    %45 = arith.addf %43, %44 : vector<14x128xf32>
    %c0_39 = arith.constant 0 : index
    %c3 = arith.constant 3 : index
    %c0_40 = arith.constant 0 : index
    %c0_41 = arith.constant 0 : index
    %46 = vector.load %arg5[%c0_39, %c3, %c0_40, %c0_41] : memref<1x14x14x128xbf16, #tpu.memory_space<vmem>>, vector<1x1x14x128xbf16>
    %47 = vector.shape_cast %46 : vector<1x1x14x128xbf16> to vector<14x128xbf16>
    %48 = arith.extf %47 : vector<14x128xbf16> to vector<14x128xf32>
    %49 = arith.addf %45, %48 : vector<14x128xf32>
    %cst_42 = arith.constant 0.000000e+00 : f32
    %50 = vector.broadcast %cst_42 : f32 to vector<14x128xf32>
    %51 = arith.maximumf %49, %50 : vector<14x128xf32>
    %c0_43 = arith.constant 0 : index
    %c3_44 = arith.constant 3 : index
    %c0_45 = arith.constant 0 : index
    %c0_46 = arith.constant 0 : index
    %52 = vector.load %arg6[%c0_43, %c3_44, %c0_45, %c0_46] : memref<1x14x14x128xf32, #tpu.memory_space<vmem>>, vector<1x1x14x128xf32>
    %53 = vector.shape_cast %52 : vector<1x1x14x128xf32> to vector<14x128xf32>
    %54 = vector.shape_cast %51 : vector<14x128xf32> to vector<1x1x14x128xf32>
    tpu.vector_store %arg6[%c0_43, %c3_44, %c0_45, %c0_46], %54 {strides = array<i32>} : memref<1x14x14x128xf32, #tpu.memory_space<vmem>>, vector<1x1x14x128xf32>,
    %c56 = arith.constant 56 : index
    %c0_47 = arith.constant 0 : index
    %55 = vector.load %arg7[%c56, %c0_47] : memref<196x128xf32, #tpu.memory_space<vmem>>, vector<14x128xf32>
    %56 = vector.broadcast %6 : vector<1x128xf32> to vector<14x128xf32>
    %57 = arith.addf %55, %56 : vector<14x128xf32>
    %c0_48 = arith.constant 0 : index
    %c4 = arith.constant 4 : index
    %c0_49 = arith.constant 0 : index
    %c0_50 = arith.constant 0 : index
    %58 = vector.load %arg5[%c0_48, %c4, %c0_49, %c0_50] : memref<1x14x14x128xbf16, #tpu.memory_space<vmem>>, vector<1x1x14x128xbf16>
    %59 = vector.shape_cast %58 : vector<1x1x14x128xbf16> to vector<14x128xbf16>
    %60 = arith.extf %59 : vector<14x128xbf16> to vector<14x128xf32>
    %61 = arith.addf %57, %60 : vector<14x128xf32>
    %cst_51 = arith.constant 0.000000e+00 : f32
    %62 = vector.broadcast %cst_51 : f32 to vector<14x128xf32>
    %63 = arith.maximumf %61, %62 : vector<14x128xf32>
    %c0_52 = arith.constant 0 : index
    %c4_53 = arith.constant 4 : index
    %c0_54 = arith.constant 0 : index
    %c0_55 = arith.constant 0 : index
    %64 = vector.load %arg6[%c0_52, %c4_53, %c0_54, %c0_55] : memref<1x14x14x128xf32, #tpu.memory_space<vmem>>, vector<1x1x14x128xf32>
    %65 = vector.shape_cast %64 : vector<1x1x14x128xf32> to vector<14x128xf32>
    %66 = vector.shape_cast %63 : vector<14x128xf32> to vector<1x1x14x128xf32>
    tpu.vector_store %arg6[%c0_52, %c4_53, %c0_54, %c0_55], %66 {strides = array<i32>} : memref<1x14x14x128xf32, #tpu.memory_space<vmem>>, vector<1x1x14x128xf32>,
    %c70 = arith.constant 70 : index
    %c0_56 = arith.constant 0 : index
    %67 = vector.load %arg7[%c70, %c0_56] : memref<196x128xf32, #tpu.memory_space<vmem>>, vector<14x128xf32>
    %68 = vector.broadcast %6 : vector<1x128xf32> to vector<14x128xf32>
    %69 = arith.addf %67, %68 : vector<14x128xf32>
    %c0_57 = arith.constant 0 : index
    %c5 = arith.constant 5 : index
    %c0_58 = arith.constant 0 : index
    %c0_59 = arith.constant 0 : index
    %70 = vector.load %arg5[%c0_57, %c5, %c0_58, %c0_59] : memref<1x14x14x128xbf16, #tpu.memory_space<vmem>>, vector<1x1x14x128xbf16>
    %71 = vector.shape_cast %70 : vector<1x1x14x128xbf16> to vector<14x128xbf16>
    %72 = arith.extf %71 : vector<14x128xbf16> to vector<14x128xf32>
    %73 = arith.addf %69, %72 : vector<14x128xf32>
    %cst_60 = arith.constant 0.000000e+00 : f32
    %74 = vector.broadcast %cst_60 : f32 to vector<14x128xf32>
    %75 = arith.maximumf %73, %74 : vector<14x128xf32>
    %c0_61 = arith.constant 0 : index
    %c5_62 = arith.constant 5 : index
    %c0_63 = arith.constant 0 : index
    %c0_64 = arith.constant 0 : index
    %76 = vector.load %arg6[%c0_61, %c5_62, %c0_63, %c0_64] : memref<1x14x14x128xf32, #tpu.memory_space<vmem>>, vector<1x1x14x128xf32>
    %77 = vector.shape_cast %76 : vector<1x1x14x128xf32> to vector<14x128xf32>
    %78 = vector.shape_cast %75 : vector<14x128xf32> to vector<1x1x14x128xf32>
    tpu.vector_store %arg6[%c0_61, %c5_62, %c0_63, %c0_64], %78 {strides = array<i32>} : memref<1x14x14x128xf32, #tpu.memory_space<vmem>>, vector<1x1x14x128xf32>,
    %c84 = arith.constant 84 : index
    %c0_65 = arith.constant 0 : index
    %79 = vector.load %arg7[%c84, %c0_65] : memref<196x128xf32, #tpu.memory_space<vmem>>, vector<14x128xf32>
    %80 = vector.broadcast %6 : vector<1x128xf32> to vector<14x128xf32>
    %81 = arith.addf %79, %80 : vector<14x128xf32>
    %c0_66 = arith.constant 0 : index
    %c6 = arith.constant 6 : index
    %c0_67 = arith.constant 0 : index
    %c0_68 = arith.constant 0 : index
    %82 = vector.load %arg5[%c0_66, %c6, %c0_67, %c0_68] : memref<1x14x14x128xbf16, #tpu.memory_space<vmem>>, vector<1x1x14x128xbf16>
    %83 = vector.shape_cast %82 : vector<1x1x14x128xbf16> to vector<14x128xbf16>
    %84 = arith.extf %83 : vector<14x128xbf16> to vector<14x128xf32>
    %85 = arith.addf %81, %84 : vector<14x128xf32>
    %cst_69 = arith.constant 0.000000e+00 : f32
    %86 = vector.broadcast %cst_69 : f32 to vector<14x128xf32>
    %87 = arith.maximumf %85, %86 : vector<14x128xf32>
    %c0_70 = arith.constant 0 : index
    %c6_71 = arith.constant 6 : index
    %c0_72 = arith.constant 0 : index
    %c0_73 = arith.constant 0 : index
    %88 = vector.load %arg6[%c0_70, %c6_71, %c0_72, %c0_73] : memref<1x14x14x128xf32, #tpu.memory_space<vmem>>, vector<1x1x14x128xf32>
    %89 = vector.shape_cast %88 : vector<1x1x14x128xf32> to vector<14x128xf32>
    %90 = vector.shape_cast %87 : vector<14x128xf32> to vector<1x1x14x128xf32>
    tpu.vector_store %arg6[%c0_70, %c6_71, %c0_72, %c0_73], %90 {strides = array<i32>} : memref<1x14x14x128xf32, #tpu.memory_space<vmem>>, vector<1x1x14x128xf32>,
    %c98 = arith.constant 98 : index
    %c0_74 = arith.constant 0 : index
    %91 = vector.load %arg7[%c98, %c0_74] : memref<196x128xf32, #tpu.memory_space<vmem>>, vector<14x128xf32>
    %92 = vector.broadcast %6 : vector<1x128xf32> to vector<14x128xf32>
    %93 = arith.addf %91, %92 : vector<14x128xf32>
    %c0_75 = arith.constant 0 : index
    %c7 = arith.constant 7 : index
    %c0_76 = arith.constant 0 : index
    %c0_77 = arith.constant 0 : index
    %94 = vector.load %arg5[%c0_75, %c7, %c0_76, %c0_77] : memref<1x14x14x128xbf16, #tpu.memory_space<vmem>>, vector<1x1x14x128xbf16>
    %95 = vector.shape_cast %94 : vector<1x1x14x128xbf16> to vector<14x128xbf16>
    %96 = arith.extf %95 : vector<14x128xbf16> to vector<14x128xf32>
    %97 = arith.addf %93, %96 : vector<14x128xf32>
    %cst_78 = arith.constant 0.000000e+00 : f32
    %98 = vector.broadcast %cst_78 : f32 to vector<14x128xf32>
    %99 = arith.maximumf %97, %98 : vector<14x128xf32>
    %c0_79 = arith.constant 0 : index
    %c7_80 = arith.constant 7 : index
    %c0_81 = arith.constant 0 : index
    %c0_82 = arith.constant 0 : index
    %100 = vector.load %arg6[%c0_79, %c7_80, %c0_81, %c0_82] : memref<1x14x14x128xf32, #tpu.memory_space<vmem>>, vector<1x1x14x128xf32>
    %101 = vector.shape_cast %100 : vector<1x1x14x128xf32> to vector<14x128xf32>
    %102 = vector.shape_cast %99 : vector<14x128xf32> to vector<1x1x14x128xf32>
    tpu.vector_store %arg6[%c0_79, %c7_80, %c0_81, %c0_82], %102 {strides = array<i32>} : memref<1x14x14x128xf32, #tpu.memory_space<vmem>>, vector<1x1x14x128xf32>,
    %c112 = arith.constant 112 : index
    %c0_83 = arith.constant 0 : index
    %103 = vector.load %arg7[%c112, %c0_83] : memref<196x128xf32, #tpu.memory_space<vmem>>, vector<14x128xf32>
    %104 = vector.broadcast %6 : vector<1x128xf32> to vector<14x128xf32>
    %105 = arith.addf %103, %104 : vector<14x128xf32>
    %c0_84 = arith.constant 0 : index
    %c8 = arith.constant 8 : index
    %c0_85 = arith.constant 0 : index
    %c0_86 = arith.constant 0 : index
    %106 = vector.load %arg5[%c0_84, %c8, %c0_85, %c0_86] : memref<1x14x14x128xbf16, #tpu.memory_space<vmem>>, vector<1x1x14x128xbf16>
    %107 = vector.shape_cast %106 : vector<1x1x14x128xbf16> to vector<14x128xbf16>
    %108 = arith.extf %107 : vector<14x128xbf16> to vector<14x128xf32>
    %109 = arith.addf %105, %108 : vector<14x128xf32>
    %cst_87 = arith.constant 0.000000e+00 : f32
    %110 = vector.broadcast %cst_87 : f32 to vector<14x128xf32>
    %111 = arith.maximumf %109, %110 : vector<14x128xf32>
    %c0_88 = arith.constant 0 : index
    %c8_89 = arith.constant 8 : index
    %c0_90 = arith.constant 0 : index
    %c0_91 = arith.constant 0 : index
    %112 = vector.load %arg6[%c0_88, %c8_89, %c0_90, %c0_91] : memref<1x14x14x128xf32, #tpu.memory_space<vmem>>, vector<1x1x14x128xf32>
    %113 = vector.shape_cast %112 : vector<1x1x14x128xf32> to vector<14x128xf32>
    %114 = vector.shape_cast %111 : vector<14x128xf32> to vector<1x1x14x128xf32>
    tpu.vector_store %arg6[%c0_88, %c8_89, %c0_90, %c0_91], %114 {strides = array<i32>} : memref<1x14x14x128xf32, #tpu.memory_space<vmem>>, vector<1x1x14x128xf32>,
    %c126 = arith.constant 126 : index
    %c0_92 = arith.constant 0 : index
    %115 = vector.load %arg7[%c126, %c0_92] : memref<196x128xf32, #tpu.memory_space<vmem>>, vector<14x128xf32>
    %116 = vector.broadcast %6 : vector<1x128xf32> to vector<14x128xf32>
    %117 = arith.addf %115, %116 : vector<14x128xf32>
    %c0_93 = arith.constant 0 : index
    %c9 = arith.constant 9 : index
    %c0_94 = arith.constant 0 : index
    %c0_95 = arith.constant 0 : index
    %118 = vector.load %arg5[%c0_93, %c9, %c0_94, %c0_95] : memref<1x14x14x128xbf16, #tpu.memory_space<vmem>>, vector<1x1x14x128xbf16>
    %119 = vector.shape_cast %118 : vector<1x1x14x128xbf16> to vector<14x128xbf16>
    %120 = arith.extf %119 : vector<14x128xbf16> to vector<14x128xf32>
    %121 = arith.addf %117, %120 : vector<14x128xf32>
    %cst_96 = arith.constant 0.000000e+00 : f32
    %122 = vector.broadcast %cst_96 : f32 to vector<14x128xf32>
    %123 = arith.maximumf %121, %122 : vector<14x128xf32>
    %c0_97 = arith.constant 0 : index
    %c9_98 = arith.constant 9 : index
    %c0_99 = arith.constant 0 : index
    %c0_100 = arith.constant 0 : index
    %124 = vector.load %arg6[%c0_97, %c9_98, %c0_99, %c0_100] : memref<1x14x14x128xf32, #tpu.memory_space<vmem>>, vector<1x1x14x128xf32>
    %125 = vector.shape_cast %124 : vector<1x1x14x128xf32> to vector<14x128xf32>
    %126 = vector.shape_cast %123 : vector<14x128xf32> to vector<1x1x14x128xf32>
    tpu.vector_store %arg6[%c0_97, %c9_98, %c0_99, %c0_100], %126 {strides = array<i32>} : memref<1x14x14x128xf32, #tpu.memory_space<vmem>>, vector<1x1x14x128xf32>,
    %c140 = arith.constant 140 : index
    %c0_101 = arith.constant 0 : index
    %127 = vector.load %arg7[%c140, %c0_101] : memref<196x128xf32, #tpu.memory_space<vmem>>, vector<14x128xf32>
    %128 = vector.broadcast %6 : vector<1x128xf32> to vector<14x128xf32>
    %129 = arith.addf %127, %128 : vector<14x128xf32>
    %c0_102 = arith.constant 0 : index
    %c10 = arith.constant 10 : index
    %c0_103 = arith.constant 0 : index
    %c0_104 = arith.constant 0 : index
    %130 = vector.load %arg5[%c0_102, %c10, %c0_103, %c0_104] : memref<1x14x14x128xbf16, #tpu.memory_space<vmem>>, vector<1x1x14x128xbf16>
    %131 = vector.shape_cast %130 : vector<1x1x14x128xbf16> to vector<14x128xbf16>
    %132 = arith.extf %131 : vector<14x128xbf16> to vector<14x128xf32>
    %133 = arith.addf %129, %132 : vector<14x128xf32>
    %cst_105 = arith.constant 0.000000e+00 : f32
    %134 = vector.broadcast %cst_105 : f32 to vector<14x128xf32>
    %135 = arith.maximumf %133, %134 : vector<14x128xf32>
    %c0_106 = arith.constant 0 : index
    %c10_107 = arith.constant 10 : index
    %c0_108 = arith.constant 0 : index
    %c0_109 = arith.constant 0 : index
    %136 = vector.load %arg6[%c0_106, %c10_107, %c0_108, %c0_109] : memref<1x14x14x128xf32, #tpu.memory_space<vmem>>, vector<1x1x14x128xf32>
    %137 = vector.shape_cast %136 : vector<1x1x14x128xf32> to vector<14x128xf32>
    %138 = vector.shape_cast %135 : vector<14x128xf32> to vector<1x1x14x128xf32>
    tpu.vector_store %arg6[%c0_106, %c10_107, %c0_108, %c0_109], %138 {strides = array<i32>} : memref<1x14x14x128xf32, #tpu.memory_space<vmem>>, vector<1x1x14x128xf32>,
    %c154 = arith.constant 154 : index
    %c0_110 = arith.constant 0 : index
    %139 = vector.load %arg7[%c154, %c0_110] : memref<196x128xf32, #tpu.memory_space<vmem>>, vector<14x128xf32>
    %140 = vector.broadcast %6 : vector<1x128xf32> to vector<14x128xf32>
    %141 = arith.addf %139, %140 : vector<14x128xf32>
    %c0_111 = arith.constant 0 : index
    %c11 = arith.constant 11 : index
    %c0_112 = arith.constant 0 : index
    %c0_113 = arith.constant 0 : index
    %142 = vector.load %arg5[%c0_111, %c11, %c0_112, %c0_113] : memref<1x14x14x128xbf16, #tpu.memory_space<vmem>>, vector<1x1x14x128xbf16>
    %143 = vector.shape_cast %142 : vector<1x1x14x128xbf16> to vector<14x128xbf16>
    %144 = arith.extf %143 : vector<14x128xbf16> to vector<14x128xf32>
    %145 = arith.addf %141, %144 : vector<14x128xf32>
    %cst_114 = arith.constant 0.000000e+00 : f32
    %146 = vector.broadcast %cst_114 : f32 to vector<14x128xf32>
    %147 = arith.maximumf %145, %146 : vector<14x128xf32>
    %c0_115 = arith.constant 0 : index
    %c11_116 = arith.constant 11 : index
    %c0_117 = arith.constant 0 : index
    %c0_118 = arith.constant 0 : index
    %148 = vector.load %arg6[%c0_115, %c11_116, %c0_117, %c0_118] : memref<1x14x14x128xf32, #tpu.memory_space<vmem>>, vector<1x1x14x128xf32>
    %149 = vector.shape_cast %148 : vector<1x1x14x128xf32> to vector<14x128xf32>
    %150 = vector.shape_cast %147 : vector<14x128xf32> to vector<1x1x14x128xf32>
    tpu.vector_store %arg6[%c0_115, %c11_116, %c0_117, %c0_118], %150 {strides = array<i32>} : memref<1x14x14x128xf32, #tpu.memory_space<vmem>>, vector<1x1x14x128xf32>,
    %c168 = arith.constant 168 : index
    %c0_119 = arith.constant 0 : index
    %151 = vector.load %arg7[%c168, %c0_119] : memref<196x128xf32, #tpu.memory_space<vmem>>, vector<14x128xf32>
    %152 = vector.broadcast %6 : vector<1x128xf32> to vector<14x128xf32>
    %153 = arith.addf %151, %152 : vector<14x128xf32>
    %c0_120 = arith.constant 0 : index
    %c12 = arith.constant 12 : index
    %c0_121 = arith.constant 0 : index
    %c0_122 = arith.constant 0 : index
    %154 = vector.load %arg5[%c0_120, %c12, %c0_121, %c0_122] : memref<1x14x14x128xbf16, #tpu.memory_space<vmem>>, vector<1x1x14x128xbf16>
    %155 = vector.shape_cast %154 : vector<1x1x14x128xbf16> to vector<14x128xbf16>
    %156 = arith.extf %155 : vector<14x128xbf16> to vector<14x128xf32>
    %157 = arith.addf %153, %156 : vector<14x128xf32>
    %cst_123 = arith.constant 0.000000e+00 : f32
    %158 = vector.broadcast %cst_123 : f32 to vector<14x128xf32>
    %159 = arith.maximumf %157, %158 : vector<14x128xf32>
    %c0_124 = arith.constant 0 : index
    %c12_125 = arith.constant 12 : index
    %c0_126 = arith.constant 0 : index
    %c0_127 = arith.constant 0 : index
    %160 = vector.load %arg6[%c0_124, %c12_125, %c0_126, %c0_127] : memref<1x14x14x128xf32, #tpu.memory_space<vmem>>, vector<1x1x14x128xf32>
    %161 = vector.shape_cast %160 : vector<1x1x14x128xf32> to vector<14x128xf32>
    %162 = vector.shape_cast %159 : vector<14x128xf32> to vector<1x1x14x128xf32>
    tpu.vector_store %arg6[%c0_124, %c12_125, %c0_126, %c0_127], %162 {strides = array<i32>} : memref<1x14x14x128xf32, #tpu.memory_space<vmem>>, vector<1x1x14x128xf32>,
    %c182 = arith.constant 182 : index
    %c0_128 = arith.constant 0 : index
    %163 = vector.load %arg7[%c182, %c0_128] : memref<196x128xf32, #tpu.memory_space<vmem>>, vector<14x128xf32>
    %164 = vector.broadcast %6 : vector<1x128xf32> to vector<14x128xf32>
    %165 = arith.addf %163, %164 : vector<14x128xf32>
    %c0_129 = arith.constant 0 : index
    %c13 = arith.constant 13 : index
    %c0_130 = arith.constant 0 : index
    %c0_131 = arith.constant 0 : index
    %166 = vector.load %arg5[%c0_129, %c13, %c0_130, %c0_131] : memref<1x14x14x128xbf16, #tpu.memory_space<vmem>>, vector<1x1x14x128xbf16>
    %167 = vector.shape_cast %166 : vector<1x1x14x128xbf16> to vector<14x128xbf16>
    %168 = arith.extf %167 : vector<14x128xbf16> to vector<14x128xf32>
    %169 = arith.addf %165, %168 : vector<14x128xf32>
    %cst_132 = arith.constant 0.000000e+00 : f32
    %170 = vector.broadcast %cst_132 : f32 to vector<14x128xf32>
    %171 = arith.maximumf %169, %170 : vector<14x128xf32>
    %c0_133 = arith.constant 0 : index
    %c13_134 = arith.constant 13 : index
    %c0_135 = arith.constant 0 : index
    %c0_136 = arith.constant 0 : index
    %172 = vector.load %arg6[%c0_133, %c13_134, %c0_135, %c0_136] : memref<1x14x14x128xf32, #tpu.memory_space<vmem>>, vector<1x1x14x128xf32>
    %173 = vector.shape_cast %172 : vector<1x1x14x128xf32> to vector<14x128xf32>
    %174 = vector.shape_cast %171 : vector<14x128xf32> to vector<1x1x14x128xf32>
    tpu.vector_store %arg6[%c0_133, %c13_134, %c0_135, %c0_136], %174 {strides = array<i32>} : memref<1x14x14x128xf32, #tpu.memory_space<vmem>>, vector<1x1x14x128xf32>,
    return
  }
  func.func @transform_0(%arg0: i32, %arg1: i32) -> (i32, i32, i32) {
    %c0_i32 = arith.constant 0 : i32
    %c0_i32_0 = arith.constant 0 : i32
    %c0_i32_1 = arith.constant 0 : i32
    return %arg0, %c0_i32, %c0_i32_0 : i32, i32, i32
  }
  func.func @transform_1(%arg0: i32, %arg1: i32) -> (i32, i32, i32) {
    %c0_i32 = arith.constant 0 : i32
    %c0_i32_0 = arith.constant 0 : i32
    %c0_i32_1 = arith.constant 0 : i32
    return %c0_i32, %c0_i32_0, %arg1 : i32, i32, i32
  }
  func.func @transform_2(%arg0: i32, %arg1: i32) -> (i32, i32) {
    %c0_i32 = arith.constant 0 : i32
    %c0_i32_0 = arith.constant 0 : i32
    return %c0_i32, %arg1 : i32, i32
  }
  func.func @transform_3(%arg0: i32, %arg1: i32) -> (i32, i32, i32, i32) {
    %c0_i32 = arith.constant 0 : i32
    %c0_i32_0 = arith.constant 0 : i32
    %c0_i32_1 = arith.constant 0 : i32
    return %arg0, %c0_i32, %c0_i32_0, %arg1 : i32, i32, i32, i32
  }
  func.func @transform_4(%arg0: i32, %arg1: i32) -> (i32, i32, i32, i32) {
    %c0_i32 = arith.constant 0 : i32
    %c0_i32_0 = arith.constant 0 : i32
    %c0_i32_1 = arith.constant 0 : i32
    return %arg0, %c0_i32, %c0_i32_0, %arg1 : i32, i32, i32, i32
  }
}

</mosaic_0001>

<llo_original>
// kernel: _lambda_.7
$region0: #{_lambda_.7}
  #allocation0 [shape = 'u32[]', space=smem, size = 0x4, offset = 0x4, fixed_abs, tag = 'smem constant byte address 0x4 - core index']
  #allocation1 [shape = 'u32[144,128]{1,0:T(1,128)}', space=vmem, size = 0x12000, scoped, tag = 'internal scratch']
  #allocation2 [shape = 'f32[196,128]{1,0:T(8,128)}', space=vmem, size = 0x19000, scoped, tag = 'scratch operand']
  %s0 = inlined_call_operand.vmem [shape: bf16[2,196,128], index: 0, kind: input, shape index: {}]
  %s1 = inlined_call_operand.vmem [shape: bf16[1,128,128], index: 1, kind: input, shape index: {}]
  %s2 = inlined_call_operand.vmem [shape: f32[1,128], index: 2, kind: input, shape index: {}]
  %s3 = inlined_call_operand.vmem [shape: bf16[2,14,14,128], index: 3, kind: input, shape index: {}]
  %s4 = inlined_call_operand.vmem [shape: f32[2,14,14,128], index: 4, kind: output, shape index: {}]
  %s5 = sld [smem:[#allocation0]]
  $region49: #{_lambda_.7} parent=0
    _
  %s7 = ssub.s32 1, %s5
  %s8 = scalar_select 0, %s7, %s5
  loop: start=0, step=1, limit=4
  $region2: #{_lambda_.7} parent=0 // loop_pre_header
    _
  $region3: #{_lambda_.7} parent=0 // loop_header
    %s10 = sphi 0, %s14
    %p11 = scmp.ge.s32.totalorder %s10, 4
    %s17 = sphi 0, %s29
    %s18 = sphi 0, %s25
    %s19 = sphi 0, %s17
    %s20 = sphi 0, %s18
    %s21 = sphi 0, %s19
    %s22 = sphi 0, %s20
    %s32 = sphi 0, %s34
    %s35 = sphi 0, %s32
    %s36 = sphi 0, %s35
    %s52 = sphi 0, %s36
    %s58 = sphi 0, %s60
    %s61 = sphi 0, %s58
    %s62 = sphi 0, %s61
    %s78 = sphi 0, %s62
    %s84 = sphi 0, %s86
    %s87 = sphi 0, %s84
    %s88 = sphi 0, %s87
    %s104 = sphi 0, %s88
    %s112 = sphi 0, %s114
    %s115 = sphi 0, %s112
    %s116 = sphi 0, %s115
    %s132 = sphi 0, %s116
    %s140 = sphi 0, %s142
    %s143 = sphi 0, %s140
    %s144 = sphi 0, %s143
    %s160 = sphi 0, %s144
  $region4: #{_lambda_.7} parent=0 // loop_header_branch
    %13 = sbr.rel (%p11) target = $region8
  $region5: #{_lambda_.7} parent=0 // loop_body
    %s15 = ssub.s32 %s10, 1
    %s16 = ssub.s32 %s10, 2
    %s23 = sadd.s32 1, %s18
    %p24 = scmp.ge.s32.totalorder %s23, 1
    %s25 = scalar_select %p24, 0, %s23
    %s26 = sadd.s32 1, %s17
    %s27 = scalar_select %p24, %s26, %s17
    %p28 = scmp.ge.s32.totalorder %s27, 2
    %s29 = scalar_select %p28, 0, %s27
    %s30 = ssub.s32 %s17, %s29
    %p31 = scmp.eq.s32.totalorder %s30, 0
    %s33 = sadd.s32 %s32, 1
    %s34 = scalar_select %p31, %s32, %s33
    %p37 = pneg %p31
    %p38 = scmp.eq.s32.totalorder %s10, 1
    %p39 = por %p37, %p38
    %p40 = scmp.ne.s32.totalorder %s32, %s35
    %p41 = scmp.eq.s32.totalorder %s10, 0
    %p42 = por %p40, %p41
    %p43 = scmp.ne.s32.totalorder %s32, %s35
    %p44 = scmp.eq.s32.totalorder %s15, 1
    %p45 = por %p43, %p44
    %p46 = scmp.ne.s32.totalorder %s35, %s36
    %p47 = scmp.eq.s32.totalorder %s15, 0
    %p48 = por %p46, %p47
    %p49 = scmp.ne.s32.totalorder %s35, %s36
    %p50 = scmp.eq.s32.totalorder %s16, 1
    %p51 = por %p49, %p50
    %p53 = scmp.ne.s32.totalorder %s36, %s52
    %p54 = scmp.eq.s32.totalorder %s16, 0
    %p55 = por %p53, %p54
    %s56 = ssub.s32 %s18, %s25
    %p57 = scmp.eq.s32.totalorder %s56, 0
    %s59 = sadd.s32 %s58, 1
    %s60 = scalar_select %p57, %s58, %s59
    %p63 = pneg %p57
    %p64 = scmp.eq.s32.totalorder %s10, 1
    %p65 = por %p63, %p64
    %p66 = scmp.ne.s32.totalorder %s58, %s61
    %p67 = scmp.eq.s32.totalorder %s10, 0
    %p68 = por %p66, %p67
    %p69 = scmp.ne.s32.totalorder %s58, %s61
    %p70 = scmp.eq.s32.totalorder %s15, 1
    %p71 = por %p69, %p70
    %p72 = scmp.ne.s32.totalorder %s61, %s62
    %p73 = scmp.eq.s32.totalorder %s15, 0
    %p74 = por %p72, %p73
    %p75 = scmp.ne.s32.totalorder %s61, %s62
    %p76 = scmp.eq.s32.totalorder %s16, 1
    %p77 = por %p75, %p76
    %p79 = scmp.ne.s32.totalorder %s62, %s78
    %p80 = scmp.eq.s32.totalorder %s16, 0
    %p81 = por %p79, %p80
    %s82 = ssub.s32 %s18, %s25
    %p83 = scmp.eq.s32.totalorder %s82, 0
    %s85 = sadd.s32 %s84, 1
    %s86 = scalar_select %p83, %s84, %s85
    %p89 = pneg %p83
    %p90 = scmp.eq.s32.totalorder %s10, 1
    %p91 = por %p89, %p90
    %p92 = scmp.ne.s32.totalorder %s84, %s87
    %p93 = scmp.eq.s32.totalorder %s10, 0
    %p94 = por %p92, %p93
    %p95 = scmp.ne.s32.totalorder %s84, %s87
    %p96 = scmp.eq.s32.totalorder %s15, 1
    %p97 = por %p95, %p96
    %p98 = scmp.ne.s32.totalorder %s87, %s88
    %p99 = scmp.eq.s32.totalorder %s15, 0
    %p100 = por %p98, %p99
    %p101 = scmp.ne.s32.totalorder %s87, %s88
    %p102 = scmp.eq.s32.totalorder %s16, 1
    %p103 = por %p101, %p102
    %p105 = scmp.ne.s32.totalorder %s88, %s104
    %p106 = scmp.eq.s32.totalorder %s16, 0
    %p107 = por %p105, %p106
    %s108 = ssub.s32 %s17, %s29
    %s109 = ssub.s32 %s18, %s25
    %s110 = sor.u32 %s108, %s109
    %p111 = scmp.eq.s32.totalorder %s110, 0
    %s113 = sadd.s32 %s112, 1
    %s114 = scalar_select %p111, %s112, %s113
    %p117 = pneg %p111
    %p118 = scmp.eq.s32.totalorder %s10, 1
    %p119 = por %p117, %p118
    %p120 = scmp.ne.s32.totalorder %s112, %s115
    %p121 = scmp.eq.s32.totalorder %s10, 0
    %p122 = por %p120, %p121
    %p123 = scmp.ne.s32.totalorder %s112, %s115
    %p124 = scmp.eq.s32.totalorder %s15, 1
    %p125 = por %p123, %p124
    %p126 = scmp.ne.s32.totalorder %s115, %s116
    %p127 = scmp.eq.s32.totalorder %s15, 0
    %p128 = por %p126, %p127
    %p129 = scmp.ne.s32.totalorder %s115, %s116
    %p130 = scmp.eq.s32.totalorder %s16, 1
    %p131 = por %p129, %p130
    %p133 = scmp.ne.s32.totalorder %s116, %s132
    %p134 = scmp.eq.s32.totalorder %s16, 0
    %p135 = por %p133, %p134
    %s136 = ssub.s32 %s17, %s29
    %s137 = ssub.s32 %s18, %s25
    %s138 = sor.u32 %s136, %s137
    %p139 = scmp.eq.s32.totalorder %s138, 0
    %s141 = sadd.s32 %s140, 1
    %s142 = scalar_select %p139, %s140, %s141
    %p145 = pneg %p139
    %p146 = scmp.eq.s32.totalorder %s10, 1
    %p147 = por %p145, %p146
    %p148 = scmp.ne.s32.totalorder %s140, %s143
    %p149 = scmp.eq.s32.totalorder %s10, 0
    %p150 = por %p148, %p149
    %p151 = scmp.ne.s32.totalorder %s140, %s143
    %p152 = scmp.eq.s32.totalorder %s15, 1
    %p153 = por %p151, %p152
    %p154 = scmp.ne.s32.totalorder %s143, %s144
    %p155 = scmp.eq.s32.totalorder %s15, 0
    %p156 = por %p154, %p155
    %p157 = scmp.ne.s32.totalorder %s143, %s144
    %p158 = scmp.eq.s32.totalorder %s16, 1
    %p159 = por %p157, %p158
    %p161 = scmp.ne.s32.totalorder %s144, %s160
    %p162 = scmp.eq.s32.totalorder %s16, 0
    %p163 = por %p161, %p162
    %p164 = scmp.le.s32.totalorder 1, %s10
    %p165 = scmp.lt.s32.totalorder %s10, 3
    %p166 = pnand %p164, %p165
    %p167 = pneg %p166
    // Predicated region
    $region9: #{_lambda_.7} parent=5 // pred_check
      _
    $region10: #{_lambda_.7} parent=5 // pred_check_branch
      %169 = sbr.rel (%p166) target = $region12
    $region11: #{_lambda_.7} parent=5 // pred_region
      %s170 = ssub.s32 %s10, 1
      // Predicated region
      $region13: #{_lambda_.7} parent=11 // pred_check
        %p171 = pneg %p74
      $region14: #{_lambda_.7} parent=11 // pred_check_branch
        %173 = sbr.rel (%p171) target = $region16
      $region15: #{_lambda_.7} parent=11 // pred_region
        %p174 = scmp.lt.s32.totalorder %s20, 0
        %s175 = scalar_select %p174, %s20, 0
        %s176 = smul.addr %s175, 4
        %s177 = scalar_lea.vmem %s1, %s176
      $region16: #{_lambda_.7} parent=11 // pred_fallthru
        _
      // Predicated region
      $region17: #{_lambda_.7} parent=11 // pred_check
        %p178 = pneg %p100
      $region18: #{_lambda_.7} parent=11 // pred_check_branch
        %180 = sbr.rel (%p178) target = $region20
      $region19: #{_lambda_.7} parent=11 // pred_region
        %p181 = scmp.lt.s32.totalorder %s20, 0
        %s182 = scalar_select %p181, %s20, 0
        %s183 = scalar_lea.vmem %s2, %s182
      $region20: #{_lambda_.7} parent=11 // pred_fallthru
        _
    $region12: #{_lambda_.7} parent=5 // pred_fallthru
      _
    %p184 = scmp.lt.s32.totalorder %s10, 2
    // Predicated region
    $region21: #{_lambda_.7} parent=5 // pred_check
      %p185 = pneg %p184
    $region22: #{_lambda_.7} parent=5 // pred_check_branch
      %187 = sbr.rel (%p185) target = $region24
    $region23: #{_lambda_.7} parent=5 // pred_region
      // Predicated region
      $region25: #{_lambda_.7} parent=23 // pred_check
        %p188 = pneg %p42
      $region26: #{_lambda_.7} parent=23 // pred_check_branch
        %190 = sbr.rel (%p188) target = $region28
      $region27: #{_lambda_.7} parent=23 // pred_region
        %p191 = scmp.lt.s32.totalorder %s17, 1
        %s192 = scalar_select %p191, %s17, 1
        %s193 = smul.addr %s192, 25
        %s194 = smul.addr %s193, 4
        %s195 = scalar_lea.vmem %s0, %s194
      $region28: #{_lambda_.7} parent=23 // pred_fallthru
        _
      // Predicated region
      $region29: #{_lambda_.7} parent=23 // pred_check
        %p196 = pneg %p122
      $region30: #{_lambda_.7} parent=23 // pred_check_branch
        %198 = sbr.rel (%p196) target = $region32
      $region31: #{_lambda_.7} parent=23 // pred_region
        %p199 = scmp.lt.s32.totalorder %s17, 1
        %s200 = scalar_select %p199, %s17, 1
        %p201 = scmp.lt.s32.totalorder %s18, 0
        %s202 = scalar_select %p201, %s18, 0
        %s203 = smul.addr %s200, 28
        %s204 = sadd.s32 %s202, %s203
        %s205 = smul.addr %s204, 4
        %s206 = scalar_lea.vmem %s3, %s205
      $region32: #{_lambda_.7} parent=23 // pred_fallthru
        _
    $region24: #{_lambda_.7} parent=5 // pred_fallthru
      _
    %p207 = scmp.le.s32.totalorder 1, %s10
    %p208 = scmp.lt.s32.totalorder %s10, 3
    %p209 = pnand %p207, %p208
    %p210 = pneg %p209
    // Predicated region
    $region33: #{_lambda_.7} parent=5 // pred_check
      _
    $region34: #{_lambda_.7} parent=5 // pred_check_branch
      %212 = sbr.rel (%p209) target = $region36
    $region35: #{_lambda_.7} parent=5 // pred_region
      %s213 = ssub.s32 %s10, 1
      %p214 = scmp.lt.s32.totalorder %s19, 1
      %s215 = scalar_select %p214, %s19, 1
      %s216 = smul.addr %s215, 25
      %s217 = smul.addr %s216, 4
      %s218 = scalar_lea.vmem %s0, %s217
      %p219 = pneg %p48
      %p220 = pneg %p45
      %p221 = scmp.lt.s32.totalorder %s20, 0
      %s222 = scalar_select %p221, %s20, 0
      %s223 = smul.addr %s222, 4
      %s224 = scalar_lea.vmem %s1, %s223
      %p225 = pneg %p74
      %p226 = pneg %p71
      %p227 = scmp.lt.s32.totalorder %s20, 0
      %s228 = scalar_select %p227, %s20, 0
      %s229 = scalar_lea.vmem %s2, %s228
      %p230 = pneg %p100
      %p231 = pneg %p97
      %p232 = scmp.lt.s32.totalorder %s19, 1
      %s233 = scalar_select %p232, %s19, 1
      %p234 = scmp.lt.s32.totalorder %s20, 0
      %s235 = scalar_select %p234, %s20, 0
      %s236 = smul.addr %s233, 28
      %s237 = sadd.s32 %s235, %s236
      %s238 = smul.addr %s237, 4
      %s239 = scalar_lea.vmem %s3, %s238
      %p240 = pneg %p128
      %p241 = pneg %p125
      %p242 = pneg %p156
      %p243 = pneg %p153
      %p244 = scmp.lt.s32.totalorder %s19, 1
      %s245 = scalar_select %p244, %s19, 1
      %p246 = scmp.lt.s32.totalorder %s20, 0
      %s247 = scalar_select %p246, %s20, 0
      %s248 = smul.addr %s245, 28
      %s249 = sadd.s32 %s247, %s248
      %s250 = smul.addr %s249, 8
      %s251 = scalar_lea.vmem %s4, %s250
      %p252 = scmp.lt.s32.totalorder %s19, 1
      %s253 = scalar_select %p252, %s19, 1
      %s254 = smul.addr %s253, 25
      %s255 = smul.addr %s254, 4
      %s256 = scalar_lea.vmem %s0, %s255
      %p257 = scmp.lt.s32.totalorder %s20, 0
      %s258 = scalar_select %p257, %s20, 0
      %s259 = smul.addr %s258, 4
      %s260 = scalar_lea.vmem %s1, %s259
      %p261 = scmp.lt.s32.totalorder %s20, 0
      %s262 = scalar_select %p261, %s20, 0
      %s263 = scalar_lea.vmem %s2, %s262
      %p264 = scmp.lt.s32.totalorder %s19, 1
      %s265 = scalar_select %p264, %s19, 1
      %p266 = scmp.lt.s32.totalorder %s20, 0
      %s267 = scalar_select %p266, %s20, 0
      %s268 = smul.addr %s265, 28
      %s269 = sadd.s32 %s267, %s268
      %s270 = smul.addr %s269, 4
      %s271 = scalar_lea.vmem %s3, %s270
      %p272 = scmp.lt.s32.totalorder %s19, 1
      %s273 = scalar_select %p272, %s19, 1
      %p274 = scmp.lt.s32.totalorder %s20, 0
      %s275 = scalar_select %p274, %s20, 0
      %s276 = smul.addr %s273, 28
      %s277 = sadd.s32 %s275, %s276
      %s278 = smul.addr %s277, 8
      %s279 = scalar_lea.vmem %s4, %s278
      %v281 = vld [vmem:[%s256] sm:$0xf]
      %v282 = vld [vmem:[%s256 + $0x4] sm:$0xf]
      %v283 = vld [vmem:[%s256 + $0x8] sm:$0xf]
      %v284 = vld [vmem:[%s256 + $0xc] sm:$0xf]
      %v285 = vld [vmem:[%s256 + $0x10] sm:$0xf]
      %v286 = vld [vmem:[%s256 + $0x14] sm:$0xf]
      %v287 = vld [vmem:[%s256 + $0x18] sm:$0xf]
      %v288 = vld [vmem:[%s256 + $0x1c] sm:$0xf]
      %v289 = vld [vmem:[%s256 + $0x20] sm:$0xf]
      %v290 = vld [vmem:[%s256 + $0x24] sm:$0xf]
      %v291 = vld [vmem:[%s256 + $0x28] sm:$0xf]
      %v292 = vld [vmem:[%s256 + $0x2c] sm:$0xf]
      %v293 = vld [vmem:[%s256 + $0x30] sm:$0xf]
      %v294 = vld [vmem:[%s256 + $0x34] sm:$0xf]
      %v295 = vld [vmem:[%s256 + $0x38] sm:$0xf]
      %v296 = vld [vmem:[%s256 + $0x3c] sm:$0xf]
      %v297 = vld [vmem:[%s256 + $0x40] sm:$0xf]
      %v298 = vld [vmem:[%s256 + $0x44] sm:$0xf]
      %v299 = vld [vmem:[%s256 + $0x48] sm:$0xf]
      %v300 = vld [vmem:[%s256 + $0x4c] sm:$0xf]
      %v301 = vld [vmem:[%s256 + $0x50] sm:$0xf]
      %v302 = vld [vmem:[%s256 + $0x54] sm:$0xf]
      %v303 = vld [vmem:[%s256 + $0x58] sm:$0xf]
      %v304 = vld [vmem:[%s256 + $0x5c] sm:$0xf]
      %v305 = vld [vmem:[%s256 + $0x60] sm:$0x3]
      %v306 = vld [vmem:[%s260] sm:$0xf]
      %v307 = vld [vmem:[%s260 + $0x4] sm:$0xf]
      %v308 = vld [vmem:[%s260 + $0x8] sm:$0xf]
      %v309 = vld [vmem:[%s260 + $0xc] sm:$0xf]
      %v310 = vld [vmem:[%s260 + $0x10] sm:$0xf]
      %v311 = vld [vmem:[%s260 + $0x14] sm:$0xf]
      %v312 = vld [vmem:[%s260 + $0x18] sm:$0xf]
      %v313 = vld [vmem:[%s260 + $0x1c] sm:$0xf]
      %v314 = vld [vmem:[%s260 + $0x20] sm:$0xf]
      %v315 = vld [vmem:[%s260 + $0x24] sm:$0xf]
      %v316 = vld [vmem:[%s260 + $0x28] sm:$0xf]
      %v317 = vld [vmem:[%s260 + $0x2c] sm:$0xf]
      %v318 = vld [vmem:[%s260 + $0x30] sm:$0xf]
      %v319 = vld [vmem:[%s260 + $0x34] sm:$0xf]
      %v320 = vld [vmem:[%s260 + $0x38] sm:$0xf]
      %v321 = vld [vmem:[%s260 + $0x3c] sm:$0xf]
      %v347 = vunpack.c.l.b16 %v281
      %v348 = vunpack.c.l.b16 %v282
      %v349 = vunpack.c.l.b16 %v283
      %v350 = vunpack.c.l.b16 %v284
      %v351 = vunpack.c.l.b16 %v285
      %v352 = vunpack.c.l.b16 %v286
      %v353 = vunpack.c.l.b16 %v287
      %v354 = vunpack.c.l.b16 %v288
      %v355 = vunpack.c.l.b16 %v289
      %v356 = vunpack.c.l.b16 %v290
      %v357 = vunpack.c.l.b16 %v291
      %v358 = vunpack.c.l.b16 %v292
      %v359 = vunpack.c.l.b16 %v293
      %v360 = vunpack.c.l.b16 %v294
      %v361 = vunpack.c.l.b16 %v295
      %v362 = vunpack.c.l.b16 %v296
      %v363 = vunpack.c.l.b16 %v297
      %v364 = vunpack.c.l.b16 %v298
      %v365 = vunpack.c.l.b16 %v299
      %v366 = vunpack.c.l.b16 %v300
      %v367 = vunpack.c.l.b16 %v301
      %v368 = vunpack.c.l.b16 %v302
      %v369 = vunpack.c.l.b16 %v303
      %v370 = vunpack.c.l.b16 %v304
      %v371 = vunpack.c.l.b16 %v305
      %v372 = vpack.c.b16 %v348, %v347
      %v373 = vpack.c.b16 %v350, %v349
      %v374 = vpack.c.b16 %v352, %v351
      %v375 = vpack.c.b16 %v354, %v353
      %v376 = vpack.c.b16 %v356, %v355
      %v377 = vpack.c.b16 %v358, %v357
      %v378 = vpack.c.b16 %v360, %v359
      %v379 = vpack.c.b16 %v362, %v361
      %v380 = vpack.c.b16 %v364, %v363
      %v381 = vpack.c.b16 %v366, %v365
      %v382 = vpack.c.b16 %v368, %v367
      %v383 = vpack.c.b16 %v370, %v369
      %v384 = vpack.c.b16 %v371, %v371
      %v414 = vunpack.c.l.b16 %v306
      %v415 = vunpack.c.l.b16 %v307
      %v416 = vunpack.c.l.b16 %v308
      %v417 = vunpack.c.l.b16 %v309
      %v418 = vunpack.c.l.b16 %v310
      %v419 = vunpack.c.l.b16 %v311
      %v420 = vunpack.c.l.b16 %v312
      %v421 = vunpack.c.l.b16 %v313
      %v422 = vunpack.c.l.b16 %v314
      %v423 = vunpack.c.l.b16 %v315
      %v424 = vunpack.c.l.b16 %v316
      %v425 = vunpack.c.l.b16 %v317
      %v426 = vunpack.c.l.b16 %v318
      %v427 = vunpack.c.l.b16 %v319
      %v428 = vunpack.c.l.b16 %v320
      %v429 = vunpack.c.l.b16 %v321
      %v430 = vpack.c.b16 %v415, %v414
      %v431 = vpack.c.b16 %v417, %v416
      %v432 = vpack.c.b16 %v419, %v418
      %v433 = vpack.c.b16 %v421, %v420
      %v434 = vpack.c.b16 %v423, %v422
      %v435 = vpack.c.b16 %v425, %v424
      %v436 = vpack.c.b16 %v427, %v426
      %v437 = vpack.c.b16 %v429, %v428
      %446 = vmatprep.subr.bf16.mxu0 0
      %447 = vmatpush1.bf16.msra.mxu0 %v437
      %448 = vmatprep.subr.bf16.mxu0 0
      %449 = vmatpush1.bf16.msra.mxu0 %v436
      %450 = vmatprep.subr.bf16.mxu0 0
      %451 = vmatpush1.bf16.msra.mxu0 %v435
      %452 = vmatprep.subr.bf16.mxu0 0
      %453 = vmatpush1.bf16.msra.mxu0 %v434
      %454 = vmatprep.subr.bf16.mxu0 0
      %455 = vmatpush1.bf16.msra.mxu0 %v433
      %456 = vmatprep.subr.bf16.mxu0 0
      %457 = vmatpush1.bf16.msra.mxu0 %v432
      %458 = vmatprep.subr.bf16.mxu0 0
      %459 = vmatpush1.bf16.msra.mxu0 %v431
      %460 = vmatprep.subr.bf16.mxu0 0
      %461 = vmatpush1.bf16.msra.mxu0 %v430
      %462 = vmatprep.subr.bf16.mxu0 0
      %463 = vmatpush2.bf16.msra.mxu0 0
      %464 = vmatprep.subr.bf16.mxu0 0
      %465 = vmatpush2.bf16.msra.mxu0 0
      %466 = vmatprep.subr.bf16.mxu0 0
      %467 = vmatpush2.bf16.msra.mxu0 0
      %468 = vmatprep.subr.bf16.mxu0 0
      %469 = vmatpush2.bf16.msra.mxu0 0
      %470 = vmatprep.subr.bf16.mxu0 0
      %471 = vmatpush2.bf16.msra.mxu0 0
      %472 = vmatprep.subr.bf16.mxu0 0
      %473 = vmatpush2.bf16.msra.mxu0 0
      %474 = vmatprep.subr.bf16.mxu0 0
      %475 = vmatpush2.bf16.msra.mxu0 0
      %476 = vmatprep.subr.bf16.mxu0 0
      %477 = vmatpush2.bf16.msra.mxu0 0
      %478 = vmatprep.mubr.bf16.mxu0 0
      %479 = vmatmul.mubr.bf16.gmra.mxu0 %v372
      %v480 = vpop.f32.mrf.mxu0
      %v481 = vadd.f32 0.0, %v480
      %v482 = vpop.f32.mrf.mxu0
      %v483 = vpop.f32.mrf.mxu0
      %v484 = vadd.f32 0.0, %v483
      %v485 = vpop.f32.mrf.mxu0
      %486 = vmatprep.mubr.bf16.mxu0 0
      %487 = vmatmul.mubr.bf16.gmra.mxu0 %v373
      %v488 = vpop.f32.mrf.mxu0
      %v489 = vadd.f32 0.0, %v488
      %v490 = vpop.f32.mrf.mxu0
      %v491 = vpop.f32.mrf.mxu0
      %v492 = vadd.f32 0.0, %v491
      %v493 = vpop.f32.mrf.mxu0
      %494 = vmatprep.mubr.bf16.mxu0 0
      %495 = vmatmul.mubr.bf16.gmra.mxu0 %v374
      %v496 = vpop.f32.mrf.mxu0
      %v497 = vadd.f32 0.0, %v496
      %v498 = vpop.f32.mrf.mxu0
      %v499 = vpop.f32.mrf.mxu0
      %v500 = vadd.f32 0.0, %v499
      %v501 = vpop.f32.mrf.mxu0
      %502 = vmatprep.mubr.bf16.mxu0 0
      %503 = vmatmul.mubr.bf16.gmra.mxu0 %v375
      %v504 = vpop.f32.mrf.mxu0
      %v505 = vadd.f32 0.0, %v504
      %v506 = vpop.f32.mrf.mxu0
      %v507 = vpop.f32.mrf.mxu0
      %v508 = vadd.f32 0.0, %v507
      %v509 = vpop.f32.mrf.mxu0
      %510 = vmatprep.mubr.bf16.mxu0 0
      %511 = vmatmul.mubr.bf16.gmra.mxu0 %v376
      %v512 = vpop.f32.mrf.mxu0
      %v513 = vadd.f32 0.0, %v512
      %v514 = vpop.f32.mrf.mxu0
      %v515 = vpop.f32.mrf.mxu0
      %v516 = vadd.f32 0.0, %v515
      %v517 = vpop.f32.mrf.mxu0
      %518 = vmatprep.mubr.bf16.mxu0 0
      %519 = vmatmul.mubr.bf16.gmra.mxu0 %v377
      %v520 = vpop.f32.mrf.mxu0
      %v521 = vadd.f32 0.0, %v520
      %v522 = vpop.f32.mrf.mxu0
      %v523 = vpop.f32.mrf.mxu0
      %v524 = vadd.f32 0.0, %v523
      %v525 = vpop.f32.mrf.mxu0
      %526 = vmatprep.mubr.bf16.mxu0 0
      %527 = vmatmul.mubr.bf16.gmra.mxu0 %v378
      %v528 = vpop.f32.mrf.mxu0
      %v529 = vadd.f32 0.0, %v528
      %v530 = vpop.f32.mrf.mxu0
      %v531 = vpop.f32.mrf.mxu0
      %v532 = vadd.f32 0.0, %v531
      %v533 = vpop.f32.mrf.mxu0
      %534 = vmatprep.mubr.bf16.mxu0 0
      %535 = vmatmul.mubr.bf16.gmra.mxu0 %v379
      %v536 = vpop.f32.mrf.mxu0
      %v537 = vadd.f32 0.0, %v536
      %v538 = vpop.f32.mrf.mxu0
      %v539 = vpop.f32.mrf.mxu0
      %v540 = vadd.f32 0.0, %v539
      %v541 = vpop.f32.mrf.mxu0
      %542 = vmatprep.mubr.bf16.mxu0 0
      %543 = vmatmul.mubr.bf16.gmra.mxu0 %v380
      %v544 = vpop.f32.mrf.mxu0
      %v545 = vadd.f32 0.0, %v544
      %v546 = vpop.f32.mrf.mxu0
      %v547 = vpop.f32.mrf.mxu0
      %v548 = vadd.f32 0.0, %v547
      %v549 = vpop.f32.mrf.mxu0
      %550 = vmatprep.mubr.bf16.mxu0 0
      %551 = vmatmul.mubr.bf16.gmra.mxu0 %v381
      %v552 = vpop.f32.mrf.mxu0
      %v553 = vadd.f32 0.0, %v552
      %v554 = vpop.f32.mrf.mxu0
      %v555 = vpop.f32.mrf.mxu0
      %v556 = vadd.f32 0.0, %v555
      %v557 = vpop.f32.mrf.mxu0
      %558 = vmatprep.mubr.bf16.mxu0 0
      %559 = vmatmul.mubr.bf16.gmra.mxu0 %v382
      %v560 = vpop.f32.mrf.mxu0
      %v561 = vadd.f32 0.0, %v560
      %v562 = vpop.f32.mrf.mxu0
      %v563 = vpop.f32.mrf.mxu0
      %v564 = vadd.f32 0.0, %v563
      %v565 = vpop.f32.mrf.mxu0
      %566 = vmatprep.mubr.bf16.mxu0 0
      %567 = vmatmul.mubr.bf16.gmra.mxu0 %v383
      %v568 = vpop.f32.mrf.mxu0
      %v569 = vadd.f32 0.0, %v568
      %v570 = vpop.f32.mrf.mxu0
      %v571 = vpop.f32.mrf.mxu0
      %v572 = vadd.f32 0.0, %v571
      %v573 = vpop.f32.mrf.mxu0
      %574 = vmatprep.mubr.bf16.mxu0 0
      %575 = vmatmul.mubr.bf16.gmra.mxu0 %v384
      %v576 = vpop.f32.mrf.mxu0
      %v577 = vadd.f32 0.0, %v576
      %v578 = vpop.f32.mrf.mxu0
      %v579 = vpop.f32.mrf.mxu0
      %v580 = vpop.f32.mrf.mxu0
      %581 = vdwg.mxu0
      %582 = vst [vmem:[#allocation2] sm:$0xff] %v481
      %583 = vst [vmem:[#allocation2 + $0x8] sm:$0xff] %v484
      %584 = vst [vmem:[#allocation2 + $0x10] sm:$0xff] %v489
      %585 = vst [vmem:[#allocation2 + $0x18] sm:$0xff] %v492
      %586 = vst [vmem:[#allocation2 + $0x20] sm:$0xff] %v497
      %587 = vst [vmem:[#allocation2 + $0x28] sm:$0xff] %v500
      %588 = vst [vmem:[#allocation2 + $0x30] sm:$0xff] %v505
      %589 = vst [vmem:[#allocation2 + $0x38] sm:$0xff] %v508
      %590 = vst [vmem:[#allocation2 + $0x40] sm:$0xff] %v513
      %591 = vst [vmem:[#allocation2 + $0x48] sm:$0xff] %v516
      %592 = vst [vmem:[#allocation2 + $0x50] sm:$0xff] %v521
      %593 = vst [vmem:[#allocation2 + $0x58] sm:$0xff] %v524
      %594 = vst [vmem:[#allocation2 + $0x60] sm:$0xff] %v529
      %595 = vst [vmem:[#allocation2 + $0x68] sm:$0xff] %v532
      %596 = vst [vmem:[#allocation2 + $0x70] sm:$0xff] %v537
      %597 = vst [vmem:[#allocation2 + $0x78] sm:$0xff] %v540
      %598 = vst [vmem:[#allocation2 + $0x80] sm:$0xff] %v545
      %599 = vst [vmem:[#allocation2 + $0x88] sm:$0xff] %v548
      %600 = vst [vmem:[#allocation2 + $0x90] sm:$0xff] %v553
      %601 = vst [vmem:[#allocation2 + $0x98] sm:$0xff] %v556
      %602 = vst [vmem:[#allocation2 + $0xa0] sm:$0xff] %v561
      %603 = vst [vmem:[#allocation2 + $0xa8] sm:$0xff] %v564
      %604 = vst [vmem:[#allocation2 + $0xb0] sm:$0xff] %v569
      %605 = vst [vmem:[#allocation2 + $0xb8] sm:$0xff] %v572
      %606 = vst [vmem:[#allocation2 + $0xc0] sm:$0xf] %v577
      %v607 = vld [vmem:[%s263] sm:$0x1]
      %v608 = vld [vmem:[#allocation2] sm:$0xff]
      %v609 = vld [vmem:[#allocation2 + $0x8] sm:$0x3f]
      %v611 = vlaneseq
      %v612 = vshrl.u32 %v611, 7
      %v613 = vsub.s32 0, %v612
      %v614 = vrot.slane %v607, %v613
      %v616 = vadd.f32 %v608, %v614
      %v617 = vadd.f32 %v609, %v614
      %v618 = vld [vmem:[%s271] sm:$0xf]
      %v619 = vld [vmem:[%s271 + $0x4] sm:$0x7]
      %v620 = vunpack.c.l.bf16 %v618
      %v621 = vunpack.c.l.bf16 %v619
      %v622 = vadd.f32 %v616, %v620
      %v623 = vadd.f32 %v617, %v621
      %v624 = vmax.f32 %v622, 0.0
      %v625 = vmax.f32 %v623, 0.0
      %626 = vst [vmem:[%s279] sm:$0xff] %v624
      %627 = vst [vmem:[%s279 + $0x8] sm:$0x3f] %v625
      %v628 = vld [vmem:[#allocation2 + $0xe] sm:$0xff]
      %v629 = vld [vmem:[#allocation2 + $0x16] sm:$0x3f]
      %v630 = vadd.f32 %v628, %v614
      %v631 = vadd.f32 %v629, %v614
      %s632 = scalar_lea.vmem %s271, 8
      %v633 = vld [vmem:[%s632] sm:$0xf]
      %v634 = vld [vmem:[%s632 + $0x4] sm:$0x7]
      %v635 = vunpack.c.l.bf16 %v633
      %v636 = vunpack.c.l.bf16 %v634
      %v637 = vadd.f32 %v630, %v635
      %v638 = vadd.f32 %v631, %v636
      %v639 = vmax.f32 %v637, 0.0
      %v640 = vmax.f32 %v638, 0.0
      %s641 = scalar_lea.vmem %s279, 16
      %642 = vst [vmem:[%s641] sm:$0xff] %v639
      %643 = vst [vmem:[%s641 + $0x8] sm:$0x3f] %v640
      %v644 = vld [vmem:[#allocation2 + $0x1c] sm:$0xff]
      %v645 = vld [vmem:[#allocation2 + $0x24] sm:$0x3f]
      %v646 = vadd.f32 %v644, %v614
      %v647 = vadd.f32 %v645, %v614
      %s648 = scalar_lea.vmem %s271, 16
      %v649 = vld [vmem:[%s648] sm:$0xf]
      %v650 = vld [vmem:[%s648 + $0x4] sm:$0x7]
      %v651 = vunpack.c.l.bf16 %v649
      %v652 = vunpack.c.l.bf16 %v650
      %v653 = vadd.f32 %v646, %v651
      %v654 = vadd.f32 %v647, %v652
      %v655 = vmax.f32 %v653, 0.0
      %v656 = vmax.f32 %v654, 0.0
      %s657 = scalar_lea.vmem %s279, 32
      %658 = vst [vmem:[%s657] sm:$0xff] %v655
      %659 = vst [vmem:[%s657 + $0x8] sm:$0x3f] %v656
      %v660 = vld [vmem:[#allocation2 + $0x2a] sm:$0xff]
      %v661 = vld [vmem:[#allocation2 + $0x32] sm:$0x3f]
      %v662 = vadd.f32 %v660, %v614
      %v663 = vadd.f32 %v661, %v614
      %s664 = scalar_lea.vmem %s271, 24
      %v665 = vld [vmem:[%s664] sm:$0xf]
      %v666 = vld [vmem:[%s664 + $0x4] sm:$0x7]
      %v667 = vunpack.c.l.bf16 %v665
      %v668 = vunpack.c.l.bf16 %v666
      %v669 = vadd.f32 %v662, %v667
      %v670 = vadd.f32 %v663, %v668
      %v671 = vmax.f32 %v669, 0.0
      %v672 = vmax.f32 %v670, 0.0
      %s673 = scalar_lea.vmem %s279, 48
      %674 = vst [vmem:[%s673] sm:$0xff] %v671
      %675 = vst [vmem:[%s673 + $0x8] sm:$0x3f] %v672
      %v676 = vld [vmem:[#allocation2 + $0x38] sm:$0xff]
      %v677 = vld [vmem:[#allocation2 + $0x40] sm:$0x3f]
      %v678 = vadd.f32 %v676, %v614
      %v679 = vadd.f32 %v677, %v614
      %s680 = scalar_lea.vmem %s271, 32
      %v681 = vld [vmem:[%s680] sm:$0xf]
      %v682 = vld [vmem:[%s680 + $0x4] sm:$0x7]
      %v683 = vunpack.c.l.bf16 %v681
      %v684 = vunpack.c.l.bf16 %v682
      %v685 = vadd.f32 %v678, %v683
      %v686 = vadd.f32 %v679, %v684
      %v687 = vmax.f32 %v685, 0.0
      %v688 = vmax.f32 %v686, 0.0
      %s689 = scalar_lea.vmem %s279, 64
      %690 = vst [vmem:[%s689] sm:$0xff] %v687
      %691 = vst [vmem:[%s689 + $0x8] sm:$0x3f] %v688
      %v692 = vld [vmem:[#allocation2 + $0x46] sm:$0xff]
      %v693 = vld [vmem:[#allocation2 + $0x4e] sm:$0x3f]
      %v694 = vadd.f32 %v692, %v614
      %v695 = vadd.f32 %v693, %v614
      %s696 = scalar_lea.vmem %s271, 40
      %v697 = vld [vmem:[%s696] sm:$0xf]
      %v698 = vld [vmem:[%s696 + $0x4] sm:$0x7]
      %v699 = vunpack.c.l.bf16 %v697
      %v700 = vunpack.c.l.bf16 %v698
      %v701 = vadd.f32 %v694, %v699
      %v702 = vadd.f32 %v695, %v700
      %v703 = vmax.f32 %v701, 0.0
      %v704 = vmax.f32 %v702, 0.0
      %s705 = scalar_lea.vmem %s279, 80
      %706 = vst [vmem:[%s705] sm:$0xff] %v703
      %707 = vst [vmem:[%s705 + $0x8] sm:$0x3f] %v704
      %v708 = vld [vmem:[#allocation2 + $0x54] sm:$0xff]
      %v709 = vld [vmem:[#allocation2 + $0x5c] sm:$0x3f]
      %v710 = vadd.f32 %v708, %v614
      %v711 = vadd.f32 %v709, %v614
      %s712 = scalar_lea.vmem %s271, 48
      %v713 = vld [vmem:[%s712] sm:$0xf]
      %v714 = vld [vmem:[%s712 + $0x4] sm:$0x7]
      %v715 = vunpack.c.l.bf16 %v713
      %v716 = vunpack.c.l.bf16 %v714
      %v717 = vadd.f32 %v710, %v715
      %v718 = vadd.f32 %v711, %v716
      %v719 = vmax.f32 %v717, 0.0
      %v720 = vmax.f32 %v718, 0.0
      %s721 = scalar_lea.vmem %s279, 96
      %722 = vst [vmem:[%s721] sm:$0xff] %v719
      %723 = vst [vmem:[%s721 + $0x8] sm:$0x3f] %v720
      %v724 = vld [vmem:[#allocation2 + $0x62] sm:$0xff]
      %v725 = vld [vmem:[#allocation2 + $0x6a] sm:$0x3f]
      %v726 = vadd.f32 %v724, %v614
      %v727 = vadd.f32 %v725, %v614
      %s728 = scalar_lea.vmem %s271, 56
      %v729 = vld [vmem:[%s728] sm:$0xf]
      %v730 = vld [vmem:[%s728 + $0x4] sm:$0x7]
      %v731 = vunpack.c.l.bf16 %v729
      %v732 = vunpack.c.l.bf16 %v730
      %v733 = vadd.f32 %v726, %v731
      %v734 = vadd.f32 %v727, %v732
      %v735 = vmax.f32 %v733, 0.0
      %v736 = vmax.f32 %v734, 0.0
      %s737 = scalar_lea.vmem %s279, 112
      %738 = vst [vmem:[%s737] sm:$0xff] %v735
      %739 = vst [vmem:[%s737 + $0x8] sm:$0x3f] %v736
      %v740 = vld [vmem:[#allocation2 + $0x70] sm:$0xff]
      %v741 = vld [vmem:[#allocation2 + $0x78] sm:$0x3f]
      %v742 = vadd.f32 %v740, %v614
      %v743 = vadd.f32 %v741, %v614
      %s744 = scalar_lea.vmem %s271, 64
      %v745 = vld [vmem:[%s744] sm:$0xf]
      %v746 = vld [vmem:[%s744 + $0x4] sm:$0x7]
      %v747 = vunpack.c.l.bf16 %v745
      %v748 = vunpack.c.l.bf16 %v746
      %v749 = vadd.f32 %v742, %v747
      %v750 = vadd.f32 %v743, %v748
      %v751 = vmax.f32 %v749, 0.0
      %v752 = vmax.f32 %v750, 0.0
      %s753 = scalar_lea.vmem %s279, 128
      %754 = vst [vmem:[%s753] sm:$0xff] %v751
      %755 = vst [vmem:[%s753 + $0x8] sm:$0x3f] %v752
      %v756 = vld [vmem:[#allocation2 + $0x7e] sm:$0xff]
      %v757 = vld [vmem:[#allocation2 + $0x86] sm:$0x3f]
      %v758 = vadd.f32 %v756, %v614
      %v759 = vadd.f32 %v757, %v614
      %s760 = scalar_lea.vmem %s271, 72
      %v761 = vld [vmem:[%s760] sm:$0xf]
      %v762 = vld [vmem:[%s760 + $0x4] sm:$0x7]
      %v763 = vunpack.c.l.bf16 %v761
      %v764 = vunpack.c.l.bf16 %v762
      %v765 = vadd.f32 %v758, %v763
      %v766 = vadd.f32 %v759, %v764
      %v767 = vmax.f32 %v765, 0.0
      %v768 = vmax.f32 %v766, 0.0
      %s769 = scalar_lea.vmem %s279, 144
      %770 = vst [vmem:[%s769] sm:$0xff] %v767
      %771 = vst [vmem:[%s769 + $0x8] sm:$0x3f] %v768
      %v772 = vld [vmem:[#allocation2 + $0x8c] sm:$0xff]
      %v773 = vld [vmem:[#allocation2 + $0x94] sm:$0x3f]
      %v774 = vadd.f32 %v772, %v614
      %v775 = vadd.f32 %v773, %v614
      %s776 = scalar_lea.vmem %s271, 80
      %v777 = vld [vmem:[%s776] sm:$0xf]
      %v778 = vld [vmem:[%s776 + $0x4] sm:$0x7]
      %v779 = vunpack.c.l.bf16 %v777
      %v780 = vunpack.c.l.bf16 %v778
      %v781 = vadd.f32 %v774, %v779
      %v782 = vadd.f32 %v775, %v780
      %v783 = vmax.f32 %v781, 0.0
      %v784 = vmax.f32 %v782, 0.0
      %s785 = scalar_lea.vmem %s279, 160
      %786 = vst [vmem:[%s785] sm:$0xff] %v783
      %787 = vst [vmem:[%s785 + $0x8] sm:$0x3f] %v784
      %v788 = vld [vmem:[#allocation2 + $0x9a] sm:$0xff]
      %v789 = vld [vmem:[#allocation2 + $0xa2] sm:$0x3f]
      %v790 = vadd.f32 %v788, %v614
      %v791 = vadd.f32 %v789, %v614
      %s792 = scalar_lea.vmem %s271, 88
      %v793 = vld [vmem:[%s792] sm:$0xf]
      %v794 = vld [vmem:[%s792 + $0x4] sm:$0x7]
      %v795 = vunpack.c.l.bf16 %v793
      %v796 = vunpack.c.l.bf16 %v794
      %v797 = vadd.f32 %v790, %v795
      %v798 = vadd.f32 %v791, %v796
      %v799 = vmax.f32 %v797, 0.0
      %v800 = vmax.f32 %v798, 0.0
      %s801 = scalar_lea.vmem %s279, 176
      %802 = vst [vmem:[%s801] sm:$0xff] %v799
      %803 = vst [vmem:[%s801 + $0x8] sm:$0x3f] %v800
      %v804 = vld [vmem:[#allocation2 + $0xa8] sm:$0xff]
      %v805 = vld [vmem:[#allocation2 + $0xb0] sm:$0x3f]
      %v806 = vadd.f32 %v804, %v614
      %v807 = vadd.f32 %v805, %v614
      %s808 = scalar_lea.vmem %s271, 96
      %v809 = vld [vmem:[%s808] sm:$0xf]
      %v810 = vld [vmem:[%s808 + $0x4] sm:$0x7]
      %v811 = vunpack.c.l.bf16 %v809
      %v812 = vunpack.c.l.bf16 %v810
      %v813 = vadd.f32 %v806, %v811
      %v814 = vadd.f32 %v807, %v812
      %v815 = vmax.f32 %v813, 0.0
      %v816 = vmax.f32 %v814, 0.0
      %s817 = scalar_lea.vmem %s279, 192
      %818 = vst [vmem:[%s817] sm:$0xff] %v815
      %819 = vst [vmem:[%s817 + $0x8] sm:$0x3f] %v816
      %v820 = vld [vmem:[#allocation2 + $0xb6] sm:$0xff]
      %v821 = vld [vmem:[#allocation2 + $0xbe] sm:$0x3f]
      %v822 = vadd.f32 %v820, %v614
      %v823 = vadd.f32 %v821, %v614
      %s824 = scalar_lea.vmem %s271, 104
      %v825 = vld [vmem:[%s824] sm:$0xf]
      %v826 = vld [vmem:[%s824 + $0x4] sm:$0x7]
      %v827 = vunpack.c.l.bf16 %v825
      %v828 = vunpack.c.l.bf16 %v826
      %v829 = vadd.f32 %v822, %v827
      %v830 = vadd.f32 %v823, %v828
      %v831 = vmax.f32 %v829, 0.0
      %v832 = vmax.f32 %v830, 0.0
      %s833 = scalar_lea.vmem %s279, 208
      %834 = vst [vmem:[%s833] sm:$0xff] %v831
      %835 = vst [vmem:[%s833 + $0x8] sm:$0x3f] %v832
      %p836 = scmp.lt.s32.totalorder %s19, 1
      %s837 = scalar_select %p836, %s19, 1
      %p838 = scmp.lt.s32.totalorder %s20, 0
      %s839 = scalar_select %p838, %s20, 0
      %s840 = smul.addr %s837, 28
      %s841 = sadd.s32 %s839, %s840
      %s842 = smul.addr %s841, 8
      %s843 = scalar_lea.vmem %s4, %s842
      // Predicated region
      $region37: #{_lambda_.7} parent=35 // pred_check
        %p844 = pneg %p153
      $region38: #{_lambda_.7} parent=35 // pred_check_branch
        %846 = sbr.rel (%p844) target = $region40
      $region39: #{_lambda_.7} parent=35 // pred_region
        _
      $region40: #{_lambda_.7} parent=35 // pred_fallthru
        _
    $region36: #{_lambda_.7} parent=5 // pred_fallthru
      _
    %p847 = scmp.le.s32.totalorder 2, %s10
    // Predicated region
    $region41: #{_lambda_.7} parent=5 // pred_check
      %p848 = pneg %p847
    $region42: #{_lambda_.7} parent=5 // pred_check_branch
      %850 = sbr.rel (%p848) target = $region44
    $region43: #{_lambda_.7} parent=5 // pred_region
      %s851 = ssub.s32 %s10, 2
      // Predicated region
      $region45: #{_lambda_.7} parent=43 // pred_check
        %p852 = pneg %p159
      $region46: #{_lambda_.7} parent=43 // pred_check_branch
        %854 = sbr.rel (%p852) target = $region48
      $region47: #{_lambda_.7} parent=43 // pred_region
        %p855 = scmp.lt.s32.totalorder %s21, 1
        %s856 = scalar_select %p855, %s21, 1
        %p857 = scmp.lt.s32.totalorder %s22, 0
        %s858 = scalar_select %p857, %s22, 0
        %s859 = smul.addr %s856, 28
        %s860 = sadd.s32 %s858, %s859
        %s861 = smul.addr %s860, 8
        %s862 = scalar_lea.vmem %s4, %s861
      $region48: #{_lambda_.7} parent=43 // pred_fallthru
        _
    $region44: #{_lambda_.7} parent=5 // pred_fallthru
      _
  $region6: #{_lambda_.7} parent=0 // loop_footer
    %s14 = sadd.s32 1, %s10
  $region7: #{_lambda_.7} parent=0 // loop_footer_branch
    %9 = sbr.rel target = $region3
  $region8: #{_lambda_.7} parent=0 // loop_exit
    _

// kernel: _lambda_.4
$region0: #{_lambda_.4}
  #allocation0 [shape = 'u32[]', space=smem, size = 0x4, offset = 0x4, fixed_abs, tag = 'smem constant byte address 0x4 - core index']
  #allocation1 [shape = 'u32[144,128]{1,0:T(1,128)}', space=vmem, size = 0x12000, scoped, tag = 'internal scratch']
  #allocation2 [shape = 'f32[222,128]{1,0:T(8,128)}', space=vmem, size = 0x1c000, scoped, tag = 'scratch operand']
  %s0 = inlined_call_operand.vmem [shape: bf16[2,256,128], index: 0, kind: input, shape index: {}]
  %s1 = inlined_call_operand.vmem [shape: bf16[9,128,128], index: 1, kind: input, shape index: {}]
  %s2 = inlined_call_operand.vmem [shape: f32[1,128], index: 2, kind: input, shape index: {}]
  %s3 = inlined_call_operand.vmem [shape: bf16[2,14,14,128], index: 3, kind: output, shape index: {}]
  %s4 = sld [smem:[#allocation0]]
  $region45: #{_lambda_.4} parent=0
    _
  %s6 = ssub.s32 1, %s4
  %s7 = scalar_select 0, %s6, %s4
  loop: start=0, step=1, limit=4
  $region2: #{_lambda_.4} parent=0 // loop_pre_header
    _
  $region3: #{_lambda_.4} parent=0 // loop_header
    %s9 = sphi 0, %s13
    %p10 = scmp.ge.s32.totalorder %s9, 4
    %s16 = sphi 0, %s28
    %s17 = sphi 0, %s24
    %s18 = sphi 0, %s16
    %s19 = sphi 0, %s17
    %s20 = sphi 0, %s18
    %s21 = sphi 0, %s19
    %s31 = sphi 0, %s33
    %s34 = sphi 0, %s31
    %s35 = sphi 0, %s34
    %s51 = sphi 0, %s35
    %s57 = sphi 0, %s59
    %s60 = sphi 0, %s57
    %s61 = sphi 0, %s60
    %s77 = sphi 0, %s61
    %s83 = sphi 0, %s85
    %s86 = sphi 0, %s83
    %s87 = sphi 0, %s86
    %s103 = sphi 0, %s87
    %s111 = sphi 0, %s113
    %s114 = sphi 0, %s111
    %s115 = sphi 0, %s114
    %s131 = sphi 0, %s115
  $region4: #{_lambda_.4} parent=0 // loop_header_branch
    %12 = sbr.rel (%p10) target = $region8
  $region5: #{_lambda_.4} parent=0 // loop_body
    %s14 = ssub.s32 %s9, 1
    %s15 = ssub.s32 %s9, 2
    %s22 = sadd.s32 1, %s17
    %p23 = scmp.ge.s32.totalorder %s22, 1
    %s24 = scalar_select %p23, 0, %s22
    %s25 = sadd.s32 1, %s16
    %s26 = scalar_select %p23, %s25, %s16
    %p27 = scmp.ge.s32.totalorder %s26, 2
    %s28 = scalar_select %p27, 0, %s26
    %s29 = ssub.s32 %s16, %s28
    %p30 = scmp.eq.s32.totalorder %s29, 0
    %s32 = sadd.s32 %s31, 1
    %s33 = scalar_select %p30, %s31, %s32
    %p36 = pneg %p30
    %p37 = scmp.eq.s32.totalorder %s9, 1
    %p38 = por %p36, %p37
    %p39 = scmp.ne.s32.totalorder %s31, %s34
    %p40 = scmp.eq.s32.totalorder %s9, 0
    %p41 = por %p39, %p40
    %p42 = scmp.ne.s32.totalorder %s31, %s34
    %p43 = scmp.eq.s32.totalorder %s14, 1
    %p44 = por %p42, %p43
    %p45 = scmp.ne.s32.totalorder %s34, %s35
    %p46 = scmp.eq.s32.totalorder %s14, 0
    %p47 = por %p45, %p46
    %p48 = scmp.ne.s32.totalorder %s34, %s35
    %p49 = scmp.eq.s32.totalorder %s15, 1
    %p50 = por %p48, %p49
    %p52 = scmp.ne.s32.totalorder %s35, %s51
    %p53 = scmp.eq.s32.totalorder %s15, 0
    %p54 = por %p52, %p53
    %s55 = ssub.s32 %s17, %s24
    %p56 = scmp.eq.s32.totalorder %s55, 0
    %s58 = sadd.s32 %s57, 1
    %s59 = scalar_select %p56, %s57, %s58
    %p62 = pneg %p56
    %p63 = scmp.eq.s32.totalorder %s9, 1
    %p64 = por %p62, %p63
    %p65 = scmp.ne.s32.totalorder %s57, %s60
    %p66 = scmp.eq.s32.totalorder %s9, 0
    %p67 = por %p65, %p66
    %p68 = scmp.ne.s32.totalorder %s57, %s60
    %p69 = scmp.eq.s32.totalorder %s14, 1
    %p70 = por %p68, %p69
    %p71 = scmp.ne.s32.totalorder %s60, %s61
    %p72 = scmp.eq.s32.totalorder %s14, 0
    %p73 = por %p71, %p72
    %p74 = scmp.ne.s32.totalorder %s60, %s61
    %p75 = scmp.eq.s32.totalorder %s15, 1
    %p76 = por %p74, %p75
    %p78 = scmp.ne.s32.totalorder %s61, %s77
    %p79 = scmp.eq.s32.totalorder %s15, 0
    %p80 = por %p78, %p79
    %s81 = ssub.s32 %s17, %s24
    %p82 = scmp.eq.s32.totalorder %s81, 0
    %s84 = sadd.s32 %s83, 1
    %s85 = scalar_select %p82, %s83, %s84
    %p88 = pneg %p82
    %p89 = scmp.eq.s32.totalorder %s9, 1
    %p90 = por %p88, %p89
    %p91 = scmp.ne.s32.totalorder %s83, %s86
    %p92 = scmp.eq.s32.totalorder %s9, 0
    %p93 = por %p91, %p92
    %p94 = scmp.ne.s32.totalorder %s83, %s86
    %p95 = scmp.eq.s32.totalorder %s14, 1
    %p96 = por %p94, %p95
    %p97 = scmp.ne.s32.totalorder %s86, %s87
    %p98 = scmp.eq.s32.totalorder %s14, 0
    %p99 = por %p97, %p98
    %p100 = scmp.ne.s32.totalorder %s86, %s87
    %p101 = scmp.eq.s32.totalorder %s15, 1
    %p102 = por %p100, %p101
    %p104 = scmp.ne.s32.totalorder %s87, %s103
    %p105 = scmp.eq.s32.totalorder %s15, 0
    %p106 = por %p104, %p105
    %s107 = ssub.s32 %s16, %s28
    %s108 = ssub.s32 %s17, %s24
    %s109 = sor.u32 %s107, %s108
    %p110 = scmp.eq.s32.totalorder %s109, 0
    %s112 = sadd.s32 %s111, 1
    %s113 = scalar_select %p110, %s111, %s112
    %p116 = pneg %p110
    %p117 = scmp.eq.s32.totalorder %s9, 1
    %p118 = por %p116, %p117
    %p119 = scmp.ne.s32.totalorder %s111, %s114
    %p120 = scmp.eq.s32.totalorder %s9, 0
    %p121 = por %p119, %p120
    %p122 = scmp.ne.s32.totalorder %s111, %s114
    %p123 = scmp.eq.s32.totalorder %s14, 1
    %p124 = por %p122, %p123
    %p125 = scmp.ne.s32.totalorder %s114, %s115
    %p126 = scmp.eq.s32.totalorder %s14, 0
    %p127 = por %p125, %p126
    %p128 = scmp.ne.s32.totalorder %s114, %s115
    %p129 = scmp.eq.s32.totalorder %s15, 1
    %p130 = por %p128, %p129
    %p132 = scmp.ne.s32.totalorder %s115, %s131
    %p133 = scmp.eq.s32.totalorder %s15, 0
    %p134 = por %p132, %p133
    %p135 = scmp.le.s32.totalorder 1, %s9
    %p136 = scmp.lt.s32.totalorder %s9, 3
    %p137 = pnand %p135, %p136
    %p138 = pneg %p137
    // Predicated region
    $region9: #{_lambda_.4} parent=5 // pred_check
      _
    $region10: #{_lambda_.4} parent=5 // pred_check_branch
      %140 = sbr.rel (%p137) target = $region12
    $region11: #{_lambda_.4} parent=5 // pred_region
      %s141 = ssub.s32 %s9, 1
      // Predicated region
      $region13: #{_lambda_.4} parent=11 // pred_check
        %p142 = pneg %p73
      $region14: #{_lambda_.4} parent=11 // pred_check_branch
        %144 = sbr.rel (%p142) target = $region16
      $region15: #{_lambda_.4} parent=11 // pred_region
        %p145 = scmp.lt.s32.totalorder %s19, 0
        %s146 = scalar_select %p145, %s19, 0
        %s147 = smul.addr %s146, 4
        %s148 = scalar_lea.vmem %s1, %s147
      $region16: #{_lambda_.4} parent=11 // pred_fallthru
        _
      // Predicated region
      $region17: #{_lambda_.4} parent=11 // pred_check
        %p149 = pneg %p99
      $region18: #{_lambda_.4} parent=11 // pred_check_branch
        %151 = sbr.rel (%p149) target = $region20
      $region19: #{_lambda_.4} parent=11 // pred_region
        %p152 = scmp.lt.s32.totalorder %s19, 0
        %s153 = scalar_select %p152, %s19, 0
        %s154 = scalar_lea.vmem %s2, %s153
      $region20: #{_lambda_.4} parent=11 // pred_fallthru
        _
    $region12: #{_lambda_.4} parent=5 // pred_fallthru
      _
    %p155 = scmp.lt.s32.totalorder %s9, 2
    // Predicated region
    $region21: #{_lambda_.4} parent=5 // pred_check
      %p156 = pneg %p155
    $region22: #{_lambda_.4} parent=5 // pred_check_branch
      %158 = sbr.rel (%p156) target = $region24
    $region23: #{_lambda_.4} parent=5 // pred_region
      // Predicated region
      $region25: #{_lambda_.4} parent=23 // pred_check
        %p159 = pneg %p41
      $region26: #{_lambda_.4} parent=23 // pred_check_branch
        %161 = sbr.rel (%p159) target = $region28
      $region27: #{_lambda_.4} parent=23 // pred_region
        %p162 = scmp.lt.s32.totalorder %s16, 1
        %s163 = scalar_select %p162, %s16, 1
        %s164 = smul.addr %s163, 32
        %s165 = smul.addr %s164, 4
        %s166 = scalar_lea.vmem %s0, %s165
      $region28: #{_lambda_.4} parent=23 // pred_fallthru
        _
    $region24: #{_lambda_.4} parent=5 // pred_fallthru
      _
    %p167 = scmp.le.s32.totalorder 1, %s9
    %p168 = scmp.lt.s32.totalorder %s9, 3
    %p169 = pnand %p167, %p168
    %p170 = pneg %p169
    // Predicated region
    $region29: #{_lambda_.4} parent=5 // pred_check
      _
    $region30: #{_lambda_.4} parent=5 // pred_check_branch
      %172 = sbr.rel (%p169) target = $region32
    $region31: #{_lambda_.4} parent=5 // pred_region
      %s173 = ssub.s32 %s9, 1
      %p174 = scmp.lt.s32.totalorder %s18, 1
      %s175 = scalar_select %p174, %s18, 1
      %s176 = smul.addr %s175, 32
      %s177 = smul.addr %s176, 4
      %s178 = scalar_lea.vmem %s0, %s177
      %p179 = pneg %p47
      %p180 = pneg %p44
      %p181 = scmp.lt.s32.totalorder %s19, 0
      %s182 = scalar_select %p181, %s19, 0
      %s183 = smul.addr %s182, 4
      %s184 = scalar_lea.vmem %s1, %s183
      %p185 = pneg %p73
      %p186 = pneg %p70
      %p187 = scmp.lt.s32.totalorder %s19, 0
      %s188 = scalar_select %p187, %s19, 0
      %s189 = scalar_lea.vmem %s2, %s188
      %p190 = pneg %p99
      %p191 = pneg %p96
      %p192 = pneg %p127
      %p193 = pneg %p124
      %p194 = scmp.lt.s32.totalorder %s18, 1
      %s195 = scalar_select %p194, %s18, 1
      %p196 = scmp.lt.s32.totalorder %s19, 0
      %s197 = scalar_select %p196, %s19, 0
      %s198 = smul.addr %s195, 28
      %s199 = sadd.s32 %s197, %s198
      %s200 = smul.addr %s199, 4
      %s201 = scalar_lea.vmem %s3, %s200
      %p202 = scmp.lt.s32.totalorder %s18, 1
      %s203 = scalar_select %p202, %s18, 1
      %s204 = smul.addr %s203, 32
      %s205 = smul.addr %s204, 4
      %s206 = scalar_lea.vmem %s0, %s205
      %p207 = scmp.lt.s32.totalorder %s19, 0
      %s208 = scalar_select %p207, %s19, 0
      %s209 = smul.addr %s208, 4
      %s210 = scalar_lea.vmem %s1, %s209
      %p211 = scmp.lt.s32.totalorder %s19, 0
      %s212 = scalar_select %p211, %s19, 0
      %s213 = scalar_lea.vmem %s2, %s212
      %p214 = scmp.lt.s32.totalorder %s18, 1
      %s215 = scalar_select %p214, %s18, 1
      %p216 = scmp.lt.s32.totalorder %s19, 0
      %s217 = scalar_select %p216, %s19, 0
      %s218 = smul.addr %s215, 28
      %s219 = sadd.s32 %s217, %s218
      %s220 = smul.addr %s219, 4
      %s221 = scalar_lea.vmem %s3, %s220
      %v223 = vld [vmem:[%s206] sm:$0xf]
      %v224 = vld [vmem:[%s206 + $0x4] sm:$0xf]
      %v225 = vld [vmem:[%s206 + $0x8] sm:$0xf]
      %v226 = vld [vmem:[%s206 + $0xc] sm:$0xf]
      %v227 = vld [vmem:[%s206 + $0x10] sm:$0xf]
      %v228 = vld [vmem:[%s206 + $0x14] sm:$0xf]
      %v229 = vld [vmem:[%s206 + $0x18] sm:$0xf]
      %v230 = vld [vmem:[%s206 + $0x1c] sm:$0xf]
      %v231 = vld [vmem:[%s206 + $0x20] sm:$0xf]
      %v232 = vld [vmem:[%s206 + $0x24] sm:$0xf]
      %v233 = vld [vmem:[%s206 + $0x28] sm:$0xf]
      %v234 = vld [vmem:[%s206 + $0x2c] sm:$0xf]
      %v235 = vld [vmem:[%s206 + $0x30] sm:$0xf]
      %v236 = vld [vmem:[%s206 + $0x34] sm:$0xf]
      %v237 = vld [vmem:[%s206 + $0x38] sm:$0xf]
      %v238 = vld [vmem:[%s206 + $0x3c] sm:$0xf]
      %v239 = vld [vmem:[%s206 + $0x40] sm:$0xf]
      %v240 = vld [vmem:[%s206 + $0x44] sm:$0xf]
      %v241 = vld [vmem:[%s206 + $0x48] sm:$0xf]
      %v242 = vld [vmem:[%s206 + $0x4c] sm:$0xf]
      %v243 = vld [vmem:[%s206 + $0x50] sm:$0xf]
      %v244 = vld [vmem:[%s206 + $0x54] sm:$0xf]
      %v245 = vld [vmem:[%s206 + $0x58] sm:$0xf]
      %v246 = vld [vmem:[%s206 + $0x5c] sm:$0xf]
      %v247 = vld [vmem:[%s206 + $0x60] sm:$0xf]
      %v248 = vld [vmem:[%s206 + $0x64] sm:$0xf]
      %v249 = vld [vmem:[%s206 + $0x68] sm:$0xf]
      %v250 = vld [vmem:[%s206 + $0x6c] sm:$0x7]
      %v251 = vld [vmem:[%s210] sm:$0xf]
      %v252 = vld [vmem:[%s210 + $0x4] sm:$0xf]
      %v253 = vld [vmem:[%s210 + $0x8] sm:$0xf]
      %v254 = vld [vmem:[%s210 + $0xc] sm:$0xf]
      %v255 = vld [vmem:[%s210 + $0x10] sm:$0xf]
      %v256 = vld [vmem:[%s210 + $0x14] sm:$0xf]
      %v257 = vld [vmem:[%s210 + $0x18] sm:$0xf]
      %v258 = vld [vmem:[%s210 + $0x1c] sm:$0xf]
      %v259 = vld [vmem:[%s210 + $0x20] sm:$0xf]
      %v260 = vld [vmem:[%s210 + $0x24] sm:$0xf]
      %v261 = vld [vmem:[%s210 + $0x28] sm:$0xf]
      %v262 = vld [vmem:[%s210 + $0x2c] sm:$0xf]
      %v263 = vld [vmem:[%s210 + $0x30] sm:$0xf]
      %v264 = vld [vmem:[%s210 + $0x34] sm:$0xf]
      %v265 = vld [vmem:[%s210 + $0x38] sm:$0xf]
      %v266 = vld [vmem:[%s210 + $0x3c] sm:$0xf]
      %v295 = vunpack.c.l.b16 %v223
      %v296 = vunpack.c.l.b16 %v224
      %v297 = vunpack.c.l.b16 %v225
      %v298 = vunpack.c.l.b16 %v226
      %v299 = vunpack.c.l.b16 %v227
      %v300 = vunpack.c.l.b16 %v228
      %v301 = vunpack.c.l.b16 %v229
      %v302 = vunpack.c.l.b16 %v230
      %v303 = vunpack.c.l.b16 %v231
      %v304 = vunpack.c.l.b16 %v232
      %v305 = vunpack.c.l.b16 %v233
      %v306 = vunpack.c.l.b16 %v234
      %v307 = vunpack.c.l.b16 %v235
      %v308 = vunpack.c.l.b16 %v236
      %v309 = vunpack.c.l.b16 %v237
      %v310 = vunpack.c.l.b16 %v238
      %v311 = vunpack.c.l.b16 %v239
      %v312 = vunpack.c.l.b16 %v240
      %v313 = vunpack.c.l.b16 %v241
      %v314 = vunpack.c.l.b16 %v242
      %v315 = vunpack.c.l.b16 %v243
      %v316 = vunpack.c.l.b16 %v244
      %v317 = vunpack.c.l.b16 %v245
      %v318 = vunpack.c.l.b16 %v246
      %v319 = vunpack.c.l.b16 %v247
      %v320 = vunpack.c.l.b16 %v248
      %v321 = vunpack.c.l.b16 %v249
      %v322 = vunpack.c.l.b16 %v250
      %v323 = vpack.c.b16 %v296, %v295
      %v324 = vpack.c.b16 %v298, %v297
      %v325 = vpack.c.b16 %v300, %v299
      %v326 = vpack.c.b16 %v302, %v301
      %v327 = vpack.c.b16 %v304, %v303
      %v328 = vpack.c.b16 %v306, %v305
      %v329 = vpack.c.b16 %v308, %v307
      %v330 = vpack.c.b16 %v310, %v309
      %v331 = vpack.c.b16 %v312, %v311
      %v332 = vpack.c.b16 %v314, %v313
      %v333 = vpack.c.b16 %v316, %v315
      %v334 = vpack.c.b16 %v318, %v317
      %v335 = vpack.c.b16 %v320, %v319
      %v336 = vpack.c.b16 %v322, %v321
      %v367 = vunpack.c.l.b16 %v251
      %v368 = vunpack.c.l.b16 %v252
      %v369 = vunpack.c.l.b16 %v253
      %v370 = vunpack.c.l.b16 %v254
      %v371 = vunpack.c.l.b16 %v255
      %v372 = vunpack.c.l.b16 %v256
      %v373 = vunpack.c.l.b16 %v257
      %v374 = vunpack.c.l.b16 %v258
      %v375 = vunpack.c.l.b16 %v259
      %v376 = vunpack.c.l.b16 %v260
      %v377 = vunpack.c.l.b16 %v261
      %v378 = vunpack.c.l.b16 %v262
      %v379 = vunpack.c.l.b16 %v263
      %v380 = vunpack.c.l.b16 %v264
      %v381 = vunpack.c.l.b16 %v265
      %v382 = vunpack.c.l.b16 %v266
      %v383 = vpack.c.b16 %v368, %v367
      %v384 = vpack.c.b16 %v370, %v369
      %v385 = vpack.c.b16 %v372, %v371
      %v386 = vpack.c.b16 %v374, %v373
      %v387 = vpack.c.b16 %v376, %v375
      %v388 = vpack.c.b16 %v378, %v377
      %v389 = vpack.c.b16 %v380, %v379
      %v390 = vpack.c.b16 %v382, %v381
      %399 = vmatprep.subr.bf16.mxu0 0
      %400 = vmatpush1.bf16.msra.mxu0 %v390
      %401 = vmatprep.subr.bf16.mxu0 0
      %402 = vmatpush1.bf16.msra.mxu0 %v389
      %403 = vmatprep.subr.bf16.mxu0 0
      %404 = vmatpush1.bf16.msra.mxu0 %v388
      %405 = vmatprep.subr.bf16.mxu0 0
      %406 = vmatpush1.bf16.msra.mxu0 %v387
      %407 = vmatprep.subr.bf16.mxu0 0
      %408 = vmatpush1.bf16.msra.mxu0 %v386
      %409 = vmatprep.subr.bf16.mxu0 0
      %410 = vmatpush1.bf16.msra.mxu0 %v385
      %411 = vmatprep.subr.bf16.mxu0 0
      %412 = vmatpush1.bf16.msra.mxu0 %v384
      %413 = vmatprep.subr.bf16.mxu0 0
      %414 = vmatpush1.bf16.msra.mxu0 %v383
      %415 = vmatprep.subr.bf16.mxu0 0
      %416 = vmatpush2.bf16.msra.mxu0 0
      %417 = vmatprep.subr.bf16.mxu0 0
      %418 = vmatpush2.bf16.msra.mxu0 0
      %419 = vmatprep.subr.bf16.mxu0 0
      %420 = vmatpush2.bf16.msra.mxu0 0
      %421 = vmatprep.subr.bf16.mxu0 0
      %422 = vmatpush2.bf16.msra.mxu0 0
      %423 = vmatprep.subr.bf16.mxu0 0
      %424 = vmatpush2.bf16.msra.mxu0 0
      %425 = vmatprep.subr.bf16.mxu0 0
      %426 = vmatpush2.bf16.msra.mxu0 0
      %427 = vmatprep.subr.bf16.mxu0 0
      %428 = vmatpush2.bf16.msra.mxu0 0
      %429 = vmatprep.subr.bf16.mxu0 0
      %430 = vmatpush2.bf16.msra.mxu0 0
      %431 = vmatprep.mubr.bf16.mxu0 0
      %432 = vmatmul.mubr.bf16.gmra.mxu0 %v323
      %v433 = vpop.f32.mrf.mxu0
      %v434 = vadd.f32 0.0, %v433
      %v435 = vpop.f32.mrf.mxu0
      %v436 = vpop.f32.mrf.mxu0
      %v437 = vadd.f32 0.0, %v436
      %v438 = vpop.f32.mrf.mxu0
      %439 = vmatprep.mubr.bf16.mxu0 0
      %440 = vmatmul.mubr.bf16.gmra.mxu0 %v324
      %v441 = vpop.f32.mrf.mxu0
      %v442 = vadd.f32 0.0, %v441
      %v443 = vpop.f32.mrf.mxu0
      %v444 = vpop.f32.mrf.mxu0
      %v445 = vadd.f32 0.0, %v444
      %v446 = vpop.f32.mrf.mxu0
      %447 = vmatprep.mubr.bf16.mxu0 0
      %448 = vmatmul.mubr.bf16.gmra.mxu0 %v325
      %v449 = vpop.f32.mrf.mxu0
      %v450 = vadd.f32 0.0, %v449
      %v451 = vpop.f32.mrf.mxu0
      %v452 = vpop.f32.mrf.mxu0
      %v453 = vadd.f32 0.0, %v452
      %v454 = vpop.f32.mrf.mxu0
      %455 = vmatprep.mubr.bf16.mxu0 0
      %456 = vmatmul.mubr.bf16.gmra.mxu0 %v326
      %v457 = vpop.f32.mrf.mxu0
      %v458 = vadd.f32 0.0, %v457
      %v459 = vpop.f32.mrf.mxu0
      %v460 = vpop.f32.mrf.mxu0
      %v461 = vadd.f32 0.0, %v460
      %v462 = vpop.f32.mrf.mxu0
      %463 = vmatprep.mubr.bf16.mxu0 0
      %464 = vmatmul.mubr.bf16.gmra.mxu0 %v327
      %v465 = vpop.f32.mrf.mxu0
      %v466 = vadd.f32 0.0, %v465
      %v467 = vpop.f32.mrf.mxu0
      %v468 = vpop.f32.mrf.mxu0
      %v469 = vadd.f32 0.0, %v468
      %v470 = vpop.f32.mrf.mxu0
      %471 = vmatprep.mubr.bf16.mxu0 0
      %472 = vmatmul.mubr.bf16.gmra.mxu0 %v328
      %v473 = vpop.f32.mrf.mxu0
      %v474 = vadd.f32 0.0, %v473
      %v475 = vpop.f32.mrf.mxu0
      %v476 = vpop.f32.mrf.mxu0
      %v477 = vadd.f32 0.0, %v476
      %v478 = vpop.f32.mrf.mxu0
      %479 = vmatprep.mubr.bf16.mxu0 0
      %480 = vmatmul.mubr.bf16.gmra.mxu0 %v329
      %v481 = vpop.f32.mrf.mxu0
      %v482 = vadd.f32 0.0, %v481
      %v483 = vpop.f32.mrf.mxu0
      %v484 = vpop.f32.mrf.mxu0
      %v485 = vadd.f32 0.0, %v484
      %v486 = vpop.f32.mrf.mxu0
      %487 = vmatprep.mubr.bf16.mxu0 0
      %488 = vmatmul.mubr.bf16.gmra.mxu0 %v330
      %v489 = vpop.f32.mrf.mxu0
      %v490 = vadd.f32 0.0, %v489
      %v491 = vpop.f32.mrf.mxu0
      %v492 = vpop.f32.mrf.mxu0
      %v493 = vadd.f32 0.0, %v492
      %v494 = vpop.f32.mrf.mxu0
      %495 = vmatprep.mubr.bf16.mxu0 0
      %496 = vmatmul.mubr.bf16.gmra.mxu0 %v331
      %v497 = vpop.f32.mrf.mxu0
      %v498 = vadd.f32 0.0, %v497
      %v499 = vpop.f32.mrf.mxu0
      %v500 = vpop.f32.mrf.mxu0
      %v501 = vadd.f32 0.0, %v500
      %v502 = vpop.f32.mrf.mxu0
      %503 = vmatprep.mubr.bf16.mxu0 0
      %504 = vmatmul.mubr.bf16.gmra.mxu0 %v332
      %v505 = vpop.f32.mrf.mxu0
      %v506 = vadd.f32 0.0, %v505
      %v507 = vpop.f32.mrf.mxu0
      %v508 = vpop.f32.mrf.mxu0
      %v509 = vadd.f32 0.0, %v508
      %v510 = vpop.f32.mrf.mxu0
      %511 = vmatprep.mubr.bf16.mxu0 0
      %512 = vmatmul.mubr.bf16.gmra.mxu0 %v333
      %v513 = vpop.f32.mrf.mxu0
      %v514 = vadd.f32 0.0, %v513
      %v515 = vpop.f32.mrf.mxu0
      %v516 = vpop.f32.mrf.mxu0
      %v517 = vadd.f32 0.0, %v516
      %v518 = vpop.f32.mrf.mxu0
      %519 = vmatprep.mubr.bf16.mxu0 0
      %520 = vmatmul.mubr.bf16.gmra.mxu0 %v334
      %v521 = vpop.f32.mrf.mxu0
      %v522 = vadd.f32 0.0, %v521
      %v523 = vpop.f32.mrf.mxu0
      %v524 = vpop.f32.mrf.mxu0
      %v525 = vadd.f32 0.0, %v524
      %v526 = vpop.f32.mrf.mxu0
      %527 = vmatprep.mubr.bf16.mxu0 0
      %528 = vmatmul.mubr.bf16.gmra.mxu0 %v335
      %v529 = vpop.f32.mrf.mxu0
      %v530 = vadd.f32 0.0, %v529
      %v531 = vpop.f32.mrf.mxu0
      %v532 = vpop.f32.mrf.mxu0
      %v533 = vadd.f32 0.0, %v532
      %v534 = vpop.f32.mrf.mxu0
      %535 = vmatprep.mubr.bf16.mxu0 0
      %536 = vmatmul.mubr.bf16.gmra.mxu0 %v336
      %v537 = vpop.f32.mrf.mxu0
      %v538 = vadd.f32 0.0, %v537
      %v539 = vpop.f32.mrf.mxu0
      %v540 = vpop.f32.mrf.mxu0
      %v541 = vadd.f32 0.0, %v540
      %v542 = vpop.f32.mrf.mxu0
      %543 = vdwg.mxu0
      %544 = vst [vmem:[#allocation2] sm:$0xff] %v434
      %545 = vst [vmem:[#allocation2 + $0x8] sm:$0xff] %v437
      %546 = vst [vmem:[#allocation2 + $0x10] sm:$0xff] %v442
      %547 = vst [vmem:[#allocation2 + $0x18] sm:$0xff] %v445
      %548 = vst [vmem:[#allocation2 + $0x20] sm:$0xff] %v450
      %549 = vst [vmem:[#allocation2 + $0x28] sm:$0xff] %v453
      %550 = vst [vmem:[#allocation2 + $0x30] sm:$0xff] %v458
      %551 = vst [vmem:[#allocation2 + $0x38] sm:$0xff] %v461
      %552 = vst [vmem:[#allocation2 + $0x40] sm:$0xff] %v466
      %553 = vst [vmem:[#allocation2 + $0x48] sm:$0xff] %v469
      %554 = vst [vmem:[#allocation2 + $0x50] sm:$0xff] %v474
      %555 = vst [vmem:[#allocation2 + $0x58] sm:$0xff] %v477
      %556 = vst [vmem:[#allocation2 + $0x60] sm:$0xff] %v482
      %557 = vst [vmem:[#allocation2 + $0x68] sm:$0xff] %v485
      %558 = vst [vmem:[#allocation2 + $0x70] sm:$0xff] %v490
      %559 = vst [vmem:[#allocation2 + $0x78] sm:$0xff] %v493
      %560 = vst [vmem:[#allocation2 + $0x80] sm:$0xff] %v498
      %561 = vst [vmem:[#allocation2 + $0x88] sm:$0xff] %v501
      %562 = vst [vmem:[#allocation2 + $0x90] sm:$0xff] %v506
      %563 = vst [vmem:[#allocation2 + $0x98] sm:$0xff] %v509
      %564 = vst [vmem:[#allocation2 + $0xa0] sm:$0xff] %v514
      %565 = vst [vmem:[#allocation2 + $0xa8] sm:$0xff] %v517
      %566 = vst [vmem:[#allocation2 + $0xb0] sm:$0xff] %v522
      %567 = vst [vmem:[#allocation2 + $0xb8] sm:$0xff] %v525
      %568 = vst [vmem:[#allocation2 + $0xc0] sm:$0xff] %v530
      %569 = vst [vmem:[#allocation2 + $0xc8] sm:$0xff] %v533
      %570 = vst [vmem:[#allocation2 + $0xd0] sm:$0xff] %v538
      %571 = vst [vmem:[#allocation2 + $0xd8] sm:$0x3f] %v541
      %v572 = vld [vmem:[%s206] sm:$0xf]
      %v573 = vld [vmem:[%s206 + $0x4] sm:$0xf]
      %v574 = vld [vmem:[%s206 + $0x8] sm:$0xf]
      %v575 = vld [vmem:[%s206 + $0xc] sm:$0xf]
      %v576 = vld [vmem:[%s206 + $0x10] sm:$0xf]
      %v577 = vld [vmem:[%s206 + $0x14] sm:$0xf]
      %v578 = vld [vmem:[%s206 + $0x18] sm:$0xf]
      %v579 = vld [vmem:[%s206 + $0x1c] sm:$0xf]
      %v580 = vld [vmem:[%s206 + $0x20] sm:$0xf]
      %v581 = vld [vmem:[%s206 + $0x24] sm:$0xf]
      %v582 = vld [vmem:[%s206 + $0x28] sm:$0xf]
      %v583 = vld [vmem:[%s206 + $0x2c] sm:$0xf]
      %v584 = vld [vmem:[%s206 + $0x30] sm:$0xf]
      %v585 = vld [vmem:[%s206 + $0x34] sm:$0xf]
      %v586 = vld [vmem:[%s206 + $0x38] sm:$0xf]
      %v587 = vld [vmem:[%s206 + $0x3c] sm:$0xf]
      %v588 = vld [vmem:[%s206 + $0x40] sm:$0xf]
      %v589 = vld [vmem:[%s206 + $0x44] sm:$0xf]
      %v590 = vld [vmem:[%s206 + $0x48] sm:$0xf]
      %v591 = vld [vmem:[%s206 + $0x4c] sm:$0xf]
      %v592 = vld [vmem:[%s206 + $0x50] sm:$0xf]
      %v593 = vld [vmem:[%s206 + $0x54] sm:$0xf]
      %v594 = vld [vmem:[%s206 + $0x58] sm:$0xf]
      %v595 = vld [vmem:[%s206 + $0x5c] sm:$0xf]
      %v596 = vld [vmem:[%s206 + $0x60] sm:$0xf]
      %v597 = vld [vmem:[%s206 + $0x64] sm:$0xf]
      %v598 = vld [vmem:[%s206 + $0x68] sm:$0xf]
      %v599 = vld [vmem:[%s206 + $0x6c] sm:$0xf]
      %s600 = scalar_lea.vmem %s210, 64
      %v601 = vld [vmem:[%s600] sm:$0xf]
      %v602 = vld [vmem:[%s600 + $0x4] sm:$0xf]
      %v603 = vld [vmem:[%s600 + $0x8] sm:$0xf]
      %v604 = vld [vmem:[%s600 + $0xc] sm:$0xf]
      %v605 = vld [vmem:[%s600 + $0x10] sm:$0xf]
      %v606 = vld [vmem:[%s600 + $0x14] sm:$0xf]
      %v607 = vld [vmem:[%s600 + $0x18] sm:$0xf]
      %v608 = vld [vmem:[%s600 + $0x1c] sm:$0xf]
      %v609 = vld [vmem:[%s600 + $0x20] sm:$0xf]
      %v610 = vld [vmem:[%s600 + $0x24] sm:$0xf]
      %v611 = vld [vmem:[%s600 + $0x28] sm:$0xf]
      %v612 = vld [vmem:[%s600 + $0x2c] sm:$0xf]
      %v613 = vld [vmem:[%s600 + $0x30] sm:$0xf]
      %v614 = vld [vmem:[%s600 + $0x34] sm:$0xf]
      %v615 = vld [vmem:[%s600 + $0x38] sm:$0xf]
      %v616 = vld [vmem:[%s600 + $0x3c] sm:$0xf]
      %v645 = vunpack.c.l.b16 %v572
      %v646 = vunpack.c.l.b16 %v573
      %v647 = vunpack.c.l.b16 %v574
      %v648 = vunpack.c.l.b16 %v575
      %v649 = vunpack.c.l.b16 %v576
      %v650 = vunpack.c.l.b16 %v577
      %v651 = vunpack.c.l.b16 %v578
      %v652 = vunpack.c.l.b16 %v579
      %v653 = vunpack.c.l.b16 %v580
      %v654 = vunpack.c.l.b16 %v581
      %v655 = vunpack.c.l.b16 %v582
      %v656 = vunpack.c.l.b16 %v583
      %v657 = vunpack.c.l.b16 %v584
      %v658 = vunpack.c.l.b16 %v585
      %v659 = vunpack.c.l.b16 %v586
      %v660 = vunpack.c.l.b16 %v587
      %v661 = vunpack.c.l.b16 %v588
      %v662 = vunpack.c.l.b16 %v589
      %v663 = vunpack.c.l.b16 %v590
      %v664 = vunpack.c.l.b16 %v591
      %v665 = vunpack.c.l.b16 %v592
      %v666 = vunpack.c.l.b16 %v593
      %v667 = vunpack.c.l.b16 %v594
      %v668 = vunpack.c.l.b16 %v595
      %v669 = vunpack.c.l.b16 %v596
      %v670 = vunpack.c.l.b16 %v597
      %v671 = vunpack.c.l.b16 %v598
      %v672 = vunpack.c.l.b16 %v599
      %v673 = vpack.c.b16 %v646, %v645
      %v674 = vpack.c.b16 %v648, %v647
      %v675 = vpack.c.b16 %v650, %v649
      %v676 = vpack.c.b16 %v652, %v651
      %v677 = vpack.c.b16 %v654, %v653
      %v678 = vpack.c.b16 %v656, %v655
      %v679 = vpack.c.b16 %v658, %v657
      %v680 = vpack.c.b16 %v660, %v659
      %v681 = vpack.c.b16 %v662, %v661
      %v682 = vpack.c.b16 %v664, %v663
      %v683 = vpack.c.b16 %v666, %v665
      %v684 = vpack.c.b16 %v668, %v667
      %v685 = vpack.c.b16 %v670, %v669
      %v686 = vpack.c.b16 %v672, %v671
      %vm687 = vsmask.f32 7424
      %v689 = vshrl.u32 %v673, 16
      %v691 = vshll.u32 %v673, 16
      %v693 = vrot.slane %v691, 1
      %v694 = vor.u32 %v689, %v693
      %v696 = vshll.u32 %v674, 16
      %v698 = vrot.slane %v696, 1
      %v699 = vsel %vm687, %v694, %v698
      %v700 = vshrl.u32 %v674, 16
      %v702 = vor.u32 %v700, %v698
      %v704 = vshll.u32 %v675, 16
      %v706 = vrot.slane %v704, 1
      %v707 = vsel %vm687, %v702, %v706
      %v708 = vshrl.u32 %v675, 16
      %v710 = vor.u32 %v708, %v706
      %v712 = vshll.u32 %v676, 16
      %v714 = vrot.slane %v712, 1
      %v715 = vsel %vm687, %v710, %v714
      %v716 = vshrl.u32 %v676, 16
      %v718 = vor.u32 %v716, %v714
      %v720 = vshll.u32 %v677, 16
      %v722 = vrot.slane %v720, 1
      %v723 = vsel %vm687, %v718, %v722
      %v724 = vshrl.u32 %v677, 16
      %v726 = vor.u32 %v724, %v722
      %v728 = vshll.u32 %v678, 16
      %v730 = vrot.slane %v728, 1
      %v731 = vsel %vm687, %v726, %v730
      %v732 = vshrl.u32 %v678, 16
      %v734 = vor.u32 %v732, %v730
      %v736 = vshll.u32 %v679, 16
      %v738 = vrot.slane %v736, 1
      %v739 = vsel %vm687, %v734, %v738
      %v740 = vshrl.u32 %v679, 16
      %v742 = vor.u32 %v740, %v738
      %v744 = vshll.u32 %v680, 16
      %v746 = vrot.slane %v744, 1
      %v747 = vsel %vm687, %v742, %v746
      %v748 = vshrl.u32 %v680, 16
      %v750 = vor.u32 %v748, %v746
      %v752 = vshll.u32 %v681, 16
      %v754 = vrot.slane %v752, 1
      %v755 = vsel %vm687, %v750, %v754
      %v756 = vshrl.u32 %v681, 16
      %v758 = vor.u32 %v756, %v754
      %v760 = vshll.u32 %v682, 16
      %v762 = vrot.slane %v760, 1
      %v763 = vsel %vm687, %v758, %v762
      %v764 = vshrl.u32 %v682, 16
      %v766 = vor.u32 %v764, %v762
      %v768 = vshll.u32 %v683, 16
      %v770 = vrot.slane %v768, 1
      %v771 = vsel %vm687, %v766, %v770
      %v772 = vshrl.u32 %v683, 16
      %v774 = vor.u32 %v772, %v770
      %v776 = vshll.u32 %v684, 16
      %v778 = vrot.slane %v776, 1
      %v779 = vsel %vm687, %v774, %v778
      %v780 = vshrl.u32 %v684, 16
      %v782 = vor.u32 %v780, %v778
      %v784 = vshll.u32 %v685, 16
      %v786 = vrot.slane %v784, 1
      %v787 = vsel %vm687, %v782, %v786
      %v788 = vshrl.u32 %v685, 16
      %v790 = vor.u32 %v788, %v786
      %v792 = vshll.u32 %v686, 16
      %v794 = vrot.slane %v792, 1
      %v795 = vsel %vm687, %v790, %v794
      %v796 = vshrl.u32 %v686, 16
      %v798 = vor.u32 %v796, %v794
      %v829 = vunpack.c.l.b16 %v601
      %v830 = vunpack.c.l.b16 %v602
      %v831 = vunpack.c.l.b16 %v603
      %v832 = vunpack.c.l.b16 %v604
      %v833 = vunpack.c.l.b16 %v605
      %v834 = vunpack.c.l.b16 %v606
      %v835 = vunpack.c.l.b16 %v607
      %v836 = vunpack.c.l.b16 %v608
      %v837 = vunpack.c.l.b16 %v609
      %v838 = vunpack.c.l.b16 %v610
      %v839 = vunpack.c.l.b16 %v611
      %v840 = vunpack.c.l.b16 %v612
      %v841 = vunpack.c.l.b16 %v613
      %v842 = vunpack.c.l.b16 %v614
      %v843 = vunpack.c.l.b16 %v615
      %v844 = vunpack.c.l.b16 %v616
      %v845 = vpack.c.b16 %v830, %v829
      %v846 = vpack.c.b16 %v832, %v831
      %v847 = vpack.c.b16 %v834, %v833
      %v848 = vpack.c.b16 %v836, %v835
      %v849 = vpack.c.b16 %v838, %v837
      %v850 = vpack.c.b16 %v840, %v839
      %v851 = vpack.c.b16 %v842, %v841
      %v852 = vpack.c.b16 %v844, %v843
      %861 = vmatprep.subr.bf16.mxu0 0
      %862 = vmatpush1.bf16.msra.mxu0 %v852
      %863 = vmatprep.subr.bf16.mxu0 0
      %864 = vmatpush1.bf16.msra.mxu0 %v851
      %865 = vmatprep.subr.bf16.mxu0 0
      %866 = vmatpush1.bf16.msra.mxu0 %v850
      %867 = vmatprep.subr.bf16.mxu0 0
      %868 = vmatpush1.bf16.msra.mxu0 %v849
      %869 = vmatprep.subr.bf16.mxu0 0
      %870 = vmatpush1.bf16.msra.mxu0 %v848
      %871 = vmatprep.subr.bf16.mxu0 0
      %872 = vmatpush1.bf16.msra.mxu0 %v847
      %873 = vmatprep.subr.bf16.mxu0 0
      %874 = vmatpush1.bf16.msra.mxu0 %v846
      %875 = vmatprep.subr.bf16.mxu0 0
      %876 = vmatpush1.bf16.msra.mxu0 %v845
      %877 = vmatprep.subr.bf16.mxu0 0
      %878 = vmatpush2.bf16.msra.mxu0 0
      %879 = vmatprep.subr.bf16.mxu0 0
      %880 = vmatpush2.bf16.msra.mxu0 0
      %881 = vmatprep.subr.bf16.mxu0 0
      %882 = vmatpush2.bf16.msra.mxu0 0
      %883 = vmatprep.subr.bf16.mxu0 0
      %884 = vmatpush2.bf16.msra.mxu0 0
      %885 = vmatprep.subr.bf16.mxu0 0
      %886 = vmatpush2.bf16.msra.mxu0 0
      %887 = vmatprep.subr.bf16.mxu0 0
      %888 = vmatpush2.bf16.msra.mxu0 0
      %889 = vmatprep.subr.bf16.mxu0 0
      %890 = vmatpush2.bf16.msra.mxu0 0
      %891 = vmatprep.subr.bf16.mxu0 0
      %892 = vmatpush2.bf16.msra.mxu0 0
      %893 = vmatprep.mubr.bf16.mxu0 0
      %894 = vmatmul.mubr.bf16.gmra.mxu0 %v699
      %v895 = vpop.f32.mrf.mxu0
      %v896 = vadd.f32 0.0, %v895
      %v897 = vpop.f32.mrf.mxu0
      %v898 = vpop.f32.mrf.mxu0
      %v899 = vadd.f32 0.0, %v898
      %v900 = vpop.f32.mrf.mxu0
      %901 = vmatprep.mubr.bf16.mxu0 0
      %902 = vmatmul.mubr.bf16.gmra.mxu0 %v707
      %v903 = vpop.f32.mrf.mxu0
      %v904 = vadd.f32 0.0, %v903
      %v905 = vpop.f32.mrf.mxu0
      %v906 = vpop.f32.mrf.mxu0
      %v907 = vadd.f32 0.0, %v906
      %v908 = vpop.f32.mrf.mxu0
      %909 = vmatprep.mubr.bf16.mxu0 0
      %910 = vmatmul.mubr.bf16.gmra.mxu0 %v715
      %v911 = vpop.f32.mrf.mxu0
      %v912 = vadd.f32 0.0, %v911
      %v913 = vpop.f32.mrf.mxu0
      %v914 = vpop.f32.mrf.mxu0
      %v915 = vadd.f32 0.0, %v914
      %v916 = vpop.f32.mrf.mxu0
      %917 = vmatprep.mubr.bf16.mxu0 0
      %918 = vmatmul.mubr.bf16.gmra.mxu0 %v723
      %v919 = vpop.f32.mrf.mxu0
      %v920 = vadd.f32 0.0, %v919
      %v921 = vpop.f32.mrf.mxu0
      %v922 = vpop.f32.mrf.mxu0
      %v923 = vadd.f32 0.0, %v922
      %v924 = vpop.f32.mrf.mxu0
      %925 = vmatprep.mubr.bf16.mxu0 0
      %926 = vmatmul.mubr.bf16.gmra.mxu0 %v731
      %v927 = vpop.f32.mrf.mxu0
      %v928 = vadd.f32 0.0, %v927
      %v929 = vpop.f32.mrf.mxu0
      %v930 = vpop.f32.mrf.mxu0
      %v931 = vadd.f32 0.0, %v930
      %v932 = vpop.f32.mrf.mxu0
      %933 = vmatprep.mubr.bf16.mxu0 0
      %934 = vmatmul.mubr.bf16.gmra.mxu0 %v739
      %v935 = vpop.f32.mrf.mxu0
      %v936 = vadd.f32 0.0, %v935
      %v937 = vpop.f32.mrf.mxu0
      %v938 = vpop.f32.mrf.mxu0
      %v939 = vadd.f32 0.0, %v938
      %v940 = vpop.f32.mrf.mxu0
      %941 = vmatprep.mubr.bf16.mxu0 0
      %942 = vmatmul.mubr.bf16.gmra.mxu0 %v747
      %v943 = vpop.f32.mrf.mxu0
      %v944 = vadd.f32 0.0, %v943
      %v945 = vpop.f32.mrf.mxu0
      %v946 = vpop.f32.mrf.mxu0
      %v947 = vadd.f32 0.0, %v946
      %v948 = vpop.f32.mrf.mxu0
      %949 = vmatprep.mubr.bf16.mxu0 0
      %950 = vmatmul.mubr.bf16.gmra.mxu0 %v755
      %v951 = vpop.f32.mrf.mxu0
      %v952 = vadd.f32 0.0, %v951
      %v953 = vpop.f32.mrf.mxu0
      %v954 = vpop.f32.mrf.mxu0
      %v955 = vadd.f32 0.0, %v954
      %v956 = vpop.f32.mrf.mxu0
      %957 = vmatprep.mubr.bf16.mxu0 0
      %958 = vmatmul.mubr.bf16.gmra.mxu0 %v763
      %v959 = vpop.f32.mrf.mxu0
      %v960 = vadd.f32 0.0, %v959
      %v961 = vpop.f32.mrf.mxu0
      %v962 = vpop.f32.mrf.mxu0
      %v963 = vadd.f32 0.0, %v962
      %v964 = vpop.f32.mrf.mxu0
      %965 = vmatprep.mubr.bf16.mxu0 0
      %966 = vmatmul.mubr.bf16.gmra.mxu0 %v771
      %v967 = vpop.f32.mrf.mxu0
      %v968 = vadd.f32 0.0, %v967
      %v969 = vpop.f32.mrf.mxu0
      %v970 = vpop.f32.mrf.mxu0
      %v971 = vadd.f32 0.0, %v970
      %v972 = vpop.f32.mrf.mxu0
      %973 = vmatprep.mubr.bf16.mxu0 0
      %974 = vmatmul.mubr.bf16.gmra.mxu0 %v779
      %v975 = vpop.f32.mrf.mxu0
      %v976 = vadd.f32 0.0, %v975
      %v977 = vpop.f32.mrf.mxu0
      %v978 = vpop.f32.mrf.mxu0
      %v979 = vadd.f32 0.0, %v978
      %v980 = vpop.f32.mrf.mxu0
      %981 = vmatprep.mubr.bf16.mxu0 0
      %982 = vmatmul.mubr.bf16.gmra.mxu0 %v787
      %v983 = vpop.f32.mrf.mxu0
      %v984 = vadd.f32 0.0, %v983
      %v985 = vpop.f32.mrf.mxu0
      %v986 = vpop.f32.mrf.mxu0
      %v987 = vadd.f32 0.0, %v986
      %v988 = vpop.f32.mrf.mxu0
      %989 = vmatprep.mubr.bf16.mxu0 0
      %990 = vmatmul.mubr.bf16.gmra.mxu0 %v795
      %v991 = vpop.f32.mrf.mxu0
      %v992 = vadd.f32 0.0, %v991
      %v993 = vpop.f32.mrf.mxu0
      %v994 = vpop.f32.mrf.mxu0
      %v995 = vadd.f32 0.0, %v994
      %v996 = vpop.f32.mrf.mxu0
      %997 = vmatprep.mubr.bf16.mxu0 0
      %998 = vmatmul.mubr.bf16.gmra.mxu0 %v798
      %v999 = vpop.f32.mrf.mxu0
      %v1000 = vadd.f32 0.0, %v999
      %v1001 = vpop.f32.mrf.mxu0
      %v1002 = vpop.f32.mrf.mxu0
      %v1003 = vadd.f32 0.0, %v1002
      %v1004 = vpop.f32.mrf.mxu0
      %1005 = vdwg.mxu0
      %v1006 = vld [vmem:[#allocation2] sm:$0xff]
      %v1007 = vld [vmem:[#allocation2 + $0x8] sm:$0xff]
      %v1008 = vld [vmem:[#allocation2 + $0x10] sm:$0xff]
      %v1009 = vld [vmem:[#allocation2 + $0x18] sm:$0xff]
      %v1010 = vld [vmem:[#allocation2 + $0x20] sm:$0xff]
      %v1011 = vld [vmem:[#allocation2 + $0x28] sm:$0xff]
      %v1012 = vld [vmem:[#allocation2 + $0x30] sm:$0xff]
      %v1013 = vld [vmem:[#allocation2 + $0x38] sm:$0xff]
      %v1014 = vld [vmem:[#allocation2 + $0x40] sm:$0xff]
      %v1015 = vld [vmem:[#allocation2 + $0x48] sm:$0xff]
      %v1016 = vld [vmem:[#allocation2 + $0x50] sm:$0xff]
      %v1017 = vld [vmem:[#allocation2 + $0x58] sm:$0xff]
      %v1018 = vld [vmem:[#allocation2 + $0x60] sm:$0xff]
      %v1019 = vld [vmem:[#allocation2 + $0x68] sm:$0xff]
      %v1020 = vld [vmem:[#allocation2 + $0x70] sm:$0xff]
      %v1021 = vld [vmem:[#allocation2 + $0x78] sm:$0xff]
      %v1022 = vld [vmem:[#allocation2 + $0x80] sm:$0xff]
      %v1023 = vld [vmem:[#allocation2 + $0x88] sm:$0xff]
      %v1024 = vld [vmem:[#allocation2 + $0x90] sm:$0xff]
      %v1025 = vld [vmem:[#allocation2 + $0x98] sm:$0xff]
      %v1026 = vld [vmem:[#allocation2 + $0xa0] sm:$0xff]
      %v1027 = vld [vmem:[#allocation2 + $0xa8] sm:$0xff]
      %v1028 = vld [vmem:[#allocation2 + $0xb0] sm:$0xff]
      %v1029 = vld [vmem:[#allocation2 + $0xb8] sm:$0xff]
      %v1030 = vld [vmem:[#allocation2 + $0xc0] sm:$0xff]
      %v1031 = vld [vmem:[#allocation2 + $0xc8] sm:$0xff]
      %v1032 = vld [vmem:[#allocation2 + $0xd0] sm:$0xff]
      %v1033 = vld [vmem:[#allocation2 + $0xd8] sm:$0x3f]
      %v1034 = vadd.f32 %v1006, %v896
      %v1035 = vadd.f32 %v1007, %v899
      %v1036 = vadd.f32 %v1008, %v904
      %v1037 = vadd.f32 %v1009, %v907
      %v1038 = vadd.f32 %v1010, %v912
      %v1039 = vadd.f32 %v1011, %v915
      %v1040 = vadd.f32 %v1012, %v920
      %v1041 = vadd.f32 %v1013, %v923
      %v1042 = vadd.f32 %v1014, %v928
      %v1043 = vadd.f32 %v1015, %v931
      %v1044 = vadd.f32 %v1016, %v936
      %v1045 = vadd.f32 %v1017, %v939
      %v1046 = vadd.f32 %v1018, %v944
      %v1047 = vadd.f32 %v1019, %v947
      %v1048 = vadd.f32 %v1020, %v952
      %v1049 = vadd.f32 %v1021, %v955
      %v1050 = vadd.f32 %v1022, %v960
      %v1051 = vadd.f32 %v1023, %v963
      %v1052 = vadd.f32 %v1024, %v968
      %v1053 = vadd.f32 %v1025, %v971
      %v1054 = vadd.f32 %v1026, %v976
      %v1055 = vadd.f32 %v1027, %v979
      %v1056 = vadd.f32 %v1028, %v984
      %v1057 = vadd.f32 %v1029, %v987
      %v1058 = vadd.f32 %v1030, %v992
      %v1059 = vadd.f32 %v1031, %v995
      %v1060 = vadd.f32 %v1032, %v1000
      %v1061 = vadd.f32 %v1033, %v1003
      %1062 = vst [vmem:[#allocation2] sm:$0xff] %v1034
      %1063 = vst [vmem:[#allocation2 + $0x8] sm:$0xff] %v1035
      %1064 = vst [vmem:[#allocation2 + $0x10] sm:$0xff] %v1036
      %1065 = vst [vmem:[#allocation2 + $0x18] sm:$0xff] %v1037
      %1066 = vst [vmem:[#allocation2 + $0x20] sm:$0xff] %v1038
      %1067 = vst [vmem:[#allocation2 + $0x28] sm:$0xff] %v1039
      %1068 = vst [vmem:[#allocation2 + $0x30] sm:$0xff] %v1040
      %1069 = vst [vmem:[#allocation2 + $0x38] sm:$0xff] %v1041
      %1070 = vst [vmem:[#allocation2 + $0x40] sm:$0xff] %v1042
      %1071 = vst [vmem:[#allocation2 + $0x48] sm:$0xff] %v1043
      %1072 = vst [vmem:[#allocation2 + $0x50] sm:$0xff] %v1044
      %1073 = vst [vmem:[#allocation2 + $0x58] sm:$0xff] %v1045
      %1074 = vst [vmem:[#allocation2 + $0x60] sm:$0xff] %v1046
      %1075 = vst [vmem:[#allocation2 + $0x68] sm:$0xff] %v1047
      %1076 = vst [vmem:[#allocation2 + $0x70] sm:$0xff] %v1048
      %1077 = vst [vmem:[#allocation2 + $0x78] sm:$0xff] %v1049
      %1078 = vst [vmem:[#allocation2 + $0x80] sm:$0xff] %v1050
      %1079 = vst [vmem:[#allocation2 + $0x88] sm:$0xff] %v1051
      %1080 = vst [vmem:[#allocation2 + $0x90] sm:$0xff] %v1052
      %1081 = vst [vmem:[#allocation2 + $0x98] sm:$0xff] %v1053
      %1082 = vst [vmem:[#allocation2 + $0xa0] sm:$0xff] %v1054
      %1083 = vst [vmem:[#allocation2 + $0xa8] sm:$0xff] %v1055
      %1084 = vst [vmem:[#allocation2 + $0xb0] sm:$0xff] %v1056
      %1085 = vst [vmem:[#allocation2 + $0xb8] sm:$0xff] %v1057
      %1086 = vst [vmem:[#allocation2 + $0xc0] sm:$0xff] %v1058
      %1087 = vst [vmem:[#allocation2 + $0xc8] sm:$0xff] %v1059
      %1088 = vst [vmem:[#allocation2 + $0xd0] sm:$0xff] %v1060
      %1089 = vst [vmem:[#allocation2 + $0xd8] sm:$0x3f] %v1061
      %v1090 = vld [vmem:[%s206] sm:$0xe]
      %v1091 = vld [vmem:[%s206 + $0x4] sm:$0xf]
      %v1092 = vld [vmem:[%s206 + $0x8] sm:$0xf]
      %v1093 = vld [vmem:[%s206 + $0xc] sm:$0xf]
      %v1094 = vld [vmem:[%s206 + $0x10] sm:$0xf]
      %v1095 = vld [vmem:[%s206 + $0x14] sm:$0xf]
      %v1096 = vld [vmem:[%s206 + $0x18] sm:$0xf]
      %v1097 = vld [vmem:[%s206 + $0x1c] sm:$0xf]
      %v1098 = vld [vmem:[%s206 + $0x20] sm:$0xf]
      %v1099 = vld [vmem:[%s206 + $0x24] sm:$0xf]
      %v1100 = vld [vmem:[%s206 + $0x28] sm:$0xf]
      %v1101 = vld [vmem:[%s206 + $0x2c] sm:$0xf]
      %v1102 = vld [vmem:[%s206 + $0x30] sm:$0xf]
      %v1103 = vld [vmem:[%s206 + $0x34] sm:$0xf]
      %v1104 = vld [vmem:[%s206 + $0x38] sm:$0xf]
      %v1105 = vld [vmem:[%s206 + $0x3c] sm:$0xf]
      %v1106 = vld [vmem:[%s206 + $0x40] sm:$0xf]
      %v1107 = vld [vmem:[%s206 + $0x44] sm:$0xf]
      %v1108 = vld [vmem:[%s206 + $0x48] sm:$0xf]
      %v1109 = vld [vmem:[%s206 + $0x4c] sm:$0xf]
      %v1110 = vld [vmem:[%s206 + $0x50] sm:$0xf]
      %v1111 = vld [vmem:[%s206 + $0x54] sm:$0xf]
      %v1112 = vld [vmem:[%s206 + $0x58] sm:$0xf]
      %v1113 = vld [vmem:[%s206 + $0x5c] sm:$0xf]
      %v1114 = vld [vmem:[%s206 + $0x60] sm:$0xf]
      %v1115 = vld [vmem:[%s206 + $0x64] sm:$0xf]
      %v1116 = vld [vmem:[%s206 + $0x68] sm:$0xf]
      %v1117 = vld [vmem:[%s206 + $0x6c] sm:$0xf]
      %s1118 = scalar_lea.vmem %s210, 128
      %v1119 = vld [vmem:[%s1118] sm:$0xf]
      %v1120 = vld [vmem:[%s1118 + $0x4] sm:$0xf]
      %v1121 = vld [vmem:[%s1118 + $0x8] sm:$0xf]
      %v1122 = vld [vmem:[%s1118 + $0xc] sm:$0xf]
      %v1123 = vld [vmem:[%s1118 + $0x10] sm:$0xf]
      %v1124 = vld [vmem:[%s1118 + $0x14] sm:$0xf]
      %v1125 = vld [vmem:[%s1118 + $0x18] sm:$0xf]
      %v1126 = vld [vmem:[%s1118 + $0x1c] sm:$0xf]
      %v1127 = vld [vmem:[%s1118 + $0x20] sm:$0xf]
      %v1128 = vld [vmem:[%s1118 + $0x24] sm:$0xf]
      %v1129 = vld [vmem:[%s1118 + $0x28] sm:$0xf]
      %v1130 = vld [vmem:[%s1118 + $0x2c] sm:$0xf]
      %v1131 = vld [vmem:[%s1118 + $0x30] sm:$0xf]
      %v1132 = vld [vmem:[%s1118 + $0x34] sm:$0xf]
      %v1133 = vld [vmem:[%s1118 + $0x38] sm:$0xf]
      %v1134 = vld [vmem:[%s1118 + $0x3c] sm:$0xf]
      %v1163 = vunpack.c.l.b16 %v1090
      %v1164 = vunpack.c.l.b16 %v1091
      %v1165 = vunpack.c.l.b16 %v1092
      %v1166 = vunpack.c.l.b16 %v1093
      %v1167 = vunpack.c.l.b16 %v1094
      %v1168 = vunpack.c.l.b16 %v1095
      %v1169 = vunpack.c.l.b16 %v1096
      %v1170 = vunpack.c.l.b16 %v1097
      %v1171 = vunpack.c.l.b16 %v1098
      %v1172 = vunpack.c.l.b16 %v1099
      %v1173 = vunpack.c.l.b16 %v1100
      %v1174 = vunpack.c.l.b16 %v1101
      %v1175 = vunpack.c.l.b16 %v1102
      %v1176 = vunpack.c.l.b16 %v1103
      %v1177 = vunpack.c.l.b16 %v1104
      %v1178 = vunpack.c.l.b16 %v1105
      %v1179 = vunpack.c.l.b16 %v1106
      %v1180 = vunpack.c.l.b16 %v1107
      %v1181 = vunpack.c.l.b16 %v1108
      %v1182 = vunpack.c.l.b16 %v1109
      %v1183 = vunpack.c.l.b16 %v1110
      %v1184 = vunpack.c.l.b16 %v1111
      %v1185 = vunpack.c.l.b16 %v1112
      %v1186 = vunpack.c.l.b16 %v1113
      %v1187 = vunpack.c.l.b16 %v1114
      %v1188 = vunpack.c.l.b16 %v1115
      %v1189 = vunpack.c.l.b16 %v1116
      %v1190 = vunpack.c.l.b16 %v1117
      %v1191 = vpack.c.b16 %v1164, %v1163
      %v1192 = vpack.c.b16 %v1166, %v1165
      %v1193 = vpack.c.b16 %v1168, %v1167
      %v1194 = vpack.c.b16 %v1170, %v1169
      %v1195 = vpack.c.b16 %v1172, %v1171
      %v1196 = vpack.c.b16 %v1174, %v1173
      %v1197 = vpack.c.b16 %v1176, %v1175
      %v1198 = vpack.c.b16 %v1178, %v1177
      %v1199 = vpack.c.b16 %v1180, %v1179
      %v1200 = vpack.c.b16 %v1182, %v1181
      %v1201 = vpack.c.b16 %v1184, %v1183
      %v1202 = vpack.c.b16 %v1186, %v1185
      %v1203 = vpack.c.b16 %v1188, %v1187
      %v1204 = vpack.c.b16 %v1190, %v1189
      %vm1205 = vcmask 1046528
      %v1206 = vrot.slane %v1191, 1
      %v1207 = vrot.slane %v1192, 1
      %v1208 = vsel %vm1205, %v1206, %v1207
      %v1209 = vrot.slane %v1193, 1
      %v1210 = vsel %vm1205, %v1207, %v1209
      %v1211 = vrot.slane %v1194, 1
      %v1212 = vsel %vm1205, %v1209, %v1211
      %v1213 = vrot.slane %v1195, 1
      %v1214 = vsel %vm1205, %v1211, %v1213
      %v1215 = vrot.slane %v1196, 1
      %v1216 = vsel %vm1205, %v1213, %v1215
      %v1217 = vrot.slane %v1197, 1
      %v1218 = vsel %vm1205, %v1215, %v1217
      %v1219 = vrot.slane %v1198, 1
      %v1220 = vsel %vm1205, %v1217, %v1219
      %v1221 = vrot.slane %v1199, 1
      %v1222 = vsel %vm1205, %v1219, %v1221
      %v1223 = vrot.slane %v1200, 1
      %v1224 = vsel %vm1205, %v1221, %v1223
      %v1225 = vrot.slane %v1201, 1
      %v1226 = vsel %vm1205, %v1223, %v1225
      %v1227 = vrot.slane %v1202, 1
      %v1228 = vsel %vm1205, %v1225, %v1227
      %v1229 = vrot.slane %v1203, 1
      %v1230 = vsel %vm1205, %v1227, %v1229
      %v1231 = vrot.slane %v1204, 1
      %v1232 = vsel %vm1205, %v1229, %v1231
      %v1263 = vunpack.c.l.b16 %v1119
      %v1264 = vunpack.c.l.b16 %v1120
      %v1265 = vunpack.c.l.b16 %v1121
      %v1266 = vunpack.c.l.b16 %v1122
      %v1267 = vunpack.c.l.b16 %v1123
      %v1268 = vunpack.c.l.b16 %v1124
      %v1269 = vunpack.c.l.b16 %v1125
      %v1270 = vunpack.c.l.b16 %v1126
      %v1271 = vunpack.c.l.b16 %v1127
      %v1272 = vunpack.c.l.b16 %v1128
      %v1273 = vunpack.c.l.b16 %v1129
      %v1274 = vunpack.c.l.b16 %v1130
      %v1275 = vunpack.c.l.b16 %v1131
      %v1276 = vunpack.c.l.b16 %v1132
      %v1277 = vunpack.c.l.b16 %v1133
      %v1278 = vunpack.c.l.b16 %v1134
      %v1279 = vpack.c.b16 %v1264, %v1263
      %v1280 = vpack.c.b16 %v1266, %v1265
      %v1281 = vpack.c.b16 %v1268, %v1267
      %v1282 = vpack.c.b16 %v1270, %v1269
      %v1283 = vpack.c.b16 %v1272, %v1271
      %v1284 = vpack.c.b16 %v1274, %v1273
      %v1285 = vpack.c.b16 %v1276, %v1275
      %v1286 = vpack.c.b16 %v1278, %v1277
      %1295 = vmatprep.subr.bf16.mxu0 0
      %1296 = vmatpush1.bf16.msra.mxu0 %v1286
      %1297 = vmatprep.subr.bf16.mxu0 0
      %1298 = vmatpush1.bf16.msra.mxu0 %v1285
      %1299 = vmatprep.subr.bf16.mxu0 0
      %1300 = vmatpush1.bf16.msra.mxu0 %v1284
      %1301 = vmatprep.subr.bf16.mxu0 0
      %1302 = vmatpush1.bf16.msra.mxu0 %v1283
      %1303 = vmatprep.subr.bf16.mxu0 0
      %1304 = vmatpush1.bf16.msra.mxu0 %v1282
      %1305 = vmatprep.subr.bf16.mxu0 0
      %1306 = vmatpush1.bf16.msra.mxu0 %v1281
      %1307 = vmatprep.subr.bf16.mxu0 0
      %1308 = vmatpush1.bf16.msra.mxu0 %v1280
      %1309 = vmatprep.subr.bf16.mxu0 0
      %1310 = vmatpush1.bf16.msra.mxu0 %v1279
      %1311 = vmatprep.subr.bf16.mxu0 0
      %1312 = vmatpush2.bf16.msra.mxu0 0
      %1313 = vmatprep.subr.bf16.mxu0 0
      %1314 = vmatpush2.bf16.msra.mxu0 0
      %1315 = vmatprep.subr.bf16.mxu0 0
      %1316 = vmatpush2.bf16.msra.mxu0 0
      %1317 = vmatprep.subr.bf16.mxu0 0
      %1318 = vmatpush2.bf16.msra.mxu0 0
      %1319 = vmatprep.subr.bf16.mxu0 0
      %1320 = vmatpush2.bf16.msra.mxu0 0
      %1321 = vmatprep.subr.bf16.mxu0 0
      %1322 = vmatpush2.bf16.msra.mxu0 0
      %1323 = vmatprep.subr.bf16.mxu0 0
      %1324 = vmatpush2.bf16.msra.mxu0 0
      %1325 = vmatprep.subr.bf16.mxu0 0
      %1326 = vmatpush2.bf16.msra.mxu0 0
      %1327 = vmatprep.mubr.bf16.mxu0 0
      %1328 = vmatmul.mubr.bf16.gmra.mxu0 %v1208
      %v1329 = vpop.f32.mrf.mxu0
      %v1330 = vadd.f32 0.0, %v1329
      %v1331 = vpop.f32.mrf.mxu0
      %v1332 = vpop.f32.mrf.mxu0
      %v1333 = vadd.f32 0.0, %v1332
      %v1334 = vpop.f32.mrf.mxu0
      %1335 = vmatprep.mubr.bf16.mxu0 0
      %1336 = vmatmul.mubr.bf16.gmra.mxu0 %v1210
      %v1337 = vpop.f32.mrf.mxu0
      %v1338 = vadd.f32 0.0, %v1337
      %v1339 = vpop.f32.mrf.mxu0
      %v1340 = vpop.f32.mrf.mxu0
      %v1341 = vadd.f32 0.0, %v1340
      %v1342 = vpop.f32.mrf.mxu0
      %1343 = vmatprep.mubr.bf16.mxu0 0
      %1344 = vmatmul.mubr.bf16.gmra.mxu0 %v1212
      %v1345 = vpop.f32.mrf.mxu0
      %v1346 = vadd.f32 0.0, %v1345
      %v1347 = vpop.f32.mrf.mxu0
      %v1348 = vpop.f32.mrf.mxu0
      %v1349 = vadd.f32 0.0, %v1348
      %v1350 = vpop.f32.mrf.mxu0
      %1351 = vmatprep.mubr.bf16.mxu0 0
      %1352 = vmatmul.mubr.bf16.gmra.mxu0 %v1214
      %v1353 = vpop.f32.mrf.mxu0
      %v1354 = vadd.f32 0.0, %v1353
      %v1355 = vpop.f32.mrf.mxu0
      %v1356 = vpop.f32.mrf.mxu0
      %v1357 = vadd.f32 0.0, %v1356
      %v1358 = vpop.f32.mrf.mxu0
      %1359 = vmatprep.mubr.bf16.mxu0 0
      %1360 = vmatmul.mubr.bf16.gmra.mxu0 %v1216
      %v1361 = vpop.f32.mrf.mxu0
      %v1362 = vadd.f32 0.0, %v1361
      %v1363 = vpop.f32.mrf.mxu0
      %v1364 = vpop.f32.mrf.mxu0
      %v1365 = vadd.f32 0.0, %v1364
      %v1366 = vpop.f32.mrf.mxu0
      %1367 = vmatprep.mubr.bf16.mxu0 0
      %1368 = vmatmul.mubr.bf16.gmra.mxu0 %v1218
      %v1369 = vpop.f32.mrf.mxu0
      %v1370 = vadd.f32 0.0, %v1369
      %v1371 = vpop.f32.mrf.mxu0
      %v1372 = vpop.f32.mrf.mxu0
      %v1373 = vadd.f32 0.0, %v1372
      %v1374 = vpop.f32.mrf.mxu0
      %1375 = vmatprep.mubr.bf16.mxu0 0
      %1376 = vmatmul.mubr.bf16.gmra.mxu0 %v1220
      %v1377 = vpop.f32.mrf.mxu0
      %v1378 = vadd.f32 0.0, %v1377
      %v1379 = vpop.f32.mrf.mxu0
      %v1380 = vpop.f32.mrf.mxu0
      %v1381 = vadd.f32 0.0, %v1380
      %v1382 = vpop.f32.mrf.mxu0
      %1383 = vmatprep.mubr.bf16.mxu0 0
      %1384 = vmatmul.mubr.bf16.gmra.mxu0 %v1222
      %v1385 = vpop.f32.mrf.mxu0
      %v1386 = vadd.f32 0.0, %v1385
      %v1387 = vpop.f32.mrf.mxu0
      %v1388 = vpop.f32.mrf.mxu0
      %v1389 = vadd.f32 0.0, %v1388
      %v1390 = vpop.f32.mrf.mxu0
      %1391 = vmatprep.mubr.bf16.mxu0 0
      %1392 = vmatmul.mubr.bf16.gmra.mxu0 %v1224
      %v1393 = vpop.f32.mrf.mxu0
      %v1394 = vadd.f32 0.0, %v1393
      %v1395 = vpop.f32.mrf.mxu0
      %v1396 = vpop.f32.mrf.mxu0
      %v1397 = vadd.f32 0.0, %v1396
      %v1398 = vpop.f32.mrf.mxu0
      %1399 = vmatprep.mubr.bf16.mxu0 0
      %1400 = vmatmul.mubr.bf16.gmra.mxu0 %v1226
      %v1401 = vpop.f32.mrf.mxu0
      %v1402 = vadd.f32 0.0, %v1401
      %v1403 = vpop.f32.mrf.mxu0
      %v1404 = vpop.f32.mrf.mxu0
      %v1405 = vadd.f32 0.0, %v1404
      %v1406 = vpop.f32.mrf.mxu0
      %1407 = vmatprep.mubr.bf16.mxu0 0
      %1408 = vmatmul.mubr.bf16.gmra.mxu0 %v1228
      %v1409 = vpop.f32.mrf.mxu0
      %v1410 = vadd.f32 0.0, %v1409
      %v1411 = vpop.f32.mrf.mxu0
      %v1412 = vpop.f32.mrf.mxu0
      %v1413 = vadd.f32 0.0, %v1412
      %v1414 = vpop.f32.mrf.mxu0
      %1415 = vmatprep.mubr.bf16.mxu0 0
      %1416 = vmatmul.mubr.bf16.gmra.mxu0 %v1230
      %v1417 = vpop.f32.mrf.mxu0
      %v1418 = vadd.f32 0.0, %v1417
      %v1419 = vpop.f32.mrf.mxu0
      %v1420 = vpop.f32.mrf.mxu0
      %v1421 = vadd.f32 0.0, %v1420
      %v1422 = vpop.f32.mrf.mxu0
      %1423 = vmatprep.mubr.bf16.mxu0 0
      %1424 = vmatmul.mubr.bf16.gmra.mxu0 %v1232
      %v1425 = vpop.f32.mrf.mxu0
      %v1426 = vadd.f32 0.0, %v1425
      %v1427 = vpop.f32.mrf.mxu0
      %v1428 = vpop.f32.mrf.mxu0
      %v1429 = vadd.f32 0.0, %v1428
      %v1430 = vpop.f32.mrf.mxu0
      %1431 = vmatprep.mubr.bf16.mxu0 0
      %1432 = vmatmul.mubr.bf16.gmra.mxu0 %v1231
      %v1433 = vpop.f32.mrf.mxu0
      %v1434 = vadd.f32 0.0, %v1433
      %v1435 = vpop.f32.mrf.mxu0
      %v1436 = vpop.f32.mrf.mxu0
      %v1437 = vadd.f32 0.0, %v1436
      %v1438 = vpop.f32.mrf.mxu0
      %1439 = vdwg.mxu0
      %v1440 = vld [vmem:[#allocation2] sm:$0xff]
      %v1441 = vld [vmem:[#allocation2 + $0x8] sm:$0xff]
      %v1442 = vld [vmem:[#allocation2 + $0x10] sm:$0xff]
      %v1443 = vld [vmem:[#allocation2 + $0x18] sm:$0xff]
      %v1444 = vld [vmem:[#allocation2 + $0x20] sm:$0xff]
      %v1445 = vld [vmem:[#allocation2 + $0x28] sm:$0xff]
      %v1446 = vld [vmem:[#allocation2 + $0x30] sm:$0xff]
      %v1447 = vld [vmem:[#allocation2 + $0x38] sm:$0xff]
      %v1448 = vld [vmem:[#allocation2 + $0x40] sm:$0xff]
      %v1449 = vld [vmem:[#allocation2 + $0x48] sm:$0xff]
      %v1450 = vld [vmem:[#allocation2 + $0x50] sm:$0xff]
      %v1451 = vld [vmem:[#allocation2 + $0x58] sm:$0xff]
      %v1452 = vld [vmem:[#allocation2 + $0x60] sm:$0xff]
      %v1453 = vld [vmem:[#allocation2 + $0x68] sm:$0xff]
      %v1454 = vld [vmem:[#allocation2 + $0x70] sm:$0xff]
      %v1455 = vld [vmem:[#allocation2 + $0x78] sm:$0xff]
      %v1456 = vld [vmem:[#allocation2 + $0x80] sm:$0xff]
      %v1457 = vld [vmem:[#allocation2 + $0x88] sm:$0xff]
      %v1458 = vld [vmem:[#allocation2 + $0x90] sm:$0xff]
      %v1459 = vld [vmem:[#allocation2 + $0x98] sm:$0xff]
      %v1460 = vld [vmem:[#allocation2 + $0xa0] sm:$0xff]
      %v1461 = vld [vmem:[#allocation2 + $0xa8] sm:$0xff]
      %v1462 = vld [vmem:[#allocation2 + $0xb0] sm:$0xff]
      %v1463 = vld [vmem:[#allocation2 + $0xb8] sm:$0xff]
      %v1464 = vld [vmem:[#allocation2 + $0xc0] sm:$0xff]
      %v1465 = vld [vmem:[#allocation2 + $0xc8] sm:$0xff]
      %v1466 = vld [vmem:[#allocation2 + $0xd0] sm:$0xff]
      %v1467 = vld [vmem:[#allocation2 + $0xd8] sm:$0x3f]
      %v1468 = vadd.f32 %v1440, %v1330
      %v1469 = vadd.f32 %v1441, %v1333
      %v1470 = vadd.f32 %v1442, %v1338
      %v1471 = vadd.f32 %v1443, %v1341
      %v1472 = vadd.f32 %v1444, %v1346
      %v1473 = vadd.f32 %v1445, %v1349
      %v1474 = vadd.f32 %v1446, %v1354
      %v1475 = vadd.f32 %v1447, %v1357
      %v1476 = vadd.f32 %v1448, %v1362
      %v1477 = vadd.f32 %v1449, %v1365
      %v1478 = vadd.f32 %v1450, %v1370
      %v1479 = vadd.f32 %v1451, %v1373
      %v1480 = vadd.f32 %v1452, %v1378
      %v1481 = vadd.f32 %v1453, %v1381
      %v1482 = vadd.f32 %v1454, %v1386
      %v1483 = vadd.f32 %v1455, %v1389
      %v1484 = vadd.f32 %v1456, %v1394
      %v1485 = vadd.f32 %v1457, %v1397
      %v1486 = vadd.f32 %v1458, %v1402
      %v1487 = vadd.f32 %v1459, %v1405
      %v1488 = vadd.f32 %v1460, %v1410
      %v1489 = vadd.f32 %v1461, %v1413
      %v1490 = vadd.f32 %v1462, %v1418
      %v1491 = vadd.f32 %v1463, %v1421
      %v1492 = vadd.f32 %v1464, %v1426
      %v1493 = vadd.f32 %v1465, %v1429
      %v1494 = vadd.f32 %v1466, %v1434
      %v1495 = vadd.f32 %v1467, %v1437
      %1496 = vst [vmem:[#allocation2] sm:$0xff] %v1468
      %1497 = vst [vmem:[#allocation2 + $0x8] sm:$0xff] %v1469
      %1498 = vst [vmem:[#allocation2 + $0x10] sm:$0xff] %v1470
      %1499 = vst [vmem:[#allocation2 + $0x18] sm:$0xff] %v1471
      %1500 = vst [vmem:[#allocation2 + $0x20] sm:$0xff] %v1472
      %1501 = vst [vmem:[#allocation2 + $0x28] sm:$0xff] %v1473
      %1502 = vst [vmem:[#allocation2 + $0x30] sm:$0xff] %v1474
      %1503 = vst [vmem:[#allocation2 + $0x38] sm:$0xff] %v1475
      %1504 = vst [vmem:[#allocation2 + $0x40] sm:$0xff] %v1476
      %1505 = vst [vmem:[#allocation2 + $0x48] sm:$0xff] %v1477
      %1506 = vst [vmem:[#allocation2 + $0x50] sm:$0xff] %v1478
      %1507 = vst [vmem:[#allocation2 + $0x58] sm:$0xff] %v1479
      %1508 = vst [vmem:[#allocation2 + $0x60] sm:$0xff] %v1480
      %1509 = vst [vmem:[#allocation2 + $0x68] sm:$0xff] %v1481
      %1510 = vst [vmem:[#allocation2 + $0x70] sm:$0xff] %v1482
      %1511 = vst [vmem:[#allocation2 + $0x78] sm:$0xff] %v1483
      %1512 = vst [vmem:[#allocation2 + $0x80] sm:$0xff] %v1484
      %1513 = vst [vmem:[#allocation2 + $0x88] sm:$0xff] %v1485
      %1514 = vst [vmem:[#allocation2 + $0x90] sm:$0xff] %v1486
      %1515 = vst [vmem:[#allocation2 + $0x98] sm:$0xff] %v1487
      %1516 = vst [vmem:[#allocation2 + $0xa0] sm:$0xff] %v1488
      %1517 = vst [vmem:[#allocation2 + $0xa8] sm:$0xff] %v1489
      %1518 = vst [vmem:[#allocation2 + $0xb0] sm:$0xff] %v1490
      %1519 = vst [vmem:[#allocation2 + $0xb8] sm:$0xff] %v1491
      %1520 = vst [vmem:[#allocation2 + $0xc0] sm:$0xff] %v1492
      %1521 = vst [vmem:[#allocation2 + $0xc8] sm:$0xff] %v1493
      %1522 = vst [vmem:[#allocation2 + $0xd0] sm:$0xff] %v1494
      %1523 = vst [vmem:[#allocation2 + $0xd8] sm:$0x3f] %v1495
      %v1524 = vld [vmem:[%s206 + $0x8] sm:$0xf]
      %v1525 = vld [vmem:[%s206 + $0xc] sm:$0xf]
      %v1526 = vld [vmem:[%s206 + $0x10] sm:$0xf]
      %v1527 = vld [vmem:[%s206 + $0x14] sm:$0xf]
      %v1528 = vld [vmem:[%s206 + $0x18] sm:$0xf]
      %v1529 = vld [vmem:[%s206 + $0x1c] sm:$0xf]
      %v1530 = vld [vmem:[%s206 + $0x20] sm:$0xf]
      %v1531 = vld [vmem:[%s206 + $0x24] sm:$0xf]
      %v1532 = vld [vmem:[%s206 + $0x28] sm:$0xf]
      %v1533 = vld [vmem:[%s206 + $0x2c] sm:$0xf]
      %v1534 = vld [vmem:[%s206 + $0x30] sm:$0xf]
      %v1535 = vld [vmem:[%s206 + $0x34] sm:$0xf]
      %v1536 = vld [vmem:[%s206 + $0x38] sm:$0xf]
      %v1537 = vld [vmem:[%s206 + $0x3c] sm:$0xf]
      %v1538 = vld [vmem:[%s206 + $0x40] sm:$0xf]
      %v1539 = vld [vmem:[%s206 + $0x44] sm:$0xf]
      %v1540 = vld [vmem:[%s206 + $0x48] sm:$0xf]
      %v1541 = vld [vmem:[%s206 + $0x4c] sm:$0xf]
      %v1542 = vld [vmem:[%s206 + $0x50] sm:$0xf]
      %v1543 = vld [vmem:[%s206 + $0x54] sm:$0xf]
      %v1544 = vld [vmem:[%s206 + $0x58] sm:$0xf]
      %v1545 = vld [vmem:[%s206 + $0x5c] sm:$0xf]
      %v1546 = vld [vmem:[%s206 + $0x60] sm:$0xf]
      %v1547 = vld [vmem:[%s206 + $0x64] sm:$0xf]
      %v1548 = vld [vmem:[%s206 + $0x68] sm:$0xf]
      %v1549 = vld [vmem:[%s206 + $0x6c] sm:$0xf]
      %v1550 = vld [vmem:[%s206 + $0x70] sm:$0xf]
      %v1551 = vld [vmem:[%s206 + $0x74] sm:$0x7]
      %s1552 = scalar_lea.vmem %s210, 192
      %v1553 = vld [vmem:[%s1552] sm:$0xf]
      %v1554 = vld [vmem:[%s1552 + $0x4] sm:$0xf]
      %v1555 = vld [vmem:[%s1552 + $0x8] sm:$0xf]
      %v1556 = vld [vmem:[%s1552 + $0xc] sm:$0xf]
      %v1557 = vld [vmem:[%s1552 + $0x10] sm:$0xf]
      %v1558 = vld [vmem:[%s1552 + $0x14] sm:$0xf]
      %v1559 = vld [vmem:[%s1552 + $0x18] sm:$0xf]
      %v1560 = vld [vmem:[%s1552 + $0x1c] sm:$0xf]
      %v1561 = vld [vmem:[%s1552 + $0x20] sm:$0xf]
      %v1562 = vld [vmem:[%s1552 + $0x24] sm:$0xf]
      %v1563 = vld [vmem:[%s1552 + $0x28] sm:$0xf]
      %v1564 = vld [vmem:[%s1552 + $0x2c] sm:$0xf]
      %v1565 = vld [vmem:[%s1552 + $0x30] sm:$0xf]
      %v1566 = vld [vmem:[%s1552 + $0x34] sm:$0xf]
      %v1567 = vld [vmem:[%s1552 + $0x38] sm:$0xf]
      %v1568 = vld [vmem:[%s1552 + $0x3c] sm:$0xf]
      %v1597 = vunpack.c.l.b16 %v1524
      %v1598 = vunpack.c.l.b16 %v1525
      %v1599 = vunpack.c.l.b16 %v1526
      %v1600 = vunpack.c.l.b16 %v1527
      %v1601 = vunpack.c.l.b16 %v1528
      %v1602 = vunpack.c.l.b16 %v1529
      %v1603 = vunpack.c.l.b16 %v1530
      %v1604 = vunpack.c.l.b16 %v1531
      %v1605 = vunpack.c.l.b16 %v1532
      %v1606 = vunpack.c.l.b16 %v1533
      %v1607 = vunpack.c.l.b16 %v1534
      %v1608 = vunpack.c.l.b16 %v1535
      %v1609 = vunpack.c.l.b16 %v1536
      %v1610 = vunpack.c.l.b16 %v1537
      %v1611 = vunpack.c.l.b16 %v1538
      %v1612 = vunpack.c.l.b16 %v1539
      %v1613 = vunpack.c.l.b16 %v1540
      %v1614 = vunpack.c.l.b16 %v1541
      %v1615 = vunpack.c.l.b16 %v1542
      %v1616 = vunpack.c.l.b16 %v1543
      %v1617 = vunpack.c.l.b16 %v1544
      %v1618 = vunpack.c.l.b16 %v1545
      %v1619 = vunpack.c.l.b16 %v1546
      %v1620 = vunpack.c.l.b16 %v1547
      %v1621 = vunpack.c.l.b16 %v1548
      %v1622 = vunpack.c.l.b16 %v1549
      %v1623 = vunpack.c.l.b16 %v1550
      %v1624 = vunpack.c.l.b16 %v1551
      %v1625 = vpack.c.b16 %v1598, %v1597
      %v1626 = vpack.c.b16 %v1600, %v1599
      %v1627 = vpack.c.b16 %v1602, %v1601
      %v1628 = vpack.c.b16 %v1604, %v1603
      %v1629 = vpack.c.b16 %v1606, %v1605
      %v1630 = vpack.c.b16 %v1608, %v1607
      %v1631 = vpack.c.b16 %v1610, %v1609
      %v1632 = vpack.c.b16 %v1612, %v1611
      %v1633 = vpack.c.b16 %v1614, %v1613
      %v1634 = vpack.c.b16 %v1616, %v1615
      %v1635 = vpack.c.b16 %v1618, %v1617
      %v1636 = vpack.c.b16 %v1620, %v1619
      %v1637 = vpack.c.b16 %v1622, %v1621
      %v1638 = vpack.c.b16 %v1624, %v1623
      %v1669 = vunpack.c.l.b16 %v1553
      %v1670 = vunpack.c.l.b16 %v1554
      %v1671 = vunpack.c.l.b16 %v1555
      %v1672 = vunpack.c.l.b16 %v1556
      %v1673 = vunpack.c.l.b16 %v1557
      %v1674 = vunpack.c.l.b16 %v1558
      %v1675 = vunpack.c.l.b16 %v1559
      %v1676 = vunpack.c.l.b16 %v1560
      %v1677 = vunpack.c.l.b16 %v1561
      %v1678 = vunpack.c.l.b16 %v1562
      %v1679 = vunpack.c.l.b16 %v1563
      %v1680 = vunpack.c.l.b16 %v1564
      %v1681 = vunpack.c.l.b16 %v1565
      %v1682 = vunpack.c.l.b16 %v1566
      %v1683 = vunpack.c.l.b16 %v1567
      %v1684 = vunpack.c.l.b16 %v1568
      %v1685 = vpack.c.b16 %v1670, %v1669
      %v1686 = vpack.c.b16 %v1672, %v1671
      %v1687 = vpack.c.b16 %v1674, %v1673
      %v1688 = vpack.c.b16 %v1676, %v1675
      %v1689 = vpack.c.b16 %v1678, %v1677
      %v1690 = vpack.c.b16 %v1680, %v1679
      %v1691 = vpack.c.b16 %v1682, %v1681
      %v1692 = vpack.c.b16 %v1684, %v1683
      %1701 = vmatprep.subr.bf16.mxu0 0
      %1702 = vmatpush1.bf16.msra.mxu0 %v1692
      %1703 = vmatprep.subr.bf16.mxu0 0
      %1704 = vmatpush1.bf16.msra.mxu0 %v1691
      %1705 = vmatprep.subr.bf16.mxu0 0
      %1706 = vmatpush1.bf16.msra.mxu0 %v1690
      %1707 = vmatprep.subr.bf16.mxu0 0
      %1708 = vmatpush1.bf16.msra.mxu0 %v1689
      %1709 = vmatprep.subr.bf16.mxu0 0
      %1710 = vmatpush1.bf16.msra.mxu0 %v1688
      %1711 = vmatprep.subr.bf16.mxu0 0
      %1712 = vmatpush1.bf16.msra.mxu0 %v1687
      %1713 = vmatprep.subr.bf16.mxu0 0
      %1714 = vmatpush1.bf16.msra.mxu0 %v1686
      %1715 = vmatprep.subr.bf16.mxu0 0
      %1716 = vmatpush1.bf16.msra.mxu0 %v1685
      %1717 = vmatprep.subr.bf16.mxu0 0
      %1718 = vmatpush2.bf16.msra.mxu0 0
      %1719 = vmatprep.subr.bf16.mxu0 0
      %1720 = vmatpush2.bf16.msra.mxu0 0
      %1721 = vmatprep.subr.bf16.mxu0 0
      %1722 = vmatpush2.bf16.msra.mxu0 0
      %1723 = vmatprep.subr.bf16.mxu0 0
      %1724 = vmatpush2.bf16.msra.mxu0 0
      %1725 = vmatprep.subr.bf16.mxu0 0
      %1726 = vmatpush2.bf16.msra.mxu0 0
      %1727 = vmatprep.subr.bf16.mxu0 0
      %1728 = vmatpush2.bf16.msra.mxu0 0
      %1729 = vmatprep.subr.bf16.mxu0 0
      %1730 = vmatpush2.bf16.msra.mxu0 0
      %1731 = vmatprep.subr.bf16.mxu0 0
      %1732 = vmatpush2.bf16.msra.mxu0 0
      %1733 = vmatprep.mubr.bf16.mxu0 0
      %1734 = vmatmul.mubr.bf16.gmra.mxu0 %v1625
      %v1735 = vpop.f32.mrf.mxu0
      %v1736 = vadd.f32 0.0, %v1735
      %v1737 = vpop.f32.mrf.mxu0
      %v1738 = vpop.f32.mrf.mxu0
      %v1739 = vadd.f32 0.0, %v1738
      %v1740 = vpop.f32.mrf.mxu0
      %1741 = vmatprep.mubr.bf16.mxu0 0
      %1742 = vmatmul.mubr.bf16.gmra.mxu0 %v1626
      %v1743 = vpop.f32.mrf.mxu0
      %v1744 = vadd.f32 0.0, %v1743
      %v1745 = vpop.f32.mrf.mxu0
      %v1746 = vpop.f32.mrf.mxu0
      %v1747 = vadd.f32 0.0, %v1746
      %v1748 = vpop.f32.mrf.mxu0
      %1749 = vmatprep.mubr.bf16.mxu0 0
      %1750 = vmatmul.mubr.bf16.gmra.mxu0 %v1627
      %v1751 = vpop.f32.mrf.mxu0
      %v1752 = vadd.f32 0.0, %v1751
      %v1753 = vpop.f32.mrf.mxu0
      %v1754 = vpop.f32.mrf.mxu0
      %v1755 = vadd.f32 0.0, %v1754
      %v1756 = vpop.f32.mrf.mxu0
      %1757 = vmatprep.mubr.bf16.mxu0 0
      %1758 = vmatmul.mubr.bf16.gmra.mxu0 %v1628
      %v1759 = vpop.f32.mrf.mxu0
      %v1760 = vadd.f32 0.0, %v1759
      %v1761 = vpop.f32.mrf.mxu0
      %v1762 = vpop.f32.mrf.mxu0
      %v1763 = vadd.f32 0.0, %v1762
      %v1764 = vpop.f32.mrf.mxu0
      %1765 = vmatprep.mubr.bf16.mxu0 0
      %1766 = vmatmul.mubr.bf16.gmra.mxu0 %v1629
      %v1767 = vpop.f32.mrf.mxu0
      %v1768 = vadd.f32 0.0, %v1767
      %v1769 = vpop.f32.mrf.mxu0
      %v1770 = vpop.f32.mrf.mxu0
      %v1771 = vadd.f32 0.0, %v1770
      %v1772 = vpop.f32.mrf.mxu0
      %1773 = vmatprep.mubr.bf16.mxu0 0
      %1774 = vmatmul.mubr.bf16.gmra.mxu0 %v1630
      %v1775 = vpop.f32.mrf.mxu0
      %v1776 = vadd.f32 0.0, %v1775
      %v1777 = vpop.f32.mrf.mxu0
      %v1778 = vpop.f32.mrf.mxu0
      %v1779 = vadd.f32 0.0, %v1778
      %v1780 = vpop.f32.mrf.mxu0
      %1781 = vmatprep.mubr.bf16.mxu0 0
      %1782 = vmatmul.mubr.bf16.gmra.mxu0 %v1631
      %v1783 = vpop.f32.mrf.mxu0
      %v1784 = vadd.f32 0.0, %v1783
      %v1785 = vpop.f32.mrf.mxu0
      %v1786 = vpop.f32.mrf.mxu0
      %v1787 = vadd.f32 0.0, %v1786
      %v1788 = vpop.f32.mrf.mxu0
      %1789 = vmatprep.mubr.bf16.mxu0 0
      %1790 = vmatmul.mubr.bf16.gmra.mxu0 %v1632
      %v1791 = vpop.f32.mrf.mxu0
      %v1792 = vadd.f32 0.0, %v1791
      %v1793 = vpop.f32.mrf.mxu0
      %v1794 = vpop.f32.mrf.mxu0
      %v1795 = vadd.f32 0.0, %v1794
      %v1796 = vpop.f32.mrf.mxu0
      %1797 = vmatprep.mubr.bf16.mxu0 0
      %1798 = vmatmul.mubr.bf16.gmra.mxu0 %v1633
      %v1799 = vpop.f32.mrf.mxu0
      %v1800 = vadd.f32 0.0, %v1799
      %v1801 = vpop.f32.mrf.mxu0
      %v1802 = vpop.f32.mrf.mxu0
      %v1803 = vadd.f32 0.0, %v1802
      %v1804 = vpop.f32.mrf.mxu0
      %1805 = vmatprep.mubr.bf16.mxu0 0
      %1806 = vmatmul.mubr.bf16.gmra.mxu0 %v1634
      %v1807 = vpop.f32.mrf.mxu0
      %v1808 = vadd.f32 0.0, %v1807
      %v1809 = vpop.f32.mrf.mxu0
      %v1810 = vpop.f32.mrf.mxu0
      %v1811 = vadd.f32 0.0, %v1810
      %v1812 = vpop.f32.mrf.mxu0
      %1813 = vmatprep.mubr.bf16.mxu0 0
      %1814 = vmatmul.mubr.bf16.gmra.mxu0 %v1635
      %v1815 = vpop.f32.mrf.mxu0
      %v1816 = vadd.f32 0.0, %v1815
      %v1817 = vpop.f32.mrf.mxu0
      %v1818 = vpop.f32.mrf.mxu0
      %v1819 = vadd.f32 0.0, %v1818
      %v1820 = vpop.f32.mrf.mxu0
      %1821 = vmatprep.mubr.bf16.mxu0 0
      %1822 = vmatmul.mubr.bf16.gmra.mxu0 %v1636
      %v1823 = vpop.f32.mrf.mxu0
      %v1824 = vadd.f32 0.0, %v1823
      %v1825 = vpop.f32.mrf.mxu0
      %v1826 = vpop.f32.mrf.mxu0
      %v1827 = vadd.f32 0.0, %v1826
      %v1828 = vpop.f32.mrf.mxu0
      %1829 = vmatprep.mubr.bf16.mxu0 0
      %1830 = vmatmul.mubr.bf16.gmra.mxu0 %v1637
      %v1831 = vpop.f32.mrf.mxu0
      %v1832 = vadd.f32 0.0, %v1831
      %v1833 = vpop.f32.mrf.mxu0
      %v1834 = vpop.f32.mrf.mxu0
      %v1835 = vadd.f32 0.0, %v1834
      %v1836 = vpop.f32.mrf.mxu0
      %1837 = vmatprep.mubr.bf16.mxu0 0
      %1838 = vmatmul.mubr.bf16.gmra.mxu0 %v1638
      %v1839 = vpop.f32.mrf.mxu0
      %v1840 = vadd.f32 0.0, %v1839
      %v1841 = vpop.f32.mrf.mxu0
      %v1842 = vpop.f32.mrf.mxu0
      %v1843 = vadd.f32 0.0, %v1842
      %v1844 = vpop.f32.mrf.mxu0
      %1845 = vdwg.mxu0
      %v1846 = vld [vmem:[#allocation2] sm:$0xff]
      %v1847 = vld [vmem:[#allocation2 + $0x8] sm:$0xff]
      %v1848 = vld [vmem:[#allocation2 + $0x10] sm:$0xff]
      %v1849 = vld [vmem:[#allocation2 + $0x18] sm:$0xff]
      %v1850 = vld [vmem:[#allocation2 + $0x20] sm:$0xff]
      %v1851 = vld [vmem:[#allocation2 + $0x28] sm:$0xff]
      %v1852 = vld [vmem:[#allocation2 + $0x30] sm:$0xff]
      %v1853 = vld [vmem:[#allocation2 + $0x38] sm:$0xff]
      %v1854 = vld [vmem:[#allocation2 + $0x40] sm:$0xff]
      %v1855 = vld [vmem:[#allocation2 + $0x48] sm:$0xff]
      %v1856 = vld [vmem:[#allocation2 + $0x50] sm:$0xff]
      %v1857 = vld [vmem:[#allocation2 + $0x58] sm:$0xff]
      %v1858 = vld [vmem:[#allocation2 + $0x60] sm:$0xff]
      %v1859 = vld [vmem:[#allocation2 + $0x68] sm:$0xff]
      %v1860 = vld [vmem:[#allocation2 + $0x70] sm:$0xff]
      %v1861 = vld [vmem:[#allocation2 + $0x78] sm:$0xff]
      %v1862 = vld [vmem:[#allocation2 + $0x80] sm:$0xff]
      %v1863 = vld [vmem:[#allocation2 + $0x88] sm:$0xff]
      %v1864 = vld [vmem:[#allocation2 + $0x90] sm:$0xff]
      %v1865 = vld [vmem:[#allocation2 + $0x98] sm:$0xff]
      %v1866 = vld [vmem:[#allocation2 + $0xa0] sm:$0xff]
      %v1867 = vld [vmem:[#allocation2 + $0xa8] sm:$0xff]
      %v1868 = vld [vmem:[#allocation2 + $0xb0] sm:$0xff]
      %v1869 = vld [vmem:[#allocation2 + $0xb8] sm:$0xff]
      %v1870 = vld [vmem:[#allocation2 + $0xc0] sm:$0xff]
      %v1871 = vld [vmem:[#allocation2 + $0xc8] sm:$0xff]
      %v1872 = vld [vmem:[#allocation2 + $0xd0] sm:$0xff]
      %v1873 = vld [vmem:[#allocation2 + $0xd8] sm:$0x3f]
      %v1874 = vadd.f32 %v1846, %v1736
      %v1875 = vadd.f32 %v1847, %v1739
      %v1876 = vadd.f32 %v1848, %v1744
      %v1877 = vadd.f32 %v1849, %v1747
      %v1878 = vadd.f32 %v1850, %v1752
      %v1879 = vadd.f32 %v1851, %v1755
      %v1880 = vadd.f32 %v1852, %v1760
      %v1881 = vadd.f32 %v1853, %v1763
      %v1882 = vadd.f32 %v1854, %v1768
      %v1883 = vadd.f32 %v1855, %v1771
      %v1884 = vadd.f32 %v1856, %v1776
      %v1885 = vadd.f32 %v1857, %v1779
      %v1886 = vadd.f32 %v1858, %v1784
      %v1887 = vadd.f32 %v1859, %v1787
      %v1888 = vadd.f32 %v1860, %v1792
      %v1889 = vadd.f32 %v1861, %v1795
      %v1890 = vadd.f32 %v1862, %v1800
      %v1891 = vadd.f32 %v1863, %v1803
      %v1892 = vadd.f32 %v1864, %v1808
      %v1893 = vadd.f32 %v1865, %v1811
      %v1894 = vadd.f32 %v1866, %v1816
      %v1895 = vadd.f32 %v1867, %v1819
      %v1896 = vadd.f32 %v1868, %v1824
      %v1897 = vadd.f32 %v1869, %v1827
      %v1898 = vadd.f32 %v1870, %v1832
      %v1899 = vadd.f32 %v1871, %v1835
      %v1900 = vadd.f32 %v1872, %v1840
      %v1901 = vadd.f32 %v1873, %v1843
      %1902 = vst [vmem:[#allocation2] sm:$0xff] %v1874
      %1903 = vst [vmem:[#allocation2 + $0x8] sm:$0xff] %v1875
      %1904 = vst [vmem:[#allocation2 + $0x10] sm:$0xff] %v1876
      %1905 = vst [vmem:[#allocation2 + $0x18] sm:$0xff] %v1877
      %1906 = vst [vmem:[#allocation2 + $0x20] sm:$0xff] %v1878
      %1907 = vst [vmem:[#allocation2 + $0x28] sm:$0xff] %v1879
      %1908 = vst [vmem:[#allocation2 + $0x30] sm:$0xff] %v1880
      %1909 = vst [vmem:[#allocation2 + $0x38] sm:$0xff] %v1881
      %1910 = vst [vmem:[#allocation2 + $0x40] sm:$0xff] %v1882
      %1911 = vst [vmem:[#allocation2 + $0x48] sm:$0xff] %v1883
      %1912 = vst [vmem:[#allocation2 + $0x50] sm:$0xff] %v1884
      %1913 = vst [vmem:[#allocation2 + $0x58] sm:$0xff] %v1885
      %1914 = vst [vmem:[#allocation2 + $0x60] sm:$0xff] %v1886
      %1915 = vst [vmem:[#allocation2 + $0x68] sm:$0xff] %v1887
      %1916 = vst [vmem:[#allocation2 + $0x70] sm:$0xff] %v1888
      %1917 = vst [vmem:[#allocation2 + $0x78] sm:$0xff] %v1889
      %1918 = vst [vmem:[#allocation2 + $0x80] sm:$0xff] %v1890
      %1919 = vst [vmem:[#allocation2 + $0x88] sm:$0xff] %v1891
      %1920 = vst [vmem:[#allocation2 + $0x90] sm:$0xff] %v1892
      %1921 = vst [vmem:[#allocation2 + $0x98] sm:$0xff] %v1893
      %1922 = vst [vmem:[#allocation2 + $0xa0] sm:$0xff] %v1894
      %1923 = vst [vmem:[#allocation2 + $0xa8] sm:$0xff] %v1895
      %1924 = vst [vmem:[#allocation2 + $0xb0] sm:$0xff] %v1896
      %1925 = vst [vmem:[#allocation2 + $0xb8] sm:$0xff] %v1897
      %1926 = vst [vmem:[#allocation2 + $0xc0] sm:$0xff] %v1898
      %1927 = vst [vmem:[#allocation2 + $0xc8] sm:$0xff] %v1899
      %1928 = vst [vmem:[#allocation2 + $0xd0] sm:$0xff] %v1900
      %1929 = vst [vmem:[#allocation2 + $0xd8] sm:$0x3f] %v1901
      %v1930 = vld [vmem:[%s206 + $0x8] sm:$0xf]
      %v1931 = vld [vmem:[%s206 + $0xc] sm:$0xf]
      %v1932 = vld [vmem:[%s206 + $0x10] sm:$0xf]
      %v1933 = vld [vmem:[%s206 + $0x14] sm:$0xf]
      %v1934 = vld [vmem:[%s206 + $0x18] sm:$0xf]
      %v1935 = vld [vmem:[%s206 + $0x1c] sm:$0xf]
      %v1936 = vld [vmem:[%s206 + $0x20] sm:$0xf]
      %v1937 = vld [vmem:[%s206 + $0x24] sm:$0xf]
      %v1938 = vld [vmem:[%s206 + $0x28] sm:$0xf]
      %v1939 = vld [vmem:[%s206 + $0x2c] sm:$0xf]
      %v1940 = vld [vmem:[%s206 + $0x30] sm:$0xf]
      %v1941 = vld [vmem:[%s206 + $0x34] sm:$0xf]
      %v1942 = vld [vmem:[%s206 + $0x38] sm:$0xf]
      %v1943 = vld [vmem:[%s206 + $0x3c] sm:$0xf]
      %v1944 = vld [vmem:[%s206 + $0x40] sm:$0xf]
      %v1945 = vld [vmem:[%s206 + $0x44] sm:$0xf]
      %v1946 = vld [vmem:[%s206 + $0x48] sm:$0xf]
      %v1947 = vld [vmem:[%s206 + $0x4c] sm:$0xf]
      %v1948 = vld [vmem:[%s206 + $0x50] sm:$0xf]
      %v1949 = vld [vmem:[%s206 + $0x54] sm:$0xf]
      %v1950 = vld [vmem:[%s206 + $0x58] sm:$0xf]
      %v1951 = vld [vmem:[%s206 + $0x5c] sm:$0xf]
      %v1952 = vld [vmem:[%s206 + $0x60] sm:$0xf]
      %v1953 = vld [vmem:[%s206 + $0x64] sm:$0xf]
      %v1954 = vld [vmem:[%s206 + $0x68] sm:$0xf]
      %v1955 = vld [vmem:[%s206 + $0x6c] sm:$0xf]
      %v1956 = vld [vmem:[%s206 + $0x70] sm:$0xf]
      %v1957 = vld [vmem:[%s206 + $0x74] sm:$0xf]
      %s1958 = scalar_lea.vmem %s210, 256
      %v1959 = vld [vmem:[%s1958] sm:$0xf]
      %v1960 = vld [vmem:[%s1958 + $0x4] sm:$0xf]
      %v1961 = vld [vmem:[%s1958 + $0x8] sm:$0xf]
      %v1962 = vld [vmem:[%s1958 + $0xc] sm:$0xf]
      %v1963 = vld [vmem:[%s1958 + $0x10] sm:$0xf]
      %v1964 = vld [vmem:[%s1958 + $0x14] sm:$0xf]
      %v1965 = vld [vmem:[%s1958 + $0x18] sm:$0xf]
      %v1966 = vld [vmem:[%s1958 + $0x1c] sm:$0xf]
      %v1967 = vld [vmem:[%s1958 + $0x20] sm:$0xf]
      %v1968 = vld [vmem:[%s1958 + $0x24] sm:$0xf]
      %v1969 = vld [vmem:[%s1958 + $0x28] sm:$0xf]
      %v1970 = vld [vmem:[%s1958 + $0x2c] sm:$0xf]
      %v1971 = vld [vmem:[%s1958 + $0x30] sm:$0xf]
      %v1972 = vld [vmem:[%s1958 + $0x34] sm:$0xf]
      %v1973 = vld [vmem:[%s1958 + $0x38] sm:$0xf]
      %v1974 = vld [vmem:[%s1958 + $0x3c] sm:$0xf]
      %v2003 = vunpack.c.l.b16 %v1930
      %v2004 = vunpack.c.l.b16 %v1931
      %v2005 = vunpack.c.l.b16 %v1932
      %v2006 = vunpack.c.l.b16 %v1933
      %v2007 = vunpack.c.l.b16 %v1934
      %v2008 = vunpack.c.l.b16 %v1935
      %v2009 = vunpack.c.l.b16 %v1936
      %v2010 = vunpack.c.l.b16 %v1937
      %v2011 = vunpack.c.l.b16 %v1938
      %v2012 = vunpack.c.l.b16 %v1939
      %v2013 = vunpack.c.l.b16 %v1940
      %v2014 = vunpack.c.l.b16 %v1941
      %v2015 = vunpack.c.l.b16 %v1942
      %v2016 = vunpack.c.l.b16 %v1943
      %v2017 = vunpack.c.l.b16 %v1944
      %v2018 = vunpack.c.l.b16 %v1945
      %v2019 = vunpack.c.l.b16 %v1946
      %v2020 = vunpack.c.l.b16 %v1947
      %v2021 = vunpack.c.l.b16 %v1948
      %v2022 = vunpack.c.l.b16 %v1949
      %v2023 = vunpack.c.l.b16 %v1950
      %v2024 = vunpack.c.l.b16 %v1951
      %v2025 = vunpack.c.l.b16 %v1952
      %v2026 = vunpack.c.l.b16 %v1953
      %v2027 = vunpack.c.l.b16 %v1954
      %v2028 = vunpack.c.l.b16 %v1955
      %v2029 = vunpack.c.l.b16 %v1956
      %v2030 = vunpack.c.l.b16 %v1957
      %v2031 = vpack.c.b16 %v2004, %v2003
      %v2032 = vpack.c.b16 %v2006, %v2005
      %v2033 = vpack.c.b16 %v2008, %v2007
      %v2034 = vpack.c.b16 %v2010, %v2009
      %v2035 = vpack.c.b16 %v2012, %v2011
      %v2036 = vpack.c.b16 %v2014, %v2013
      %v2037 = vpack.c.b16 %v2016, %v2015
      %v2038 = vpack.c.b16 %v2018, %v2017
      %v2039 = vpack.c.b16 %v2020, %v2019
      %v2040 = vpack.c.b16 %v2022, %v2021
      %v2041 = vpack.c.b16 %v2024, %v2023
      %v2042 = vpack.c.b16 %v2026, %v2025
      %v2043 = vpack.c.b16 %v2028, %v2027
      %v2044 = vpack.c.b16 %v2030, %v2029
      %v2046 = vshrl.u32 %v2031, 16
      %v2048 = vshll.u32 %v2031, 16
      %v2050 = vrot.slane %v2048, 1
      %v2051 = vor.u32 %v2046, %v2050
      %v2053 = vshll.u32 %v2032, 16
      %v2055 = vrot.slane %v2053, 1
      %v2056 = vsel %vm687, %v2051, %v2055
      %v2057 = vshrl.u32 %v2032, 16
      %v2059 = vor.u32 %v2057, %v2055
      %v2061 = vshll.u32 %v2033, 16
      %v2063 = vrot.slane %v2061, 1
      %v2064 = vsel %vm687, %v2059, %v2063
      %v2065 = vshrl.u32 %v2033, 16
      %v2067 = vor.u32 %v2065, %v2063
      %v2069 = vshll.u32 %v2034, 16
      %v2071 = vrot.slane %v2069, 1
      %v2072 = vsel %vm687, %v2067, %v2071
      %v2073 = vshrl.u32 %v2034, 16
      %v2075 = vor.u32 %v2073, %v2071
      %v2077 = vshll.u32 %v2035, 16
      %v2079 = vrot.slane %v2077, 1
      %v2080 = vsel %vm687, %v2075, %v2079
      %v2081 = vshrl.u32 %v2035, 16
      %v2083 = vor.u32 %v2081, %v2079
      %v2085 = vshll.u32 %v2036, 16
      %v2087 = vrot.slane %v2085, 1
      %v2088 = vsel %vm687, %v2083, %v2087
      %v2089 = vshrl.u32 %v2036, 16
      %v2091 = vor.u32 %v2089, %v2087
      %v2093 = vshll.u32 %v2037, 16
      %v2095 = vrot.slane %v2093, 1
      %v2096 = vsel %vm687, %v2091, %v2095
      %v2097 = vshrl.u32 %v2037, 16
      %v2099 = vor.u32 %v2097, %v2095
      %v2101 = vshll.u32 %v2038, 16
      %v2103 = vrot.slane %v2101, 1
      %v2104 = vsel %vm687, %v2099, %v2103
      %v2105 = vshrl.u32 %v2038, 16
      %v2107 = vor.u32 %v2105, %v2103
      %v2109 = vshll.u32 %v2039, 16
      %v2111 = vrot.slane %v2109, 1
      %v2112 = vsel %vm687, %v2107, %v2111
      %v2113 = vshrl.u32 %v2039, 16
      %v2115 = vor.u32 %v2113, %v2111
      %v2117 = vshll.u32 %v2040, 16
      %v2119 = vrot.slane %v2117, 1
      %v2120 = vsel %vm687, %v2115, %v2119
      %v2121 = vshrl.u32 %v2040, 16
      %v2123 = vor.u32 %v2121, %v2119
      %v2125 = vshll.u32 %v2041, 16
      %v2127 = vrot.slane %v2125, 1
      %v2128 = vsel %vm687, %v2123, %v2127
      %v2129 = vshrl.u32 %v2041, 16
      %v2131 = vor.u32 %v2129, %v2127
      %v2133 = vshll.u32 %v2042, 16
      %v2135 = vrot.slane %v2133, 1
      %v2136 = vsel %vm687, %v2131, %v2135
      %v2137 = vshrl.u32 %v2042, 16
      %v2139 = vor.u32 %v2137, %v2135
      %v2141 = vshll.u32 %v2043, 16
      %v2143 = vrot.slane %v2141, 1
      %v2144 = vsel %vm687, %v2139, %v2143
      %v2145 = vshrl.u32 %v2043, 16
      %v2147 = vor.u32 %v2145, %v2143
      %v2149 = vshll.u32 %v2044, 16
      %v2151 = vrot.slane %v2149, 1
      %v2152 = vsel %vm687, %v2147, %v2151
      %v2153 = vshrl.u32 %v2044, 16
      %v2155 = vor.u32 %v2153, %v2151
      %v2186 = vunpack.c.l.b16 %v1959
      %v2187 = vunpack.c.l.b16 %v1960
      %v2188 = vunpack.c.l.b16 %v1961
      %v2189 = vunpack.c.l.b16 %v1962
      %v2190 = vunpack.c.l.b16 %v1963
      %v2191 = vunpack.c.l.b16 %v1964
      %v2192 = vunpack.c.l.b16 %v1965
      %v2193 = vunpack.c.l.b16 %v1966
      %v2194 = vunpack.c.l.b16 %v1967
      %v2195 = vunpack.c.l.b16 %v1968
      %v2196 = vunpack.c.l.b16 %v1969
      %v2197 = vunpack.c.l.b16 %v1970
      %v2198 = vunpack.c.l.b16 %v1971
      %v2199 = vunpack.c.l.b16 %v1972
      %v2200 = vunpack.c.l.b16 %v1973
      %v2201 = vunpack.c.l.b16 %v1974
      %v2202 = vpack.c.b16 %v2187, %v2186
      %v2203 = vpack.c.b16 %v2189, %v2188
      %v2204 = vpack.c.b16 %v2191, %v2190
      %v2205 = vpack.c.b16 %v2193, %v2192
      %v2206 = vpack.c.b16 %v2195, %v2194
      %v2207 = vpack.c.b16 %v2197, %v2196
      %v2208 = vpack.c.b16 %v2199, %v2198
      %v2209 = vpack.c.b16 %v2201, %v2200
      %2218 = vmatprep.subr.bf16.mxu0 0
      %2219 = vmatpush1.bf16.msra.mxu0 %v2209
      %2220 = vmatprep.subr.bf16.mxu0 0
      %2221 = vmatpush1.bf16.msra.mxu0 %v2208
      %2222 = vmatprep.subr.bf16.mxu0 0
      %2223 = vmatpush1.bf16.msra.mxu0 %v2207
      %2224 = vmatprep.subr.bf16.mxu0 0
      %2225 = vmatpush1.bf16.msra.mxu0 %v2206
      %2226 = vmatprep.subr.bf16.mxu0 0
      %2227 = vmatpush1.bf16.msra.mxu0 %v2205
      %2228 = vmatprep.subr.bf16.mxu0 0
      %2229 = vmatpush1.bf16.msra.mxu0 %v2204
      %2230 = vmatprep.subr.bf16.mxu0 0
      %2231 = vmatpush1.bf16.msra.mxu0 %v2203
      %2232 = vmatprep.subr.bf16.mxu0 0
      %2233 = vmatpush1.bf16.msra.mxu0 %v2202
      %2234 = vmatprep.subr.bf16.mxu0 0
      %2235 = vmatpush2.bf16.msra.mxu0 0
      %2236 = vmatprep.subr.bf16.mxu0 0
      %2237 = vmatpush2.bf16.msra.mxu0 0
      %2238 = vmatprep.subr.bf16.mxu0 0
      %2239 = vmatpush2.bf16.msra.mxu0 0
      %2240 = vmatprep.subr.bf16.mxu0 0
      %2241 = vmatpush2.bf16.msra.mxu0 0
      %2242 = vmatprep.subr.bf16.mxu0 0
      %2243 = vmatpush2.bf16.msra.mxu0 0
      %2244 = vmatprep.subr.bf16.mxu0 0
      %2245 = vmatpush2.bf16.msra.mxu0 0
      %2246 = vmatprep.subr.bf16.mxu0 0
      %2247 = vmatpush2.bf16.msra.mxu0 0
      %2248 = vmatprep.subr.bf16.mxu0 0
      %2249 = vmatpush2.bf16.msra.mxu0 0
      %2250 = vmatprep.mubr.bf16.mxu0 0
      %2251 = vmatmul.mubr.bf16.gmra.mxu0 %v2056
      %v2252 = vpop.f32.mrf.mxu0
      %v2253 = vadd.f32 0.0, %v2252
      %v2254 = vpop.f32.mrf.mxu0
      %v2255 = vpop.f32.mrf.mxu0
      %v2256 = vadd.f32 0.0, %v2255
      %v2257 = vpop.f32.mrf.mxu0
      %2258 = vmatprep.mubr.bf16.mxu0 0
      %2259 = vmatmul.mubr.bf16.gmra.mxu0 %v2064
      %v2260 = vpop.f32.mrf.mxu0
      %v2261 = vadd.f32 0.0, %v2260
      %v2262 = vpop.f32.mrf.mxu0
      %v2263 = vpop.f32.mrf.mxu0
      %v2264 = vadd.f32 0.0, %v2263
      %v2265 = vpop.f32.mrf.mxu0
      %2266 = vmatprep.mubr.bf16.mxu0 0
      %2267 = vmatmul.mubr.bf16.gmra.mxu0 %v2072
      %v2268 = vpop.f32.mrf.mxu0
      %v2269 = vadd.f32 0.0, %v2268
      %v2270 = vpop.f32.mrf.mxu0
      %v2271 = vpop.f32.mrf.mxu0
      %v2272 = vadd.f32 0.0, %v2271
      %v2273 = vpop.f32.mrf.mxu0
      %2274 = vmatprep.mubr.bf16.mxu0 0
      %2275 = vmatmul.mubr.bf16.gmra.mxu0 %v2080
      %v2276 = vpop.f32.mrf.mxu0
      %v2277 = vadd.f32 0.0, %v2276
      %v2278 = vpop.f32.mrf.mxu0
      %v2279 = vpop.f32.mrf.mxu0
      %v2280 = vadd.f32 0.0, %v2279
      %v2281 = vpop.f32.mrf.mxu0
      %2282 = vmatprep.mubr.bf16.mxu0 0
      %2283 = vmatmul.mubr.bf16.gmra.mxu0 %v2088
      %v2284 = vpop.f32.mrf.mxu0
      %v2285 = vadd.f32 0.0, %v2284
      %v2286 = vpop.f32.mrf.mxu0
      %v2287 = vpop.f32.mrf.mxu0
      %v2288 = vadd.f32 0.0, %v2287
      %v2289 = vpop.f32.mrf.mxu0
      %2290 = vmatprep.mubr.bf16.mxu0 0
      %2291 = vmatmul.mubr.bf16.gmra.mxu0 %v2096
      %v2292 = vpop.f32.mrf.mxu0
      %v2293 = vadd.f32 0.0, %v2292
      %v2294 = vpop.f32.mrf.mxu0
      %v2295 = vpop.f32.mrf.mxu0
      %v2296 = vadd.f32 0.0, %v2295
      %v2297 = vpop.f32.mrf.mxu0
      %2298 = vmatprep.mubr.bf16.mxu0 0
      %2299 = vmatmul.mubr.bf16.gmra.mxu0 %v2104
      %v2300 = vpop.f32.mrf.mxu0
      %v2301 = vadd.f32 0.0, %v2300
      %v2302 = vpop.f32.mrf.mxu0
      %v2303 = vpop.f32.mrf.mxu0
      %v2304 = vadd.f32 0.0, %v2303
      %v2305 = vpop.f32.mrf.mxu0
      %2306 = vmatprep.mubr.bf16.mxu0 0
      %2307 = vmatmul.mubr.bf16.gmra.mxu0 %v2112
      %v2308 = vpop.f32.mrf.mxu0
      %v2309 = vadd.f32 0.0, %v2308
      %v2310 = vpop.f32.mrf.mxu0
      %v2311 = vpop.f32.mrf.mxu0
      %v2312 = vadd.f32 0.0, %v2311
      %v2313 = vpop.f32.mrf.mxu0
      %2314 = vmatprep.mubr.bf16.mxu0 0
      %2315 = vmatmul.mubr.bf16.gmra.mxu0 %v2120
      %v2316 = vpop.f32.mrf.mxu0
      %v2317 = vadd.f32 0.0, %v2316
      %v2318 = vpop.f32.mrf.mxu0
      %v2319 = vpop.f32.mrf.mxu0
      %v2320 = vadd.f32 0.0, %v2319
      %v2321 = vpop.f32.mrf.mxu0
      %2322 = vmatprep.mubr.bf16.mxu0 0
      %2323 = vmatmul.mubr.bf16.gmra.mxu0 %v2128
      %v2324 = vpop.f32.mrf.mxu0
      %v2325 = vadd.f32 0.0, %v2324
      %v2326 = vpop.f32.mrf.mxu0
      %v2327 = vpop.f32.mrf.mxu0
      %v2328 = vadd.f32 0.0, %v2327
      %v2329 = vpop.f32.mrf.mxu0
      %2330 = vmatprep.mubr.bf16.mxu0 0
      %2331 = vmatmul.mubr.bf16.gmra.mxu0 %v2136
      %v2332 = vpop.f32.mrf.mxu0
      %v2333 = vadd.f32 0.0, %v2332
      %v2334 = vpop.f32.mrf.mxu0
      %v2335 = vpop.f32.mrf.mxu0
      %v2336 = vadd.f32 0.0, %v2335
      %v2337 = vpop.f32.mrf.mxu0
      %2338 = vmatprep.mubr.bf16.mxu0 0
      %2339 = vmatmul.mubr.bf16.gmra.mxu0 %v2144
      %v2340 = vpop.f32.mrf.mxu0
      %v2341 = vadd.f32 0.0, %v2340
      %v2342 = vpop.f32.mrf.mxu0
      %v2343 = vpop.f32.mrf.mxu0
      %v2344 = vadd.f32 0.0, %v2343
      %v2345 = vpop.f32.mrf.mxu0
      %2346 = vmatprep.mubr.bf16.mxu0 0
      %2347 = vmatmul.mubr.bf16.gmra.mxu0 %v2152
      %v2348 = vpop.f32.mrf.mxu0
      %v2349 = vadd.f32 0.0, %v2348
      %v2350 = vpop.f32.mrf.mxu0
      %v2351 = vpop.f32.mrf.mxu0
      %v2352 = vadd.f32 0.0, %v2351
      %v2353 = vpop.f32.mrf.mxu0
      %2354 = vmatprep.mubr.bf16.mxu0 0
      %2355 = vmatmul.mubr.bf16.gmra.mxu0 %v2155
      %v2356 = vpop.f32.mrf.mxu0
      %v2357 = vadd.f32 0.0, %v2356
      %v2358 = vpop.f32.mrf.mxu0
      %v2359 = vpop.f32.mrf.mxu0
      %v2360 = vadd.f32 0.0, %v2359
      %v2361 = vpop.f32.mrf.mxu0
      %2362 = vdwg.mxu0
      %v2363 = vld [vmem:[#allocation2] sm:$0xff]
      %v2364 = vld [vmem:[#allocation2 + $0x8] sm:$0xff]
      %v2365 = vld [vmem:[#allocation2 + $0x10] sm:$0xff]
      %v2366 = vld [vmem:[#allocation2 + $0x18] sm:$0xff]
      %v2367 = vld [vmem:[#allocation2 + $0x20] sm:$0xff]
      %v2368 = vld [vmem:[#allocation2 + $0x28] sm:$0xff]
      %v2369 = vld [vmem:[#allocation2 + $0x30] sm:$0xff]
      %v2370 = vld [vmem:[#allocation2 + $0x38] sm:$0xff]
      %v2371 = vld [vmem:[#allocation2 + $0x40] sm:$0xff]
      %v2372 = vld [vmem:[#allocation2 + $0x48] sm:$0xff]
      %v2373 = vld [vmem:[#allocation2 + $0x50] sm:$0xff]
      %v2374 = vld [vmem:[#allocation2 + $0x58] sm:$0xff]
      %v2375 = vld [vmem:[#allocation2 + $0x60] sm:$0xff]
      %v2376 = vld [vmem:[#allocation2 + $0x68] sm:$0xff]
      %v2377 = vld [vmem:[#allocation2 + $0x70] sm:$0xff]
      %v2378 = vld [vmem:[#allocation2 + $0x78] sm:$0xff]
      %v2379 = vld [vmem:[#allocation2 + $0x80] sm:$0xff]
      %v2380 = vld [vmem:[#allocation2 + $0x88] sm:$0xff]
      %v2381 = vld [vmem:[#allocation2 + $0x90] sm:$0xff]
      %v2382 = vld [vmem:[#allocation2 + $0x98] sm:$0xff]
      %v2383 = vld [vmem:[#allocation2 + $0xa0] sm:$0xff]
      %v2384 = vld [vmem:[#allocation2 + $0xa8] sm:$0xff]
      %v2385 = vld [vmem:[#allocation2 + $0xb0] sm:$0xff]
      %v2386 = vld [vmem:[#allocation2 + $0xb8] sm:$0xff]
      %v2387 = vld [vmem:[#allocation2 + $0xc0] sm:$0xff]
      %v2388 = vld [vmem:[#allocation2 + $0xc8] sm:$0xff]
      %v2389 = vld [vmem:[#allocation2 + $0xd0] sm:$0xff]
      %v2390 = vld [vmem:[#allocation2 + $0xd8] sm:$0x3f]
      %v2391 = vadd.f32 %v2363, %v2253
      %v2392 = vadd.f32 %v2364, %v2256
      %v2393 = vadd.f32 %v2365, %v2261
      %v2394 = vadd.f32 %v2366, %v2264
      %v2395 = vadd.f32 %v2367, %v2269
      %v2396 = vadd.f32 %v2368, %v2272
      %v2397 = vadd.f32 %v2369, %v2277
      %v2398 = vadd.f32 %v2370, %v2280
      %v2399 = vadd.f32 %v2371, %v2285
      %v2400 = vadd.f32 %v2372, %v2288
      %v2401 = vadd.f32 %v2373, %v2293
      %v2402 = vadd.f32 %v2374, %v2296
      %v2403 = vadd.f32 %v2375, %v2301
      %v2404 = vadd.f32 %v2376, %v2304
      %v2405 = vadd.f32 %v2377, %v2309
      %v2406 = vadd.f32 %v2378, %v2312
      %v2407 = vadd.f32 %v2379, %v2317
      %v2408 = vadd.f32 %v2380, %v2320
      %v2409 = vadd.f32 %v2381, %v2325
      %v2410 = vadd.f32 %v2382, %v2328
      %v2411 = vadd.f32 %v2383, %v2333
      %v2412 = vadd.f32 %v2384, %v2336
      %v2413 = vadd.f32 %v2385, %v2341
      %v2414 = vadd.f32 %v2386, %v2344
      %v2415 = vadd.f32 %v2387, %v2349
      %v2416 = vadd.f32 %v2388, %v2352
      %v2417 = vadd.f32 %v2389, %v2357
      %v2418 = vadd.f32 %v2390, %v2360
      %2419 = vst [vmem:[#allocation2] sm:$0xff] %v2391
      %2420 = vst [vmem:[#allocation2 + $0x8] sm:$0xff] %v2392
      %2421 = vst [vmem:[#allocation2 + $0x10] sm:$0xff] %v2393
      %2422 = vst [vmem:[#allocation2 + $0x18] sm:$0xff] %v2394
      %2423 = vst [vmem:[#allocation2 + $0x20] sm:$0xff] %v2395
      %2424 = vst [vmem:[#allocation2 + $0x28] sm:$0xff] %v2396
      %2425 = vst [vmem:[#allocation2 + $0x30] sm:$0xff] %v2397
      %2426 = vst [vmem:[#allocation2 + $0x38] sm:$0xff] %v2398
      %2427 = vst [vmem:[#allocation2 + $0x40] sm:$0xff] %v2399
      %2428 = vst [vmem:[#allocation2 + $0x48] sm:$0xff] %v2400
      %2429 = vst [vmem:[#allocation2 + $0x50] sm:$0xff] %v2401
      %2430 = vst [vmem:[#allocation2 + $0x58] sm:$0xff] %v2402
      %2431 = vst [vmem:[#allocation2 + $0x60] sm:$0xff] %v2403
      %2432 = vst [vmem:[#allocation2 + $0x68] sm:$0xff] %v2404
      %2433 = vst [vmem:[#allocation2 + $0x70] sm:$0xff] %v2405
      %2434 = vst [vmem:[#allocation2 + $0x78] sm:$0xff] %v2406
      %2435 = vst [vmem:[#allocation2 + $0x80] sm:$0xff] %v2407
      %2436 = vst [vmem:[#allocation2 + $0x88] sm:$0xff] %v2408
      %2437 = vst [vmem:[#allocation2 + $0x90] sm:$0xff] %v2409
      %2438 = vst [vmem:[#allocation2 + $0x98] sm:$0xff] %v2410
      %2439 = vst [vmem:[#allocation2 + $0xa0] sm:$0xff] %v2411
      %2440 = vst [vmem:[#allocation2 + $0xa8] sm:$0xff] %v2412
      %2441 = vst [vmem:[#allocation2 + $0xb0] sm:$0xff] %v2413
      %2442 = vst [vmem:[#allocation2 + $0xb8] sm:$0xff] %v2414
      %2443 = vst [vmem:[#allocation2 + $0xc0] sm:$0xff] %v2415
      %2444 = vst [vmem:[#allocation2 + $0xc8] sm:$0xff] %v2416
      %2445 = vst [vmem:[#allocation2 + $0xd0] sm:$0xff] %v2417
      %2446 = vst [vmem:[#allocation2 + $0xd8] sm:$0x3f] %v2418
      %v2447 = vld [vmem:[%s206 + $0x8] sm:$0xe]
      %v2448 = vld [vmem:[%s206 + $0xc] sm:$0xf]
      %v2449 = vld [vmem:[%s206 + $0x10] sm:$0xf]
      %v2450 = vld [vmem:[%s206 + $0x14] sm:$0xf]
      %v2451 = vld [vmem:[%s206 + $0x18] sm:$0xf]
      %v2452 = vld [vmem:[%s206 + $0x1c] sm:$0xf]
      %v2453 = vld [vmem:[%s206 + $0x20] sm:$0xf]
      %v2454 = vld [vmem:[%s206 + $0x24] sm:$0xf]
      %v2455 = vld [vmem:[%s206 + $0x28] sm:$0xf]
      %v2456 = vld [vmem:[%s206 + $0x2c] sm:$0xf]
      %v2457 = vld [vmem:[%s206 + $0x30] sm:$0xf]
      %v2458 = vld [vmem:[%s206 + $0x34] sm:$0xf]
      %v2459 = vld [vmem:[%s206 + $0x38] sm:$0xf]
      %v2460 = vld [vmem:[%s206 + $0x3c] sm:$0xf]
      %v2461 = vld [vmem:[%s206 + $0x40] sm:$0xf]
      %v2462 = vld [vmem:[%s206 + $0x44] sm:$0xf]
      %v2463 = vld [vmem:[%s206 + $0x48] sm:$0xf]
      %v2464 = vld [vmem:[%s206 + $0x4c] sm:$0xf]
      %v2465 = vld [vmem:[%s206 + $0x50] sm:$0xf]
      %v2466 = vld [vmem:[%s206 + $0x54] sm:$0xf]
      %v2467 = vld [vmem:[%s206 + $0x58] sm:$0xf]
      %v2468 = vld [vmem:[%s206 + $0x5c] sm:$0xf]
      %v2469 = vld [vmem:[%s206 + $0x60] sm:$0xf]
      %v2470 = vld [vmem:[%s206 + $0x64] sm:$0xf]
      %v2471 = vld [vmem:[%s206 + $0x68] sm:$0xf]
      %v2472 = vld [vmem:[%s206 + $0x6c] sm:$0xf]
      %v2473 = vld [vmem:[%s206 + $0x70] sm:$0xf]
      %v2474 = vld [vmem:[%s206 + $0x74] sm:$0xf]
      %s2475 = scalar_lea.vmem %s210, 320
      %v2476 = vld [vmem:[%s2475] sm:$0xf]
      %v2477 = vld [vmem:[%s2475 + $0x4] sm:$0xf]
      %v2478 = vld [vmem:[%s2475 + $0x8] sm:$0xf]
      %v2479 = vld [vmem:[%s2475 + $0xc] sm:$0xf]
      %v2480 = vld [vmem:[%s2475 + $0x10] sm:$0xf]
      %v2481 = vld [vmem:[%s2475 + $0x14] sm:$0xf]
      %v2482 = vld [vmem:[%s2475 + $0x18] sm:$0xf]
      %v2483 = vld [vmem:[%s2475 + $0x1c] sm:$0xf]
      %v2484 = vld [vmem:[%s2475 + $0x20] sm:$0xf]
      %v2485 = vld [vmem:[%s2475 + $0x24] sm:$0xf]
      %v2486 = vld [vmem:[%s2475 + $0x28] sm:$0xf]
      %v2487 = vld [vmem:[%s2475 + $0x2c] sm:$0xf]
      %v2488 = vld [vmem:[%s2475 + $0x30] sm:$0xf]
      %v2489 = vld [vmem:[%s2475 + $0x34] sm:$0xf]
      %v2490 = vld [vmem:[%s2475 + $0x38] sm:$0xf]
      %v2491 = vld [vmem:[%s2475 + $0x3c] sm:$0xf]
      %v2520 = vunpack.c.l.b16 %v2447
      %v2521 = vunpack.c.l.b16 %v2448
      %v2522 = vunpack.c.l.b16 %v2449
      %v2523 = vunpack.c.l.b16 %v2450
      %v2524 = vunpack.c.l.b16 %v2451
      %v2525 = vunpack.c.l.b16 %v2452
      %v2526 = vunpack.c.l.b16 %v2453
      %v2527 = vunpack.c.l.b16 %v2454
      %v2528 = vunpack.c.l.b16 %v2455
      %v2529 = vunpack.c.l.b16 %v2456
      %v2530 = vunpack.c.l.b16 %v2457
      %v2531 = vunpack.c.l.b16 %v2458
      %v2532 = vunpack.c.l.b16 %v2459
      %v2533 = vunpack.c.l.b16 %v2460
      %v2534 = vunpack.c.l.b16 %v2461
      %v2535 = vunpack.c.l.b16 %v2462
      %v2536 = vunpack.c.l.b16 %v2463
      %v2537 = vunpack.c.l.b16 %v2464
      %v2538 = vunpack.c.l.b16 %v2465
      %v2539 = vunpack.c.l.b16 %v2466
      %v2540 = vunpack.c.l.b16 %v2467
      %v2541 = vunpack.c.l.b16 %v2468
      %v2542 = vunpack.c.l.b16 %v2469
      %v2543 = vunpack.c.l.b16 %v2470
      %v2544 = vunpack.c.l.b16 %v2471
      %v2545 = vunpack.c.l.b16 %v2472
      %v2546 = vunpack.c.l.b16 %v2473
      %v2547 = vunpack.c.l.b16 %v2474
      %v2548 = vpack.c.b16 %v2521, %v2520
      %v2549 = vpack.c.b16 %v2523, %v2522
      %v2550 = vpack.c.b16 %v2525, %v2524
      %v2551 = vpack.c.b16 %v2527, %v2526
      %v2552 = vpack.c.b16 %v2529, %v2528
      %v2553 = vpack.c.b16 %v2531, %v2530
      %v2554 = vpack.c.b16 %v2533, %v2532
      %v2555 = vpack.c.b16 %v2535, %v2534
      %v2556 = vpack.c.b16 %v2537, %v2536
      %v2557 = vpack.c.b16 %v2539, %v2538
      %v2558 = vpack.c.b16 %v2541, %v2540
      %v2559 = vpack.c.b16 %v2543, %v2542
      %v2560 = vpack.c.b16 %v2545, %v2544
      %v2561 = vpack.c.b16 %v2547, %v2546
      %v2562 = vrot.slane %v2548, 1
      %v2563 = vrot.slane %v2549, 1
      %v2564 = vsel %vm1205, %v2562, %v2563
      %v2565 = vrot.slane %v2550, 1
      %v2566 = vsel %vm1205, %v2563, %v2565
      %v2567 = vrot.slane %v2551, 1
      %v2568 = vsel %vm1205, %v2565, %v2567
      %v2569 = vrot.slane %v2552, 1
      %v2570 = vsel %vm1205, %v2567, %v2569
      %v2571 = vrot.slane %v2553, 1
      %v2572 = vsel %vm1205, %v2569, %v2571
      %v2573 = vrot.slane %v2554, 1
      %v2574 = vsel %vm1205, %v2571, %v2573
      %v2575 = vrot.slane %v2555, 1
      %v2576 = vsel %vm1205, %v2573, %v2575
      %v2577 = vrot.slane %v2556, 1
      %v2578 = vsel %vm1205, %v2575, %v2577
      %v2579 = vrot.slane %v2557, 1
      %v2580 = vsel %vm1205, %v2577, %v2579
      %v2581 = vrot.slane %v2558, 1
      %v2582 = vsel %vm1205, %v2579, %v2581
      %v2583 = vrot.slane %v2559, 1
      %v2584 = vsel %vm1205, %v2581, %v2583
      %v2585 = vrot.slane %v2560, 1
      %v2586 = vsel %vm1205, %v2583, %v2585
      %v2587 = vrot.slane %v2561, 1
      %v2588 = vsel %vm1205, %v2585, %v2587
      %v2619 = vunpack.c.l.b16 %v2476
      %v2620 = vunpack.c.l.b16 %v2477
      %v2621 = vunpack.c.l.b16 %v2478
      %v2622 = vunpack.c.l.b16 %v2479
      %v2623 = vunpack.c.l.b16 %v2480
      %v2624 = vunpack.c.l.b16 %v2481
      %v2625 = vunpack.c.l.b16 %v2482
      %v2626 = vunpack.c.l.b16 %v2483
      %v2627 = vunpack.c.l.b16 %v2484
      %v2628 = vunpack.c.l.b16 %v2485
      %v2629 = vunpack.c.l.b16 %v2486
      %v2630 = vunpack.c.l.b16 %v2487
      %v2631 = vunpack.c.l.b16 %v2488
      %v2632 = vunpack.c.l.b16 %v2489
      %v2633 = vunpack.c.l.b16 %v2490
      %v2634 = vunpack.c.l.b16 %v2491
      %v2635 = vpack.c.b16 %v2620, %v2619
      %v2636 = vpack.c.b16 %v2622, %v2621
      %v2637 = vpack.c.b16 %v2624, %v2623
      %v2638 = vpack.c.b16 %v2626, %v2625
      %v2639 = vpack.c.b16 %v2628, %v2627
      %v2640 = vpack.c.b16 %v2630, %v2629
      %v2641 = vpack.c.b16 %v2632, %v2631
      %v2642 = vpack.c.b16 %v2634, %v2633
      %2651 = vmatprep.subr.bf16.mxu0 0
      %2652 = vmatpush1.bf16.msra.mxu0 %v2642
      %2653 = vmatprep.subr.bf16.mxu0 0
      %2654 = vmatpush1.bf16.msra.mxu0 %v2641
      %2655 = vmatprep.subr.bf16.mxu0 0
      %2656 = vmatpush1.bf16.msra.mxu0 %v2640
      %2657 = vmatprep.subr.bf16.mxu0 0
      %2658 = vmatpush1.bf16.msra.mxu0 %v2639
      %2659 = vmatprep.subr.bf16.mxu0 0
      %2660 = vmatpush1.bf16.msra.mxu0 %v2638
      %2661 = vmatprep.subr.bf16.mxu0 0
      %2662 = vmatpush1.bf16.msra.mxu0 %v2637
      %2663 = vmatprep.subr.bf16.mxu0 0
      %2664 = vmatpush1.bf16.msra.mxu0 %v2636
      %2665 = vmatprep.subr.bf16.mxu0 0
      %2666 = vmatpush1.bf16.msra.mxu0 %v2635
      %2667 = vmatprep.subr.bf16.mxu0 0
      %2668 = vmatpush2.bf16.msra.mxu0 0
      %2669 = vmatprep.subr.bf16.mxu0 0
      %2670 = vmatpush2.bf16.msra.mxu0 0
      %2671 = vmatprep.subr.bf16.mxu0 0
      %2672 = vmatpush2.bf16.msra.mxu0 0
      %2673 = vmatprep.subr.bf16.mxu0 0
      %2674 = vmatpush2.bf16.msra.mxu0 0
      %2675 = vmatprep.subr.bf16.mxu0 0
      %2676 = vmatpush2.bf16.msra.mxu0 0
      %2677 = vmatprep.subr.bf16.mxu0 0
      %2678 = vmatpush2.bf16.msra.mxu0 0
      %2679 = vmatprep.subr.bf16.mxu0 0
      %2680 = vmatpush2.bf16.msra.mxu0 0
      %2681 = vmatprep.subr.bf16.mxu0 0
      %2682 = vmatpush2.bf16.msra.mxu0 0
      %2683 = vmatprep.mubr.bf16.mxu0 0
      %2684 = vmatmul.mubr.bf16.gmra.mxu0 %v2564
      %v2685 = vpop.f32.mrf.mxu0
      %v2686 = vadd.f32 0.0, %v2685
      %v2687 = vpop.f32.mrf.mxu0
      %v2688 = vpop.f32.mrf.mxu0
      %v2689 = vadd.f32 0.0, %v2688
      %v2690 = vpop.f32.mrf.mxu0
      %2691 = vmatprep.mubr.bf16.mxu0 0
      %2692 = vmatmul.mubr.bf16.gmra.mxu0 %v2566
      %v2693 = vpop.f32.mrf.mxu0
      %v2694 = vadd.f32 0.0, %v2693
      %v2695 = vpop.f32.mrf.mxu0
      %v2696 = vpop.f32.mrf.mxu0
      %v2697 = vadd.f32 0.0, %v2696
      %v2698 = vpop.f32.mrf.mxu0
      %2699 = vmatprep.mubr.bf16.mxu0 0
      %2700 = vmatmul.mubr.bf16.gmra.mxu0 %v2568
      %v2701 = vpop.f32.mrf.mxu0
      %v2702 = vadd.f32 0.0, %v2701
      %v2703 = vpop.f32.mrf.mxu0
      %v2704 = vpop.f32.mrf.mxu0
      %v2705 = vadd.f32 0.0, %v2704
      %v2706 = vpop.f32.mrf.mxu0
      %2707 = vmatprep.mubr.bf16.mxu0 0
      %2708 = vmatmul.mubr.bf16.gmra.mxu0 %v2570
      %v2709 = vpop.f32.mrf.mxu0
      %v2710 = vadd.f32 0.0, %v2709
      %v2711 = vpop.f32.mrf.mxu0
      %v2712 = vpop.f32.mrf.mxu0
      %v2713 = vadd.f32 0.0, %v2712
      %v2714 = vpop.f32.mrf.mxu0
      %2715 = vmatprep.mubr.bf16.mxu0 0
      %2716 = vmatmul.mubr.bf16.gmra.mxu0 %v2572
      %v2717 = vpop.f32.mrf.mxu0
      %v2718 = vadd.f32 0.0, %v2717
      %v2719 = vpop.f32.mrf.mxu0
      %v2720 = vpop.f32.mrf.mxu0
      %v2721 = vadd.f32 0.0, %v2720
      %v2722 = vpop.f32.mrf.mxu0
      %2723 = vmatprep.mubr.bf16.mxu0 0
      %2724 = vmatmul.mubr.bf16.gmra.mxu0 %v2574
      %v2725 = vpop.f32.mrf.mxu0
      %v2726 = vadd.f32 0.0, %v2725
      %v2727 = vpop.f32.mrf.mxu0
      %v2728 = vpop.f32.mrf.mxu0
      %v2729 = vadd.f32 0.0, %v2728
      %v2730 = vpop.f32.mrf.mxu0
      %2731 = vmatprep.mubr.bf16.mxu0 0
      %2732 = vmatmul.mubr.bf16.gmra.mxu0 %v2576
      %v2733 = vpop.f32.mrf.mxu0
      %v2734 = vadd.f32 0.0, %v2733
      %v2735 = vpop.f32.mrf.mxu0
      %v2736 = vpop.f32.mrf.mxu0
      %v2737 = vadd.f32 0.0, %v2736
      %v2738 = vpop.f32.mrf.mxu0
      %2739 = vmatprep.mubr.bf16.mxu0 0
      %2740 = vmatmul.mubr.bf16.gmra.mxu0 %v2578
      %v2741 = vpop.f32.mrf.mxu0
      %v2742 = vadd.f32 0.0, %v2741
      %v2743 = vpop.f32.mrf.mxu0
      %v2744 = vpop.f32.mrf.mxu0
      %v2745 = vadd.f32 0.0, %v2744
      %v2746 = vpop.f32.mrf.mxu0
      %2747 = vmatprep.mubr.bf16.mxu0 0
      %2748 = vmatmul.mubr.bf16.gmra.mxu0 %v2580
      %v2749 = vpop.f32.mrf.mxu0
      %v2750 = vadd.f32 0.0, %v2749
      %v2751 = vpop.f32.mrf.mxu0
      %v2752 = vpop.f32.mrf.mxu0
      %v2753 = vadd.f32 0.0, %v2752
      %v2754 = vpop.f32.mrf.mxu0
      %2755 = vmatprep.mubr.bf16.mxu0 0
      %2756 = vmatmul.mubr.bf16.gmra.mxu0 %v2582
      %v2757 = vpop.f32.mrf.mxu0
      %v2758 = vadd.f32 0.0, %v2757
      %v2759 = vpop.f32.mrf.mxu0
      %v2760 = vpop.f32.mrf.mxu0
      %v2761 = vadd.f32 0.0, %v2760
      %v2762 = vpop.f32.mrf.mxu0
      %2763 = vmatprep.mubr.bf16.mxu0 0
      %2764 = vmatmul.mubr.bf16.gmra.mxu0 %v2584
      %v2765 = vpop.f32.mrf.mxu0
      %v2766 = vadd.f32 0.0, %v2765
      %v2767 = vpop.f32.mrf.mxu0
      %v2768 = vpop.f32.mrf.mxu0
      %v2769 = vadd.f32 0.0, %v2768
      %v2770 = vpop.f32.mrf.mxu0
      %2771 = vmatprep.mubr.bf16.mxu0 0
      %2772 = vmatmul.mubr.bf16.gmra.mxu0 %v2586
      %v2773 = vpop.f32.mrf.mxu0
      %v2774 = vadd.f32 0.0, %v2773
      %v2775 = vpop.f32.mrf.mxu0
      %v2776 = vpop.f32.mrf.mxu0
      %v2777 = vadd.f32 0.0, %v2776
      %v2778 = vpop.f32.mrf.mxu0
      %2779 = vmatprep.mubr.bf16.mxu0 0
      %2780 = vmatmul.mubr.bf16.gmra.mxu0 %v2588
      %v2781 = vpop.f32.mrf.mxu0
      %v2782 = vadd.f32 0.0, %v2781
      %v2783 = vpop.f32.mrf.mxu0
      %v2784 = vpop.f32.mrf.mxu0
      %v2785 = vadd.f32 0.0, %v2784
      %v2786 = vpop.f32.mrf.mxu0
      %2787 = vmatprep.mubr.bf16.mxu0 0
      %2788 = vmatmul.mubr.bf16.gmra.mxu0 %v2587
      %v2789 = vpop.f32.mrf.mxu0
      %v2790 = vadd.f32 0.0, %v2789
      %v2791 = vpop.f32.mrf.mxu0
      %v2792 = vpop.f32.mrf.mxu0
      %v2793 = vadd.f32 0.0, %v2792
      %v2794 = vpop.f32.mrf.mxu0
      %2795 = vdwg.mxu0
      %v2796 = vld [vmem:[#allocation2] sm:$0xff]
      %v2797 = vld [vmem:[#allocation2 + $0x8] sm:$0xff]
      %v2798 = vld [vmem:[#allocation2 + $0x10] sm:$0xff]
      %v2799 = vld [vmem:[#allocation2 + $0x18] sm:$0xff]
      %v2800 = vld [vmem:[#allocation2 + $0x20] sm:$0xff]
      %v2801 = vld [vmem:[#allocation2 + $0x28] sm:$0xff]
      %v2802 = vld [vmem:[#allocation2 + $0x30] sm:$0xff]
      %v2803 = vld [vmem:[#allocation2 + $0x38] sm:$0xff]
      %v2804 = vld [vmem:[#allocation2 + $0x40] sm:$0xff]
      %v2805 = vld [vmem:[#allocation2 + $0x48] sm:$0xff]
      %v2806 = vld [vmem:[#allocation2 + $0x50] sm:$0xff]
      %v2807 = vld [vmem:[#allocation2 + $0x58] sm:$0xff]
      %v2808 = vld [vmem:[#allocation2 + $0x60] sm:$0xff]
      %v2809 = vld [vmem:[#allocation2 + $0x68] sm:$0xff]
      %v2810 = vld [vmem:[#allocation2 + $0x70] sm:$0xff]
      %v2811 = vld [vmem:[#allocation2 + $0x78] sm:$0xff]
      %v2812 = vld [vmem:[#allocation2 + $0x80] sm:$0xff]
      %v2813 = vld [vmem:[#allocation2 + $0x88] sm:$0xff]
      %v2814 = vld [vmem:[#allocation2 + $0x90] sm:$0xff]
      %v2815 = vld [vmem:[#allocation2 + $0x98] sm:$0xff]
      %v2816 = vld [vmem:[#allocation2 + $0xa0] sm:$0xff]
      %v2817 = vld [vmem:[#allocation2 + $0xa8] sm:$0xff]
      %v2818 = vld [vmem:[#allocation2 + $0xb0] sm:$0xff]
      %v2819 = vld [vmem:[#allocation2 + $0xb8] sm:$0xff]
      %v2820 = vld [vmem:[#allocation2 + $0xc0] sm:$0xff]
      %v2821 = vld [vmem:[#allocation2 + $0xc8] sm:$0xff]
      %v2822 = vld [vmem:[#allocation2 + $0xd0] sm:$0xff]
      %v2823 = vld [vmem:[#allocation2 + $0xd8] sm:$0x3f]
      %v2824 = vadd.f32 %v2796, %v2686
      %v2825 = vadd.f32 %v2797, %v2689
      %v2826 = vadd.f32 %v2798, %v2694
      %v2827 = vadd.f32 %v2799, %v2697
      %v2828 = vadd.f32 %v2800, %v2702
      %v2829 = vadd.f32 %v2801, %v2705
      %v2830 = vadd.f32 %v2802, %v2710
      %v2831 = vadd.f32 %v2803, %v2713
      %v2832 = vadd.f32 %v2804, %v2718
      %v2833 = vadd.f32 %v2805, %v2721
      %v2834 = vadd.f32 %v2806, %v2726
      %v2835 = vadd.f32 %v2807, %v2729
      %v2836 = vadd.f32 %v2808, %v2734
      %v2837 = vadd.f32 %v2809, %v2737
      %v2838 = vadd.f32 %v2810, %v2742
      %v2839 = vadd.f32 %v2811, %v2745
      %v2840 = vadd.f32 %v2812, %v2750
      %v2841 = vadd.f32 %v2813, %v2753
      %v2842 = vadd.f32 %v2814, %v2758
      %v2843 = vadd.f32 %v2815, %v2761
      %v2844 = vadd.f32 %v2816, %v2766
      %v2845 = vadd.f32 %v2817, %v2769
      %v2846 = vadd.f32 %v2818, %v2774
      %v2847 = vadd.f32 %v2819, %v2777
      %v2848 = vadd.f32 %v2820, %v2782
      %v2849 = vadd.f32 %v2821, %v2785
      %v2850 = vadd.f32 %v2822, %v2790
      %v2851 = vadd.f32 %v2823, %v2793
      %2852 = vst [vmem:[#allocation2] sm:$0xff] %v2824
      %2853 = vst [vmem:[#allocation2 + $0x8] sm:$0xff] %v2825
      %2854 = vst [vmem:[#allocation2 + $0x10] sm:$0xff] %v2826
      %2855 = vst [vmem:[#allocation2 + $0x18] sm:$0xff] %v2827
      %2856 = vst [vmem:[#allocation2 + $0x20] sm:$0xff] %v2828
      %2857 = vst [vmem:[#allocation2 + $0x28] sm:$0xff] %v2829
      %2858 = vst [vmem:[#allocation2 + $0x30] sm:$0xff] %v2830
      %2859 = vst [vmem:[#allocation2 + $0x38] sm:$0xff] %v2831
      %2860 = vst [vmem:[#allocation2 + $0x40] sm:$0xff] %v2832
      %2861 = vst [vmem:[#allocation2 + $0x48] sm:$0xff] %v2833
      %2862 = vst [vmem:[#allocation2 + $0x50] sm:$0xff] %v2834
      %2863 = vst [vmem:[#allocation2 + $0x58] sm:$0xff] %v2835
      %2864 = vst [vmem:[#allocation2 + $0x60] sm:$0xff] %v2836
      %2865 = vst [vmem:[#allocation2 + $0x68] sm:$0xff] %v2837
      %2866 = vst [vmem:[#allocation2 + $0x70] sm:$0xff] %v2838
      %2867 = vst [vmem:[#allocation2 + $0x78] sm:$0xff] %v2839
      %2868 = vst [vmem:[#allocation2 + $0x80] sm:$0xff] %v2840
      %2869 = vst [vmem:[#allocation2 + $0x88] sm:$0xff] %v2841
      %2870 = vst [vmem:[#allocation2 + $0x90] sm:$0xff] %v2842
      %2871 = vst [vmem:[#allocation2 + $0x98] sm:$0xff] %v2843
      %2872 = vst [vmem:[#allocation2 + $0xa0] sm:$0xff] %v2844
      %2873 = vst [vmem:[#allocation2 + $0xa8] sm:$0xff] %v2845
      %2874 = vst [vmem:[#allocation2 + $0xb0] sm:$0xff] %v2846
      %2875 = vst [vmem:[#allocation2 + $0xb8] sm:$0xff] %v2847
      %2876 = vst [vmem:[#allocation2 + $0xc0] sm:$0xff] %v2848
      %2877 = vst [vmem:[#allocation2 + $0xc8] sm:$0xff] %v2849
      %2878 = vst [vmem:[#allocation2 + $0xd0] sm:$0xff] %v2850
      %2879 = vst [vmem:[#allocation2 + $0xd8] sm:$0x3f] %v2851
      %v2880 = vld [vmem:[%s206 + $0x10] sm:$0xf]
      %v2881 = vld [vmem:[%s206 + $0x14] sm:$0xf]
      %v2882 = vld [vmem:[%s206 + $0x18] sm:$0xf]
      %v2883 = vld [vmem:[%s206 + $0x1c] sm:$0xf]
      %v2884 = vld [vmem:[%s206 + $0x20] sm:$0xf]
      %v2885 = vld [vmem:[%s206 + $0x24] sm:$0xf]
      %v2886 = vld [vmem:[%s206 + $0x28] sm:$0xf]
      %v2887 = vld [vmem:[%s206 + $0x2c] sm:$0xf]
      %v2888 = vld [vmem:[%s206 + $0x30] sm:$0xf]
      %v2889 = vld [vmem:[%s206 + $0x34] sm:$0xf]
      %v2890 = vld [vmem:[%s206 + $0x38] sm:$0xf]
      %v2891 = vld [vmem:[%s206 + $0x3c] sm:$0xf]
      %v2892 = vld [vmem:[%s206 + $0x40] sm:$0xf]
      %v2893 = vld [vmem:[%s206 + $0x44] sm:$0xf]
      %v2894 = vld [vmem:[%s206 + $0x48] sm:$0xf]
      %v2895 = vld [vmem:[%s206 + $0x4c] sm:$0xf]
      %v2896 = vld [vmem:[%s206 + $0x50] sm:$0xf]
      %v2897 = vld [vmem:[%s206 + $0x54] sm:$0xf]
      %v2898 = vld [vmem:[%s206 + $0x58] sm:$0xf]
      %v2899 = vld [vmem:[%s206 + $0x5c] sm:$0xf]
      %v2900 = vld [vmem:[%s206 + $0x60] sm:$0xf]
      %v2901 = vld [vmem:[%s206 + $0x64] sm:$0xf]
      %v2902 = vld [vmem:[%s206 + $0x68] sm:$0xf]
      %v2903 = vld [vmem:[%s206 + $0x6c] sm:$0xf]
      %v2904 = vld [vmem:[%s206 + $0x70] sm:$0xf]
      %v2905 = vld [vmem:[%s206 + $0x74] sm:$0xf]
      %v2906 = vld [vmem:[%s206 + $0x78] sm:$0xf]
      %v2907 = vld [vmem:[%s206 + $0x7c] sm:$0x7]
      %s2908 = scalar_lea.vmem %s210, 384
      %v2909 = vld [vmem:[%s2908] sm:$0xf]
      %v2910 = vld [vmem:[%s2908 + $0x4] sm:$0xf]
      %v2911 = vld [vmem:[%s2908 + $0x8] sm:$0xf]
      %v2912 = vld [vmem:[%s2908 + $0xc] sm:$0xf]
      %v2913 = vld [vmem:[%s2908 + $0x10] sm:$0xf]
      %v2914 = vld [vmem:[%s2908 + $0x14] sm:$0xf]
      %v2915 = vld [vmem:[%s2908 + $0x18] sm:$0xf]
      %v2916 = vld [vmem:[%s2908 + $0x1c] sm:$0xf]
      %v2917 = vld [vmem:[%s2908 + $0x20] sm:$0xf]
      %v2918 = vld [vmem:[%s2908 + $0x24] sm:$0xf]
      %v2919 = vld [vmem:[%s2908 + $0x28] sm:$0xf]
      %v2920 = vld [vmem:[%s2908 + $0x2c] sm:$0xf]
      %v2921 = vld [vmem:[%s2908 + $0x30] sm:$0xf]
      %v2922 = vld [vmem:[%s2908 + $0x34] sm:$0xf]
      %v2923 = vld [vmem:[%s2908 + $0x38] sm:$0xf]
      %v2924 = vld [vmem:[%s2908 + $0x3c] sm:$0xf]
      %v2953 = vunpack.c.l.b16 %v2880
      %v2954 = vunpack.c.l.b16 %v2881
      %v2955 = vunpack.c.l.b16 %v2882
      %v2956 = vunpack.c.l.b16 %v2883
      %v2957 = vunpack.c.l.b16 %v2884
      %v2958 = vunpack.c.l.b16 %v2885
      %v2959 = vunpack.c.l.b16 %v2886
      %v2960 = vunpack.c.l.b16 %v2887
      %v2961 = vunpack.c.l.b16 %v2888
      %v2962 = vunpack.c.l.b16 %v2889
      %v2963 = vunpack.c.l.b16 %v2890
      %v2964 = vunpack.c.l.b16 %v2891
      %v2965 = vunpack.c.l.b16 %v2892
      %v2966 = vunpack.c.l.b16 %v2893
      %v2967 = vunpack.c.l.b16 %v2894
      %v2968 = vunpack.c.l.b16 %v2895
      %v2969 = vunpack.c.l.b16 %v2896
      %v2970 = vunpack.c.l.b16 %v2897
      %v2971 = vunpack.c.l.b16 %v2898
      %v2972 = vunpack.c.l.b16 %v2899
      %v2973 = vunpack.c.l.b16 %v2900
      %v2974 = vunpack.c.l.b16 %v2901
      %v2975 = vunpack.c.l.b16 %v2902
      %v2976 = vunpack.c.l.b16 %v2903
      %v2977 = vunpack.c.l.b16 %v2904
      %v2978 = vunpack.c.l.b16 %v2905
      %v2979 = vunpack.c.l.b16 %v2906
      %v2980 = vunpack.c.l.b16 %v2907
      %v2981 = vpack.c.b16 %v2954, %v2953
      %v2982 = vpack.c.b16 %v2956, %v2955
      %v2983 = vpack.c.b16 %v2958, %v2957
      %v2984 = vpack.c.b16 %v2960, %v2959
      %v2985 = vpack.c.b16 %v2962, %v2961
      %v2986 = vpack.c.b16 %v2964, %v2963
      %v2987 = vpack.c.b16 %v2966, %v2965
      %v2988 = vpack.c.b16 %v2968, %v2967
      %v2989 = vpack.c.b16 %v2970, %v2969
      %v2990 = vpack.c.b16 %v2972, %v2971
      %v2991 = vpack.c.b16 %v2974, %v2973
      %v2992 = vpack.c.b16 %v2976, %v2975
      %v2993 = vpack.c.b16 %v2978, %v2977
      %v2994 = vpack.c.b16 %v2980, %v2979
      %v3025 = vunpack.c.l.b16 %v2909
      %v3026 = vunpack.c.l.b16 %v2910
      %v3027 = vunpack.c.l.b16 %v2911
      %v3028 = vunpack.c.l.b16 %v2912
      %v3029 = vunpack.c.l.b16 %v2913
      %v3030 = vunpack.c.l.b16 %v2914
      %v3031 = vunpack.c.l.b16 %v2915
      %v3032 = vunpack.c.l.b16 %v2916
      %v3033 = vunpack.c.l.b16 %v2917
      %v3034 = vunpack.c.l.b16 %v2918
      %v3035 = vunpack.c.l.b16 %v2919
      %v3036 = vunpack.c.l.b16 %v2920
      %v3037 = vunpack.c.l.b16 %v2921
      %v3038 = vunpack.c.l.b16 %v2922
      %v3039 = vunpack.c.l.b16 %v2923
      %v3040 = vunpack.c.l.b16 %v2924
      %v3041 = vpack.c.b16 %v3026, %v3025
      %v3042 = vpack.c.b16 %v3028, %v3027
      %v3043 = vpack.c.b16 %v3030, %v3029
      %v3044 = vpack.c.b16 %v3032, %v3031
      %v3045 = vpack.c.b16 %v3034, %v3033
      %v3046 = vpack.c.b16 %v3036, %v3035
      %v3047 = vpack.c.b16 %v3038, %v3037
      %v3048 = vpack.c.b16 %v3040, %v3039
      %3057 = vmatprep.subr.bf16.mxu0 0
      %3058 = vmatpush1.bf16.msra.mxu0 %v3048
      %3059 = vmatprep.subr.bf16.mxu0 0
      %3060 = vmatpush1.bf16.msra.mxu0 %v3047
      %3061 = vmatprep.subr.bf16.mxu0 0
      %3062 = vmatpush1.bf16.msra.mxu0 %v3046
      %3063 = vmatprep.subr.bf16.mxu0 0
      %3064 = vmatpush1.bf16.msra.mxu0 %v3045
      %3065 = vmatprep.subr.bf16.mxu0 0
      %3066 = vmatpush1.bf16.msra.mxu0 %v3044
      %3067 = vmatprep.subr.bf16.mxu0 0
      %3068 = vmatpush1.bf16.msra.mxu0 %v3043
      %3069 = vmatprep.subr.bf16.mxu0 0
      %3070 = vmatpush1.bf16.msra.mxu0 %v3042
      %3071 = vmatprep.subr.bf16.mxu0 0
      %3072 = vmatpush1.bf16.msra.mxu0 %v3041
      %3073 = vmatprep.subr.bf16.mxu0 0
      %3074 = vmatpush2.bf16.msra.mxu0 0
      %3075 = vmatprep.subr.bf16.mxu0 0
      %3076 = vmatpush2.bf16.msra.mxu0 0
      %3077 = vmatprep.subr.bf16.mxu0 0
      %3078 = vmatpush2.bf16.msra.mxu0 0
      %3079 = vmatprep.subr.bf16.mxu0 0
      %3080 = vmatpush2.bf16.msra.mxu0 0
      %3081 = vmatprep.subr.bf16.mxu0 0
      %3082 = vmatpush2.bf16.msra.mxu0 0
      %3083 = vmatprep.subr.bf16.mxu0 0
      %3084 = vmatpush2.bf16.msra.mxu0 0
      %3085 = vmatprep.subr.bf16.mxu0 0
      %3086 = vmatpush2.bf16.msra.mxu0 0
      %3087 = vmatprep.subr.bf16.mxu0 0
      %3088 = vmatpush2.bf16.msra.mxu0 0
      %3089 = vmatprep.mubr.bf16.mxu0 0
      %3090 = vmatmul.mubr.bf16.gmra.mxu0 %v2981
      %v3091 = vpop.f32.mrf.mxu0
      %v3092 = vadd.f32 0.0, %v3091
      %v3093 = vpop.f32.mrf.mxu0
      %v3094 = vpop.f32.mrf.mxu0
      %v3095 = vadd.f32 0.0, %v3094
      %v3096 = vpop.f32.mrf.mxu0
      %3097 = vmatprep.mubr.bf16.mxu0 0
      %3098 = vmatmul.mubr.bf16.gmra.mxu0 %v2982
      %v3099 = vpop.f32.mrf.mxu0
      %v3100 = vadd.f32 0.0, %v3099
      %v3101 = vpop.f32.mrf.mxu0
      %v3102 = vpop.f32.mrf.mxu0
      %v3103 = vadd.f32 0.0, %v3102
      %v3104 = vpop.f32.mrf.mxu0
      %3105 = vmatprep.mubr.bf16.mxu0 0
      %3106 = vmatmul.mubr.bf16.gmra.mxu0 %v2983
      %v3107 = vpop.f32.mrf.mxu0
      %v3108 = vadd.f32 0.0, %v3107
      %v3109 = vpop.f32.mrf.mxu0
      %v3110 = vpop.f32.mrf.mxu0
      %v3111 = vadd.f32 0.0, %v3110
      %v3112 = vpop.f32.mrf.mxu0
      %3113 = vmatprep.mubr.bf16.mxu0 0
      %3114 = vmatmul.mubr.bf16.gmra.mxu0 %v2984
      %v3115 = vpop.f32.mrf.mxu0
      %v3116 = vadd.f32 0.0, %v3115
      %v3117 = vpop.f32.mrf.mxu0
      %v3118 = vpop.f32.mrf.mxu0
      %v3119 = vadd.f32 0.0, %v3118
      %v3120 = vpop.f32.mrf.mxu0
      %3121 = vmatprep.mubr.bf16.mxu0 0
      %3122 = vmatmul.mubr.bf16.gmra.mxu0 %v2985
      %v3123 = vpop.f32.mrf.mxu0
      %v3124 = vadd.f32 0.0, %v3123
      %v3125 = vpop.f32.mrf.mxu0
      %v3126 = vpop.f32.mrf.mxu0
      %v3127 = vadd.f32 0.0, %v3126
      %v3128 = vpop.f32.mrf.mxu0
      %3129 = vmatprep.mubr.bf16.mxu0 0
      %3130 = vmatmul.mubr.bf16.gmra.mxu0 %v2986
      %v3131 = vpop.f32.mrf.mxu0
      %v3132 = vadd.f32 0.0, %v3131
      %v3133 = vpop.f32.mrf.mxu0
      %v3134 = vpop.f32.mrf.mxu0
      %v3135 = vadd.f32 0.0, %v3134
      %v3136 = vpop.f32.mrf.mxu0
      %3137 = vmatprep.mubr.bf16.mxu0 0
      %3138 = vmatmul.mubr.bf16.gmra.mxu0 %v2987
      %v3139 = vpop.f32.mrf.mxu0
      %v3140 = vadd.f32 0.0, %v3139
      %v3141 = vpop.f32.mrf.mxu0
      %v3142 = vpop.f32.mrf.mxu0
      %v3143 = vadd.f32 0.0, %v3142
      %v3144 = vpop.f32.mrf.mxu0
      %3145 = vmatprep.mubr.bf16.mxu0 0
      %3146 = vmatmul.mubr.bf16.gmra.mxu0 %v2988
      %v3147 = vpop.f32.mrf.mxu0
      %v3148 = vadd.f32 0.0, %v3147
      %v3149 = vpop.f32.mrf.mxu0
      %v3150 = vpop.f32.mrf.mxu0
      %v3151 = vadd.f32 0.0, %v3150
      %v3152 = vpop.f32.mrf.mxu0
      %3153 = vmatprep.mubr.bf16.mxu0 0
      %3154 = vmatmul.mubr.bf16.gmra.mxu0 %v2989
      %v3155 = vpop.f32.mrf.mxu0
      %v3156 = vadd.f32 0.0, %v3155
      %v3157 = vpop.f32.mrf.mxu0
      %v3158 = vpop.f32.mrf.mxu0
      %v3159 = vadd.f32 0.0, %v3158
      %v3160 = vpop.f32.mrf.mxu0
      %3161 = vmatprep.mubr.bf16.mxu0 0
      %3162 = vmatmul.mubr.bf16.gmra.mxu0 %v2990
      %v3163 = vpop.f32.mrf.mxu0
      %v3164 = vadd.f32 0.0, %v3163
      %v3165 = vpop.f32.mrf.mxu0
      %v3166 = vpop.f32.mrf.mxu0
      %v3167 = vadd.f32 0.0, %v3166
      %v3168 = vpop.f32.mrf.mxu0
      %3169 = vmatprep.mubr.bf16.mxu0 0
      %3170 = vmatmul.mubr.bf16.gmra.mxu0 %v2991
      %v3171 = vpop.f32.mrf.mxu0
      %v3172 = vadd.f32 0.0, %v3171
      %v3173 = vpop.f32.mrf.mxu0
      %v3174 = vpop.f32.mrf.mxu0
      %v3175 = vadd.f32 0.0, %v3174
      %v3176 = vpop.f32.mrf.mxu0
      %3177 = vmatprep.mubr.bf16.mxu0 0
      %3178 = vmatmul.mubr.bf16.gmra.mxu0 %v2992
      %v3179 = vpop.f32.mrf.mxu0
      %v3180 = vadd.f32 0.0, %v3179
      %v3181 = vpop.f32.mrf.mxu0
      %v3182 = vpop.f32.mrf.mxu0
      %v3183 = vadd.f32 0.0, %v3182
      %v3184 = vpop.f32.mrf.mxu0
      %3185 = vmatprep.mubr.bf16.mxu0 0
      %3186 = vmatmul.mubr.bf16.gmra.mxu0 %v2993
      %v3187 = vpop.f32.mrf.mxu0
      %v3188 = vadd.f32 0.0, %v3187
      %v3189 = vpop.f32.mrf.mxu0
      %v3190 = vpop.f32.mrf.mxu0
      %v3191 = vadd.f32 0.0, %v3190
      %v3192 = vpop.f32.mrf.mxu0
      %3193 = vmatprep.mubr.bf16.mxu0 0
      %3194 = vmatmul.mubr.bf16.gmra.mxu0 %v2994
      %v3195 = vpop.f32.mrf.mxu0
      %v3196 = vadd.f32 0.0, %v3195
      %v3197 = vpop.f32.mrf.mxu0
      %v3198 = vpop.f32.mrf.mxu0
      %v3199 = vadd.f32 0.0, %v3198
      %v3200 = vpop.f32.mrf.mxu0
      %3201 = vdwg.mxu0
      %v3202 = vld [vmem:[#allocation2] sm:$0xff]
      %v3203 = vld [vmem:[#allocation2 + $0x8] sm:$0xff]
      %v3204 = vld [vmem:[#allocation2 + $0x10] sm:$0xff]
      %v3205 = vld [vmem:[#allocation2 + $0x18] sm:$0xff]
      %v3206 = vld [vmem:[#allocation2 + $0x20] sm:$0xff]
      %v3207 = vld [vmem:[#allocation2 + $0x28] sm:$0xff]
      %v3208 = vld [vmem:[#allocation2 + $0x30] sm:$0xff]
      %v3209 = vld [vmem:[#allocation2 + $0x38] sm:$0xff]
      %v3210 = vld [vmem:[#allocation2 + $0x40] sm:$0xff]
      %v3211 = vld [vmem:[#allocation2 + $0x48] sm:$0xff]
      %v3212 = vld [vmem:[#allocation2 + $0x50] sm:$0xff]
      %v3213 = vld [vmem:[#allocation2 + $0x58] sm:$0xff]
      %v3214 = vld [vmem:[#allocation2 + $0x60] sm:$0xff]
      %v3215 = vld [vmem:[#allocation2 + $0x68] sm:$0xff]
      %v3216 = vld [vmem:[#allocation2 + $0x70] sm:$0xff]
      %v3217 = vld [vmem:[#allocation2 + $0x78] sm:$0xff]
      %v3218 = vld [vmem:[#allocation2 + $0x80] sm:$0xff]
      %v3219 = vld [vmem:[#allocation2 + $0x88] sm:$0xff]
      %v3220 = vld [vmem:[#allocation2 + $0x90] sm:$0xff]
      %v3221 = vld [vmem:[#allocation2 + $0x98] sm:$0xff]
      %v3222 = vld [vmem:[#allocation2 + $0xa0] sm:$0xff]
      %v3223 = vld [vmem:[#allocation2 + $0xa8] sm:$0xff]
      %v3224 = vld [vmem:[#allocation2 + $0xb0] sm:$0xff]
      %v3225 = vld [vmem:[#allocation2 + $0xb8] sm:$0xff]
      %v3226 = vld [vmem:[#allocation2 + $0xc0] sm:$0xff]
      %v3227 = vld [vmem:[#allocation2 + $0xc8] sm:$0xff]
      %v3228 = vld [vmem:[#allocation2 + $0xd0] sm:$0xff]
      %v3229 = vld [vmem:[#allocation2 + $0xd8] sm:$0x3f]
      %v3230 = vadd.f32 %v3202, %v3092
      %v3231 = vadd.f32 %v3203, %v3095
      %v3232 = vadd.f32 %v3204, %v3100
      %v3233 = vadd.f32 %v3205, %v3103
      %v3234 = vadd.f32 %v3206, %v3108
      %v3235 = vadd.f32 %v3207, %v3111
      %v3236 = vadd.f32 %v3208, %v3116
      %v3237 = vadd.f32 %v3209, %v3119
      %v3238 = vadd.f32 %v3210, %v3124
      %v3239 = vadd.f32 %v3211, %v3127
      %v3240 = vadd.f32 %v3212, %v3132
      %v3241 = vadd.f32 %v3213, %v3135
      %v3242 = vadd.f32 %v3214, %v3140
      %v3243 = vadd.f32 %v3215, %v3143
      %v3244 = vadd.f32 %v3216, %v3148
      %v3245 = vadd.f32 %v3217, %v3151
      %v3246 = vadd.f32 %v3218, %v3156
      %v3247 = vadd.f32 %v3219, %v3159
      %v3248 = vadd.f32 %v3220, %v3164
      %v3249 = vadd.f32 %v3221, %v3167
      %v3250 = vadd.f32 %v3222, %v3172
      %v3251 = vadd.f32 %v3223, %v3175
      %v3252 = vadd.f32 %v3224, %v3180
      %v3253 = vadd.f32 %v3225, %v3183
      %v3254 = vadd.f32 %v3226, %v3188
      %v3255 = vadd.f32 %v3227, %v3191
      %v3256 = vadd.f32 %v3228, %v3196
      %v3257 = vadd.f32 %v3229, %v3199
      %3258 = vst [vmem:[#allocation2] sm:$0xff] %v3230
      %3259 = vst [vmem:[#allocation2 + $0x8] sm:$0xff] %v3231
      %3260 = vst [vmem:[#allocation2 + $0x10] sm:$0xff] %v3232
      %3261 = vst [vmem:[#allocation2 + $0x18] sm:$0xff] %v3233
      %3262 = vst [vmem:[#allocation2 + $0x20] sm:$0xff] %v3234
      %3263 = vst [vmem:[#allocation2 + $0x28] sm:$0xff] %v3235
      %3264 = vst [vmem:[#allocation2 + $0x30] sm:$0xff] %v3236
      %3265 = vst [vmem:[#allocation2 + $0x38] sm:$0xff] %v3237
      %3266 = vst [vmem:[#allocation2 + $0x40] sm:$0xff] %v3238
      %3267 = vst [vmem:[#allocation2 + $0x48] sm:$0xff] %v3239
      %3268 = vst [vmem:[#allocation2 + $0x50] sm:$0xff] %v3240
      %3269 = vst [vmem:[#allocation2 + $0x58] sm:$0xff] %v3241
      %3270 = vst [vmem:[#allocation2 + $0x60] sm:$0xff] %v3242
      %3271 = vst [vmem:[#allocation2 + $0x68] sm:$0xff] %v3243
      %3272 = vst [vmem:[#allocation2 + $0x70] sm:$0xff] %v3244
      %3273 = vst [vmem:[#allocation2 + $0x78] sm:$0xff] %v3245
      %3274 = vst [vmem:[#allocation2 + $0x80] sm:$0xff] %v3246
      %3275 = vst [vmem:[#allocation2 + $0x88] sm:$0xff] %v3247
      %3276 = vst [vmem:[#allocation2 + $0x90] sm:$0xff] %v3248
      %3277 = vst [vmem:[#allocation2 + $0x98] sm:$0xff] %v3249
      %3278 = vst [vmem:[#allocation2 + $0xa0] sm:$0xff] %v3250
      %3279 = vst [vmem:[#allocation2 + $0xa8] sm:$0xff] %v3251
      %3280 = vst [vmem:[#allocation2 + $0xb0] sm:$0xff] %v3252
      %3281 = vst [vmem:[#allocation2 + $0xb8] sm:$0xff] %v3253
      %3282 = vst [vmem:[#allocation2 + $0xc0] sm:$0xff] %v3254
      %3283 = vst [vmem:[#allocation2 + $0xc8] sm:$0xff] %v3255
      %3284 = vst [vmem:[#allocation2 + $0xd0] sm:$0xff] %v3256
      %3285 = vst [vmem:[#allocation2 + $0xd8] sm:$0x3f] %v3257
      %v3286 = vld [vmem:[%s206 + $0x10] sm:$0xf]
      %v3287 = vld [vmem:[%s206 + $0x14] sm:$0xf]
      %v3288 = vld [vmem:[%s206 + $0x18] sm:$0xf]
      %v3289 = vld [vmem:[%s206 + $0x1c] sm:$0xf]
      %v3290 = vld [vmem:[%s206 + $0x20] sm:$0xf]
      %v3291 = vld [vmem:[%s206 + $0x24] sm:$0xf]
      %v3292 = vld [vmem:[%s206 + $0x28] sm:$0xf]
      %v3293 = vld [vmem:[%s206 + $0x2c] sm:$0xf]
      %v3294 = vld [vmem:[%s206 + $0x30] sm:$0xf]
      %v3295 = vld [vmem:[%s206 + $0x34] sm:$0xf]
      %v3296 = vld [vmem:[%s206 + $0x38] sm:$0xf]
      %v3297 = vld [vmem:[%s206 + $0x3c] sm:$0xf]
      %v3298 = vld [vmem:[%s206 + $0x40] sm:$0xf]
      %v3299 = vld [vmem:[%s206 + $0x44] sm:$0xf]
      %v3300 = vld [vmem:[%s206 + $0x48] sm:$0xf]
      %v3301 = vld [vmem:[%s206 + $0x4c] sm:$0xf]
      %v3302 = vld [vmem:[%s206 + $0x50] sm:$0xf]
      %v3303 = vld [vmem:[%s206 + $0x54] sm:$0xf]
      %v3304 = vld [vmem:[%s206 + $0x58] sm:$0xf]
      %v3305 = vld [vmem:[%s206 + $0x5c] sm:$0xf]
      %v3306 = vld [vmem:[%s206 + $0x60] sm:$0xf]
      %v3307 = vld [vmem:[%s206 + $0x64] sm:$0xf]
      %v3308 = vld [vmem:[%s206 + $0x68] sm:$0xf]
      %v3309 = vld [vmem:[%s206 + $0x6c] sm:$0xf]
      %v3310 = vld [vmem:[%s206 + $0x70] sm:$0xf]
      %v3311 = vld [vmem:[%s206 + $0x74] sm:$0xf]
      %v3312 = vld [vmem:[%s206 + $0x78] sm:$0xf]
      %v3313 = vld [vmem:[%s206 + $0x7c] sm:$0xf]
      %s3314 = scalar_lea.vmem %s210, 448
      %v3315 = vld [vmem:[%s3314] sm:$0xf]
      %v3316 = vld [vmem:[%s3314 + $0x4] sm:$0xf]
      %v3317 = vld [vmem:[%s3314 + $0x8] sm:$0xf]
      %v3318 = vld [vmem:[%s3314 + $0xc] sm:$0xf]
      %v3319 = vld [vmem:[%s3314 + $0x10] sm:$0xf]
      %v3320 = vld [vmem:[%s3314 + $0x14] sm:$0xf]
      %v3321 = vld [vmem:[%s3314 + $0x18] sm:$0xf]
      %v3322 = vld [vmem:[%s3314 + $0x1c] sm:$0xf]
      %v3323 = vld [vmem:[%s3314 + $0x20] sm:$0xf]
      %v3324 = vld [vmem:[%s3314 + $0x24] sm:$0xf]
      %v3325 = vld [vmem:[%s3314 + $0x28] sm:$0xf]
      %v3326 = vld [vmem:[%s3314 + $0x2c] sm:$0xf]
      %v3327 = vld [vmem:[%s3314 + $0x30] sm:$0xf]
      %v3328 = vld [vmem:[%s3314 + $0x34] sm:$0xf]
      %v3329 = vld [vmem:[%s3314 + $0x38] sm:$0xf]
      %v3330 = vld [vmem:[%s3314 + $0x3c] sm:$0xf]
      %v3359 = vunpack.c.l.b16 %v3286
      %v3360 = vunpack.c.l.b16 %v3287
      %v3361 = vunpack.c.l.b16 %v3288
      %v3362 = vunpack.c.l.b16 %v3289
      %v3363 = vunpack.c.l.b16 %v3290
      %v3364 = vunpack.c.l.b16 %v3291
      %v3365 = vunpack.c.l.b16 %v3292
      %v3366 = vunpack.c.l.b16 %v3293
      %v3367 = vunpack.c.l.b16 %v3294
      %v3368 = vunpack.c.l.b16 %v3295
      %v3369 = vunpack.c.l.b16 %v3296
      %v3370 = vunpack.c.l.b16 %v3297
      %v3371 = vunpack.c.l.b16 %v3298
      %v3372 = vunpack.c.l.b16 %v3299
      %v3373 = vunpack.c.l.b16 %v3300
      %v3374 = vunpack.c.l.b16 %v3301
      %v3375 = vunpack.c.l.b16 %v3302
      %v3376 = vunpack.c.l.b16 %v3303
      %v3377 = vunpack.c.l.b16 %v3304
      %v3378 = vunpack.c.l.b16 %v3305
      %v3379 = vunpack.c.l.b16 %v3306
      %v3380 = vunpack.c.l.b16 %v3307
      %v3381 = vunpack.c.l.b16 %v3308
      %v3382 = vunpack.c.l.b16 %v3309
      %v3383 = vunpack.c.l.b16 %v3310
      %v3384 = vunpack.c.l.b16 %v3311
      %v3385 = vunpack.c.l.b16 %v3312
      %v3386 = vunpack.c.l.b16 %v3313
      %v3387 = vpack.c.b16 %v3360, %v3359
      %v3388 = vpack.c.b16 %v3362, %v3361
      %v3389 = vpack.c.b16 %v3364, %v3363
      %v3390 = vpack.c.b16 %v3366, %v3365
      %v3391 = vpack.c.b16 %v3368, %v3367
      %v3392 = vpack.c.b16 %v3370, %v3369
      %v3393 = vpack.c.b16 %v3372, %v3371
      %v3394 = vpack.c.b16 %v3374, %v3373
      %v3395 = vpack.c.b16 %v3376, %v3375
      %v3396 = vpack.c.b16 %v3378, %v3377
      %v3397 = vpack.c.b16 %v3380, %v3379
      %v3398 = vpack.c.b16 %v3382, %v3381
      %v3399 = vpack.c.b16 %v3384, %v3383
      %v3400 = vpack.c.b16 %v3386, %v3385
      %v3402 = vshrl.u32 %v3387, 16
      %v3404 = vshll.u32 %v3387, 16
      %v3406 = vrot.slane %v3404, 1
      %v3407 = vor.u32 %v3402, %v3406
      %v3409 = vshll.u32 %v3388, 16
      %v3411 = vrot.slane %v3409, 1
      %v3412 = vsel %vm687, %v3407, %v3411
      %v3413 = vshrl.u32 %v3388, 16
      %v3415 = vor.u32 %v3413, %v3411
      %v3417 = vshll.u32 %v3389, 16
      %v3419 = vrot.slane %v3417, 1
      %v3420 = vsel %vm687, %v3415, %v3419
      %v3421 = vshrl.u32 %v3389, 16
      %v3423 = vor.u32 %v3421, %v3419
      %v3425 = vshll.u32 %v3390, 16
      %v3427 = vrot.slane %v3425, 1
      %v3428 = vsel %vm687, %v3423, %v3427
      %v3429 = vshrl.u32 %v3390, 16
      %v3431 = vor.u32 %v3429, %v3427
      %v3433 = vshll.u32 %v3391, 16
      %v3435 = vrot.slane %v3433, 1
      %v3436 = vsel %vm687, %v3431, %v3435
      %v3437 = vshrl.u32 %v3391, 16
      %v3439 = vor.u32 %v3437, %v3435
      %v3441 = vshll.u32 %v3392, 16
      %v3443 = vrot.slane %v3441, 1
      %v3444 = vsel %vm687, %v3439, %v3443
      %v3445 = vshrl.u32 %v3392, 16
      %v3447 = vor.u32 %v3445, %v3443
      %v3449 = vshll.u32 %v3393, 16
      %v3451 = vrot.slane %v3449, 1
      %v3452 = vsel %vm687, %v3447, %v3451
      %v3453 = vshrl.u32 %v3393, 16
      %v3455 = vor.u32 %v3453, %v3451
      %v3457 = vshll.u32 %v3394, 16
      %v3459 = vrot.slane %v3457, 1
      %v3460 = vsel %vm687, %v3455, %v3459
      %v3461 = vshrl.u32 %v3394, 16
      %v3463 = vor.u32 %v3461, %v3459
      %v3465 = vshll.u32 %v3395, 16
      %v3467 = vrot.slane %v3465, 1
      %v3468 = vsel %vm687, %v3463, %v3467
      %v3469 = vshrl.u32 %v3395, 16
      %v3471 = vor.u32 %v3469, %v3467
      %v3473 = vshll.u32 %v3396, 16
      %v3475 = vrot.slane %v3473, 1
      %v3476 = vsel %vm687, %v3471, %v3475
      %v3477 = vshrl.u32 %v3396, 16
      %v3479 = vor.u32 %v3477, %v3475
      %v3481 = vshll.u32 %v3397, 16
      %v3483 = vrot.slane %v3481, 1
      %v3484 = vsel %vm687, %v3479, %v3483
      %v3485 = vshrl.u32 %v3397, 16
      %v3487 = vor.u32 %v3485, %v3483
      %v3489 = vshll.u32 %v3398, 16
      %v3491 = vrot.slane %v3489, 1
      %v3492 = vsel %vm687, %v3487, %v3491
      %v3493 = vshrl.u32 %v3398, 16
      %v3495 = vor.u32 %v3493, %v3491
      %v3497 = vshll.u32 %v3399, 16
      %v3499 = vrot.slane %v3497, 1
      %v3500 = vsel %vm687, %v3495, %v3499
      %v3501 = vshrl.u32 %v3399, 16
      %v3503 = vor.u32 %v3501, %v3499
      %v3505 = vshll.u32 %v3400, 16
      %v3507 = vrot.slane %v3505, 1
      %v3508 = vsel %vm687, %v3503, %v3507
      %v3509 = vshrl.u32 %v3400, 16
      %v3511 = vor.u32 %v3509, %v3507
      %v3542 = vunpack.c.l.b16 %v3315
      %v3543 = vunpack.c.l.b16 %v3316
      %v3544 = vunpack.c.l.b16 %v3317
      %v3545 = vunpack.c.l.b16 %v3318
      %v3546 = vunpack.c.l.b16 %v3319
      %v3547 = vunpack.c.l.b16 %v3320
      %v3548 = vunpack.c.l.b16 %v3321
      %v3549 = vunpack.c.l.b16 %v3322
      %v3550 = vunpack.c.l.b16 %v3323
      %v3551 = vunpack.c.l.b16 %v3324
      %v3552 = vunpack.c.l.b16 %v3325
      %v3553 = vunpack.c.l.b16 %v3326
      %v3554 = vunpack.c.l.b16 %v3327
      %v3555 = vunpack.c.l.b16 %v3328
      %v3556 = vunpack.c.l.b16 %v3329
      %v3557 = vunpack.c.l.b16 %v3330
      %v3558 = vpack.c.b16 %v3543, %v3542
      %v3559 = vpack.c.b16 %v3545, %v3544
      %v3560 = vpack.c.b16 %v3547, %v3546
      %v3561 = vpack.c.b16 %v3549, %v3548
      %v3562 = vpack.c.b16 %v3551, %v3550
      %v3563 = vpack.c.b16 %v3553, %v3552
      %v3564 = vpack.c.b16 %v3555, %v3554
      %v3565 = vpack.c.b16 %v3557, %v3556
      %3574 = vmatprep.subr.bf16.mxu0 0
      %3575 = vmatpush1.bf16.msra.mxu0 %v3565
      %3576 = vmatprep.subr.bf16.mxu0 0
      %3577 = vmatpush1.bf16.msra.mxu0 %v3564
      %3578 = vmatprep.subr.bf16.mxu0 0
      %3579 = vmatpush1.bf16.msra.mxu0 %v3563
      %3580 = vmatprep.subr.bf16.mxu0 0
      %3581 = vmatpush1.bf16.msra.mxu0 %v3562
      %3582 = vmatprep.subr.bf16.mxu0 0
      %3583 = vmatpush1.bf16.msra.mxu0 %v3561
      %3584 = vmatprep.subr.bf16.mxu0 0
      %3585 = vmatpush1.bf16.msra.mxu0 %v3560
      %3586 = vmatprep.subr.bf16.mxu0 0
      %3587 = vmatpush1.bf16.msra.mxu0 %v3559
      %3588 = vmatprep.subr.bf16.mxu0 0
      %3589 = vmatpush1.bf16.msra.mxu0 %v3558
      %3590 = vmatprep.subr.bf16.mxu0 0
      %3591 = vmatpush2.bf16.msra.mxu0 0
      %3592 = vmatprep.subr.bf16.mxu0 0
      %3593 = vmatpush2.bf16.msra.mxu0 0
      %3594 = vmatprep.subr.bf16.mxu0 0
      %3595 = vmatpush2.bf16.msra.mxu0 0
      %3596 = vmatprep.subr.bf16.mxu0 0
      %3597 = vmatpush2.bf16.msra.mxu0 0
      %3598 = vmatprep.subr.bf16.mxu0 0
      %3599 = vmatpush2.bf16.msra.mxu0 0
      %3600 = vmatprep.subr.bf16.mxu0 0
      %3601 = vmatpush2.bf16.msra.mxu0 0
      %3602 = vmatprep.subr.bf16.mxu0 0
      %3603 = vmatpush2.bf16.msra.mxu0 0
      %3604 = vmatprep.subr.bf16.mxu0 0
      %3605 = vmatpush2.bf16.msra.mxu0 0
      %3606 = vmatprep.mubr.bf16.mxu0 0
      %3607 = vmatmul.mubr.bf16.gmra.mxu0 %v3412
      %v3608 = vpop.f32.mrf.mxu0
      %v3609 = vadd.f32 0.0, %v3608
      %v3610 = vpop.f32.mrf.mxu0
      %v3611 = vpop.f32.mrf.mxu0
      %v3612 = vadd.f32 0.0, %v3611
      %v3613 = vpop.f32.mrf.mxu0
      %3614 = vmatprep.mubr.bf16.mxu0 0
      %3615 = vmatmul.mubr.bf16.gmra.mxu0 %v3420
      %v3616 = vpop.f32.mrf.mxu0
      %v3617 = vadd.f32 0.0, %v3616
      %v3618 = vpop.f32.mrf.mxu0
      %v3619 = vpop.f32.mrf.mxu0
      %v3620 = vadd.f32 0.0, %v3619
      %v3621 = vpop.f32.mrf.mxu0
      %3622 = vmatprep.mubr.bf16.mxu0 0
      %3623 = vmatmul.mubr.bf16.gmra.mxu0 %v3428
      %v3624 = vpop.f32.mrf.mxu0
      %v3625 = vadd.f32 0.0, %v3624
      %v3626 = vpop.f32.mrf.mxu0
      %v3627 = vpop.f32.mrf.mxu0
      %v3628 = vadd.f32 0.0, %v3627
      %v3629 = vpop.f32.mrf.mxu0
      %3630 = vmatprep.mubr.bf16.mxu0 0
      %3631 = vmatmul.mubr.bf16.gmra.mxu0 %v3436
      %v3632 = vpop.f32.mrf.mxu0
      %v3633 = vadd.f32 0.0, %v3632
      %v3634 = vpop.f32.mrf.mxu0
      %v3635 = vpop.f32.mrf.mxu0
      %v3636 = vadd.f32 0.0, %v3635
      %v3637 = vpop.f32.mrf.mxu0
      %3638 = vmatprep.mubr.bf16.mxu0 0
      %3639 = vmatmul.mubr.bf16.gmra.mxu0 %v3444
      %v3640 = vpop.f32.mrf.mxu0
      %v3641 = vadd.f32 0.0, %v3640
      %v3642 = vpop.f32.mrf.mxu0
      %v3643 = vpop.f32.mrf.mxu0
      %v3644 = vadd.f32 0.0, %v3643
      %v3645 = vpop.f32.mrf.mxu0
      %3646 = vmatprep.mubr.bf16.mxu0 0
      %3647 = vmatmul.mubr.bf16.gmra.mxu0 %v3452
      %v3648 = vpop.f32.mrf.mxu0
      %v3649 = vadd.f32 0.0, %v3648
      %v3650 = vpop.f32.mrf.mxu0
      %v3651 = vpop.f32.mrf.mxu0
      %v3652 = vadd.f32 0.0, %v3651
      %v3653 = vpop.f32.mrf.mxu0
      %3654 = vmatprep.mubr.bf16.mxu0 0
      %3655 = vmatmul.mubr.bf16.gmra.mxu0 %v3460
      %v3656 = vpop.f32.mrf.mxu0
      %v3657 = vadd.f32 0.0, %v3656
      %v3658 = vpop.f32.mrf.mxu0
      %v3659 = vpop.f32.mrf.mxu0
      %v3660 = vadd.f32 0.0, %v3659
      %v3661 = vpop.f32.mrf.mxu0
      %3662 = vmatprep.mubr.bf16.mxu0 0
      %3663 = vmatmul.mubr.bf16.gmra.mxu0 %v3468
      %v3664 = vpop.f32.mrf.mxu0
      %v3665 = vadd.f32 0.0, %v3664
      %v3666 = vpop.f32.mrf.mxu0
      %v3667 = vpop.f32.mrf.mxu0
      %v3668 = vadd.f32 0.0, %v3667
      %v3669 = vpop.f32.mrf.mxu0
      %3670 = vmatprep.mubr.bf16.mxu0 0
      %3671 = vmatmul.mubr.bf16.gmra.mxu0 %v3476
      %v3672 = vpop.f32.mrf.mxu0
      %v3673 = vadd.f32 0.0, %v3672
      %v3674 = vpop.f32.mrf.mxu0
      %v3675 = vpop.f32.mrf.mxu0
      %v3676 = vadd.f32 0.0, %v3675
      %v3677 = vpop.f32.mrf.mxu0
      %3678 = vmatprep.mubr.bf16.mxu0 0
      %3679 = vmatmul.mubr.bf16.gmra.mxu0 %v3484
      %v3680 = vpop.f32.mrf.mxu0
      %v3681 = vadd.f32 0.0, %v3680
      %v3682 = vpop.f32.mrf.mxu0
      %v3683 = vpop.f32.mrf.mxu0
      %v3684 = vadd.f32 0.0, %v3683
      %v3685 = vpop.f32.mrf.mxu0
      %3686 = vmatprep.mubr.bf16.mxu0 0
      %3687 = vmatmul.mubr.bf16.gmra.mxu0 %v3492
      %v3688 = vpop.f32.mrf.mxu0
      %v3689 = vadd.f32 0.0, %v3688
      %v3690 = vpop.f32.mrf.mxu0
      %v3691 = vpop.f32.mrf.mxu0
      %v3692 = vadd.f32 0.0, %v3691
      %v3693 = vpop.f32.mrf.mxu0
      %3694 = vmatprep.mubr.bf16.mxu0 0
      %3695 = vmatmul.mubr.bf16.gmra.mxu0 %v3500
      %v3696 = vpop.f32.mrf.mxu0
      %v3697 = vadd.f32 0.0, %v3696
      %v3698 = vpop.f32.mrf.mxu0
      %v3699 = vpop.f32.mrf.mxu0
      %v3700 = vadd.f32 0.0, %v3699
      %v3701 = vpop.f32.mrf.mxu0
      %3702 = vmatprep.mubr.bf16.mxu0 0
      %3703 = vmatmul.mubr.bf16.gmra.mxu0 %v3508
      %v3704 = vpop.f32.mrf.mxu0
      %v3705 = vadd.f32 0.0, %v3704
      %v3706 = vpop.f32.mrf.mxu0
      %v3707 = vpop.f32.mrf.mxu0
      %v3708 = vadd.f32 0.0, %v3707
      %v3709 = vpop.f32.mrf.mxu0
      %3710 = vmatprep.mubr.bf16.mxu0 0
      %3711 = vmatmul.mubr.bf16.gmra.mxu0 %v3511
      %v3712 = vpop.f32.mrf.mxu0
      %v3713 = vadd.f32 0.0, %v3712
      %v3714 = vpop.f32.mrf.mxu0
      %v3715 = vpop.f32.mrf.mxu0
      %v3716 = vadd.f32 0.0, %v3715
      %v3717 = vpop.f32.mrf.mxu0
      %3718 = vdwg.mxu0
      %v3719 = vld [vmem:[#allocation2] sm:$0xff]
      %v3720 = vld [vmem:[#allocation2 + $0x8] sm:$0xff]
      %v3721 = vld [vmem:[#allocation2 + $0x10] sm:$0xff]
      %v3722 = vld [vmem:[#allocation2 + $0x18] sm:$0xff]
      %v3723 = vld [vmem:[#allocation2 + $0x20] sm:$0xff]
      %v3724 = vld [vmem:[#allocation2 + $0x28] sm:$0xff]
      %v3725 = vld [vmem:[#allocation2 + $0x30] sm:$0xff]
      %v3726 = vld [vmem:[#allocation2 + $0x38] sm:$0xff]
      %v3727 = vld [vmem:[#allocation2 + $0x40] sm:$0xff]
      %v3728 = vld [vmem:[#allocation2 + $0x48] sm:$0xff]
      %v3729 = vld [vmem:[#allocation2 + $0x50] sm:$0xff]
      %v3730 = vld [vmem:[#allocation2 + $0x58] sm:$0xff]
      %v3731 = vld [vmem:[#allocation2 + $0x60] sm:$0xff]
      %v3732 = vld [vmem:[#allocation2 + $0x68] sm:$0xff]
      %v3733 = vld [vmem:[#allocation2 + $0x70] sm:$0xff]
      %v3734 = vld [vmem:[#allocation2 + $0x78] sm:$0xff]
      %v3735 = vld [vmem:[#allocation2 + $0x80] sm:$0xff]
      %v3736 = vld [vmem:[#allocation2 + $0x88] sm:$0xff]
      %v3737 = vld [vmem:[#allocation2 + $0x90] sm:$0xff]
      %v3738 = vld [vmem:[#allocation2 + $0x98] sm:$0xff]
      %v3739 = vld [vmem:[#allocation2 + $0xa0] sm:$0xff]
      %v3740 = vld [vmem:[#allocation2 + $0xa8] sm:$0xff]
      %v3741 = vld [vmem:[#allocation2 + $0xb0] sm:$0xff]
      %v3742 = vld [vmem:[#allocation2 + $0xb8] sm:$0xff]
      %v3743 = vld [vmem:[#allocation2 + $0xc0] sm:$0xff]
      %v3744 = vld [vmem:[#allocation2 + $0xc8] sm:$0xff]
      %v3745 = vld [vmem:[#allocation2 + $0xd0] sm:$0xff]
      %v3746 = vld [vmem:[#allocation2 + $0xd8] sm:$0x3f]
      %v3747 = vadd.f32 %v3719, %v3609
      %v3748 = vadd.f32 %v3720, %v3612
      %v3749 = vadd.f32 %v3721, %v3617
      %v3750 = vadd.f32 %v3722, %v3620
      %v3751 = vadd.f32 %v3723, %v3625
      %v3752 = vadd.f32 %v3724, %v3628
      %v3753 = vadd.f32 %v3725, %v3633
      %v3754 = vadd.f32 %v3726, %v3636
      %v3755 = vadd.f32 %v3727, %v3641
      %v3756 = vadd.f32 %v3728, %v3644
      %v3757 = vadd.f32 %v3729, %v3649
      %v3758 = vadd.f32 %v3730, %v3652
      %v3759 = vadd.f32 %v3731, %v3657
      %v3760 = vadd.f32 %v3732, %v3660
      %v3761 = vadd.f32 %v3733, %v3665
      %v3762 = vadd.f32 %v3734, %v3668
      %v3763 = vadd.f32 %v3735, %v3673
      %v3764 = vadd.f32 %v3736, %v3676
      %v3765 = vadd.f32 %v3737, %v3681
      %v3766 = vadd.f32 %v3738, %v3684
      %v3767 = vadd.f32 %v3739, %v3689
      %v3768 = vadd.f32 %v3740, %v3692
      %v3769 = vadd.f32 %v3741, %v3697
      %v3770 = vadd.f32 %v3742, %v3700
      %v3771 = vadd.f32 %v3743, %v3705
      %v3772 = vadd.f32 %v3744, %v3708
      %v3773 = vadd.f32 %v3745, %v3713
      %v3774 = vadd.f32 %v3746, %v3716
      %3775 = vst [vmem:[#allocation2] sm:$0xff] %v3747
      %3776 = vst [vmem:[#allocation2 + $0x8] sm:$0xff] %v3748
      %3777 = vst [vmem:[#allocation2 + $0x10] sm:$0xff] %v3749
      %3778 = vst [vmem:[#allocation2 + $0x18] sm:$0xff] %v3750
      %3779 = vst [vmem:[#allocation2 + $0x20] sm:$0xff] %v3751
      %3780 = vst [vmem:[#allocation2 + $0x28] sm:$0xff] %v3752
      %3781 = vst [vmem:[#allocation2 + $0x30] sm:$0xff] %v3753
      %3782 = vst [vmem:[#allocation2 + $0x38] sm:$0xff] %v3754
      %3783 = vst [vmem:[#allocation2 + $0x40] sm:$0xff] %v3755
      %3784 = vst [vmem:[#allocation2 + $0x48] sm:$0xff] %v3756
      %3785 = vst [vmem:[#allocation2 + $0x50] sm:$0xff] %v3757
      %3786 = vst [vmem:[#allocation2 + $0x58] sm:$0xff] %v3758
      %3787 = vst [vmem:[#allocation2 + $0x60] sm:$0xff] %v3759
      %3788 = vst [vmem:[#allocation2 + $0x68] sm:$0xff] %v3760
      %3789 = vst [vmem:[#allocation2 + $0x70] sm:$0xff] %v3761
      %3790 = vst [vmem:[#allocation2 + $0x78] sm:$0xff] %v3762
      %3791 = vst [vmem:[#allocation2 + $0x80] sm:$0xff] %v3763
      %3792 = vst [vmem:[#allocation2 + $0x88] sm:$0xff] %v3764
      %3793 = vst [vmem:[#allocation2 + $0x90] sm:$0xff] %v3765
      %3794 = vst [vmem:[#allocation2 + $0x98] sm:$0xff] %v3766
      %3795 = vst [vmem:[#allocation2 + $0xa0] sm:$0xff] %v3767
      %3796 = vst [vmem:[#allocation2 + $0xa8] sm:$0xff] %v3768
      %3797 = vst [vmem:[#allocation2 + $0xb0] sm:$0xff] %v3769
      %3798 = vst [vmem:[#allocation2 + $0xb8] sm:$0xff] %v3770
      %3799 = vst [vmem:[#allocation2 + $0xc0] sm:$0xff] %v3771
      %3800 = vst [vmem:[#allocation2 + $0xc8] sm:$0xff] %v3772
      %3801 = vst [vmem:[#allocation2 + $0xd0] sm:$0xff] %v3773
      %3802 = vst [vmem:[#allocation2 + $0xd8] sm:$0x3f] %v3774
      %v3803 = vld [vmem:[%s206 + $0x10] sm:$0xe]
      %v3804 = vld [vmem:[%s206 + $0x14] sm:$0xf]
      %v3805 = vld [vmem:[%s206 + $0x18] sm:$0xf]
      %v3806 = vld [vmem:[%s206 + $0x1c] sm:$0xf]
      %v3807 = vld [vmem:[%s206 + $0x20] sm:$0xf]
      %v3808 = vld [vmem:[%s206 + $0x24] sm:$0xf]
      %v3809 = vld [vmem:[%s206 + $0x28] sm:$0xf]
      %v3810 = vld [vmem:[%s206 + $0x2c] sm:$0xf]
      %v3811 = vld [vmem:[%s206 + $0x30] sm:$0xf]
      %v3812 = vld [vmem:[%s206 + $0x34] sm:$0xf]
      %v3813 = vld [vmem:[%s206 + $0x38] sm:$0xf]
      %v3814 = vld [vmem:[%s206 + $0x3c] sm:$0xf]
      %v3815 = vld [vmem:[%s206 + $0x40] sm:$0xf]
      %v3816 = vld [vmem:[%s206 + $0x44] sm:$0xf]
      %v3817 = vld [vmem:[%s206 + $0x48] sm:$0xf]
      %v3818 = vld [vmem:[%s206 + $0x4c] sm:$0xf]
      %v3819 = vld [vmem:[%s206 + $0x50] sm:$0xf]
      %v3820 = vld [vmem:[%s206 + $0x54] sm:$0xf]
      %v3821 = vld [vmem:[%s206 + $0x58] sm:$0xf]
      %v3822 = vld [vmem:[%s206 + $0x5c] sm:$0xf]
      %v3823 = vld [vmem:[%s206 + $0x60] sm:$0xf]
      %v3824 = vld [vmem:[%s206 + $0x64] sm:$0xf]
      %v3825 = vld [vmem:[%s206 + $0x68] sm:$0xf]
      %v3826 = vld [vmem:[%s206 + $0x6c] sm:$0xf]
      %v3827 = vld [vmem:[%s206 + $0x70] sm:$0xf]
      %v3828 = vld [vmem:[%s206 + $0x74] sm:$0xf]
      %v3829 = vld [vmem:[%s206 + $0x78] sm:$0xf]
      %v3830 = vld [vmem:[%s206 + $0x7c] sm:$0xf]
      %s3831 = scalar_lea.vmem %s210, 512
      %v3832 = vld [vmem:[%s3831] sm:$0xf]
      %v3833 = vld [vmem:[%s3831 + $0x4] sm:$0xf]
      %v3834 = vld [vmem:[%s3831 + $0x8] sm:$0xf]
      %v3835 = vld [vmem:[%s3831 + $0xc] sm:$0xf]
      %v3836 = vld [vmem:[%s3831 + $0x10] sm:$0xf]
      %v3837 = vld [vmem:[%s3831 + $0x14] sm:$0xf]
      %v3838 = vld [vmem:[%s3831 + $0x18] sm:$0xf]
      %v3839 = vld [vmem:[%s3831 + $0x1c] sm:$0xf]
      %v3840 = vld [vmem:[%s3831 + $0x20] sm:$0xf]
      %v3841 = vld [vmem:[%s3831 + $0x24] sm:$0xf]
      %v3842 = vld [vmem:[%s3831 + $0x28] sm:$0xf]
      %v3843 = vld [vmem:[%s3831 + $0x2c] sm:$0xf]
      %v3844 = vld [vmem:[%s3831 + $0x30] sm:$0xf]
      %v3845 = vld [vmem:[%s3831 + $0x34] sm:$0xf]
      %v3846 = vld [vmem:[%s3831 + $0x38] sm:$0xf]
      %v3847 = vld [vmem:[%s3831 + $0x3c] sm:$0xf]
      %v3876 = vunpack.c.l.b16 %v3803
      %v3877 = vunpack.c.l.b16 %v3804
      %v3878 = vunpack.c.l.b16 %v3805
      %v3879 = vunpack.c.l.b16 %v3806
      %v3880 = vunpack.c.l.b16 %v3807
      %v3881 = vunpack.c.l.b16 %v3808
      %v3882 = vunpack.c.l.b16 %v3809
      %v3883 = vunpack.c.l.b16 %v3810
      %v3884 = vunpack.c.l.b16 %v3811
      %v3885 = vunpack.c.l.b16 %v3812
      %v3886 = vunpack.c.l.b16 %v3813
      %v3887 = vunpack.c.l.b16 %v3814
      %v3888 = vunpack.c.l.b16 %v3815
      %v3889 = vunpack.c.l.b16 %v3816
      %v3890 = vunpack.c.l.b16 %v3817
      %v3891 = vunpack.c.l.b16 %v3818
      %v3892 = vunpack.c.l.b16 %v3819
      %v3893 = vunpack.c.l.b16 %v3820
      %v3894 = vunpack.c.l.b16 %v3821
      %v3895 = vunpack.c.l.b16 %v3822
      %v3896 = vunpack.c.l.b16 %v3823
      %v3897 = vunpack.c.l.b16 %v3824
      %v3898 = vunpack.c.l.b16 %v3825
      %v3899 = vunpack.c.l.b16 %v3826
      %v3900 = vunpack.c.l.b16 %v3827
      %v3901 = vunpack.c.l.b16 %v3828
      %v3902 = vunpack.c.l.b16 %v3829
      %v3903 = vunpack.c.l.b16 %v3830
      %v3904 = vpack.c.b16 %v3877, %v3876
      %v3905 = vpack.c.b16 %v3879, %v3878
      %v3906 = vpack.c.b16 %v3881, %v3880
      %v3907 = vpack.c.b16 %v3883, %v3882
      %v3908 = vpack.c.b16 %v3885, %v3884
      %v3909 = vpack.c.b16 %v3887, %v3886
      %v3910 = vpack.c.b16 %v3889, %v3888
      %v3911 = vpack.c.b16 %v3891, %v3890
      %v3912 = vpack.c.b16 %v3893, %v3892
      %v3913 = vpack.c.b16 %v3895, %v3894
      %v3914 = vpack.c.b16 %v3897, %v3896
      %v3915 = vpack.c.b16 %v3899, %v3898
      %v3916 = vpack.c.b16 %v3901, %v3900
      %v3917 = vpack.c.b16 %v3903, %v3902
      %v3918 = vrot.slane %v3904, 1
      %v3919 = vrot.slane %v3905, 1
      %v3920 = vsel %vm1205, %v3918, %v3919
      %v3921 = vrot.slane %v3906, 1
      %v3922 = vsel %vm1205, %v3919, %v3921
      %v3923 = vrot.slane %v3907, 1
      %v3924 = vsel %vm1205, %v3921, %v3923
      %v3925 = vrot.slane %v3908, 1
      %v3926 = vsel %vm1205, %v3923, %v3925
      %v3927 = vrot.slane %v3909, 1
      %v3928 = vsel %vm1205, %v3925, %v3927
      %v3929 = vrot.slane %v3910, 1
      %v3930 = vsel %vm1205, %v3927, %v3929
      %v3931 = vrot.slane %v3911, 1
      %v3932 = vsel %vm1205, %v3929, %v3931
      %v3933 = vrot.slane %v3912, 1
      %v3934 = vsel %vm1205, %v3931, %v3933
      %v3935 = vrot.slane %v3913, 1
      %v3936 = vsel %vm1205, %v3933, %v3935
      %v3937 = vrot.slane %v3914, 1
      %v3938 = vsel %vm1205, %v3935, %v3937
      %v3939 = vrot.slane %v3915, 1
      %v3940 = vsel %vm1205, %v3937, %v3939
      %v3941 = vrot.slane %v3916, 1
      %v3942 = vsel %vm1205, %v3939, %v3941
      %v3943 = vrot.slane %v3917, 1
      %v3944 = vsel %vm1205, %v3941, %v3943
      %v3975 = vunpack.c.l.b16 %v3832
      %v3976 = vunpack.c.l.b16 %v3833
      %v3977 = vunpack.c.l.b16 %v3834
      %v3978 = vunpack.c.l.b16 %v3835
      %v3979 = vunpack.c.l.b16 %v3836
      %v3980 = vunpack.c.l.b16 %v3837
      %v3981 = vunpack.c.l.b16 %v3838
      %v3982 = vunpack.c.l.b16 %v3839
      %v3983 = vunpack.c.l.b16 %v3840
      %v3984 = vunpack.c.l.b16 %v3841
      %v3985 = vunpack.c.l.b16 %v3842
      %v3986 = vunpack.c.l.b16 %v3843
      %v3987 = vunpack.c.l.b16 %v3844
      %v3988 = vunpack.c.l.b16 %v3845
      %v3989 = vunpack.c.l.b16 %v3846
      %v3990 = vunpack.c.l.b16 %v3847
      %v3991 = vpack.c.b16 %v3976, %v3975
      %v3992 = vpack.c.b16 %v3978, %v3977
      %v3993 = vpack.c.b16 %v3980, %v3979
      %v3994 = vpack.c.b16 %v3982, %v3981
      %v3995 = vpack.c.b16 %v3984, %v3983
      %v3996 = vpack.c.b16 %v3986, %v3985
      %v3997 = vpack.c.b16 %v3988, %v3987
      %v3998 = vpack.c.b16 %v3990, %v3989
      %4007 = vmatprep.subr.bf16.mxu0 0
      %4008 = vmatpush1.bf16.msra.mxu0 %v3998
      %4009 = vmatprep.subr.bf16.mxu0 0
      %4010 = vmatpush1.bf16.msra.mxu0 %v3997
      %4011 = vmatprep.subr.bf16.mxu0 0
      %4012 = vmatpush1.bf16.msra.mxu0 %v3996
      %4013 = vmatprep.subr.bf16.mxu0 0
      %4014 = vmatpush1.bf16.msra.mxu0 %v3995
      %4015 = vmatprep.subr.bf16.mxu0 0
      %4016 = vmatpush1.bf16.msra.mxu0 %v3994
      %4017 = vmatprep.subr.bf16.mxu0 0
      %4018 = vmatpush1.bf16.msra.mxu0 %v3993
      %4019 = vmatprep.subr.bf16.mxu0 0
      %4020 = vmatpush1.bf16.msra.mxu0 %v3992
      %4021 = vmatprep.subr.bf16.mxu0 0
      %4022 = vmatpush1.bf16.msra.mxu0 %v3991
      %4023 = vmatprep.subr.bf16.mxu0 0
      %4024 = vmatpush2.bf16.msra.mxu0 0
      %4025 = vmatprep.subr.bf16.mxu0 0
      %4026 = vmatpush2.bf16.msra.mxu0 0
      %4027 = vmatprep.subr.bf16.mxu0 0
      %4028 = vmatpush2.bf16.msra.mxu0 0
      %4029 = vmatprep.subr.bf16.mxu0 0
      %4030 = vmatpush2.bf16.msra.mxu0 0
      %4031 = vmatprep.subr.bf16.mxu0 0
      %4032 = vmatpush2.bf16.msra.mxu0 0
      %4033 = vmatprep.subr.bf16.mxu0 0
      %4034 = vmatpush2.bf16.msra.mxu0 0
      %4035 = vmatprep.subr.bf16.mxu0 0
      %4036 = vmatpush2.bf16.msra.mxu0 0
      %4037 = vmatprep.subr.bf16.mxu0 0
      %4038 = vmatpush2.bf16.msra.mxu0 0
      %4039 = vmatprep.mubr.bf16.mxu0 0
      %4040 = vmatmul.mubr.bf16.gmra.mxu0 %v3920
      %v4041 = vpop.f32.mrf.mxu0
      %v4042 = vadd.f32 0.0, %v4041
      %v4043 = vpop.f32.mrf.mxu0
      %v4044 = vpop.f32.mrf.mxu0
      %v4045 = vadd.f32 0.0, %v4044
      %v4046 = vpop.f32.mrf.mxu0
      %4047 = vmatprep.mubr.bf16.mxu0 0
      %4048 = vmatmul.mubr.bf16.gmra.mxu0 %v3922
      %v4049 = vpop.f32.mrf.mxu0
      %v4050 = vadd.f32 0.0, %v4049
      %v4051 = vpop.f32.mrf.mxu0
      %v4052 = vpop.f32.mrf.mxu0
      %v4053 = vadd.f32 0.0, %v4052
      %v4054 = vpop.f32.mrf.mxu0
      %4055 = vmatprep.mubr.bf16.mxu0 0
      %4056 = vmatmul.mubr.bf16.gmra.mxu0 %v3924
      %v4057 = vpop.f32.mrf.mxu0
      %v4058 = vadd.f32 0.0, %v4057
      %v4059 = vpop.f32.mrf.mxu0
      %v4060 = vpop.f32.mrf.mxu0
      %v4061 = vadd.f32 0.0, %v4060
      %v4062 = vpop.f32.mrf.mxu0
      %4063 = vmatprep.mubr.bf16.mxu0 0
      %4064 = vmatmul.mubr.bf16.gmra.mxu0 %v3926
      %v4065 = vpop.f32.mrf.mxu0
      %v4066 = vadd.f32 0.0, %v4065
      %v4067 = vpop.f32.mrf.mxu0
      %v4068 = vpop.f32.mrf.mxu0
      %v4069 = vadd.f32 0.0, %v4068
      %v4070 = vpop.f32.mrf.mxu0
      %4071 = vmatprep.mubr.bf16.mxu0 0
      %4072 = vmatmul.mubr.bf16.gmra.mxu0 %v3928
      %v4073 = vpop.f32.mrf.mxu0
      %v4074 = vadd.f32 0.0, %v4073
      %v4075 = vpop.f32.mrf.mxu0
      %v4076 = vpop.f32.mrf.mxu0
      %v4077 = vadd.f32 0.0, %v4076
      %v4078 = vpop.f32.mrf.mxu0
      %4079 = vmatprep.mubr.bf16.mxu0 0
      %4080 = vmatmul.mubr.bf16.gmra.mxu0 %v3930
      %v4081 = vpop.f32.mrf.mxu0
      %v4082 = vadd.f32 0.0, %v4081
      %v4083 = vpop.f32.mrf.mxu0
      %v4084 = vpop.f32.mrf.mxu0
      %v4085 = vadd.f32 0.0, %v4084
      %v4086 = vpop.f32.mrf.mxu0
      %4087 = vmatprep.mubr.bf16.mxu0 0
      %4088 = vmatmul.mubr.bf16.gmra.mxu0 %v3932
      %v4089 = vpop.f32.mrf.mxu0
      %v4090 = vadd.f32 0.0, %v4089
      %v4091 = vpop.f32.mrf.mxu0
      %v4092 = vpop.f32.mrf.mxu0
      %v4093 = vadd.f32 0.0, %v4092
      %v4094 = vpop.f32.mrf.mxu0
      %4095 = vmatprep.mubr.bf16.mxu0 0
      %4096 = vmatmul.mubr.bf16.gmra.mxu0 %v3934
      %v4097 = vpop.f32.mrf.mxu0
      %v4098 = vadd.f32 0.0, %v4097
      %v4099 = vpop.f32.mrf.mxu0
      %v4100 = vpop.f32.mrf.mxu0
      %v4101 = vadd.f32 0.0, %v4100
      %v4102 = vpop.f32.mrf.mxu0
      %4103 = vmatprep.mubr.bf16.mxu0 0
      %4104 = vmatmul.mubr.bf16.gmra.mxu0 %v3936
      %v4105 = vpop.f32.mrf.mxu0
      %v4106 = vadd.f32 0.0, %v4105
      %v4107 = vpop.f32.mrf.mxu0
      %v4108 = vpop.f32.mrf.mxu0
      %v4109 = vadd.f32 0.0, %v4108
      %v4110 = vpop.f32.mrf.mxu0
      %4111 = vmatprep.mubr.bf16.mxu0 0
      %4112 = vmatmul.mubr.bf16.gmra.mxu0 %v3938
      %v4113 = vpop.f32.mrf.mxu0
      %v4114 = vadd.f32 0.0, %v4113
      %v4115 = vpop.f32.mrf.mxu0
      %v4116 = vpop.f32.mrf.mxu0
      %v4117 = vadd.f32 0.0, %v4116
      %v4118 = vpop.f32.mrf.mxu0
      %4119 = vmatprep.mubr.bf16.mxu0 0
      %4120 = vmatmul.mubr.bf16.gmra.mxu0 %v3940
      %v4121 = vpop.f32.mrf.mxu0
      %v4122 = vadd.f32 0.0, %v4121
      %v4123 = vpop.f32.mrf.mxu0
      %v4124 = vpop.f32.mrf.mxu0
      %v4125 = vadd.f32 0.0, %v4124
      %v4126 = vpop.f32.mrf.mxu0
      %4127 = vmatprep.mubr.bf16.mxu0 0
      %4128 = vmatmul.mubr.bf16.gmra.mxu0 %v3942
      %v4129 = vpop.f32.mrf.mxu0
      %v4130 = vadd.f32 0.0, %v4129
      %v4131 = vpop.f32.mrf.mxu0
      %v4132 = vpop.f32.mrf.mxu0
      %v4133 = vadd.f32 0.0, %v4132
      %v4134 = vpop.f32.mrf.mxu0
      %4135 = vmatprep.mubr.bf16.mxu0 0
      %4136 = vmatmul.mubr.bf16.gmra.mxu0 %v3944
      %v4137 = vpop.f32.mrf.mxu0
      %v4138 = vadd.f32 0.0, %v4137
      %v4139 = vpop.f32.mrf.mxu0
      %v4140 = vpop.f32.mrf.mxu0
      %v4141 = vadd.f32 0.0, %v4140
      %v4142 = vpop.f32.mrf.mxu0
      %4143 = vmatprep.mubr.bf16.mxu0 0
      %4144 = vmatmul.mubr.bf16.gmra.mxu0 %v3943
      %v4145 = vpop.f32.mrf.mxu0
      %v4146 = vadd.f32 0.0, %v4145
      %v4147 = vpop.f32.mrf.mxu0
      %v4148 = vpop.f32.mrf.mxu0
      %v4149 = vadd.f32 0.0, %v4148
      %v4150 = vpop.f32.mrf.mxu0
      %4151 = vdwg.mxu0
      %v4152 = vld [vmem:[#allocation2] sm:$0xff]
      %v4153 = vld [vmem:[#allocation2 + $0x8] sm:$0xff]
      %v4154 = vld [vmem:[#allocation2 + $0x10] sm:$0xff]
      %v4155 = vld [vmem:[#allocation2 + $0x18] sm:$0xff]
      %v4156 = vld [vmem:[#allocation2 + $0x20] sm:$0xff]
      %v4157 = vld [vmem:[#allocation2 + $0x28] sm:$0xff]
      %v4158 = vld [vmem:[#allocation2 + $0x30] sm:$0xff]
      %v4159 = vld [vmem:[#allocation2 + $0x38] sm:$0xff]
      %v4160 = vld [vmem:[#allocation2 + $0x40] sm:$0xff]
      %v4161 = vld [vmem:[#allocation2 + $0x48] sm:$0xff]
      %v4162 = vld [vmem:[#allocation2 + $0x50] sm:$0xff]
      %v4163 = vld [vmem:[#allocation2 + $0x58] sm:$0xff]
      %v4164 = vld [vmem:[#allocation2 + $0x60] sm:$0xff]
      %v4165 = vld [vmem:[#allocation2 + $0x68] sm:$0xff]
      %v4166 = vld [vmem:[#allocation2 + $0x70] sm:$0xff]
      %v4167 = vld [vmem:[#allocation2 + $0x78] sm:$0xff]
      %v4168 = vld [vmem:[#allocation2 + $0x80] sm:$0xff]
      %v4169 = vld [vmem:[#allocation2 + $0x88] sm:$0xff]
      %v4170 = vld [vmem:[#allocation2 + $0x90] sm:$0xff]
      %v4171 = vld [vmem:[#allocation2 + $0x98] sm:$0xff]
      %v4172 = vld [vmem:[#allocation2 + $0xa0] sm:$0xff]
      %v4173 = vld [vmem:[#allocation2 + $0xa8] sm:$0xff]
      %v4174 = vld [vmem:[#allocation2 + $0xb0] sm:$0xff]
      %v4175 = vld [vmem:[#allocation2 + $0xb8] sm:$0xff]
      %v4176 = vld [vmem:[#allocation2 + $0xc0] sm:$0xff]
      %v4177 = vld [vmem:[#allocation2 + $0xc8] sm:$0xff]
      %v4178 = vld [vmem:[#allocation2 + $0xd0] sm:$0xff]
      %v4179 = vld [vmem:[#allocation2 + $0xd8] sm:$0x3f]
      %v4180 = vadd.f32 %v4152, %v4042
      %v4181 = vadd.f32 %v4153, %v4045
      %v4182 = vadd.f32 %v4154, %v4050
      %v4183 = vadd.f32 %v4155, %v4053
      %v4184 = vadd.f32 %v4156, %v4058
      %v4185 = vadd.f32 %v4157, %v4061
      %v4186 = vadd.f32 %v4158, %v4066
      %v4187 = vadd.f32 %v4159, %v4069
      %v4188 = vadd.f32 %v4160, %v4074
      %v4189 = vadd.f32 %v4161, %v4077
      %v4190 = vadd.f32 %v4162, %v4082
      %v4191 = vadd.f32 %v4163, %v4085
      %v4192 = vadd.f32 %v4164, %v4090
      %v4193 = vadd.f32 %v4165, %v4093
      %v4194 = vadd.f32 %v4166, %v4098
      %v4195 = vadd.f32 %v4167, %v4101
      %v4196 = vadd.f32 %v4168, %v4106
      %v4197 = vadd.f32 %v4169, %v4109
      %v4198 = vadd.f32 %v4170, %v4114
      %v4199 = vadd.f32 %v4171, %v4117
      %v4200 = vadd.f32 %v4172, %v4122
      %v4201 = vadd.f32 %v4173, %v4125
      %v4202 = vadd.f32 %v4174, %v4130
      %v4203 = vadd.f32 %v4175, %v4133
      %v4204 = vadd.f32 %v4176, %v4138
      %v4205 = vadd.f32 %v4177, %v4141
      %v4206 = vadd.f32 %v4178, %v4146
      %v4207 = vadd.f32 %v4179, %v4149
      %4208 = vst [vmem:[#allocation2] sm:$0xff] %v4180
      %4209 = vst [vmem:[#allocation2 + $0x8] sm:$0xff] %v4181
      %4210 = vst [vmem:[#allocation2 + $0x10] sm:$0xff] %v4182
      %4211 = vst [vmem:[#allocation2 + $0x18] sm:$0xff] %v4183
      %4212 = vst [vmem:[#allocation2 + $0x20] sm:$0xff] %v4184
      %4213 = vst [vmem:[#allocation2 + $0x28] sm:$0xff] %v4185
      %4214 = vst [vmem:[#allocation2 + $0x30] sm:$0xff] %v4186
      %4215 = vst [vmem:[#allocation2 + $0x38] sm:$0xff] %v4187
      %4216 = vst [vmem:[#allocation2 + $0x40] sm:$0xff] %v4188
      %4217 = vst [vmem:[#allocation2 + $0x48] sm:$0xff] %v4189
      %4218 = vst [vmem:[#allocation2 + $0x50] sm:$0xff] %v4190
      %4219 = vst [vmem:[#allocation2 + $0x58] sm:$0xff] %v4191
      %4220 = vst [vmem:[#allocation2 + $0x60] sm:$0xff] %v4192
      %4221 = vst [vmem:[#allocation2 + $0x68] sm:$0xff] %v4193
      %4222 = vst [vmem:[#allocation2 + $0x70] sm:$0xff] %v4194
      %4223 = vst [vmem:[#allocation2 + $0x78] sm:$0xff] %v4195
      %4224 = vst [vmem:[#allocation2 + $0x80] sm:$0xff] %v4196
      %4225 = vst [vmem:[#allocation2 + $0x88] sm:$0xff] %v4197
      %4226 = vst [vmem:[#allocation2 + $0x90] sm:$0xff] %v4198
      %4227 = vst [vmem:[#allocation2 + $0x98] sm:$0xff] %v4199
      %4228 = vst [vmem:[#allocation2 + $0xa0] sm:$0xff] %v4200
      %4229 = vst [vmem:[#allocation2 + $0xa8] sm:$0xff] %v4201
      %4230 = vst [vmem:[#allocation2 + $0xb0] sm:$0xff] %v4202
      %4231 = vst [vmem:[#allocation2 + $0xb8] sm:$0xff] %v4203
      %4232 = vst [vmem:[#allocation2 + $0xc0] sm:$0xff] %v4204
      %4233 = vst [vmem:[#allocation2 + $0xc8] sm:$0xff] %v4205
      %4234 = vst [vmem:[#allocation2 + $0xd0] sm:$0xff] %v4206
      %4235 = vst [vmem:[#allocation2 + $0xd8] sm:$0x3f] %v4207
      %v4236 = vld [vmem:[%s213] sm:$0x1]
      %v4237 = vld [vmem:[#allocation2] sm:$0xff]
      %v4238 = vld [vmem:[#allocation2 + $0x8] sm:$0x3f]
      %v4240 = vlaneseq
      %v4241 = vshrl.u32 %v4240, 7
      %v4242 = vsub.s32 0, %v4241
      %v4243 = vrot.slane %v4236, %v4242
      %v4245 = vadd.f32 %v4237, %v4243
      %v4246 = vadd.f32 %v4238, %v4243
      %v4247 = vpack.c.bf16 %v4246, %v4245
      %v4249 = vunpack.c.l.b16 %v4247
      %v4250 = vunpack.c.h.b16 %v4247
      %v4251 = vpack.c.b16 %v4249, %v4249
      %v4252 = vpack.c.b16 %v4250, %v4250
      %4255 = vst [vmem:[%s221] sm:$0xf] %v4251
      %4256 = vst [vmem:[%s221 + $0x4] sm:$0x7] %v4252
      %v4257 = vld [vmem:[#allocation2 + $0x10] sm:$0xff]
      %v4258 = vld [vmem:[#allocation2 + $0x18] sm:$0x3f]
      %v4259 = vadd.f32 %v4257, %v4243
      %v4260 = vadd.f32 %v4258, %v4243
      %v4261 = vpack.c.bf16 %v4260, %v4259
      %v4263 = vunpack.c.l.b16 %v4261
      %v4264 = vunpack.c.h.b16 %v4261
      %v4265 = vpack.c.b16 %v4263, %v4263
      %v4266 = vpack.c.b16 %v4264, %v4264
      %s4269 = scalar_lea.vmem %s221, 8
      %4270 = vst [vmem:[%s4269] sm:$0xf] %v4265
      %4271 = vst [vmem:[%s4269 + $0x4] sm:$0x7] %v4266
      %v4272 = vld [vmem:[#allocation2 + $0x20] sm:$0xff]
      %v4273 = vld [vmem:[#allocation2 + $0x28] sm:$0x3f]
      %v4274 = vadd.f32 %v4272, %v4243
      %v4275 = vadd.f32 %v4273, %v4243
      %v4276 = vpack.c.bf16 %v4275, %v4274
      %v4278 = vunpack.c.l.b16 %v4276
      %v4279 = vunpack.c.h.b16 %v4276
      %v4280 = vpack.c.b16 %v4278, %v4278
      %v4281 = vpack.c.b16 %v4279, %v4279
      %s4284 = scalar_lea.vmem %s221, 16
      %4285 = vst [vmem:[%s4284] sm:$0xf] %v4280
      %4286 = vst [vmem:[%s4284 + $0x4] sm:$0x7] %v4281
      %v4287 = vld [vmem:[#allocation2 + $0x30] sm:$0xff]
      %v4288 = vld [vmem:[#allocation2 + $0x38] sm:$0x3f]
      %v4289 = vadd.f32 %v4287, %v4243
      %v4290 = vadd.f32 %v4288, %v4243
      %v4291 = vpack.c.bf16 %v4290, %v4289
      %v4293 = vunpack.c.l.b16 %v4291
      %v4294 = vunpack.c.h.b16 %v4291
      %v4295 = vpack.c.b16 %v4293, %v4293
      %v4296 = vpack.c.b16 %v4294, %v4294
      %s4299 = scalar_lea.vmem %s221, 24
      %4300 = vst [vmem:[%s4299] sm:$0xf] %v4295
      %4301 = vst [vmem:[%s4299 + $0x4] sm:$0x7] %v4296
      %v4302 = vld [vmem:[#allocation2 + $0x40] sm:$0xff]
      %v4303 = vld [vmem:[#allocation2 + $0x48] sm:$0x3f]
      %v4304 = vadd.f32 %v4302, %v4243
      %v4305 = vadd.f32 %v4303, %v4243
      %v4306 = vpack.c.bf16 %v4305, %v4304
      %v4308 = vunpack.c.l.b16 %v4306
      %v4309 = vunpack.c.h.b16 %v4306
      %v4310 = vpack.c.b16 %v4308, %v4308
      %v4311 = vpack.c.b16 %v4309, %v4309
      %s4314 = scalar_lea.vmem %s221, 32
      %4315 = vst [vmem:[%s4314] sm:$0xf] %v4310
      %4316 = vst [vmem:[%s4314 + $0x4] sm:$0x7] %v4311
      %v4317 = vld [vmem:[#allocation2 + $0x50] sm:$0xff]
      %v4318 = vld [vmem:[#allocation2 + $0x58] sm:$0x3f]
      %v4319 = vadd.f32 %v4317, %v4243
      %v4320 = vadd.f32 %v4318, %v4243
      %v4321 = vpack.c.bf16 %v4320, %v4319
      %v4323 = vunpack.c.l.b16 %v4321
      %v4324 = vunpack.c.h.b16 %v4321
      %v4325 = vpack.c.b16 %v4323, %v4323
      %v4326 = vpack.c.b16 %v4324, %v4324
      %s4329 = scalar_lea.vmem %s221, 40
      %4330 = vst [vmem:[%s4329] sm:$0xf] %v4325
      %4331 = vst [vmem:[%s4329 + $0x4] sm:$0x7] %v4326
      %v4332 = vld [vmem:[#allocation2 + $0x60] sm:$0xff]
      %v4333 = vld [vmem:[#allocation2 + $0x68] sm:$0x3f]
      %v4334 = vadd.f32 %v4332, %v4243
      %v4335 = vadd.f32 %v4333, %v4243
      %v4336 = vpack.c.bf16 %v4335, %v4334
      %v4338 = vunpack.c.l.b16 %v4336
      %v4339 = vunpack.c.h.b16 %v4336
      %v4340 = vpack.c.b16 %v4338, %v4338
      %v4341 = vpack.c.b16 %v4339, %v4339
      %s4344 = scalar_lea.vmem %s221, 48
      %4345 = vst [vmem:[%s4344] sm:$0xf] %v4340
      %4346 = vst [vmem:[%s4344 + $0x4] sm:$0x7] %v4341
      %v4347 = vld [vmem:[#allocation2 + $0x70] sm:$0xff]
      %v4348 = vld [vmem:[#allocation2 + $0x78] sm:$0x3f]
      %v4349 = vadd.f32 %v4347, %v4243
      %v4350 = vadd.f32 %v4348, %v4243
      %v4351 = vpack.c.bf16 %v4350, %v4349
      %v4353 = vunpack.c.l.b16 %v4351
      %v4354 = vunpack.c.h.b16 %v4351
      %v4355 = vpack.c.b16 %v4353, %v4353
      %v4356 = vpack.c.b16 %v4354, %v4354
      %s4359 = scalar_lea.vmem %s221, 56
      %4360 = vst [vmem:[%s4359] sm:$0xf] %v4355
      %4361 = vst [vmem:[%s4359 + $0x4] sm:$0x7] %v4356
      %v4362 = vld [vmem:[#allocation2 + $0x80] sm:$0xff]
      %v4363 = vld [vmem:[#allocation2 + $0x88] sm:$0x3f]
      %v4364 = vadd.f32 %v4362, %v4243
      %v4365 = vadd.f32 %v4363, %v4243
      %v4366 = vpack.c.bf16 %v4365, %v4364
      %v4368 = vunpack.c.l.b16 %v4366
      %v4369 = vunpack.c.h.b16 %v4366
      %v4370 = vpack.c.b16 %v4368, %v4368
      %v4371 = vpack.c.b16 %v4369, %v4369
      %s4374 = scalar_lea.vmem %s221, 64
      %4375 = vst [vmem:[%s4374] sm:$0xf] %v4370
      %4376 = vst [vmem:[%s4374 + $0x4] sm:$0x7] %v4371
      %v4377 = vld [vmem:[#allocation2 + $0x90] sm:$0xff]
      %v4378 = vld [vmem:[#allocation2 + $0x98] sm:$0x3f]
      %v4379 = vadd.f32 %v4377, %v4243
      %v4380 = vadd.f32 %v4378, %v4243
      %v4381 = vpack.c.bf16 %v4380, %v4379
      %v4383 = vunpack.c.l.b16 %v4381
      %v4384 = vunpack.c.h.b16 %v4381
      %v4385 = vpack.c.b16 %v4383, %v4383
      %v4386 = vpack.c.b16 %v4384, %v4384
      %s4389 = scalar_lea.vmem %s221, 72
      %4390 = vst [vmem:[%s4389] sm:$0xf] %v4385
      %4391 = vst [vmem:[%s4389 + $0x4] sm:$0x7] %v4386
      %v4392 = vld [vmem:[#allocation2 + $0xa0] sm:$0xff]
      %v4393 = vld [vmem:[#allocation2 + $0xa8] sm:$0x3f]
      %v4394 = vadd.f32 %v4392, %v4243
      %v4395 = vadd.f32 %v4393, %v4243
      %v4396 = vpack.c.bf16 %v4395, %v4394
      %v4398 = vunpack.c.l.b16 %v4396
      %v4399 = vunpack.c.h.b16 %v4396
      %v4400 = vpack.c.b16 %v4398, %v4398
      %v4401 = vpack.c.b16 %v4399, %v4399
      %s4404 = scalar_lea.vmem %s221, 80
      %4405 = vst [vmem:[%s4404] sm:$0xf] %v4400
      %4406 = vst [vmem:[%s4404 + $0x4] sm:$0x7] %v4401
      %v4407 = vld [vmem:[#allocation2 + $0xb0] sm:$0xff]
      %v4408 = vld [vmem:[#allocation2 + $0xb8] sm:$0x3f]
      %v4409 = vadd.f32 %v4407, %v4243
      %v4410 = vadd.f32 %v4408, %v4243
      %v4411 = vpack.c.bf16 %v4410, %v4409
      %v4413 = vunpack.c.l.b16 %v4411
      %v4414 = vunpack.c.h.b16 %v4411
      %v4415 = vpack.c.b16 %v4413, %v4413
      %v4416 = vpack.c.b16 %v4414, %v4414
      %s4419 = scalar_lea.vmem %s221, 88
      %4420 = vst [vmem:[%s4419] sm:$0xf] %v4415
      %4421 = vst [vmem:[%s4419 + $0x4] sm:$0x7] %v4416
      %v4422 = vld [vmem:[#allocation2 + $0xc0] sm:$0xff]
      %v4423 = vld [vmem:[#allocation2 + $0xc8] sm:$0x3f]
      %v4424 = vadd.f32 %v4422, %v4243
      %v4425 = vadd.f32 %v4423, %v4243
      %v4426 = vpack.c.bf16 %v4425, %v4424
      %v4428 = vunpack.c.l.b16 %v4426
      %v4429 = vunpack.c.h.b16 %v4426
      %v4430 = vpack.c.b16 %v4428, %v4428
      %v4431 = vpack.c.b16 %v4429, %v4429
      %s4434 = scalar_lea.vmem %s221, 96
      %4435 = vst [vmem:[%s4434] sm:$0xf] %v4430
      %4436 = vst [vmem:[%s4434 + $0x4] sm:$0x7] %v4431
      %v4437 = vld [vmem:[#allocation2 + $0xd0] sm:$0xff]
      %v4438 = vld [vmem:[#allocation2 + $0xd8] sm:$0x3f]
      %v4439 = vadd.f32 %v4437, %v4243
      %v4440 = vadd.f32 %v4438, %v4243
      %v4441 = vpack.c.bf16 %v4440, %v4439
      %v4443 = vunpack.c.l.b16 %v4441
      %v4444 = vunpack.c.h.b16 %v4441
      %v4445 = vpack.c.b16 %v4443, %v4443
      %v4446 = vpack.c.b16 %v4444, %v4444
      %s4449 = scalar_lea.vmem %s221, 104
      %4450 = vst [vmem:[%s4449] sm:$0xf] %v4445
      %4451 = vst [vmem:[%s4449 + $0x4] sm:$0x7] %v4446
      %p4452 = scmp.lt.s32.totalorder %s18, 1
      %s4453 = scalar_select %p4452, %s18, 1
      %p4454 = scmp.lt.s32.totalorder %s19, 0
      %s4455 = scalar_select %p4454, %s19, 0
      %s4456 = smul.addr %s4453, 28
      %s4457 = sadd.s32 %s4455, %s4456
      %s4458 = smul.addr %s4457, 4
      %s4459 = scalar_lea.vmem %s3, %s4458
      // Predicated region
      $region33: #{_lambda_.4} parent=31 // pred_check
        %p4460 = pneg %p124
      $region34: #{_lambda_.4} parent=31 // pred_check_branch
        %4462 = sbr.rel (%p4460) target = $region36
      $region35: #{_lambda_.4} parent=31 // pred_region
        _
      $region36: #{_lambda_.4} parent=31 // pred_fallthru
        _
    $region32: #{_lambda_.4} parent=5 // pred_fallthru
      _
    %p4463 = scmp.le.s32.totalorder 2, %s9
    // Predicated region
    $region37: #{_lambda_.4} parent=5 // pred_check
      %p4464 = pneg %p4463
    $region38: #{_lambda_.4} parent=5 // pred_check_branch
      %4466 = sbr.rel (%p4464) target = $region40
    $region39: #{_lambda_.4} parent=5 // pred_region
      %s4467 = ssub.s32 %s9, 2
      // Predicated region
      $region41: #{_lambda_.4} parent=39 // pred_check
        %p4468 = pneg %p130
      $region42: #{_lambda_.4} parent=39 // pred_check_branch
        %4470 = sbr.rel (%p4468) target = $region44
      $region43: #{_lambda_.4} parent=39 // pred_region
        %p4471 = scmp.lt.s32.totalorder %s20, 1
        %s4472 = scalar_select %p4471, %s20, 1
        %p4473 = scmp.lt.s32.totalorder %s21, 0
        %s4474 = scalar_select %p4473, %s21, 0
        %s4475 = smul.addr %s4472, 28
        %s4476 = sadd.s32 %s4474, %s4475
        %s4477 = smul.addr %s4476, 4
        %s4478 = scalar_lea.vmem %s3, %s4477
      $region44: #{_lambda_.4} parent=39 // pred_fallthru
        _
    $region40: #{_lambda_.4} parent=5 // pred_fallthru
      _
  $region6: #{_lambda_.4} parent=0 // loop_footer
    %s13 = sadd.s32 1, %s9
  $region7: #{_lambda_.4} parent=0 // loop_footer_branch
    %8 = sbr.rel target = $region3
  $region8: #{_lambda_.4} parent=0 // loop_exit
    _

// kernel: _lambda_.5
$region0: #{_lambda_.5}
  #allocation0 [shape = 'u32[]', space=smem, size = 0x4, offset = 0x4, fixed_abs, tag = 'smem constant byte address 0x4 - core index']
  #allocation1 [shape = 'u32[144,128]{1,0:T(1,128)}', space=vmem, size = 0x12000, scoped, tag = 'internal scratch']
  #allocation2 [shape = 'f32[222,128]{1,0:T(8,128)}', space=vmem, size = 0x1c000, scoped, tag = 'scratch operand']
  %s0 = inlined_call_operand.vmem [shape: bf16[2,256,128], index: 0, kind: input, shape index: {}]
  %s1 = inlined_call_operand.vmem [shape: bf16[9,128,128], index: 1, kind: input, shape index: {}]
  %s2 = inlined_call_operand.vmem [shape: f32[1,128], index: 2, kind: input, shape index: {}]
  %s3 = inlined_call_operand.vmem [shape: bf16[2,14,14,128], index: 3, kind: output, shape index: {}]
  %s4 = sld [smem:[#allocation0]]
  $region45: #{_lambda_.5} parent=0
    _
  %s6 = ssub.s32 1, %s4
  %s7 = scalar_select 0, %s6, %s4
  loop: start=0, step=1, limit=4
  $region2: #{_lambda_.5} parent=0 // loop_pre_header
    _
  $region3: #{_lambda_.5} parent=0 // loop_header
    %s9 = sphi 0, %s13
    %p10 = scmp.ge.s32.totalorder %s9, 4
    %s16 = sphi 0, %s28
    %s17 = sphi 0, %s24
    %s18 = sphi 0, %s16
    %s19 = sphi 0, %s17
    %s20 = sphi 0, %s18
    %s21 = sphi 0, %s19
    %s31 = sphi 0, %s33
    %s34 = sphi 0, %s31
    %s35 = sphi 0, %s34
    %s51 = sphi 0, %s35
    %s57 = sphi 0, %s59
    %s60 = sphi 0, %s57
    %s61 = sphi 0, %s60
    %s77 = sphi 0, %s61
    %s83 = sphi 0, %s85
    %s86 = sphi 0, %s83
    %s87 = sphi 0, %s86
    %s103 = sphi 0, %s87
    %s111 = sphi 0, %s113
    %s114 = sphi 0, %s111
    %s115 = sphi 0, %s114
    %s131 = sphi 0, %s115
  $region4: #{_lambda_.5} parent=0 // loop_header_branch
    %12 = sbr.rel (%p10) target = $region8
  $region5: #{_lambda_.5} parent=0 // loop_body
    %s14 = ssub.s32 %s9, 1
    %s15 = ssub.s32 %s9, 2
    %s22 = sadd.s32 1, %s17
    %p23 = scmp.ge.s32.totalorder %s22, 1
    %s24 = scalar_select %p23, 0, %s22
    %s25 = sadd.s32 1, %s16
    %s26 = scalar_select %p23, %s25, %s16
    %p27 = scmp.ge.s32.totalorder %s26, 2
    %s28 = scalar_select %p27, 0, %s26
    %s29 = ssub.s32 %s16, %s28
    %p30 = scmp.eq.s32.totalorder %s29, 0
    %s32 = sadd.s32 %s31, 1
    %s33 = scalar_select %p30, %s31, %s32
    %p36 = pneg %p30
    %p37 = scmp.eq.s32.totalorder %s9, 1
    %p38 = por %p36, %p37
    %p39 = scmp.ne.s32.totalorder %s31, %s34
    %p40 = scmp.eq.s32.totalorder %s9, 0
    %p41 = por %p39, %p40
    %p42 = scmp.ne.s32.totalorder %s31, %s34
    %p43 = scmp.eq.s32.totalorder %s14, 1
    %p44 = por %p42, %p43
    %p45 = scmp.ne.s32.totalorder %s34, %s35
    %p46 = scmp.eq.s32.totalorder %s14, 0
    %p47 = por %p45, %p46
    %p48 = scmp.ne.s32.totalorder %s34, %s35
    %p49 = scmp.eq.s32.totalorder %s15, 1
    %p50 = por %p48, %p49
    %p52 = scmp.ne.s32.totalorder %s35, %s51
    %p53 = scmp.eq.s32.totalorder %s15, 0
    %p54 = por %p52, %p53
    %s55 = ssub.s32 %s17, %s24
    %p56 = scmp.eq.s32.totalorder %s55, 0
    %s58 = sadd.s32 %s57, 1
    %s59 = scalar_select %p56, %s57, %s58
    %p62 = pneg %p56
    %p63 = scmp.eq.s32.totalorder %s9, 1
    %p64 = por %p62, %p63
    %p65 = scmp.ne.s32.totalorder %s57, %s60
    %p66 = scmp.eq.s32.totalorder %s9, 0
    %p67 = por %p65, %p66
    %p68 = scmp.ne.s32.totalorder %s57, %s60
    %p69 = scmp.eq.s32.totalorder %s14, 1
    %p70 = por %p68, %p69
    %p71 = scmp.ne.s32.totalorder %s60, %s61
    %p72 = scmp.eq.s32.totalorder %s14, 0
    %p73 = por %p71, %p72
    %p74 = scmp.ne.s32.totalorder %s60, %s61
    %p75 = scmp.eq.s32.totalorder %s15, 1
    %p76 = por %p74, %p75
    %p78 = scmp.ne.s32.totalorder %s61, %s77
    %p79 = scmp.eq.s32.totalorder %s15, 0
    %p80 = por %p78, %p79
    %s81 = ssub.s32 %s17, %s24
    %p82 = scmp.eq.s32.totalorder %s81, 0
    %s84 = sadd.s32 %s83, 1
    %s85 = scalar_select %p82, %s83, %s84
    %p88 = pneg %p82
    %p89 = scmp.eq.s32.totalorder %s9, 1
    %p90 = por %p88, %p89
    %p91 = scmp.ne.s32.totalorder %s83, %s86
    %p92 = scmp.eq.s32.totalorder %s9, 0
    %p93 = por %p91, %p92
    %p94 = scmp.ne.s32.totalorder %s83, %s86
    %p95 = scmp.eq.s32.totalorder %s14, 1
    %p96 = por %p94, %p95
    %p97 = scmp.ne.s32.totalorder %s86, %s87
    %p98 = scmp.eq.s32.totalorder %s14, 0
    %p99 = por %p97, %p98
    %p100 = scmp.ne.s32.totalorder %s86, %s87
    %p101 = scmp.eq.s32.totalorder %s15, 1
    %p102 = por %p100, %p101
    %p104 = scmp.ne.s32.totalorder %s87, %s103
    %p105 = scmp.eq.s32.totalorder %s15, 0
    %p106 = por %p104, %p105
    %s107 = ssub.s32 %s16, %s28
    %s108 = ssub.s32 %s17, %s24
    %s109 = sor.u32 %s107, %s108
    %p110 = scmp.eq.s32.totalorder %s109, 0
    %s112 = sadd.s32 %s111, 1
    %s113 = scalar_select %p110, %s111, %s112
    %p116 = pneg %p110
    %p117 = scmp.eq.s32.totalorder %s9, 1
    %p118 = por %p116, %p117
    %p119 = scmp.ne.s32.totalorder %s111, %s114
    %p120 = scmp.eq.s32.totalorder %s9, 0
    %p121 = por %p119, %p120
    %p122 = scmp.ne.s32.totalorder %s111, %s114
    %p123 = scmp.eq.s32.totalorder %s14, 1
    %p124 = por %p122, %p123
    %p125 = scmp.ne.s32.totalorder %s114, %s115
    %p126 = scmp.eq.s32.totalorder %s14, 0
    %p127 = por %p125, %p126
    %p128 = scmp.ne.s32.totalorder %s114, %s115
    %p129 = scmp.eq.s32.totalorder %s15, 1
    %p130 = por %p128, %p129
    %p132 = scmp.ne.s32.totalorder %s115, %s131
    %p133 = scmp.eq.s32.totalorder %s15, 0
    %p134 = por %p132, %p133
    %p135 = scmp.le.s32.totalorder 1, %s9
    %p136 = scmp.lt.s32.totalorder %s9, 3
    %p137 = pnand %p135, %p136
    %p138 = pneg %p137
    // Predicated region
    $region9: #{_lambda_.5} parent=5 // pred_check
      _
    $region10: #{_lambda_.5} parent=5 // pred_check_branch
      %140 = sbr.rel (%p137) target = $region12
    $region11: #{_lambda_.5} parent=5 // pred_region
      %s141 = ssub.s32 %s9, 1
      // Predicated region
      $region13: #{_lambda_.5} parent=11 // pred_check
        %p142 = pneg %p73
      $region14: #{_lambda_.5} parent=11 // pred_check_branch
        %144 = sbr.rel (%p142) target = $region16
      $region15: #{_lambda_.5} parent=11 // pred_region
        %p145 = scmp.lt.s32.totalorder %s19, 0
        %s146 = scalar_select %p145, %s19, 0
        %s147 = smul.addr %s146, 4
        %s148 = scalar_lea.vmem %s1, %s147
      $region16: #{_lambda_.5} parent=11 // pred_fallthru
        _
      // Predicated region
      $region17: #{_lambda_.5} parent=11 // pred_check
        %p149 = pneg %p99
      $region18: #{_lambda_.5} parent=11 // pred_check_branch
        %151 = sbr.rel (%p149) target = $region20
      $region19: #{_lambda_.5} parent=11 // pred_region
        %p152 = scmp.lt.s32.totalorder %s19, 0
        %s153 = scalar_select %p152, %s19, 0
        %s154 = scalar_lea.vmem %s2, %s153
      $region20: #{_lambda_.5} parent=11 // pred_fallthru
        _
    $region12: #{_lambda_.5} parent=5 // pred_fallthru
      _
    %p155 = scmp.lt.s32.totalorder %s9, 2
    // Predicated region
    $region21: #{_lambda_.5} parent=5 // pred_check
      %p156 = pneg %p155
    $region22: #{_lambda_.5} parent=5 // pred_check_branch
      %158 = sbr.rel (%p156) target = $region24
    $region23: #{_lambda_.5} parent=5 // pred_region
      // Predicated region
      $region25: #{_lambda_.5} parent=23 // pred_check
        %p159 = pneg %p41
      $region26: #{_lambda_.5} parent=23 // pred_check_branch
        %161 = sbr.rel (%p159) target = $region28
      $region27: #{_lambda_.5} parent=23 // pred_region
        %p162 = scmp.lt.s32.totalorder %s16, 1
        %s163 = scalar_select %p162, %s16, 1
        %s164 = smul.addr %s163, 32
        %s165 = smul.addr %s164, 4
        %s166 = scalar_lea.vmem %s0, %s165
      $region28: #{_lambda_.5} parent=23 // pred_fallthru
        _
    $region24: #{_lambda_.5} parent=5 // pred_fallthru
      _
    %p167 = scmp.le.s32.totalorder 1, %s9
    %p168 = scmp.lt.s32.totalorder %s9, 3
    %p169 = pnand %p167, %p168
    %p170 = pneg %p169
    // Predicated region
    $region29: #{_lambda_.5} parent=5 // pred_check
      _
    $region30: #{_lambda_.5} parent=5 // pred_check_branch
      %172 = sbr.rel (%p169) target = $region32
    $region31: #{_lambda_.5} parent=5 // pred_region
      %s173 = ssub.s32 %s9, 1
      %p174 = scmp.lt.s32.totalorder %s18, 1
      %s175 = scalar_select %p174, %s18, 1
      %s176 = smul.addr %s175, 32
      %s177 = smul.addr %s176, 4
      %s178 = scalar_lea.vmem %s0, %s177
      %p179 = pneg %p47
      %p180 = pneg %p44
      %p181 = scmp.lt.s32.totalorder %s19, 0
      %s182 = scalar_select %p181, %s19, 0
      %s183 = smul.addr %s182, 4
      %s184 = scalar_lea.vmem %s1, %s183
      %p185 = pneg %p73
      %p186 = pneg %p70
      %p187 = scmp.lt.s32.totalorder %s19, 0
      %s188 = scalar_select %p187, %s19, 0
      %s189 = scalar_lea.vmem %s2, %s188
      %p190 = pneg %p99
      %p191 = pneg %p96
      %p192 = pneg %p127
      %p193 = pneg %p124
      %p194 = scmp.lt.s32.totalorder %s18, 1
      %s195 = scalar_select %p194, %s18, 1
      %p196 = scmp.lt.s32.totalorder %s19, 0
      %s197 = scalar_select %p196, %s19, 0
      %s198 = smul.addr %s195, 28
      %s199 = sadd.s32 %s197, %s198
      %s200 = smul.addr %s199, 4
      %s201 = scalar_lea.vmem %s3, %s200
      %p202 = scmp.lt.s32.totalorder %s18, 1
      %s203 = scalar_select %p202, %s18, 1
      %s204 = smul.addr %s203, 32
      %s205 = smul.addr %s204, 4
      %s206 = scalar_lea.vmem %s0, %s205
      %p207 = scmp.lt.s32.totalorder %s19, 0
      %s208 = scalar_select %p207, %s19, 0
      %s209 = smul.addr %s208, 4
      %s210 = scalar_lea.vmem %s1, %s209
      %p211 = scmp.lt.s32.totalorder %s19, 0
      %s212 = scalar_select %p211, %s19, 0
      %s213 = scalar_lea.vmem %s2, %s212
      %p214 = scmp.lt.s32.totalorder %s18, 1
      %s215 = scalar_select %p214, %s18, 1
      %p216 = scmp.lt.s32.totalorder %s19, 0
      %s217 = scalar_select %p216, %s19, 0
      %s218 = smul.addr %s215, 28
      %s219 = sadd.s32 %s217, %s218
      %s220 = smul.addr %s219, 4
      %s221 = scalar_lea.vmem %s3, %s220
      %v223 = vld [vmem:[%s206] sm:$0xf]
      %v224 = vld [vmem:[%s206 + $0x4] sm:$0xf]
      %v225 = vld [vmem:[%s206 + $0x8] sm:$0xf]
      %v226 = vld [vmem:[%s206 + $0xc] sm:$0xf]
      %v227 = vld [vmem:[%s206 + $0x10] sm:$0xf]
      %v228 = vld [vmem:[%s206 + $0x14] sm:$0xf]
      %v229 = vld [vmem:[%s206 + $0x18] sm:$0xf]
      %v230 = vld [vmem:[%s206 + $0x1c] sm:$0xf]
      %v231 = vld [vmem:[%s206 + $0x20] sm:$0xf]
      %v232 = vld [vmem:[%s206 + $0x24] sm:$0xf]
      %v233 = vld [vmem:[%s206 + $0x28] sm:$0xf]
      %v234 = vld [vmem:[%s206 + $0x2c] sm:$0xf]
      %v235 = vld [vmem:[%s206 + $0x30] sm:$0xf]
      %v236 = vld [vmem:[%s206 + $0x34] sm:$0xf]
      %v237 = vld [vmem:[%s206 + $0x38] sm:$0xf]
      %v238 = vld [vmem:[%s206 + $0x3c] sm:$0xf]
      %v239 = vld [vmem:[%s206 + $0x40] sm:$0xf]
      %v240 = vld [vmem:[%s206 + $0x44] sm:$0xf]
      %v241 = vld [vmem:[%s206 + $0x48] sm:$0xf]
      %v242 = vld [vmem:[%s206 + $0x4c] sm:$0xf]
      %v243 = vld [vmem:[%s206 + $0x50] sm:$0xf]
      %v244 = vld [vmem:[%s206 + $0x54] sm:$0xf]
      %v245 = vld [vmem:[%s206 + $0x58] sm:$0xf]
      %v246 = vld [vmem:[%s206 + $0x5c] sm:$0xf]
      %v247 = vld [vmem:[%s206 + $0x60] sm:$0xf]
      %v248 = vld [vmem:[%s206 + $0x64] sm:$0xf]
      %v249 = vld [vmem:[%s206 + $0x68] sm:$0xf]
      %v250 = vld [vmem:[%s206 + $0x6c] sm:$0x7]
      %v251 = vld [vmem:[%s210] sm:$0xf]
      %v252 = vld [vmem:[%s210 + $0x4] sm:$0xf]
      %v253 = vld [vmem:[%s210 + $0x8] sm:$0xf]
      %v254 = vld [vmem:[%s210 + $0xc] sm:$0xf]
      %v255 = vld [vmem:[%s210 + $0x10] sm:$0xf]
      %v256 = vld [vmem:[%s210 + $0x14] sm:$0xf]
      %v257 = vld [vmem:[%s210 + $0x18] sm:$0xf]
      %v258 = vld [vmem:[%s210 + $0x1c] sm:$0xf]
      %v259 = vld [vmem:[%s210 + $0x20] sm:$0xf]
      %v260 = vld [vmem:[%s210 + $0x24] sm:$0xf]
      %v261 = vld [vmem:[%s210 + $0x28] sm:$0xf]
      %v262 = vld [vmem:[%s210 + $0x2c] sm:$0xf]
      %v263 = vld [vmem:[%s210 + $0x30] sm:$0xf]
      %v264 = vld [vmem:[%s210 + $0x34] sm:$0xf]
      %v265 = vld [vmem:[%s210 + $0x38] sm:$0xf]
      %v266 = vld [vmem:[%s210 + $0x3c] sm:$0xf]
      %v295 = vunpack.c.l.b16 %v223
      %v296 = vunpack.c.l.b16 %v224
      %v297 = vunpack.c.l.b16 %v225
      %v298 = vunpack.c.l.b16 %v226
      %v299 = vunpack.c.l.b16 %v227
      %v300 = vunpack.c.l.b16 %v228
      %v301 = vunpack.c.l.b16 %v229
      %v302 = vunpack.c.l.b16 %v230
      %v303 = vunpack.c.l.b16 %v231
      %v304 = vunpack.c.l.b16 %v232
      %v305 = vunpack.c.l.b16 %v233
      %v306 = vunpack.c.l.b16 %v234
      %v307 = vunpack.c.l.b16 %v235
      %v308 = vunpack.c.l.b16 %v236
      %v309 = vunpack.c.l.b16 %v237
      %v310 = vunpack.c.l.b16 %v238
      %v311 = vunpack.c.l.b16 %v239
      %v312 = vunpack.c.l.b16 %v240
      %v313 = vunpack.c.l.b16 %v241
      %v314 = vunpack.c.l.b16 %v242
      %v315 = vunpack.c.l.b16 %v243
      %v316 = vunpack.c.l.b16 %v244
      %v317 = vunpack.c.l.b16 %v245
      %v318 = vunpack.c.l.b16 %v246
      %v319 = vunpack.c.l.b16 %v247
      %v320 = vunpack.c.l.b16 %v248
      %v321 = vunpack.c.l.b16 %v249
      %v322 = vunpack.c.l.b16 %v250
      %v323 = vpack.c.b16 %v296, %v295
      %v324 = vpack.c.b16 %v298, %v297
      %v325 = vpack.c.b16 %v300, %v299
      %v326 = vpack.c.b16 %v302, %v301
      %v327 = vpack.c.b16 %v304, %v303
      %v328 = vpack.c.b16 %v306, %v305
      %v329 = vpack.c.b16 %v308, %v307
      %v330 = vpack.c.b16 %v310, %v309
      %v331 = vpack.c.b16 %v312, %v311
      %v332 = vpack.c.b16 %v314, %v313
      %v333 = vpack.c.b16 %v316, %v315
      %v334 = vpack.c.b16 %v318, %v317
      %v335 = vpack.c.b16 %v320, %v319
      %v336 = vpack.c.b16 %v322, %v321
      %v367 = vunpack.c.l.b16 %v251
      %v368 = vunpack.c.l.b16 %v252
      %v369 = vunpack.c.l.b16 %v253
      %v370 = vunpack.c.l.b16 %v254
      %v371 = vunpack.c.l.b16 %v255
      %v372 = vunpack.c.l.b16 %v256
      %v373 = vunpack.c.l.b16 %v257
      %v374 = vunpack.c.l.b16 %v258
      %v375 = vunpack.c.l.b16 %v259
      %v376 = vunpack.c.l.b16 %v260
      %v377 = vunpack.c.l.b16 %v261
      %v378 = vunpack.c.l.b16 %v262
      %v379 = vunpack.c.l.b16 %v263
      %v380 = vunpack.c.l.b16 %v264
      %v381 = vunpack.c.l.b16 %v265
      %v382 = vunpack.c.l.b16 %v266
      %v383 = vpack.c.b16 %v368, %v367
      %v384 = vpack.c.b16 %v370, %v369
      %v385 = vpack.c.b16 %v372, %v371
      %v386 = vpack.c.b16 %v374, %v373
      %v387 = vpack.c.b16 %v376, %v375
      %v388 = vpack.c.b16 %v378, %v377
      %v389 = vpack.c.b16 %v380, %v379
      %v390 = vpack.c.b16 %v382, %v381
      %399 = vmatprep.subr.bf16.mxu0 0
      %400 = vmatpush1.bf16.msra.mxu0 %v390
      %401 = vmatprep.subr.bf16.mxu0 0
      %402 = vmatpush1.bf16.msra.mxu0 %v389
      %403 = vmatprep.subr.bf16.mxu0 0
      %404 = vmatpush1.bf16.msra.mxu0 %v388
      %405 = vmatprep.subr.bf16.mxu0 0
      %406 = vmatpush1.bf16.msra.mxu0 %v387
      %407 = vmatprep.subr.bf16.mxu0 0
      %408 = vmatpush1.bf16.msra.mxu0 %v386
      %409 = vmatprep.subr.bf16.mxu0 0
      %410 = vmatpush1.bf16.msra.mxu0 %v385
      %411 = vmatprep.subr.bf16.mxu0 0
      %412 = vmatpush1.bf16.msra.mxu0 %v384
      %413 = vmatprep.subr.bf16.mxu0 0
      %414 = vmatpush1.bf16.msra.mxu0 %v383
      %415 = vmatprep.subr.bf16.mxu0 0
      %416 = vmatpush2.bf16.msra.mxu0 0
      %417 = vmatprep.subr.bf16.mxu0 0
      %418 = vmatpush2.bf16.msra.mxu0 0
      %419 = vmatprep.subr.bf16.mxu0 0
      %420 = vmatpush2.bf16.msra.mxu0 0
      %421 = vmatprep.subr.bf16.mxu0 0
      %422 = vmatpush2.bf16.msra.mxu0 0
      %423 = vmatprep.subr.bf16.mxu0 0
      %424 = vmatpush2.bf16.msra.mxu0 0
      %425 = vmatprep.subr.bf16.mxu0 0
      %426 = vmatpush2.bf16.msra.mxu0 0
      %427 = vmatprep.subr.bf16.mxu0 0
      %428 = vmatpush2.bf16.msra.mxu0 0
      %429 = vmatprep.subr.bf16.mxu0 0
      %430 = vmatpush2.bf16.msra.mxu0 0
      %431 = vmatprep.mubr.bf16.mxu0 0
      %432 = vmatmul.mubr.bf16.gmra.mxu0 %v323
      %v433 = vpop.f32.mrf.mxu0
      %v434 = vadd.f32 0.0, %v433
      %v435 = vpop.f32.mrf.mxu0
      %v436 = vpop.f32.mrf.mxu0
      %v437 = vadd.f32 0.0, %v436
      %v438 = vpop.f32.mrf.mxu0
      %439 = vmatprep.mubr.bf16.mxu0 0
      %440 = vmatmul.mubr.bf16.gmra.mxu0 %v324
      %v441 = vpop.f32.mrf.mxu0
      %v442 = vadd.f32 0.0, %v441
      %v443 = vpop.f32.mrf.mxu0
      %v444 = vpop.f32.mrf.mxu0
      %v445 = vadd.f32 0.0, %v444
      %v446 = vpop.f32.mrf.mxu0
      %447 = vmatprep.mubr.bf16.mxu0 0
      %448 = vmatmul.mubr.bf16.gmra.mxu0 %v325
      %v449 = vpop.f32.mrf.mxu0
      %v450 = vadd.f32 0.0, %v449
      %v451 = vpop.f32.mrf.mxu0
      %v452 = vpop.f32.mrf.mxu0
      %v453 = vadd.f32 0.0, %v452
      %v454 = vpop.f32.mrf.mxu0
      %455 = vmatprep.mubr.bf16.mxu0 0
      %456 = vmatmul.mubr.bf16.gmra.mxu0 %v326
      %v457 = vpop.f32.mrf.mxu0
      %v458 = vadd.f32 0.0, %v457
      %v459 = vpop.f32.mrf.mxu0
      %v460 = vpop.f32.mrf.mxu0
      %v461 = vadd.f32 0.0, %v460
      %v462 = vpop.f32.mrf.mxu0
      %463 = vmatprep.mubr.bf16.mxu0 0
      %464 = vmatmul.mubr.bf16.gmra.mxu0 %v327
      %v465 = vpop.f32.mrf.mxu0
      %v466 = vadd.f32 0.0, %v465
      %v467 = vpop.f32.mrf.mxu0
      %v468 = vpop.f32.mrf.mxu0
      %v469 = vadd.f32 0.0, %v468
      %v470 = vpop.f32.mrf.mxu0
      %471 = vmatprep.mubr.bf16.mxu0 0
      %472 = vmatmul.mubr.bf16.gmra.mxu0 %v328
      %v473 = vpop.f32.mrf.mxu0
      %v474 = vadd.f32 0.0, %v473
      %v475 = vpop.f32.mrf.mxu0
      %v476 = vpop.f32.mrf.mxu0
      %v477 = vadd.f32 0.0, %v476
      %v478 = vpop.f32.mrf.mxu0
      %479 = vmatprep.mubr.bf16.mxu0 0
      %480 = vmatmul.mubr.bf16.gmra.mxu0 %v329
      %v481 = vpop.f32.mrf.mxu0
      %v482 = vadd.f32 0.0, %v481
      %v483 = vpop.f32.mrf.mxu0
      %v484 = vpop.f32.mrf.mxu0
      %v485 = vadd.f32 0.0, %v484
      %v486 = vpop.f32.mrf.mxu0
      %487 = vmatprep.mubr.bf16.mxu0 0
      %488 = vmatmul.mubr.bf16.gmra.mxu0 %v330
      %v489 = vpop.f32.mrf.mxu0
      %v490 = vadd.f32 0.0, %v489
      %v491 = vpop.f32.mrf.mxu0
      %v492 = vpop.f32.mrf.mxu0
      %v493 = vadd.f32 0.0, %v492
      %v494 = vpop.f32.mrf.mxu0
      %495 = vmatprep.mubr.bf16.mxu0 0
      %496 = vmatmul.mubr.bf16.gmra.mxu0 %v331
      %v497 = vpop.f32.mrf.mxu0
      %v498 = vadd.f32 0.0, %v497
      %v499 = vpop.f32.mrf.mxu0
      %v500 = vpop.f32.mrf.mxu0
      %v501 = vadd.f32 0.0, %v500
      %v502 = vpop.f32.mrf.mxu0
      %503 = vmatprep.mubr.bf16.mxu0 0
      %504 = vmatmul.mubr.bf16.gmra.mxu0 %v332
      %v505 = vpop.f32.mrf.mxu0
      %v506 = vadd.f32 0.0, %v505
      %v507 = vpop.f32.mrf.mxu0
      %v508 = vpop.f32.mrf.mxu0
      %v509 = vadd.f32 0.0, %v508
      %v510 = vpop.f32.mrf.mxu0
      %511 = vmatprep.mubr.bf16.mxu0 0
      %512 = vmatmul.mubr.bf16.gmra.mxu0 %v333
      %v513 = vpop.f32.mrf.mxu0
      %v514 = vadd.f32 0.0, %v513
      %v515 = vpop.f32.mrf.mxu0
      %v516 = vpop.f32.mrf.mxu0
      %v517 = vadd.f32 0.0, %v516
      %v518 = vpop.f32.mrf.mxu0
      %519 = vmatprep.mubr.bf16.mxu0 0
      %520 = vmatmul.mubr.bf16.gmra.mxu0 %v334
      %v521 = vpop.f32.mrf.mxu0
      %v522 = vadd.f32 0.0, %v521
      %v523 = vpop.f32.mrf.mxu0
      %v524 = vpop.f32.mrf.mxu0
      %v525 = vadd.f32 0.0, %v524
      %v526 = vpop.f32.mrf.mxu0
      %527 = vmatprep.mubr.bf16.mxu0 0
      %528 = vmatmul.mubr.bf16.gmra.mxu0 %v335
      %v529 = vpop.f32.mrf.mxu0
      %v530 = vadd.f32 0.0, %v529
      %v531 = vpop.f32.mrf.mxu0
      %v532 = vpop.f32.mrf.mxu0
      %v533 = vadd.f32 0.0, %v532
      %v534 = vpop.f32.mrf.mxu0
      %535 = vmatprep.mubr.bf16.mxu0 0
      %536 = vmatmul.mubr.bf16.gmra.mxu0 %v336
      %v537 = vpop.f32.mrf.mxu0
      %v538 = vadd.f32 0.0, %v537
      %v539 = vpop.f32.mrf.mxu0
      %v540 = vpop.f32.mrf.mxu0
      %v541 = vadd.f32 0.0, %v540
      %v542 = vpop.f32.mrf.mxu0
      %543 = vdwg.mxu0
      %544 = vst [vmem:[#allocation2] sm:$0xff] %v434
      %545 = vst [vmem:[#allocation2 + $0x8] sm:$0xff] %v437
      %546 = vst [vmem:[#allocation2 + $0x10] sm:$0xff] %v442
      %547 = vst [vmem:[#allocation2 + $0x18] sm:$0xff] %v445
      %548 = vst [vmem:[#allocation2 + $0x20] sm:$0xff] %v450
      %549 = vst [vmem:[#allocation2 + $0x28] sm:$0xff] %v453
      %550 = vst [vmem:[#allocation2 + $0x30] sm:$0xff] %v458
      %551 = vst [vmem:[#allocation2 + $0x38] sm:$0xff] %v461
      %552 = vst [vmem:[#allocation2 + $0x40] sm:$0xff] %v466
      %553 = vst [vmem:[#allocation2 + $0x48] sm:$0xff] %v469
      %554 = vst [vmem:[#allocation2 + $0x50] sm:$0xff] %v474
      %555 = vst [vmem:[#allocation2 + $0x58] sm:$0xff] %v477
      %556 = vst [vmem:[#allocation2 + $0x60] sm:$0xff] %v482
      %557 = vst [vmem:[#allocation2 + $0x68] sm:$0xff] %v485
      %558 = vst [vmem:[#allocation2 + $0x70] sm:$0xff] %v490
      %559 = vst [vmem:[#allocation2 + $0x78] sm:$0xff] %v493
      %560 = vst [vmem:[#allocation2 + $0x80] sm:$0xff] %v498
      %561 = vst [vmem:[#allocation2 + $0x88] sm:$0xff] %v501
      %562 = vst [vmem:[#allocation2 + $0x90] sm:$0xff] %v506
      %563 = vst [vmem:[#allocation2 + $0x98] sm:$0xff] %v509
      %564 = vst [vmem:[#allocation2 + $0xa0] sm:$0xff] %v514
      %565 = vst [vmem:[#allocation2 + $0xa8] sm:$0xff] %v517
      %566 = vst [vmem:[#allocation2 + $0xb0] sm:$0xff] %v522
      %567 = vst [vmem:[#allocation2 + $0xb8] sm:$0xff] %v525
      %568 = vst [vmem:[#allocation2 + $0xc0] sm:$0xff] %v530
      %569 = vst [vmem:[#allocation2 + $0xc8] sm:$0xff] %v533
      %570 = vst [vmem:[#allocation2 + $0xd0] sm:$0xff] %v538
      %571 = vst [vmem:[#allocation2 + $0xd8] sm:$0x3f] %v541
      %v572 = vld [vmem:[%s206] sm:$0xf]
      %v573 = vld [vmem:[%s206 + $0x4] sm:$0xf]
      %v574 = vld [vmem:[%s206 + $0x8] sm:$0xf]
      %v575 = vld [vmem:[%s206 + $0xc] sm:$0xf]
      %v576 = vld [vmem:[%s206 + $0x10] sm:$0xf]
      %v577 = vld [vmem:[%s206 + $0x14] sm:$0xf]
      %v578 = vld [vmem:[%s206 + $0x18] sm:$0xf]
      %v579 = vld [vmem:[%s206 + $0x1c] sm:$0xf]
      %v580 = vld [vmem:[%s206 + $0x20] sm:$0xf]
      %v581 = vld [vmem:[%s206 + $0x24] sm:$0xf]
      %v582 = vld [vmem:[%s206 + $0x28] sm:$0xf]
      %v583 = vld [vmem:[%s206 + $0x2c] sm:$0xf]
      %v584 = vld [vmem:[%s206 + $0x30] sm:$0xf]
      %v585 = vld [vmem:[%s206 + $0x34] sm:$0xf]
      %v586 = vld [vmem:[%s206 + $0x38] sm:$0xf]
      %v587 = vld [vmem:[%s206 + $0x3c] sm:$0xf]
      %v588 = vld [vmem:[%s206 + $0x40] sm:$0xf]
      %v589 = vld [vmem:[%s206 + $0x44] sm:$0xf]
      %v590 = vld [vmem:[%s206 + $0x48] sm:$0xf]
      %v591 = vld [vmem:[%s206 + $0x4c] sm:$0xf]
      %v592 = vld [vmem:[%s206 + $0x50] sm:$0xf]
      %v593 = vld [vmem:[%s206 + $0x54] sm:$0xf]
      %v594 = vld [vmem:[%s206 + $0x58] sm:$0xf]
      %v595 = vld [vmem:[%s206 + $0x5c] sm:$0xf]
      %v596 = vld [vmem:[%s206 + $0x60] sm:$0xf]
      %v597 = vld [vmem:[%s206 + $0x64] sm:$0xf]
      %v598 = vld [vmem:[%s206 + $0x68] sm:$0xf]
      %v599 = vld [vmem:[%s206 + $0x6c] sm:$0xf]
      %s600 = scalar_lea.vmem %s210, 64
      %v601 = vld [vmem:[%s600] sm:$0xf]
      %v602 = vld [vmem:[%s600 + $0x4] sm:$0xf]
      %v603 = vld [vmem:[%s600 + $0x8] sm:$0xf]
      %v604 = vld [vmem:[%s600 + $0xc] sm:$0xf]
      %v605 = vld [vmem:[%s600 + $0x10] sm:$0xf]
      %v606 = vld [vmem:[%s600 + $0x14] sm:$0xf]
      %v607 = vld [vmem:[%s600 + $0x18] sm:$0xf]
      %v608 = vld [vmem:[%s600 + $0x1c] sm:$0xf]
      %v609 = vld [vmem:[%s600 + $0x20] sm:$0xf]
      %v610 = vld [vmem:[%s600 + $0x24] sm:$0xf]
      %v611 = vld [vmem:[%s600 + $0x28] sm:$0xf]
      %v612 = vld [vmem:[%s600 + $0x2c] sm:$0xf]
      %v613 = vld [vmem:[%s600 + $0x30] sm:$0xf]
      %v614 = vld [vmem:[%s600 + $0x34] sm:$0xf]
      %v615 = vld [vmem:[%s600 + $0x38] sm:$0xf]
      %v616 = vld [vmem:[%s600 + $0x3c] sm:$0xf]
      %v645 = vunpack.c.l.b16 %v572
      %v646 = vunpack.c.l.b16 %v573
      %v647 = vunpack.c.l.b16 %v574
      %v648 = vunpack.c.l.b16 %v575
      %v649 = vunpack.c.l.b16 %v576
      %v650 = vunpack.c.l.b16 %v577
      %v651 = vunpack.c.l.b16 %v578
      %v652 = vunpack.c.l.b16 %v579
      %v653 = vunpack.c.l.b16 %v580
      %v654 = vunpack.c.l.b16 %v581
      %v655 = vunpack.c.l.b16 %v582
      %v656 = vunpack.c.l.b16 %v583
      %v657 = vunpack.c.l.b16 %v584
      %v658 = vunpack.c.l.b16 %v585
      %v659 = vunpack.c.l.b16 %v586
      %v660 = vunpack.c.l.b16 %v587
      %v661 = vunpack.c.l.b16 %v588
      %v662 = vunpack.c.l.b16 %v589
      %v663 = vunpack.c.l.b16 %v590
      %v664 = vunpack.c.l.b16 %v591
      %v665 = vunpack.c.l.b16 %v592
      %v666 = vunpack.c.l.b16 %v593
      %v667 = vunpack.c.l.b16 %v594
      %v668 = vunpack.c.l.b16 %v595
      %v669 = vunpack.c.l.b16 %v596
      %v670 = vunpack.c.l.b16 %v597
      %v671 = vunpack.c.l.b16 %v598
      %v672 = vunpack.c.l.b16 %v599
      %v673 = vpack.c.b16 %v646, %v645
      %v674 = vpack.c.b16 %v648, %v647
      %v675 = vpack.c.b16 %v650, %v649
      %v676 = vpack.c.b16 %v652, %v651
      %v677 = vpack.c.b16 %v654, %v653
      %v678 = vpack.c.b16 %v656, %v655
      %v679 = vpack.c.b16 %v658, %v657
      %v680 = vpack.c.b16 %v660, %v659
      %v681 = vpack.c.b16 %v662, %v661
      %v682 = vpack.c.b16 %v664, %v663
      %v683 = vpack.c.b16 %v666, %v665
      %v684 = vpack.c.b16 %v668, %v667
      %v685 = vpack.c.b16 %v670, %v669
      %v686 = vpack.c.b16 %v672, %v671
      %vm687 = vsmask.f32 7424
      %v689 = vshrl.u32 %v673, 16
      %v691 = vshll.u32 %v673, 16
      %v693 = vrot.slane %v691, 1
      %v694 = vor.u32 %v689, %v693
      %v696 = vshll.u32 %v674, 16
      %v698 = vrot.slane %v696, 1
      %v699 = vsel %vm687, %v694, %v698
      %v700 = vshrl.u32 %v674, 16
      %v702 = vor.u32 %v700, %v698
      %v704 = vshll.u32 %v675, 16
      %v706 = vrot.slane %v704, 1
      %v707 = vsel %vm687, %v702, %v706
      %v708 = vshrl.u32 %v675, 16
      %v710 = vor.u32 %v708, %v706
      %v712 = vshll.u32 %v676, 16
      %v714 = vrot.slane %v712, 1
      %v715 = vsel %vm687, %v710, %v714
      %v716 = vshrl.u32 %v676, 16
      %v718 = vor.u32 %v716, %v714
      %v720 = vshll.u32 %v677, 16
      %v722 = vrot.slane %v720, 1
      %v723 = vsel %vm687, %v718, %v722
      %v724 = vshrl.u32 %v677, 16
      %v726 = vor.u32 %v724, %v722
      %v728 = vshll.u32 %v678, 16
      %v730 = vrot.slane %v728, 1
      %v731 = vsel %vm687, %v726, %v730
      %v732 = vshrl.u32 %v678, 16
      %v734 = vor.u32 %v732, %v730
      %v736 = vshll.u32 %v679, 16
      %v738 = vrot.slane %v736, 1
      %v739 = vsel %vm687, %v734, %v738
      %v740 = vshrl.u32 %v679, 16
      %v742 = vor.u32 %v740, %v738
      %v744 = vshll.u32 %v680, 16
      %v746 = vrot.slane %v744, 1
      %v747 = vsel %vm687, %v742, %v746
      %v748 = vshrl.u32 %v680, 16
      %v750 = vor.u32 %v748, %v746
      %v752 = vshll.u32 %v681, 16
      %v754 = vrot.slane %v752, 1
      %v755 = vsel %vm687, %v750, %v754
      %v756 = vshrl.u32 %v681, 16
      %v758 = vor.u32 %v756, %v754
      %v760 = vshll.u32 %v682, 16
      %v762 = vrot.slane %v760, 1
      %v763 = vsel %vm687, %v758, %v762
      %v764 = vshrl.u32 %v682, 16
      %v766 = vor.u32 %v764, %v762
      %v768 = vshll.u32 %v683, 16
      %v770 = vrot.slane %v768, 1
      %v771 = vsel %vm687, %v766, %v770
      %v772 = vshrl.u32 %v683, 16
      %v774 = vor.u32 %v772, %v770
      %v776 = vshll.u32 %v684, 16
      %v778 = vrot.slane %v776, 1
      %v779 = vsel %vm687, %v774, %v778
      %v780 = vshrl.u32 %v684, 16
      %v782 = vor.u32 %v780, %v778
      %v784 = vshll.u32 %v685, 16
      %v786 = vrot.slane %v784, 1
      %v787 = vsel %vm687, %v782, %v786
      %v788 = vshrl.u32 %v685, 16
      %v790 = vor.u32 %v788, %v786
      %v792 = vshll.u32 %v686, 16
      %v794 = vrot.slane %v792, 1
      %v795 = vsel %vm687, %v790, %v794
      %v796 = vshrl.u32 %v686, 16
      %v798 = vor.u32 %v796, %v794
      %v829 = vunpack.c.l.b16 %v601
      %v830 = vunpack.c.l.b16 %v602
      %v831 = vunpack.c.l.b16 %v603
      %v832 = vunpack.c.l.b16 %v604
      %v833 = vunpack.c.l.b16 %v605
      %v834 = vunpack.c.l.b16 %v606
      %v835 = vunpack.c.l.b16 %v607
      %v836 = vunpack.c.l.b16 %v608
      %v837 = vunpack.c.l.b16 %v609
      %v838 = vunpack.c.l.b16 %v610
      %v839 = vunpack.c.l.b16 %v611
      %v840 = vunpack.c.l.b16 %v612
      %v841 = vunpack.c.l.b16 %v613
      %v842 = vunpack.c.l.b16 %v614
      %v843 = vunpack.c.l.b16 %v615
      %v844 = vunpack.c.l.b16 %v616
      %v845 = vpack.c.b16 %v830, %v829
      %v846 = vpack.c.b16 %v832, %v831
      %v847 = vpack.c.b16 %v834, %v833
      %v848 = vpack.c.b16 %v836, %v835
      %v849 = vpack.c.b16 %v838, %v837
      %v850 = vpack.c.b16 %v840, %v839
      %v851 = vpack.c.b16 %v842, %v841
      %v852 = vpack.c.b16 %v844, %v843
      %861 = vmatprep.subr.bf16.mxu0 0
      %862 = vmatpush1.bf16.msra.mxu0 %v852
      %863 = vmatprep.subr.bf16.mxu0 0
      %864 = vmatpush1.bf16.msra.mxu0 %v851
      %865 = vmatprep.subr.bf16.mxu0 0
      %866 = vmatpush1.bf16.msra.mxu0 %v850
      %867 = vmatprep.subr.bf16.mxu0 0
      %868 = vmatpush1.bf16.msra.mxu0 %v849
      %869 = vmatprep.subr.bf16.mxu0 0
      %870 = vmatpush1.bf16.msra.mxu0 %v848
      %871 = vmatprep.subr.bf16.mxu0 0
      %872 = vmatpush1.bf16.msra.mxu0 %v847
      %873 = vmatprep.subr.bf16.mxu0 0
      %874 = vmatpush1.bf16.msra.mxu0 %v846
      %875 = vmatprep.subr.bf16.mxu0 0
      %876 = vmatpush1.bf16.msra.mxu0 %v845
      %877 = vmatprep.subr.bf16.mxu0 0
      %878 = vmatpush2.bf16.msra.mxu0 0
      %879 = vmatprep.subr.bf16.mxu0 0
      %880 = vmatpush2.bf16.msra.mxu0 0
      %881 = vmatprep.subr.bf16.mxu0 0
      %882 = vmatpush2.bf16.msra.mxu0 0
      %883 = vmatprep.subr.bf16.mxu0 0
      %884 = vmatpush2.bf16.msra.mxu0 0
      %885 = vmatprep.subr.bf16.mxu0 0
      %886 = vmatpush2.bf16.msra.mxu0 0
      %887 = vmatprep.subr.bf16.mxu0 0
      %888 = vmatpush2.bf16.msra.mxu0 0
      %889 = vmatprep.subr.bf16.mxu0 0
      %890 = vmatpush2.bf16.msra.mxu0 0
      %891 = vmatprep.subr.bf16.mxu0 0
      %892 = vmatpush2.bf16.msra.mxu0 0
      %893 = vmatprep.mubr.bf16.mxu0 0
      %894 = vmatmul.mubr.bf16.gmra.mxu0 %v699
      %v895 = vpop.f32.mrf.mxu0
      %v896 = vadd.f32 0.0, %v895
      %v897 = vpop.f32.mrf.mxu0
      %v898 = vpop.f32.mrf.mxu0
      %v899 = vadd.f32 0.0, %v898
      %v900 = vpop.f32.mrf.mxu0
      %901 = vmatprep.mubr.bf16.mxu0 0
      %902 = vmatmul.mubr.bf16.gmra.mxu0 %v707
      %v903 = vpop.f32.mrf.mxu0
      %v904 = vadd.f32 0.0, %v903
      %v905 = vpop.f32.mrf.mxu0
      %v906 = vpop.f32.mrf.mxu0
      %v907 = vadd.f32 0.0, %v906
      %v908 = vpop.f32.mrf.mxu0
      %909 = vmatprep.mubr.bf16.mxu0 0
      %910 = vmatmul.mubr.bf16.gmra.mxu0 %v715
      %v911 = vpop.f32.mrf.mxu0
      %v912 = vadd.f32 0.0, %v911
      %v913 = vpop.f32.mrf.mxu0
      %v914 = vpop.f32.mrf.mxu0
      %v915 = vadd.f32 0.0, %v914
      %v916 = vpop.f32.mrf.mxu0
      %917 = vmatprep.mubr.bf16.mxu0 0
      %918 = vmatmul.mubr.bf16.gmra.mxu0 %v723
      %v919 = vpop.f32.mrf.mxu0
      %v920 = vadd.f32 0.0, %v919
      %v921 = vpop.f32.mrf.mxu0
      %v922 = vpop.f32.mrf.mxu0
      %v923 = vadd.f32 0.0, %v922
      %v924 = vpop.f32.mrf.mxu0
      %925 = vmatprep.mubr.bf16.mxu0 0
      %926 = vmatmul.mubr.bf16.gmra.mxu0 %v731
      %v927 = vpop.f32.mrf.mxu0
      %v928 = vadd.f32 0.0, %v927
      %v929 = vpop.f32.mrf.mxu0
      %v930 = vpop.f32.mrf.mxu0
      %v931 = vadd.f32 0.0, %v930
      %v932 = vpop.f32.mrf.mxu0
      %933 = vmatprep.mubr.bf16.mxu0 0
      %934 = vmatmul.mubr.bf16.gmra.mxu0 %v739
      %v935 = vpop.f32.mrf.mxu0
      %v936 = vadd.f32 0.0, %v935
      %v937 = vpop.f32.mrf.mxu0
      %v938 = vpop.f32.mrf.mxu0
      %v939 = vadd.f32 0.0, %v938
      %v940 = vpop.f32.mrf.mxu0
      %941 = vmatprep.mubr.bf16.mxu0 0
      %942 = vmatmul.mubr.bf16.gmra.mxu0 %v747
      %v943 = vpop.f32.mrf.mxu0
      %v944 = vadd.f32 0.0, %v943
      %v945 = vpop.f32.mrf.mxu0
      %v946 = vpop.f32.mrf.mxu0
      %v947 = vadd.f32 0.0, %v946
      %v948 = vpop.f32.mrf.mxu0
      %949 = vmatprep.mubr.bf16.mxu0 0
      %950 = vmatmul.mubr.bf16.gmra.mxu0 %v755
      %v951 = vpop.f32.mrf.mxu0
      %v952 = vadd.f32 0.0, %v951
      %v953 = vpop.f32.mrf.mxu0
      %v954 = vpop.f32.mrf.mxu0
      %v955 = vadd.f32 0.0, %v954
      %v956 = vpop.f32.mrf.mxu0
      %957 = vmatprep.mubr.bf16.mxu0 0
      %958 = vmatmul.mubr.bf16.gmra.mxu0 %v763
      %v959 = vpop.f32.mrf.mxu0
      %v960 = vadd.f32 0.0, %v959
      %v961 = vpop.f32.mrf.mxu0
      %v962 = vpop.f32.mrf.mxu0
      %v963 = vadd.f32 0.0, %v962
      %v964 = vpop.f32.mrf.mxu0
      %965 = vmatprep.mubr.bf16.mxu0 0
      %966 = vmatmul.mubr.bf16.gmra.mxu0 %v771
      %v967 = vpop.f32.mrf.mxu0
      %v968 = vadd.f32 0.0, %v967
      %v969 = vpop.f32.mrf.mxu0
      %v970 = vpop.f32.mrf.mxu0
      %v971 = vadd.f32 0.0, %v970
      %v972 = vpop.f32.mrf.mxu0
      %973 = vmatprep.mubr.bf16.mxu0 0
      %974 = vmatmul.mubr.bf16.gmra.mxu0 %v779
      %v975 = vpop.f32.mrf.mxu0
      %v976 = vadd.f32 0.0, %v975
      %v977 = vpop.f32.mrf.mxu0
      %v978 = vpop.f32.mrf.mxu0
      %v979 = vadd.f32 0.0, %v978
      %v980 = vpop.f32.mrf.mxu0
      %981 = vmatprep.mubr.bf16.mxu0 0
      %982 = vmatmul.mubr.bf16.gmra.mxu0 %v787
      %v983 = vpop.f32.mrf.mxu0
      %v984 = vadd.f32 0.0, %v983
      %v985 = vpop.f32.mrf.mxu0
      %v986 = vpop.f32.mrf.mxu0
      %v987 = vadd.f32 0.0, %v986
      %v988 = vpop.f32.mrf.mxu0
      %989 = vmatprep.mubr.bf16.mxu0 0
      %990 = vmatmul.mubr.bf16.gmra.mxu0 %v795
      %v991 = vpop.f32.mrf.mxu0
      %v992 = vadd.f32 0.0, %v991
      %v993 = vpop.f32.mrf.mxu0
      %v994 = vpop.f32.mrf.mxu0
      %v995 = vadd.f32 0.0, %v994
      %v996 = vpop.f32.mrf.mxu0
      %997 = vmatprep.mubr.bf16.mxu0 0
      %998 = vmatmul.mubr.bf16.gmra.mxu0 %v798
      %v999 = vpop.f32.mrf.mxu0
      %v1000 = vadd.f32 0.0, %v999
      %v1001 = vpop.f32.mrf.mxu0
      %v1002 = vpop.f32.mrf.mxu0
      %v1003 = vadd.f32 0.0, %v1002
      %v1004 = vpop.f32.mrf.mxu0
      %1005 = vdwg.mxu0
      %v1006 = vld [vmem:[#allocation2] sm:$0xff]
      %v1007 = vld [vmem:[#allocation2 + $0x8] sm:$0xff]
      %v1008 = vld [vmem:[#allocation2 + $0x10] sm:$0xff]
      %v1009 = vld [vmem:[#allocation2 + $0x18] sm:$0xff]
      %v1010 = vld [vmem:[#allocation2 + $0x20] sm:$0xff]
      %v1011 = vld [vmem:[#allocation2 + $0x28] sm:$0xff]
      %v1012 = vld [vmem:[#allocation2 + $0x30] sm:$0xff]
      %v1013 = vld [vmem:[#allocation2 + $0x38] sm:$0xff]
      %v1014 = vld [vmem:[#allocation2 + $0x40] sm:$0xff]
      %v1015 = vld [vmem:[#allocation2 + $0x48] sm:$0xff]
      %v1016 = vld [vmem:[#allocation2 + $0x50] sm:$0xff]
      %v1017 = vld [vmem:[#allocation2 + $0x58] sm:$0xff]
      %v1018 = vld [vmem:[#allocation2 + $0x60] sm:$0xff]
      %v1019 = vld [vmem:[#allocation2 + $0x68] sm:$0xff]
      %v1020 = vld [vmem:[#allocation2 + $0x70] sm:$0xff]
      %v1021 = vld [vmem:[#allocation2 + $0x78] sm:$0xff]
      %v1022 = vld [vmem:[#allocation2 + $0x80] sm:$0xff]
      %v1023 = vld [vmem:[#allocation2 + $0x88] sm:$0xff]
      %v1024 = vld [vmem:[#allocation2 + $0x90] sm:$0xff]
      %v1025 = vld [vmem:[#allocation2 + $0x98] sm:$0xff]
      %v1026 = vld [vmem:[#allocation2 + $0xa0] sm:$0xff]
      %v1027 = vld [vmem:[#allocation2 + $0xa8] sm:$0xff]
      %v1028 = vld [vmem:[#allocation2 + $0xb0] sm:$0xff]
      %v1029 = vld [vmem:[#allocation2 + $0xb8] sm:$0xff]
      %v1030 = vld [vmem:[#allocation2 + $0xc0] sm:$0xff]
      %v1031 = vld [vmem:[#allocation2 + $0xc8] sm:$0xff]
      %v1032 = vld [vmem:[#allocation2 + $0xd0] sm:$0xff]
      %v1033 = vld [vmem:[#allocation2 + $0xd8] sm:$0x3f]
      %v1034 = vadd.f32 %v1006, %v896
      %v1035 = vadd.f32 %v1007, %v899
      %v1036 = vadd.f32 %v1008, %v904
      %v1037 = vadd.f32 %v1009, %v907
      %v1038 = vadd.f32 %v1010, %v912
      %v1039 = vadd.f32 %v1011, %v915
      %v1040 = vadd.f32 %v1012, %v920
      %v1041 = vadd.f32 %v1013, %v923
      %v1042 = vadd.f32 %v1014, %v928
      %v1043 = vadd.f32 %v1015, %v931
      %v1044 = vadd.f32 %v1016, %v936
      %v1045 = vadd.f32 %v1017, %v939
      %v1046 = vadd.f32 %v1018, %v944
      %v1047 = vadd.f32 %v1019, %v947
      %v1048 = vadd.f32 %v1020, %v952
      %v1049 = vadd.f32 %v1021, %v955
      %v1050 = vadd.f32 %v1022, %v960
      %v1051 = vadd.f32 %v1023, %v963
      %v1052 = vadd.f32 %v1024, %v968
      %v1053 = vadd.f32 %v1025, %v971
      %v1054 = vadd.f32 %v1026, %v976
      %v1055 = vadd.f32 %v1027, %v979
      %v1056 = vadd.f32 %v1028, %v984
      %v1057 = vadd.f32 %v1029, %v987
      %v1058 = vadd.f32 %v1030, %v992
      %v1059 = vadd.f32 %v1031, %v995
      %v1060 = vadd.f32 %v1032, %v1000
      %v1061 = vadd.f32 %v1033, %v1003
      %1062 = vst [vmem:[#allocation2] sm:$0xff] %v1034
      %1063 = vst [vmem:[#allocation2 + $0x8] sm:$0xff] %v1035
      %1064 = vst [vmem:[#allocation2 + $0x10] sm:$0xff] %v1036
      %1065 = vst [vmem:[#allocation2 + $0x18] sm:$0xff] %v1037
      %1066 = vst [vmem:[#allocation2 + $0x20] sm:$0xff] %v1038
      %1067 = vst [vmem:[#allocation2 + $0x28] sm:$0xff] %v1039
      %1068 = vst [vmem:[#allocation2 + $0x30] sm:$0xff] %v1040
      %1069 = vst [vmem:[#allocation2 + $0x38] sm:$0xff] %v1041
      %1070 = vst [vmem:[#allocation2 + $0x40] sm:$0xff] %v1042
      %1071 = vst [vmem:[#allocation2 + $0x48] sm:$0xff] %v1043
      %1072 = vst [vmem:[#allocation2 + $0x50] sm:$0xff] %v1044
      %1073 = vst [vmem:[#allocation2 + $0x58] sm:$0xff] %v1045
      %1074 = vst [vmem:[#allocation2 + $0x60] sm:$0xff] %v1046
      %1075 = vst [vmem:[#allocation2 + $0x68] sm:$0xff] %v1047
      %1076 = vst [vmem:[#allocation2 + $0x70] sm:$0xff] %v1048
      %1077 = vst [vmem:[#allocation2 + $0x78] sm:$0xff] %v1049
      %1078 = vst [vmem:[#allocation2 + $0x80] sm:$0xff] %v1050
      %1079 = vst [vmem:[#allocation2 + $0x88] sm:$0xff] %v1051
      %1080 = vst [vmem:[#allocation2 + $0x90] sm:$0xff] %v1052
      %1081 = vst [vmem:[#allocation2 + $0x98] sm:$0xff] %v1053
      %1082 = vst [vmem:[#allocation2 + $0xa0] sm:$0xff] %v1054
      %1083 = vst [vmem:[#allocation2 + $0xa8] sm:$0xff] %v1055
      %1084 = vst [vmem:[#allocation2 + $0xb0] sm:$0xff] %v1056
      %1085 = vst [vmem:[#allocation2 + $0xb8] sm:$0xff] %v1057
      %1086 = vst [vmem:[#allocation2 + $0xc0] sm:$0xff] %v1058
      %1087 = vst [vmem:[#allocation2 + $0xc8] sm:$0xff] %v1059
      %1088 = vst [vmem:[#allocation2 + $0xd0] sm:$0xff] %v1060
      %1089 = vst [vmem:[#allocation2 + $0xd8] sm:$0x3f] %v1061
      %v1090 = vld [vmem:[%s206] sm:$0xe]
      %v1091 = vld [vmem:[%s206 + $0x4] sm:$0xf]
      %v1092 = vld [vmem:[%s206 + $0x8] sm:$0xf]
      %v1093 = vld [vmem:[%s206 + $0xc] sm:$0xf]
      %v1094 = vld [vmem:[%s206 + $0x10] sm:$0xf]
      %v1095 = vld [vmem:[%s206 + $0x14] sm:$0xf]
      %v1096 = vld [vmem:[%s206 + $0x18] sm:$0xf]
      %v1097 = vld [vmem:[%s206 + $0x1c] sm:$0xf]
      %v1098 = vld [vmem:[%s206 + $0x20] sm:$0xf]
      %v1099 = vld [vmem:[%s206 + $0x24] sm:$0xf]
      %v1100 = vld [vmem:[%s206 + $0x28] sm:$0xf]
      %v1101 = vld [vmem:[%s206 + $0x2c] sm:$0xf]
      %v1102 = vld [vmem:[%s206 + $0x30] sm:$0xf]
      %v1103 = vld [vmem:[%s206 + $0x34] sm:$0xf]
      %v1104 = vld [vmem:[%s206 + $0x38] sm:$0xf]
      %v1105 = vld [vmem:[%s206 + $0x3c] sm:$0xf]
      %v1106 = vld [vmem:[%s206 + $0x40] sm:$0xf]
      %v1107 = vld [vmem:[%s206 + $0x44] sm:$0xf]
      %v1108 = vld [vmem:[%s206 + $0x48] sm:$0xf]
      %v1109 = vld [vmem:[%s206 + $0x4c] sm:$0xf]
      %v1110 = vld [vmem:[%s206 + $0x50] sm:$0xf]
      %v1111 = vld [vmem:[%s206 + $0x54] sm:$0xf]
      %v1112 = vld [vmem:[%s206 + $0x58] sm:$0xf]
      %v1113 = vld [vmem:[%s206 + $0x5c] sm:$0xf]
      %v1114 = vld [vmem:[%s206 + $0x60] sm:$0xf]
      %v1115 = vld [vmem:[%s206 + $0x64] sm:$0xf]
      %v1116 = vld [vmem:[%s206 + $0x68] sm:$0xf]
      %v1117 = vld [vmem:[%s206 + $0x6c] sm:$0xf]
      %s1118 = scalar_lea.vmem %s210, 128
      %v1119 = vld [vmem:[%s1118] sm:$0xf]
      %v1120 = vld [vmem:[%s1118 + $0x4] sm:$0xf]
      %v1121 = vld [vmem:[%s1118 + $0x8] sm:$0xf]
      %v1122 = vld [vmem:[%s1118 + $0xc] sm:$0xf]
      %v1123 = vld [vmem:[%s1118 + $0x10] sm:$0xf]
      %v1124 = vld [vmem:[%s1118 + $0x14] sm:$0xf]
      %v1125 = vld [vmem:[%s1118 + $0x18] sm:$0xf]
      %v1126 = vld [vmem:[%s1118 + $0x1c] sm:$0xf]
      %v1127 = vld [vmem:[%s1118 + $0x20] sm:$0xf]
      %v1128 = vld [vmem:[%s1118 + $0x24] sm:$0xf]
      %v1129 = vld [vmem:[%s1118 + $0x28] sm:$0xf]
      %v1130 = vld [vmem:[%s1118 + $0x2c] sm:$0xf]
      %v1131 = vld [vmem:[%s1118 + $0x30] sm:$0xf]
      %v1132 = vld [vmem:[%s1118 + $0x34] sm:$0xf]
      %v1133 = vld [vmem:[%s1118 + $0x38] sm:$0xf]
      %v1134 = vld [vmem:[%s1118 + $0x3c] sm:$0xf]
      %v1163 = vunpack.c.l.b16 %v1090
      %v1164 = vunpack.c.l.b16 %v1091
      %v1165 = vunpack.c.l.b16 %v1092
      %v1166 = vunpack.c.l.b16 %v1093
      %v1167 = vunpack.c.l.b16 %v1094
      %v1168 = vunpack.c.l.b16 %v1095
      %v1169 = vunpack.c.l.b16 %v1096
      %v1170 = vunpack.c.l.b16 %v1097
      %v1171 = vunpack.c.l.b16 %v1098
      %v1172 = vunpack.c.l.b16 %v1099
      %v1173 = vunpack.c.l.b16 %v1100
      %v1174 = vunpack.c.l.b16 %v1101
      %v1175 = vunpack.c.l.b16 %v1102
      %v1176 = vunpack.c.l.b16 %v1103
      %v1177 = vunpack.c.l.b16 %v1104
      %v1178 = vunpack.c.l.b16 %v1105
      %v1179 = vunpack.c.l.b16 %v1106
      %v1180 = vunpack.c.l.b16 %v1107
      %v1181 = vunpack.c.l.b16 %v1108
      %v1182 = vunpack.c.l.b16 %v1109
      %v1183 = vunpack.c.l.b16 %v1110
      %v1184 = vunpack.c.l.b16 %v1111
      %v1185 = vunpack.c.l.b16 %v1112
      %v1186 = vunpack.c.l.b16 %v1113
      %v1187 = vunpack.c.l.b16 %v1114
      %v1188 = vunpack.c.l.b16 %v1115
      %v1189 = vunpack.c.l.b16 %v1116
      %v1190 = vunpack.c.l.b16 %v1117
      %v1191 = vpack.c.b16 %v1164, %v1163
      %v1192 = vpack.c.b16 %v1166, %v1165
      %v1193 = vpack.c.b16 %v1168, %v1167
      %v1194 = vpack.c.b16 %v1170, %v1169
      %v1195 = vpack.c.b16 %v1172, %v1171
      %v1196 = vpack.c.b16 %v1174, %v1173
      %v1197 = vpack.c.b16 %v1176, %v1175
      %v1198 = vpack.c.b16 %v1178, %v1177
      %v1199 = vpack.c.b16 %v1180, %v1179
      %v1200 = vpack.c.b16 %v1182, %v1181
      %v1201 = vpack.c.b16 %v1184, %v1183
      %v1202 = vpack.c.b16 %v1186, %v1185
      %v1203 = vpack.c.b16 %v1188, %v1187
      %v1204 = vpack.c.b16 %v1190, %v1189
      %vm1205 = vcmask 1046528
      %v1206 = vrot.slane %v1191, 1
      %v1207 = vrot.slane %v1192, 1
      %v1208 = vsel %vm1205, %v1206, %v1207
      %v1209 = vrot.slane %v1193, 1
      %v1210 = vsel %vm1205, %v1207, %v1209
      %v1211 = vrot.slane %v1194, 1
      %v1212 = vsel %vm1205, %v1209, %v1211
      %v1213 = vrot.slane %v1195, 1
      %v1214 = vsel %vm1205, %v1211, %v1213
      %v1215 = vrot.slane %v1196, 1
      %v1216 = vsel %vm1205, %v1213, %v1215
      %v1217 = vrot.slane %v1197, 1
      %v1218 = vsel %vm1205, %v1215, %v1217
      %v1219 = vrot.slane %v1198, 1
      %v1220 = vsel %vm1205, %v1217, %v1219
      %v1221 = vrot.slane %v1199, 1
      %v1222 = vsel %vm1205, %v1219, %v1221
      %v1223 = vrot.slane %v1200, 1
      %v1224 = vsel %vm1205, %v1221, %v1223
      %v1225 = vrot.slane %v1201, 1
      %v1226 = vsel %vm1205, %v1223, %v1225
      %v1227 = vrot.slane %v1202, 1
      %v1228 = vsel %vm1205, %v1225, %v1227
      %v1229 = vrot.slane %v1203, 1
      %v1230 = vsel %vm1205, %v1227, %v1229
      %v1231 = vrot.slane %v1204, 1
      %v1232 = vsel %vm1205, %v1229, %v1231
      %v1263 = vunpack.c.l.b16 %v1119
      %v1264 = vunpack.c.l.b16 %v1120
      %v1265 = vunpack.c.l.b16 %v1121
      %v1266 = vunpack.c.l.b16 %v1122
      %v1267 = vunpack.c.l.b16 %v1123
      %v1268 = vunpack.c.l.b16 %v1124
      %v1269 = vunpack.c.l.b16 %v1125
      %v1270 = vunpack.c.l.b16 %v1126
      %v1271 = vunpack.c.l.b16 %v1127
      %v1272 = vunpack.c.l.b16 %v1128
      %v1273 = vunpack.c.l.b16 %v1129
      %v1274 = vunpack.c.l.b16 %v1130
      %v1275 = vunpack.c.l.b16 %v1131
      %v1276 = vunpack.c.l.b16 %v1132
      %v1277 = vunpack.c.l.b16 %v1133
      %v1278 = vunpack.c.l.b16 %v1134
      %v1279 = vpack.c.b16 %v1264, %v1263
      %v1280 = vpack.c.b16 %v1266, %v1265
      %v1281 = vpack.c.b16 %v1268, %v1267
      %v1282 = vpack.c.b16 %v1270, %v1269
      %v1283 = vpack.c.b16 %v1272, %v1271
      %v1284 = vpack.c.b16 %v1274, %v1273
      %v1285 = vpack.c.b16 %v1276, %v1275
      %v1286 = vpack.c.b16 %v1278, %v1277
      %1295 = vmatprep.subr.bf16.mxu0 0
      %1296 = vmatpush1.bf16.msra.mxu0 %v1286
      %1297 = vmatprep.subr.bf16.mxu0 0
      %1298 = vmatpush1.bf16.msra.mxu0 %v1285
      %1299 = vmatprep.subr.bf16.mxu0 0
      %1300 = vmatpush1.bf16.msra.mxu0 %v1284
      %1301 = vmatprep.subr.bf16.mxu0 0
      %1302 = vmatpush1.bf16.msra.mxu0 %v1283
      %1303 = vmatprep.subr.bf16.mxu0 0
      %1304 = vmatpush1.bf16.msra.mxu0 %v1282
      %1305 = vmatprep.subr.bf16.mxu0 0
      %1306 = vmatpush1.bf16.msra.mxu0 %v1281
      %1307 = vmatprep.subr.bf16.mxu0 0
      %1308 = vmatpush1.bf16.msra.mxu0 %v1280
      %1309 = vmatprep.subr.bf16.mxu0 0
      %1310 = vmatpush1.bf16.msra.mxu0 %v1279
      %1311 = vmatprep.subr.bf16.mxu0 0
      %1312 = vmatpush2.bf16.msra.mxu0 0
      %1313 = vmatprep.subr.bf16.mxu0 0
      %1314 = vmatpush2.bf16.msra.mxu0 0
      %1315 = vmatprep.subr.bf16.mxu0 0
      %1316 = vmatpush2.bf16.msra.mxu0 0
      %1317 = vmatprep.subr.bf16.mxu0 0
      %1318 = vmatpush2.bf16.msra.mxu0 0
      %1319 = vmatprep.subr.bf16.mxu0 0
      %1320 = vmatpush2.bf16.msra.mxu0 0
      %1321 = vmatprep.subr.bf16.mxu0 0
      %1322 = vmatpush2.bf16.msra.mxu0 0
      %1323 = vmatprep.subr.bf16.mxu0 0
      %1324 = vmatpush2.bf16.msra.mxu0 0
      %1325 = vmatprep.subr.bf16.mxu0 0
      %1326 = vmatpush2.bf16.msra.mxu0 0
      %1327 = vmatprep.mubr.bf16.mxu0 0
      %1328 = vmatmul.mubr.bf16.gmra.mxu0 %v1208
      %v1329 = vpop.f32.mrf.mxu0
      %v1330 = vadd.f32 0.0, %v1329
      %v1331 = vpop.f32.mrf.mxu0
      %v1332 = vpop.f32.mrf.mxu0
      %v1333 = vadd.f32 0.0, %v1332
      %v1334 = vpop.f32.mrf.mxu0
      %1335 = vmatprep.mubr.bf16.mxu0 0
      %1336 = vmatmul.mubr.bf16.gmra.mxu0 %v1210
      %v1337 = vpop.f32.mrf.mxu0
      %v1338 = vadd.f32 0.0, %v1337
      %v1339 = vpop.f32.mrf.mxu0
      %v1340 = vpop.f32.mrf.mxu0
      %v1341 = vadd.f32 0.0, %v1340
      %v1342 = vpop.f32.mrf.mxu0
      %1343 = vmatprep.mubr.bf16.mxu0 0
      %1344 = vmatmul.mubr.bf16.gmra.mxu0 %v1212
      %v1345 = vpop.f32.mrf.mxu0
      %v1346 = vadd.f32 0.0, %v1345
      %v1347 = vpop.f32.mrf.mxu0
      %v1348 = vpop.f32.mrf.mxu0
      %v1349 = vadd.f32 0.0, %v1348
      %v1350 = vpop.f32.mrf.mxu0
      %1351 = vmatprep.mubr.bf16.mxu0 0
      %1352 = vmatmul.mubr.bf16.gmra.mxu0 %v1214
      %v1353 = vpop.f32.mrf.mxu0
      %v1354 = vadd.f32 0.0, %v1353
      %v1355 = vpop.f32.mrf.mxu0
      %v1356 = vpop.f32.mrf.mxu0
      %v1357 = vadd.f32 0.0, %v1356
      %v1358 = vpop.f32.mrf.mxu0
      %1359 = vmatprep.mubr.bf16.mxu0 0
      %1360 = vmatmul.mubr.bf16.gmra.mxu0 %v1216
      %v1361 = vpop.f32.mrf.mxu0
      %v1362 = vadd.f32 0.0, %v1361
      %v1363 = vpop.f32.mrf.mxu0
      %v1364 = vpop.f32.mrf.mxu0
      %v1365 = vadd.f32 0.0, %v1364
      %v1366 = vpop.f32.mrf.mxu0
      %1367 = vmatprep.mubr.bf16.mxu0 0
      %1368 = vmatmul.mubr.bf16.gmra.mxu0 %v1218
      %v1369 = vpop.f32.mrf.mxu0
      %v1370 = vadd.f32 0.0, %v1369
      %v1371 = vpop.f32.mrf.mxu0
      %v1372 = vpop.f32.mrf.mxu0
      %v1373 = vadd.f32 0.0, %v1372
      %v1374 = vpop.f32.mrf.mxu0
      %1375 = vmatprep.mubr.bf16.mxu0 0
      %1376 = vmatmul.mubr.bf16.gmra.mxu0 %v1220
      %v1377 = vpop.f32.mrf.mxu0
      %v1378 = vadd.f32 0.0, %v1377
      %v1379 = vpop.f32.mrf.mxu0
      %v1380 = vpop.f32.mrf.mxu0
      %v1381 = vadd.f32 0.0, %v1380
      %v1382 = vpop.f32.mrf.mxu0
      %1383 = vmatprep.mubr.bf16.mxu0 0
      %1384 = vmatmul.mubr.bf16.gmra.mxu0 %v1222
      %v1385 = vpop.f32.mrf.mxu0
      %v1386 = vadd.f32 0.0, %v1385
      %v1387 = vpop.f32.mrf.mxu0
      %v1388 = vpop.f32.mrf.mxu0
      %v1389 = vadd.f32 0.0, %v1388
      %v1390 = vpop.f32.mrf.mxu0
      %1391 = vmatprep.mubr.bf16.mxu0 0
      %1392 = vmatmul.mubr.bf16.gmra.mxu0 %v1224
      %v1393 = vpop.f32.mrf.mxu0
      %v1394 = vadd.f32 0.0, %v1393
      %v1395 = vpop.f32.mrf.mxu0
      %v1396 = vpop.f32.mrf.mxu0
      %v1397 = vadd.f32 0.0, %v1396
      %v1398 = vpop.f32.mrf.mxu0
      %1399 = vmatprep.mubr.bf16.mxu0 0
      %1400 = vmatmul.mubr.bf16.gmra.mxu0 %v1226
      %v1401 = vpop.f32.mrf.mxu0
      %v1402 = vadd.f32 0.0, %v1401
      %v1403 = vpop.f32.mrf.mxu0
      %v1404 = vpop.f32.mrf.mxu0
      %v1405 = vadd.f32 0.0, %v1404
      %v1406 = vpop.f32.mrf.mxu0
      %1407 = vmatprep.mubr.bf16.mxu0 0
      %1408 = vmatmul.mubr.bf16.gmra.mxu0 %v1228
      %v1409 = vpop.f32.mrf.mxu0
      %v1410 = vadd.f32 0.0, %v1409
      %v1411 = vpop.f32.mrf.mxu0
      %v1412 = vpop.f32.mrf.mxu0
      %v1413 = vadd.f32 0.0, %v1412
      %v1414 = vpop.f32.mrf.mxu0
      %1415 = vmatprep.mubr.bf16.mxu0 0
      %1416 = vmatmul.mubr.bf16.gmra.mxu0 %v1230
      %v1417 = vpop.f32.mrf.mxu0
      %v1418 = vadd.f32 0.0, %v1417
      %v1419 = vpop.f32.mrf.mxu0
      %v1420 = vpop.f32.mrf.mxu0
      %v1421 = vadd.f32 0.0, %v1420
      %v1422 = vpop.f32.mrf.mxu0
      %1423 = vmatprep.mubr.bf16.mxu0 0
      %1424 = vmatmul.mubr.bf16.gmra.mxu0 %v1232
      %v1425 = vpop.f32.mrf.mxu0
      %v1426 = vadd.f32 0.0, %v1425
      %v1427 = vpop.f32.mrf.mxu0
      %v1428 = vpop.f32.mrf.mxu0
      %v1429 = vadd.f32 0.0, %v1428
      %v1430 = vpop.f32.mrf.mxu0
      %1431 = vmatprep.mubr.bf16.mxu0 0
      %1432 = vmatmul.mubr.bf16.gmra.mxu0 %v1231
      %v1433 = vpop.f32.mrf.mxu0
      %v1434 = vadd.f32 0.0, %v1433
      %v1435 = vpop.f32.mrf.mxu0
      %v1436 = vpop.f32.mrf.mxu0
      %v1437 = vadd.f32 0.0, %v1436
      %v1438 = vpop.f32.mrf.mxu0
      %1439 = vdwg.mxu0
      %v1440 = vld [vmem:[#allocation2] sm:$0xff]
      %v1441 = vld [vmem:[#allocation2 + $0x8] sm:$0xff]
      %v1442 = vld [vmem:[#allocation2 + $0x10] sm:$0xff]
      %v1443 = vld [vmem:[#allocation2 + $0x18] sm:$0xff]
      %v1444 = vld [vmem:[#allocation2 + $0x20] sm:$0xff]
      %v1445 = vld [vmem:[#allocation2 + $0x28] sm:$0xff]
      %v1446 = vld [vmem:[#allocation2 + $0x30] sm:$0xff]
      %v1447 = vld [vmem:[#allocation2 + $0x38] sm:$0xff]
      %v1448 = vld [vmem:[#allocation2 + $0x40] sm:$0xff]
      %v1449 = vld [vmem:[#allocation2 + $0x48] sm:$0xff]
      %v1450 = vld [vmem:[#allocation2 + $0x50] sm:$0xff]
      %v1451 = vld [vmem:[#allocation2 + $0x58] sm:$0xff]
      %v1452 = vld [vmem:[#allocation2 + $0x60] sm:$0xff]
      %v1453 = vld [vmem:[#allocation2 + $0x68] sm:$0xff]
      %v1454 = vld [vmem:[#allocation2 + $0x70] sm:$0xff]
      %v1455 = vld [vmem:[#allocation2 + $0x78] sm:$0xff]
      %v1456 = vld [vmem:[#allocation2 + $0x80] sm:$0xff]
      %v1457 = vld [vmem:[#allocation2 + $0x88] sm:$0xff]
      %v1458 = vld [vmem:[#allocation2 + $0x90] sm:$0xff]
      %v1459 = vld [vmem:[#allocation2 + $0x98] sm:$0xff]
      %v1460 = vld [vmem:[#allocation2 + $0xa0] sm:$0xff]
      %v1461 = vld [vmem:[#allocation2 + $0xa8] sm:$0xff]
      %v1462 = vld [vmem:[#allocation2 + $0xb0] sm:$0xff]
      %v1463 = vld [vmem:[#allocation2 + $0xb8] sm:$0xff]
      %v1464 = vld [vmem:[#allocation2 + $0xc0] sm:$0xff]
      %v1465 = vld [vmem:[#allocation2 + $0xc8] sm:$0xff]
      %v1466 = vld [vmem:[#allocation2 + $0xd0] sm:$0xff]
      %v1467 = vld [vmem:[#allocation2 + $0xd8] sm:$0x3f]
      %v1468 = vadd.f32 %v1440, %v1330
      %v1469 = vadd.f32 %v1441, %v1333
      %v1470 = vadd.f32 %v1442, %v1338
      %v1471 = vadd.f32 %v1443, %v1341
      %v1472 = vadd.f32 %v1444, %v1346
      %v1473 = vadd.f32 %v1445, %v1349
      %v1474 = vadd.f32 %v1446, %v1354
      %v1475 = vadd.f32 %v1447, %v1357
      %v1476 = vadd.f32 %v1448, %v1362
      %v1477 = vadd.f32 %v1449, %v1365
      %v1478 = vadd.f32 %v1450, %v1370
      %v1479 = vadd.f32 %v1451, %v1373
      %v1480 = vadd.f32 %v1452, %v1378
      %v1481 = vadd.f32 %v1453, %v1381
      %v1482 = vadd.f32 %v1454, %v1386
      %v1483 = vadd.f32 %v1455, %v1389
      %v1484 = vadd.f32 %v1456, %v1394
      %v1485 = vadd.f32 %v1457, %v1397
      %v1486 = vadd.f32 %v1458, %v1402
      %v1487 = vadd.f32 %v1459, %v1405
      %v1488 = vadd.f32 %v1460, %v1410
      %v1489 = vadd.f32 %v1461, %v1413
      %v1490 = vadd.f32 %v1462, %v1418
      %v1491 = vadd.f32 %v1463, %v1421
      %v1492 = vadd.f32 %v1464, %v1426
      %v1493 = vadd.f32 %v1465, %v1429
      %v1494 = vadd.f32 %v1466, %v1434
      %v1495 = vadd.f32 %v1467, %v1437
      %1496 = vst [vmem:[#allocation2] sm:$0xff] %v1468
      %1497 = vst [vmem:[#allocation2 + $0x8] sm:$0xff] %v1469
      %1498 = vst [vmem:[#allocation2 + $0x10] sm:$0xff] %v1470
      %1499 = vst [vmem:[#allocation2 + $0x18] sm:$0xff] %v1471
      %1500 = vst [vmem:[#allocation2 + $0x20] sm:$0xff] %v1472
      %1501 = vst [vmem:[#allocation2 + $0x28] sm:$0xff] %v1473
      %1502 = vst [vmem:[#allocation2 + $0x30] sm:$0xff] %v1474
      %1503 = vst [vmem:[#allocation2 + $0x38] sm:$0xff] %v1475
      %1504 = vst [vmem:[#allocation2 + $0x40] sm:$0xff] %v1476
      %1505 = vst [vmem:[#allocation2 + $0x48] sm:$0xff] %v1477
      %1506 = vst [vmem:[#allocation2 + $0x50] sm:$0xff] %v1478
      %1507 = vst [vmem:[#allocation2 + $0x58] sm:$0xff] %v1479
      %1508 = vst [vmem:[#allocation2 + $0x60] sm:$0xff] %v1480
      %1509 = vst [vmem:[#allocation2 + $0x68] sm:$0xff] %v1481
      %1510 = vst [vmem:[#allocation2 + $0x70] sm:$0xff] %v1482
      %1511 = vst [vmem:[#allocation2 + $0x78] sm:$0xff] %v1483
      %1512 = vst [vmem:[#allocation2 + $0x80] sm:$0xff] %v1484
      %1513 = vst [vmem:[#allocation2 + $0x88] sm:$0xff] %v1485
      %1514 = vst [vmem:[#allocation2 + $0x90] sm:$0xff] %v1486
      %1515 = vst [vmem:[#allocation2 + $0x98] sm:$0xff] %v1487
      %1516 = vst [vmem:[#allocation2 + $0xa0] sm:$0xff] %v1488
      %1517 = vst [vmem:[#allocation2 + $0xa8] sm:$0xff] %v1489
      %1518 = vst [vmem:[#allocation2 + $0xb0] sm:$0xff] %v1490
      %1519 = vst [vmem:[#allocation2 + $0xb8] sm:$0xff] %v1491
      %1520 = vst [vmem:[#allocation2 + $0xc0] sm:$0xff] %v1492
      %1521 = vst [vmem:[#allocation2 + $0xc8] sm:$0xff] %v1493
      %1522 = vst [vmem:[#allocation2 + $0xd0] sm:$0xff] %v1494
      %1523 = vst [vmem:[#allocation2 + $0xd8] sm:$0x3f] %v1495
      %v1524 = vld [vmem:[%s206 + $0x8] sm:$0xf]
      %v1525 = vld [vmem:[%s206 + $0xc] sm:$0xf]
      %v1526 = vld [vmem:[%s206 + $0x10] sm:$0xf]
      %v1527 = vld [vmem:[%s206 + $0x14] sm:$0xf]
      %v1528 = vld [vmem:[%s206 + $0x18] sm:$0xf]
      %v1529 = vld [vmem:[%s206 + $0x1c] sm:$0xf]
      %v1530 = vld [vmem:[%s206 + $0x20] sm:$0xf]
      %v1531 = vld [vmem:[%s206 + $0x24] sm:$0xf]
      %v1532 = vld [vmem:[%s206 + $0x28] sm:$0xf]
      %v1533 = vld [vmem:[%s206 + $0x2c] sm:$0xf]
      %v1534 = vld [vmem:[%s206 + $0x30] sm:$0xf]
      %v1535 = vld [vmem:[%s206 + $0x34] sm:$0xf]
      %v1536 = vld [vmem:[%s206 + $0x38] sm:$0xf]
      %v1537 = vld [vmem:[%s206 + $0x3c] sm:$0xf]
      %v1538 = vld [vmem:[%s206 + $0x40] sm:$0xf]
      %v1539 = vld [vmem:[%s206 + $0x44] sm:$0xf]
      %v1540 = vld [vmem:[%s206 + $0x48] sm:$0xf]
      %v1541 = vld [vmem:[%s206 + $0x4c] sm:$0xf]
      %v1542 = vld [vmem:[%s206 + $0x50] sm:$0xf]
      %v1543 = vld [vmem:[%s206 + $0x54] sm:$0xf]
      %v1544 = vld [vmem:[%s206 + $0x58] sm:$0xf]
      %v1545 = vld [vmem:[%s206 + $0x5c] sm:$0xf]
      %v1546 = vld [vmem:[%s206 + $0x60] sm:$0xf]
      %v1547 = vld [vmem:[%s206 + $0x64] sm:$0xf]
      %v1548 = vld [vmem:[%s206 + $0x68] sm:$0xf]
      %v1549 = vld [vmem:[%s206 + $0x6c] sm:$0xf]
      %v1550 = vld [vmem:[%s206 + $0x70] sm:$0xf]
      %v1551 = vld [vmem:[%s206 + $0x74] sm:$0x7]
      %s1552 = scalar_lea.vmem %s210, 192
      %v1553 = vld [vmem:[%s1552] sm:$0xf]
      %v1554 = vld [vmem:[%s1552 + $0x4] sm:$0xf]
      %v1555 = vld [vmem:[%s1552 + $0x8] sm:$0xf]
      %v1556 = vld [vmem:[%s1552 + $0xc] sm:$0xf]
      %v1557 = vld [vmem:[%s1552 + $0x10] sm:$0xf]
      %v1558 = vld [vmem:[%s1552 + $0x14] sm:$0xf]
      %v1559 = vld [vmem:[%s1552 + $0x18] sm:$0xf]
      %v1560 = vld [vmem:[%s1552 + $0x1c] sm:$0xf]
      %v1561 = vld [vmem:[%s1552 + $0x20] sm:$0xf]
      %v1562 = vld [vmem:[%s1552 + $0x24] sm:$0xf]
      %v1563 = vld [vmem:[%s1552 + $0x28] sm:$0xf]
      %v1564 = vld [vmem:[%s1552 + $0x2c] sm:$0xf]
      %v1565 = vld [vmem:[%s1552 + $0x30] sm:$0xf]
      %v1566 = vld [vmem:[%s1552 + $0x34] sm:$0xf]
      %v1567 = vld [vmem:[%s1552 + $0x38] sm:$0xf]
      %v1568 = vld [vmem:[%s1552 + $0x3c] sm:$0xf]
      %v1597 = vunpack.c.l.b16 %v1524
      %v1598 = vunpack.c.l.b16 %v1525
      %v1599 = vunpack.c.l.b16 %v1526
      %v1600 = vunpack.c.l.b16 %v1527
      %v1601 = vunpack.c.l.b16 %v1528
      %v1602 = vunpack.c.l.b16 %v1529
      %v1603 = vunpack.c.l.b16 %v1530
      %v1604 = vunpack.c.l.b16 %v1531
      %v1605 = vunpack.c.l.b16 %v1532
      %v1606 = vunpack.c.l.b16 %v1533
      %v1607 = vunpack.c.l.b16 %v1534
      %v1608 = vunpack.c.l.b16 %v1535
      %v1609 = vunpack.c.l.b16 %v1536
      %v1610 = vunpack.c.l.b16 %v1537
      %v1611 = vunpack.c.l.b16 %v1538
      %v1612 = vunpack.c.l.b16 %v1539
      %v1613 = vunpack.c.l.b16 %v1540
      %v1614 = vunpack.c.l.b16 %v1541
      %v1615 = vunpack.c.l.b16 %v1542
      %v1616 = vunpack.c.l.b16 %v1543
      %v1617 = vunpack.c.l.b16 %v1544
      %v1618 = vunpack.c.l.b16 %v1545
      %v1619 = vunpack.c.l.b16 %v1546
      %v1620 = vunpack.c.l.b16 %v1547
      %v1621 = vunpack.c.l.b16 %v1548
      %v1622 = vunpack.c.l.b16 %v1549
      %v1623 = vunpack.c.l.b16 %v1550
      %v1624 = vunpack.c.l.b16 %v1551
      %v1625 = vpack.c.b16 %v1598, %v1597
      %v1626 = vpack.c.b16 %v1600, %v1599
      %v1627 = vpack.c.b16 %v1602, %v1601
      %v1628 = vpack.c.b16 %v1604, %v1603
      %v1629 = vpack.c.b16 %v1606, %v1605
      %v1630 = vpack.c.b16 %v1608, %v1607
      %v1631 = vpack.c.b16 %v1610, %v1609
      %v1632 = vpack.c.b16 %v1612, %v1611
      %v1633 = vpack.c.b16 %v1614, %v1613
      %v1634 = vpack.c.b16 %v1616, %v1615
      %v1635 = vpack.c.b16 %v1618, %v1617
      %v1636 = vpack.c.b16 %v1620, %v1619
      %v1637 = vpack.c.b16 %v1622, %v1621
      %v1638 = vpack.c.b16 %v1624, %v1623
      %v1669 = vunpack.c.l.b16 %v1553
      %v1670 = vunpack.c.l.b16 %v1554
      %v1671 = vunpack.c.l.b16 %v1555
      %v1672 = vunpack.c.l.b16 %v1556
      %v1673 = vunpack.c.l.b16 %v1557
      %v1674 = vunpack.c.l.b16 %v1558
      %v1675 = vunpack.c.l.b16 %v1559
      %v1676 = vunpack.c.l.b16 %v1560
      %v1677 = vunpack.c.l.b16 %v1561
      %v1678 = vunpack.c.l.b16 %v1562
      %v1679 = vunpack.c.l.b16 %v1563
      %v1680 = vunpack.c.l.b16 %v1564
      %v1681 = vunpack.c.l.b16 %v1565
      %v1682 = vunpack.c.l.b16 %v1566
      %v1683 = vunpack.c.l.b16 %v1567
      %v1684 = vunpack.c.l.b16 %v1568
      %v1685 = vpack.c.b16 %v1670, %v1669
      %v1686 = vpack.c.b16 %v1672, %v1671
      %v1687 = vpack.c.b16 %v1674, %v1673
      %v1688 = vpack.c.b16 %v1676, %v1675
      %v1689 = vpack.c.b16 %v1678, %v1677
      %v1690 = vpack.c.b16 %v1680, %v1679
      %v1691 = vpack.c.b16 %v1682, %v1681
      %v1692 = vpack.c.b16 %v1684, %v1683
      %1701 = vmatprep.subr.bf16.mxu0 0
      %1702 = vmatpush1.bf16.msra.mxu0 %v1692
      %1703 = vmatprep.subr.bf16.mxu0 0
      %1704 = vmatpush1.bf16.msra.mxu0 %v1691
      %1705 = vmatprep.subr.bf16.mxu0 0
      %1706 = vmatpush1.bf16.msra.mxu0 %v1690
      %1707 = vmatprep.subr.bf16.mxu0 0
      %1708 = vmatpush1.bf16.msra.mxu0 %v1689
      %1709 = vmatprep.subr.bf16.mxu0 0
      %1710 = vmatpush1.bf16.msra.mxu0 %v1688
      %1711 = vmatprep.subr.bf16.mxu0 0
      %1712 = vmatpush1.bf16.msra.mxu0 %v1687
      %1713 = vmatprep.subr.bf16.mxu0 0
      %1714 = vmatpush1.bf16.msra.mxu0 %v1686
      %1715 = vmatprep.subr.bf16.mxu0 0
      %1716 = vmatpush1.bf16.msra.mxu0 %v1685
      %1717 = vmatprep.subr.bf16.mxu0 0
      %1718 = vmatpush2.bf16.msra.mxu0 0
      %1719 = vmatprep.subr.bf16.mxu0 0
      %1720 = vmatpush2.bf16.msra.mxu0 0
      %1721 = vmatprep.subr.bf16.mxu0 0
      %1722 = vmatpush2.bf16.msra.mxu0 0
      %1723 = vmatprep.subr.bf16.mxu0 0
      %1724 = vmatpush2.bf16.msra.mxu0 0
      %1725 = vmatprep.subr.bf16.mxu0 0
      %1726 = vmatpush2.bf16.msra.mxu0 0
      %1727 = vmatprep.subr.bf16.mxu0 0
      %1728 = vmatpush2.bf16.msra.mxu0 0
      %1729 = vmatprep.subr.bf16.mxu0 0
      %1730 = vmatpush2.bf16.msra.mxu0 0
      %1731 = vmatprep.subr.bf16.mxu0 0
      %1732 = vmatpush2.bf16.msra.mxu0 0
      %1733 = vmatprep.mubr.bf16.mxu0 0
      %1734 = vmatmul.mubr.bf16.gmra.mxu0 %v1625
      %v1735 = vpop.f32.mrf.mxu0
      %v1736 = vadd.f32 0.0, %v1735
      %v1737 = vpop.f32.mrf.mxu0
      %v1738 = vpop.f32.mrf.mxu0
      %v1739 = vadd.f32 0.0, %v1738
      %v1740 = vpop.f32.mrf.mxu0
      %1741 = vmatprep.mubr.bf16.mxu0 0
      %1742 = vmatmul.mubr.bf16.gmra.mxu0 %v1626
      %v1743 = vpop.f32.mrf.mxu0
      %v1744 = vadd.f32 0.0, %v1743
      %v1745 = vpop.f32.mrf.mxu0
      %v1746 = vpop.f32.mrf.mxu0
      %v1747 = vadd.f32 0.0, %v1746
      %v1748 = vpop.f32.mrf.mxu0
      %1749 = vmatprep.mubr.bf16.mxu0 0
      %1750 = vmatmul.mubr.bf16.gmra.mxu0 %v1627
      %v1751 = vpop.f32.mrf.mxu0
      %v1752 = vadd.f32 0.0, %v1751
      %v1753 = vpop.f32.mrf.mxu0
      %v1754 = vpop.f32.mrf.mxu0
      %v1755 = vadd.f32 0.0, %v1754
      %v1756 = vpop.f32.mrf.mxu0
      %1757 = vmatprep.mubr.bf16.mxu0 0
      %1758 = vmatmul.mubr.bf16.gmra.mxu0 %v1628
      %v1759 = vpop.f32.mrf.mxu0
      %v1760 = vadd.f32 0.0, %v1759
      %v1761 = vpop.f32.mrf.mxu0
      %v1762 = vpop.f32.mrf.mxu0
      %v1763 = vadd.f32 0.0, %v1762
      %v1764 = vpop.f32.mrf.mxu0
      %1765 = vmatprep.mubr.bf16.mxu0 0
      %1766 = vmatmul.mubr.bf16.gmra.mxu0 %v1629
      %v1767 = vpop.f32.mrf.mxu0
      %v1768 = vadd.f32 0.0, %v1767
      %v1769 = vpop.f32.mrf.mxu0
      %v1770 = vpop.f32.mrf.mxu0
      %v1771 = vadd.f32 0.0, %v1770
      %v1772 = vpop.f32.mrf.mxu0
      %1773 = vmatprep.mubr.bf16.mxu0 0
      %1774 = vmatmul.mubr.bf16.gmra.mxu0 %v1630
      %v1775 = vpop.f32.mrf.mxu0
      %v1776 = vadd.f32 0.0, %v1775
      %v1777 = vpop.f32.mrf.mxu0
      %v1778 = vpop.f32.mrf.mxu0
      %v1779 = vadd.f32 0.0, %v1778
      %v1780 = vpop.f32.mrf.mxu0
      %1781 = vmatprep.mubr.bf16.mxu0 0
      %1782 = vmatmul.mubr.bf16.gmra.mxu0 %v1631
      %v1783 = vpop.f32.mrf.mxu0
      %v1784 = vadd.f32 0.0, %v1783
      %v1785 = vpop.f32.mrf.mxu0
      %v1786 = vpop.f32.mrf.mxu0
      %v1787 = vadd.f32 0.0, %v1786
      %v1788 = vpop.f32.mrf.mxu0
      %1789 = vmatprep.mubr.bf16.mxu0 0
      %1790 = vmatmul.mubr.bf16.gmra.mxu0 %v1632
      %v1791 = vpop.f32.mrf.mxu0
      %v1792 = vadd.f32 0.0, %v1791
      %v1793 = vpop.f32.mrf.mxu0
      %v1794 = vpop.f32.mrf.mxu0
      %v1795 = vadd.f32 0.0, %v1794
      %v1796 = vpop.f32.mrf.mxu0
      %1797 = vmatprep.mubr.bf16.mxu0 0
      %1798 = vmatmul.mubr.bf16.gmra.mxu0 %v1633
      %v1799 = vpop.f32.mrf.mxu0
      %v1800 = vadd.f32 0.0, %v1799
      %v1801 = vpop.f32.mrf.mxu0
      %v1802 = vpop.f32.mrf.mxu0
      %v1803 = vadd.f32 0.0, %v1802
      %v1804 = vpop.f32.mrf.mxu0
      %1805 = vmatprep.mubr.bf16.mxu0 0
      %1806 = vmatmul.mubr.bf16.gmra.mxu0 %v1634
      %v1807 = vpop.f32.mrf.mxu0
      %v1808 = vadd.f32 0.0, %v1807
      %v1809 = vpop.f32.mrf.mxu0
      %v1810 = vpop.f32.mrf.mxu0
      %v1811 = vadd.f32 0.0, %v1810
      %v1812 = vpop.f32.mrf.mxu0
      %1813 = vmatprep.mubr.bf16.mxu0 0
      %1814 = vmatmul.mubr.bf16.gmra.mxu0 %v1635
      %v1815 = vpop.f32.mrf.mxu0
      %v1816 = vadd.f32 0.0, %v1815
      %v1817 = vpop.f32.mrf.mxu0
      %v1818 = vpop.f32.mrf.mxu0
      %v1819 = vadd.f32 0.0, %v1818
      %v1820 = vpop.f32.mrf.mxu0
      %1821 = vmatprep.mubr.bf16.mxu0 0
      %1822 = vmatmul.mubr.bf16.gmra.mxu0 %v1636
      %v1823 = vpop.f32.mrf.mxu0
      %v1824 = vadd.f32 0.0, %v1823
      %v1825 = vpop.f32.mrf.mxu0
      %v1826 = vpop.f32.mrf.mxu0
      %v1827 = vadd.f32 0.0, %v1826
      %v1828 = vpop.f32.mrf.mxu0
      %1829 = vmatprep.mubr.bf16.mxu0 0
      %1830 = vmatmul.mubr.bf16.gmra.mxu0 %v1637
      %v1831 = vpop.f32.mrf.mxu0
      %v1832 = vadd.f32 0.0, %v1831
      %v1833 = vpop.f32.mrf.mxu0
      %v1834 = vpop.f32.mrf.mxu0
      %v1835 = vadd.f32 0.0, %v1834
      %v1836 = vpop.f32.mrf.mxu0
      %1837 = vmatprep.mubr.bf16.mxu0 0
      %1838 = vmatmul.mubr.bf16.gmra.mxu0 %v1638
      %v1839 = vpop.f32.mrf.mxu0
      %v1840 = vadd.f32 0.0, %v1839
      %v1841 = vpop.f32.mrf.mxu0
      %v1842 = vpop.f32.mrf.mxu0
      %v1843 = vadd.f32 0.0, %v1842
      %v1844 = vpop.f32.mrf.mxu0
      %1845 = vdwg.mxu0
      %v1846 = vld [vmem:[#allocation2] sm:$0xff]
      %v1847 = vld [vmem:[#allocation2 + $0x8] sm:$0xff]
      %v1848 = vld [vmem:[#allocation2 + $0x10] sm:$0xff]
      %v1849 = vld [vmem:[#allocation2 + $0x18] sm:$0xff]
      %v1850 = vld [vmem:[#allocation2 + $0x20] sm:$0xff]
      %v1851 = vld [vmem:[#allocation2 + $0x28] sm:$0xff]
      %v1852 = vld [vmem:[#allocation2 + $0x30] sm:$0xff]
      %v1853 = vld [vmem:[#allocation2 + $0x38] sm:$0xff]
      %v1854 = vld [vmem:[#allocation2 + $0x40] sm:$0xff]
      %v1855 = vld [vmem:[#allocation2 + $0x48] sm:$0xff]
      %v1856 = vld [vmem:[#allocation2 + $0x50] sm:$0xff]
      %v1857 = vld [vmem:[#allocation2 + $0x58] sm:$0xff]
      %v1858 = vld [vmem:[#allocation2 + $0x60] sm:$0xff]
      %v1859 = vld [vmem:[#allocation2 + $0x68] sm:$0xff]
      %v1860 = vld [vmem:[#allocation2 + $0x70] sm:$0xff]
      %v1861 = vld [vmem:[#allocation2 + $0x78] sm:$0xff]
      %v1862 = vld [vmem:[#allocation2 + $0x80] sm:$0xff]
      %v1863 = vld [vmem:[#allocation2 + $0x88] sm:$0xff]
      %v1864 = vld [vmem:[#allocation2 + $0x90] sm:$0xff]
      %v1865 = vld [vmem:[#allocation2 + $0x98] sm:$0xff]
      %v1866 = vld [vmem:[#allocation2 + $0xa0] sm:$0xff]
      %v1867 = vld [vmem:[#allocation2 + $0xa8] sm:$0xff]
      %v1868 = vld [vmem:[#allocation2 + $0xb0] sm:$0xff]
      %v1869 = vld [vmem:[#allocation2 + $0xb8] sm:$0xff]
      %v1870 = vld [vmem:[#allocation2 + $0xc0] sm:$0xff]
      %v1871 = vld [vmem:[#allocation2 + $0xc8] sm:$0xff]
      %v1872 = vld [vmem:[#allocation2 + $0xd0] sm:$0xff]
      %v1873 = vld [vmem:[#allocation2 + $0xd8] sm:$0x3f]
      %v1874 = vadd.f32 %v1846, %v1736
      %v1875 = vadd.f32 %v1847, %v1739
      %v1876 = vadd.f32 %v1848, %v1744
      %v1877 = vadd.f32 %v1849, %v1747
      %v1878 = vadd.f32 %v1850, %v1752
      %v1879 = vadd.f32 %v1851, %v1755
      %v1880 = vadd.f32 %v1852, %v1760
      %v1881 = vadd.f32 %v1853, %v1763
      %v1882 = vadd.f32 %v1854, %v1768
      %v1883 = vadd.f32 %v1855, %v1771
      %v1884 = vadd.f32 %v1856, %v1776
      %v1885 = vadd.f32 %v1857, %v1779
      %v1886 = vadd.f32 %v1858, %v1784
      %v1887 = vadd.f32 %v1859, %v1787
      %v1888 = vadd.f32 %v1860, %v1792
      %v1889 = vadd.f32 %v1861, %v1795
      %v1890 = vadd.f32 %v1862, %v1800
      %v1891 = vadd.f32 %v1863, %v1803
      %v1892 = vadd.f32 %v1864, %v1808
      %v1893 = vadd.f32 %v1865, %v1811
      %v1894 = vadd.f32 %v1866, %v1816
      %v1895 = vadd.f32 %v1867, %v1819
      %v1896 = vadd.f32 %v1868, %v1824
      %v1897 = vadd.f32 %v1869, %v1827
      %v1898 = vadd.f32 %v1870, %v1832
      %v1899 = vadd.f32 %v1871, %v1835
      %v1900 = vadd.f32 %v1872, %v1840
      %v1901 = vadd.f32 %v1873, %v1843
      %1902 = vst [vmem:[#allocation2] sm:$0xff] %v1874
      %1903 = vst [vmem:[#allocation2 + $0x8] sm:$0xff] %v1875
      %1904 = vst [vmem:[#allocation2 + $0x10] sm:$0xff] %v1876
      %1905 = vst [vmem:[#allocation2 + $0x18] sm:$0xff] %v1877
      %1906 = vst [vmem:[#allocation2 + $0x20] sm:$0xff] %v1878
      %1907 = vst [vmem:[#allocation2 + $0x28] sm:$0xff] %v1879
      %1908 = vst [vmem:[#allocation2 + $0x30] sm:$0xff] %v1880
      %1909 = vst [vmem:[#allocation2 + $0x38] sm:$0xff] %v1881
      %1910 = vst [vmem:[#allocation2 + $0x40] sm:$0xff] %v1882
      %1911 = vst [vmem:[#allocation2 + $0x48] sm:$0xff] %v1883
      %1912 = vst [vmem:[#allocation2 + $0x50] sm:$0xff] %v1884
      %1913 = vst [vmem:[#allocation2 + $0x58] sm:$0xff] %v1885
      %1914 = vst [vmem:[#allocation2 + $0x60] sm:$0xff] %v1886
      %1915 = vst [vmem:[#allocation2 + $0x68] sm:$0xff] %v1887
      %1916 = vst [vmem:[#allocation2 + $0x70] sm:$0xff] %v1888
      %1917 = vst [vmem:[#allocation2 + $0x78] sm:$0xff] %v1889
      %1918 = vst [vmem:[#allocation2 + $0x80] sm:$0xff] %v1890
      %1919 = vst [vmem:[#allocation2 + $0x88] sm:$0xff] %v1891
      %1920 = vst [vmem:[#allocation2 + $0x90] sm:$0xff] %v1892
      %1921 = vst [vmem:[#allocation2 + $0x98] sm:$0xff] %v1893
      %1922 = vst [vmem:[#allocation2 + $0xa0] sm:$0xff] %v1894
      %1923 = vst [vmem:[#allocation2 + $0xa8] sm:$0xff] %v1895
      %1924 = vst [vmem:[#allocation2 + $0xb0] sm:$0xff] %v1896
      %1925 = vst [vmem:[#allocation2 + $0xb8] sm:$0xff] %v1897
      %1926 = vst [vmem:[#allocation2 + $0xc0] sm:$0xff] %v1898
      %1927 = vst [vmem:[#allocation2 + $0xc8] sm:$0xff] %v1899
      %1928 = vst [vmem:[#allocation2 + $0xd0] sm:$0xff] %v1900
      %1929 = vst [vmem:[#allocation2 + $0xd8] sm:$0x3f] %v1901
      %v1930 = vld [vmem:[%s206 + $0x8] sm:$0xf]
      %v1931 = vld [vmem:[%s206 + $0xc] sm:$0xf]
      %v1932 = vld [vmem:[%s206 + $0x10] sm:$0xf]
      %v1933 = vld [vmem:[%s206 + $0x14] sm:$0xf]
      %v1934 = vld [vmem:[%s206 + $0x18] sm:$0xf]
      %v1935 = vld [vmem:[%s206 + $0x1c] sm:$0xf]
      %v1936 = vld [vmem:[%s206 + $0x20] sm:$0xf]
      %v1937 = vld [vmem:[%s206 + $0x24] sm:$0xf]
      %v1938 = vld [vmem:[%s206 + $0x28] sm:$0xf]
      %v1939 = vld [vmem:[%s206 + $0x2c] sm:$0xf]
      %v1940 = vld [vmem:[%s206 + $0x30] sm:$0xf]
      %v1941 = vld [vmem:[%s206 + $0x34] sm:$0xf]
      %v1942 = vld [vmem:[%s206 + $0x38] sm:$0xf]
      %v1943 = vld [vmem:[%s206 + $0x3c] sm:$0xf]
      %v1944 = vld [vmem:[%s206 + $0x40] sm:$0xf]
      %v1945 = vld [vmem:[%s206 + $0x44] sm:$0xf]
      %v1946 = vld [vmem:[%s206 + $0x48] sm:$0xf]
      %v1947 = vld [vmem:[%s206 + $0x4c] sm:$0xf]
      %v1948 = vld [vmem:[%s206 + $0x50] sm:$0xf]
      %v1949 = vld [vmem:[%s206 + $0x54] sm:$0xf]
      %v1950 = vld [vmem:[%s206 + $0x58] sm:$0xf]
      %v1951 = vld [vmem:[%s206 + $0x5c] sm:$0xf]
      %v1952 = vld [vmem:[%s206 + $0x60] sm:$0xf]
      %v1953 = vld [vmem:[%s206 + $0x64] sm:$0xf]
      %v1954 = vld [vmem:[%s206 + $0x68] sm:$0xf]
      %v1955 = vld [vmem:[%s206 + $0x6c] sm:$0xf]
      %v1956 = vld [vmem:[%s206 + $0x70] sm:$0xf]
      %v1957 = vld [vmem:[%s206 + $0x74] sm:$0xf]
      %s1958 = scalar_lea.vmem %s210, 256
      %v1959 = vld [vmem:[%s1958] sm:$0xf]
      %v1960 = vld [vmem:[%s1958 + $0x4] sm:$0xf]
      %v1961 = vld [vmem:[%s1958 + $0x8] sm:$0xf]
      %v1962 = vld [vmem:[%s1958 + $0xc] sm:$0xf]
      %v1963 = vld [vmem:[%s1958 + $0x10] sm:$0xf]
      %v1964 = vld [vmem:[%s1958 + $0x14] sm:$0xf]
      %v1965 = vld [vmem:[%s1958 + $0x18] sm:$0xf]
      %v1966 = vld [vmem:[%s1958 + $0x1c] sm:$0xf]
      %v1967 = vld [vmem:[%s1958 + $0x20] sm:$0xf]
      %v1968 = vld [vmem:[%s1958 + $0x24] sm:$0xf]
      %v1969 = vld [vmem:[%s1958 + $0x28] sm:$0xf]
      %v1970 = vld [vmem:[%s1958 + $0x2c] sm:$0xf]
      %v1971 = vld [vmem:[%s1958 + $0x30] sm:$0xf]
      %v1972 = vld [vmem:[%s1958 + $0x34] sm:$0xf]
      %v1973 = vld [vmem:[%s1958 + $0x38] sm:$0xf]
      %v1974 = vld [vmem:[%s1958 + $0x3c] sm:$0xf]
      %v2003 = vunpack.c.l.b16 %v1930
      %v2004 = vunpack.c.l.b16 %v1931
      %v2005 = vunpack.c.l.b16 %v1932
      %v2006 = vunpack.c.l.b16 %v1933
      %v2007 = vunpack.c.l.b16 %v1934
      %v2008 = vunpack.c.l.b16 %v1935
      %v2009 = vunpack.c.l.b16 %v1936
      %v2010 = vunpack.c.l.b16 %v1937
      %v2011 = vunpack.c.l.b16 %v1938
      %v2012 = vunpack.c.l.b16 %v1939
      %v2013 = vunpack.c.l.b16 %v1940
      %v2014 = vunpack.c.l.b16 %v1941
      %v2015 = vunpack.c.l.b16 %v1942
      %v2016 = vunpack.c.l.b16 %v1943
      %v2017 = vunpack.c.l.b16 %v1944
      %v2018 = vunpack.c.l.b16 %v1945
      %v2019 = vunpack.c.l.b16 %v1946
      %v2020 = vunpack.c.l.b16 %v1947
      %v2021 = vunpack.c.l.b16 %v1948
      %v2022 = vunpack.c.l.b16 %v1949
      %v2023 = vunpack.c.l.b16 %v1950
      %v2024 = vunpack.c.l.b16 %v1951
      %v2025 = vunpack.c.l.b16 %v1952
      %v2026 = vunpack.c.l.b16 %v1953
      %v2027 = vunpack.c.l.b16 %v1954
      %v2028 = vunpack.c.l.b16 %v1955
      %v2029 = vunpack.c.l.b16 %v1956
      %v2030 = vunpack.c.l.b16 %v1957
      %v2031 = vpack.c.b16 %v2004, %v2003
      %v2032 = vpack.c.b16 %v2006, %v2005
      %v2033 = vpack.c.b16 %v2008, %v2007
      %v2034 = vpack.c.b16 %v2010, %v2009
      %v2035 = vpack.c.b16 %v2012, %v2011
      %v2036 = vpack.c.b16 %v2014, %v2013
      %v2037 = vpack.c.b16 %v2016, %v2015
      %v2038 = vpack.c.b16 %v2018, %v2017
      %v2039 = vpack.c.b16 %v2020, %v2019
      %v2040 = vpack.c.b16 %v2022, %v2021
      %v2041 = vpack.c.b16 %v2024, %v2023
      %v2042 = vpack.c.b16 %v2026, %v2025
      %v2043 = vpack.c.b16 %v2028, %v2027
      %v2044 = vpack.c.b16 %v2030, %v2029
      %v2046 = vshrl.u32 %v2031, 16
      %v2048 = vshll.u32 %v2031, 16
      %v2050 = vrot.slane %v2048, 1
      %v2051 = vor.u32 %v2046, %v2050
      %v2053 = vshll.u32 %v2032, 16
      %v2055 = vrot.slane %v2053, 1
      %v2056 = vsel %vm687, %v2051, %v2055
      %v2057 = vshrl.u32 %v2032, 16
      %v2059 = vor.u32 %v2057, %v2055
      %v2061 = vshll.u32 %v2033, 16
      %v2063 = vrot.slane %v2061, 1
      %v2064 = vsel %vm687, %v2059, %v2063
      %v2065 = vshrl.u32 %v2033, 16
      %v2067 = vor.u32 %v2065, %v2063
      %v2069 = vshll.u32 %v2034, 16
      %v2071 = vrot.slane %v2069, 1
      %v2072 = vsel %vm687, %v2067, %v2071
      %v2073 = vshrl.u32 %v2034, 16
      %v2075 = vor.u32 %v2073, %v2071
      %v2077 = vshll.u32 %v2035, 16
      %v2079 = vrot.slane %v2077, 1
      %v2080 = vsel %vm687, %v2075, %v2079
      %v2081 = vshrl.u32 %v2035, 16
      %v2083 = vor.u32 %v2081, %v2079
      %v2085 = vshll.u32 %v2036, 16
      %v2087 = vrot.slane %v2085, 1
      %v2088 = vsel %vm687, %v2083, %v2087
      %v2089 = vshrl.u32 %v2036, 16
      %v2091 = vor.u32 %v2089, %v2087
      %v2093 = vshll.u32 %v2037, 16
      %v2095 = vrot.slane %v2093, 1
      %v2096 = vsel %vm687, %v2091, %v2095
      %v2097 = vshrl.u32 %v2037, 16
      %v2099 = vor.u32 %v2097, %v2095
      %v2101 = vshll.u32 %v2038, 16
      %v2103 = vrot.slane %v2101, 1
      %v2104 = vsel %vm687, %v2099, %v2103
      %v2105 = vshrl.u32 %v2038, 16
      %v2107 = vor.u32 %v2105, %v2103
      %v2109 = vshll.u32 %v2039, 16
      %v2111 = vrot.slane %v2109, 1
      %v2112 = vsel %vm687, %v2107, %v2111
      %v2113 = vshrl.u32 %v2039, 16
      %v2115 = vor.u32 %v2113, %v2111
      %v2117 = vshll.u32 %v2040, 16
      %v2119 = vrot.slane %v2117, 1
      %v2120 = vsel %vm687, %v2115, %v2119
      %v2121 = vshrl.u32 %v2040, 16
      %v2123 = vor.u32 %v2121, %v2119
      %v2125 = vshll.u32 %v2041, 16
      %v2127 = vrot.slane %v2125, 1
      %v2128 = vsel %vm687, %v2123, %v2127
      %v2129 = vshrl.u32 %v2041, 16
      %v2131 = vor.u32 %v2129, %v2127
      %v2133 = vshll.u32 %v2042, 16
      %v2135 = vrot.slane %v2133, 1
      %v2136 = vsel %vm687, %v2131, %v2135
      %v2137 = vshrl.u32 %v2042, 16
      %v2139 = vor.u32 %v2137, %v2135
      %v2141 = vshll.u32 %v2043, 16
      %v2143 = vrot.slane %v2141, 1
      %v2144 = vsel %vm687, %v2139, %v2143
      %v2145 = vshrl.u32 %v2043, 16
      %v2147 = vor.u32 %v2145, %v2143
      %v2149 = vshll.u32 %v2044, 16
      %v2151 = vrot.slane %v2149, 1
      %v2152 = vsel %vm687, %v2147, %v2151
      %v2153 = vshrl.u32 %v2044, 16
      %v2155 = vor.u32 %v2153, %v2151
      %v2186 = vunpack.c.l.b16 %v1959
      %v2187 = vunpack.c.l.b16 %v1960
      %v2188 = vunpack.c.l.b16 %v1961
      %v2189 = vunpack.c.l.b16 %v1962
      %v2190 = vunpack.c.l.b16 %v1963
      %v2191 = vunpack.c.l.b16 %v1964
      %v2192 = vunpack.c.l.b16 %v1965
      %v2193 = vunpack.c.l.b16 %v1966
      %v2194 = vunpack.c.l.b16 %v1967
      %v2195 = vunpack.c.l.b16 %v1968
      %v2196 = vunpack.c.l.b16 %v1969
      %v2197 = vunpack.c.l.b16 %v1970
      %v2198 = vunpack.c.l.b16 %v1971
      %v2199 = vunpack.c.l.b16 %v1972
      %v2200 = vunpack.c.l.b16 %v1973
      %v2201 = vunpack.c.l.b16 %v1974
      %v2202 = vpack.c.b16 %v2187, %v2186
      %v2203 = vpack.c.b16 %v2189, %v2188
      %v2204 = vpack.c.b16 %v2191, %v2190
      %v2205 = vpack.c.b16 %v2193, %v2192
      %v2206 = vpack.c.b16 %v2195, %v2194
      %v2207 = vpack.c.b16 %v2197, %v2196
      %v2208 = vpack.c.b16 %v2199, %v2198
      %v2209 = vpack.c.b16 %v2201, %v2200
      %2218 = vmatprep.subr.bf16.mxu0 0
      %2219 = vmatpush1.bf16.msra.mxu0 %v2209
      %2220 = vmatprep.subr.bf16.mxu0 0
      %2221 = vmatpush1.bf16.msra.mxu0 %v2208
      %2222 = vmatprep.subr.bf16.mxu0 0
      %2223 = vmatpush1.bf16.msra.mxu0 %v2207
      %2224 = vmatprep.subr.bf16.mxu0 0
      %2225 = vmatpush1.bf16.msra.mxu0 %v2206
      %2226 = vmatprep.subr.bf16.mxu0 0
      %2227 = vmatpush1.bf16.msra.mxu0 %v2205
      %2228 = vmatprep.subr.bf16.mxu0 0
      %2229 = vmatpush1.bf16.msra.mxu0 %v2204
      %2230 = vmatprep.subr.bf16.mxu0 0
      %2231 = vmatpush1.bf16.msra.mxu0 %v2203
      %2232 = vmatprep.subr.bf16.mxu0 0
      %2233 = vmatpush1.bf16.msra.mxu0 %v2202
      %2234 = vmatprep.subr.bf16.mxu0 0
      %2235 = vmatpush2.bf16.msra.mxu0 0
      %2236 = vmatprep.subr.bf16.mxu0 0
      %2237 = vmatpush2.bf16.msra.mxu0 0
      %2238 = vmatprep.subr.bf16.mxu0 0
      %2239 = vmatpush2.bf16.msra.mxu0 0
      %2240 = vmatprep.subr.bf16.mxu0 0
      %2241 = vmatpush2.bf16.msra.mxu0 0
      %2242 = vmatprep.subr.bf16.mxu0 0
      %2243 = vmatpush2.bf16.msra.mxu0 0
      %2244 = vmatprep.subr.bf16.mxu0 0
      %2245 = vmatpush2.bf16.msra.mxu0 0
      %2246 = vmatprep.subr.bf16.mxu0 0
      %2247 = vmatpush2.bf16.msra.mxu0 0
      %2248 = vmatprep.subr.bf16.mxu0 0
      %2249 = vmatpush2.bf16.msra.mxu0 0
      %2250 = vmatprep.mubr.bf16.mxu0 0
      %2251 = vmatmul.mubr.bf16.gmra.mxu0 %v2056
      %v2252 = vpop.f32.mrf.mxu0
      %v2253 = vadd.f32 0.0, %v2252
      %v2254 = vpop.f32.mrf.mxu0
      %v2255 = vpop.f32.mrf.mxu0
      %v2256 = vadd.f32 0.0, %v2255
      %v2257 = vpop.f32.mrf.mxu0
      %2258 = vmatprep.mubr.bf16.mxu0 0
      %2259 = vmatmul.mubr.bf16.gmra.mxu0 %v2064
      %v2260 = vpop.f32.mrf.mxu0
      %v2261 = vadd.f32 0.0, %v2260
      %v2262 = vpop.f32.mrf.mxu0
      %v2263 = vpop.f32.mrf.mxu0
      %v2264 = vadd.f32 0.0, %v2263
      %v2265 = vpop.f32.mrf.mxu0
      %2266 = vmatprep.mubr.bf16.mxu0 0
      %2267 = vmatmul.mubr.bf16.gmra.mxu0 %v2072
      %v2268 = vpop.f32.mrf.mxu0
      %v2269 = vadd.f32 0.0, %v2268
      %v2270 = vpop.f32.mrf.mxu0
      %v2271 = vpop.f32.mrf.mxu0
      %v2272 = vadd.f32 0.0, %v2271
      %v2273 = vpop.f32.mrf.mxu0
      %2274 = vmatprep.mubr.bf16.mxu0 0
      %2275 = vmatmul.mubr.bf16.gmra.mxu0 %v2080
      %v2276 = vpop.f32.mrf.mxu0
      %v2277 = vadd.f32 0.0, %v2276
      %v2278 = vpop.f32.mrf.mxu0
      %v2279 = vpop.f32.mrf.mxu0
      %v2280 = vadd.f32 0.0, %v2279
      %v2281 = vpop.f32.mrf.mxu0
      %2282 = vmatprep.mubr.bf16.mxu0 0
      %2283 = vmatmul.mubr.bf16.gmra.mxu0 %v2088
      %v2284 = vpop.f32.mrf.mxu0
      %v2285 = vadd.f32 0.0, %v2284
      %v2286 = vpop.f32.mrf.mxu0
      %v2287 = vpop.f32.mrf.mxu0
      %v2288 = vadd.f32 0.0, %v2287
      %v2289 = vpop.f32.mrf.mxu0
      %2290 = vmatprep.mubr.bf16.mxu0 0
      %2291 = vmatmul.mubr.bf16.gmra.mxu0 %v2096
      %v2292 = vpop.f32.mrf.mxu0
      %v2293 = vadd.f32 0.0, %v2292
      %v2294 = vpop.f32.mrf.mxu0
      %v2295 = vpop.f32.mrf.mxu0
      %v2296 = vadd.f32 0.0, %v2295
      %v2297 = vpop.f32.mrf.mxu0
      %2298 = vmatprep.mubr.bf16.mxu0 0
      %2299 = vmatmul.mubr.bf16.gmra.mxu0 %v2104
      %v2300 = vpop.f32.mrf.mxu0
      %v2301 = vadd.f32 0.0, %v2300
      %v2302 = vpop.f32.mrf.mxu0
      %v2303 = vpop.f32.mrf.mxu0
      %v2304 = vadd.f32 0.0, %v2303
      %v2305 = vpop.f32.mrf.mxu0
      %2306 = vmatprep.mubr.bf16.mxu0 0
      %2307 = vmatmul.mubr.bf16.gmra.mxu0 %v2112
      %v2308 = vpop.f32.mrf.mxu0
      %v2309 = vadd.f32 0.0, %v2308
      %v2310 = vpop.f32.mrf.mxu0
      %v2311 = vpop.f32.mrf.mxu0
      %v2312 = vadd.f32 0.0, %v2311
      %v2313 = vpop.f32.mrf.mxu0
      %2314 = vmatprep.mubr.bf16.mxu0 0
      %2315 = vmatmul.mubr.bf16.gmra.mxu0 %v2120
      %v2316 = vpop.f32.mrf.mxu0
      %v2317 = vadd.f32 0.0, %v2316
      %v2318 = vpop.f32.mrf.mxu0
      %v2319 = vpop.f32.mrf.mxu0
      %v2320 = vadd.f32 0.0, %v2319
      %v2321 = vpop.f32.mrf.mxu0
      %2322 = vmatprep.mubr.bf16.mxu0 0
      %2323 = vmatmul.mubr.bf16.gmra.mxu0 %v2128
      %v2324 = vpop.f32.mrf.mxu0
      %v2325 = vadd.f32 0.0, %v2324
      %v2326 = vpop.f32.mrf.mxu0
      %v2327 = vpop.f32.mrf.mxu0
      %v2328 = vadd.f32 0.0, %v2327
      %v2329 = vpop.f32.mrf.mxu0
      %2330 = vmatprep.mubr.bf16.mxu0 0
      %2331 = vmatmul.mubr.bf16.gmra.mxu0 %v2136
      %v2332 = vpop.f32.mrf.mxu0
      %v2333 = vadd.f32 0.0, %v2332
      %v2334 = vpop.f32.mrf.mxu0
      %v2335 = vpop.f32.mrf.mxu0
      %v2336 = vadd.f32 0.0, %v2335
      %v2337 = vpop.f32.mrf.mxu0
      %2338 = vmatprep.mubr.bf16.mxu0 0
      %2339 = vmatmul.mubr.bf16.gmra.mxu0 %v2144
      %v2340 = vpop.f32.mrf.mxu0
      %v2341 = vadd.f32 0.0, %v2340
      %v2342 = vpop.f32.mrf.mxu0
      %v2343 = vpop.f32.mrf.mxu0
      %v2344 = vadd.f32 0.0, %v2343
      %v2345 = vpop.f32.mrf.mxu0
      %2346 = vmatprep.mubr.bf16.mxu0 0
      %2347 = vmatmul.mubr.bf16.gmra.mxu0 %v2152
      %v2348 = vpop.f32.mrf.mxu0
      %v2349 = vadd.f32 0.0, %v2348
      %v2350 = vpop.f32.mrf.mxu0
      %v2351 = vpop.f32.mrf.mxu0
      %v2352 = vadd.f32 0.0, %v2351
      %v2353 = vpop.f32.mrf.mxu0
      %2354 = vmatprep.mubr.bf16.mxu0 0
      %2355 = vmatmul.mubr.bf16.gmra.mxu0 %v2155
      %v2356 = vpop.f32.mrf.mxu0
      %v2357 = vadd.f32 0.0, %v2356
      %v2358 = vpop.f32.mrf.mxu0
      %v2359 = vpop.f32.mrf.mxu0
      %v2360 = vadd.f32 0.0, %v2359
      %v2361 = vpop.f32.mrf.mxu0
      %2362 = vdwg.mxu0
      %v2363 = vld [vmem:[#allocation2] sm:$0xff]
      %v2364 = vld [vmem:[#allocation2 + $0x8] sm:$0xff]
      %v2365 = vld [vmem:[#allocation2 + $0x10] sm:$0xff]
      %v2366 = vld [vmem:[#allocation2 + $0x18] sm:$0xff]
      %v2367 = vld [vmem:[#allocation2 + $0x20] sm:$0xff]
      %v2368 = vld [vmem:[#allocation2 + $0x28] sm:$0xff]
      %v2369 = vld [vmem:[#allocation2 + $0x30] sm:$0xff]
      %v2370 = vld [vmem:[#allocation2 + $0x38] sm:$0xff]
      %v2371 = vld [vmem:[#allocation2 + $0x40] sm:$0xff]
      %v2372 = vld [vmem:[#allocation2 + $0x48] sm:$0xff]
      %v2373 = vld [vmem:[#allocation2 + $0x50] sm:$0xff]
      %v2374 = vld [vmem:[#allocation2 + $0x58] sm:$0xff]
      %v2375 = vld [vmem:[#allocation2 + $0x60] sm:$0xff]
      %v2376 = vld [vmem:[#allocation2 + $0x68] sm:$0xff]
      %v2377 = vld [vmem:[#allocation2 + $0x70] sm:$0xff]
      %v2378 = vld [vmem:[#allocation2 + $0x78] sm:$0xff]
      %v2379 = vld [vmem:[#allocation2 + $0x80] sm:$0xff]
      %v2380 = vld [vmem:[#allocation2 + $0x88] sm:$0xff]
      %v2381 = vld [vmem:[#allocation2 + $0x90] sm:$0xff]
      %v2382 = vld [vmem:[#allocation2 + $0x98] sm:$0xff]
      %v2383 = vld [vmem:[#allocation2 + $0xa0] sm:$0xff]
      %v2384 = vld [vmem:[#allocation2 + $0xa8] sm:$0xff]
      %v2385 = vld [vmem:[#allocation2 + $0xb0] sm:$0xff]
      %v2386 = vld [vmem:[#allocation2 + $0xb8] sm:$0xff]
      %v2387 = vld [vmem:[#allocation2 + $0xc0] sm:$0xff]
      %v2388 = vld [vmem:[#allocation2 + $0xc8] sm:$0xff]
      %v2389 = vld [vmem:[#allocation2 + $0xd0] sm:$0xff]
      %v2390 = vld [vmem:[#allocation2 + $0xd8] sm:$0x3f]
      %v2391 = vadd.f32 %v2363, %v2253
      %v2392 = vadd.f32 %v2364, %v2256
      %v2393 = vadd.f32 %v2365, %v2261
      %v2394 = vadd.f32 %v2366, %v2264
      %v2395 = vadd.f32 %v2367, %v2269
      %v2396 = vadd.f32 %v2368, %v2272
      %v2397 = vadd.f32 %v2369, %v2277
      %v2398 = vadd.f32 %v2370, %v2280
      %v2399 = vadd.f32 %v2371, %v2285
      %v2400 = vadd.f32 %v2372, %v2288
      %v2401 = vadd.f32 %v2373, %v2293
      %v2402 = vadd.f32 %v2374, %v2296
      %v2403 = vadd.f32 %v2375, %v2301
      %v2404 = vadd.f32 %v2376, %v2304
      %v2405 = vadd.f32 %v2377, %v2309
      %v2406 = vadd.f32 %v2378, %v2312
      %v2407 = vadd.f32 %v2379, %v2317
      %v2408 = vadd.f32 %v2380, %v2320
      %v2409 = vadd.f32 %v2381, %v2325
      %v2410 = vadd.f32 %v2382, %v2328
      %v2411 = vadd.f32 %v2383, %v2333
      %v2412 = vadd.f32 %v2384, %v2336
      %v2413 = vadd.f32 %v2385, %v2341
      %v2414 = vadd.f32 %v2386, %v2344
      %v2415 = vadd.f32 %v2387, %v2349
      %v2416 = vadd.f32 %v2388, %v2352
      %v2417 = vadd.f32 %v2389, %v2357
      %v2418 = vadd.f32 %v2390, %v2360
      %2419 = vst [vmem:[#allocation2] sm:$0xff] %v2391
      %2420 = vst [vmem:[#allocation2 + $0x8] sm:$0xff] %v2392
      %2421 = vst [vmem:[#allocation2 + $0x10] sm:$0xff] %v2393
      %2422 = vst [vmem:[#allocation2 + $0x18] sm:$0xff] %v2394
      %2423 = vst [vmem:[#allocation2 + $0x20] sm:$0xff] %v2395
      %2424 = vst [vmem:[#allocation2 + $0x28] sm:$0xff] %v2396
      %2425 = vst [vmem:[#allocation2 + $0x30] sm:$0xff] %v2397
      %2426 = vst [vmem:[#allocation2 + $0x38] sm:$0xff] %v2398
      %2427 = vst [vmem:[#allocation2 + $0x40] sm:$0xff] %v2399
      %2428 = vst [vmem:[#allocation2 + $0x48] sm:$0xff] %v2400
      %2429 = vst [vmem:[#allocation2 + $0x50] sm:$0xff] %v2401
      %2430 = vst [vmem:[#allocation2 + $0x58] sm:$0xff] %v2402
      %2431 = vst [vmem:[#allocation2 + $0x60] sm:$0xff] %v2403
      %2432 = vst [vmem:[#allocation2 + $0x68] sm:$0xff] %v2404
      %2433 = vst [vmem:[#allocation2 + $0x70] sm:$0xff] %v2405
      %2434 = vst [vmem:[#allocation2 + $0x78] sm:$0xff] %v2406
      %2435 = vst [vmem:[#allocation2 + $0x80] sm:$0xff] %v2407
      %2436 = vst [vmem:[#allocation2 + $0x88] sm:$0xff] %v2408
      %2437 = vst [vmem:[#allocation2 + $0x90] sm:$0xff] %v2409
      %2438 = vst [vmem:[#allocation2 + $0x98] sm:$0xff] %v2410
      %2439 = vst [vmem:[#allocation2 + $0xa0] sm:$0xff] %v2411
      %2440 = vst [vmem:[#allocation2 + $0xa8] sm:$0xff] %v2412
      %2441 = vst [vmem:[#allocation2 + $0xb0] sm:$0xff] %v2413
      %2442 = vst [vmem:[#allocation2 + $0xb8] sm:$0xff] %v2414
      %2443 = vst [vmem:[#allocation2 + $0xc0] sm:$0xff] %v2415
      %2444 = vst [vmem:[#allocation2 + $0xc8] sm:$0xff] %v2416
      %2445 = vst [vmem:[#allocation2 + $0xd0] sm:$0xff] %v2417
      %2446 = vst [vmem:[#allocation2 + $0xd8] sm:$0x3f] %v2418
      %v2447 = vld [vmem:[%s206 + $0x8] sm:$0xe]
      %v2448 = vld [vmem:[%s206 + $0xc] sm:$0xf]
      %v2449 = vld [vmem:[%s206 + $0x10] sm:$0xf]
      %v2450 = vld [vmem:[%s206 + $0x14] sm:$0xf]
      %v2451 = vld [vmem:[%s206 + $0x18] sm:$0xf]
      %v2452 = vld [vmem:[%s206 + $0x1c] sm:$0xf]
      %v2453 = vld [vmem:[%s206 + $0x20] sm:$0xf]
      %v2454 = vld [vmem:[%s206 + $0x24] sm:$0xf]
      %v2455 = vld [vmem:[%s206 + $0x28] sm:$0xf]
      %v2456 = vld [vmem:[%s206 + $0x2c] sm:$0xf]
      %v2457 = vld [vmem:[%s206 + $0x30] sm:$0xf]
      %v2458 = vld [vmem:[%s206 + $0x34] sm:$0xf]
      %v2459 = vld [vmem:[%s206 + $0x38] sm:$0xf]
      %v2460 = vld [vmem:[%s206 + $0x3c] sm:$0xf]
      %v2461 = vld [vmem:[%s206 + $0x40] sm:$0xf]
      %v2462 = vld [vmem:[%s206 + $0x44] sm:$0xf]
      %v2463 = vld [vmem:[%s206 + $0x48] sm:$0xf]
      %v2464 = vld [vmem:[%s206 + $0x4c] sm:$0xf]
      %v2465 = vld [vmem:[%s206 + $0x50] sm:$0xf]
      %v2466 = vld [vmem:[%s206 + $0x54] sm:$0xf]
      %v2467 = vld [vmem:[%s206 + $0x58] sm:$0xf]
      %v2468 = vld [vmem:[%s206 + $0x5c] sm:$0xf]
      %v2469 = vld [vmem:[%s206 + $0x60] sm:$0xf]
      %v2470 = vld [vmem:[%s206 + $0x64] sm:$0xf]
      %v2471 = vld [vmem:[%s206 + $0x68] sm:$0xf]
      %v2472 = vld [vmem:[%s206 + $0x6c] sm:$0xf]
      %v2473 = vld [vmem:[%s206 + $0x70] sm:$0xf]
      %v2474 = vld [vmem:[%s206 + $0x74] sm:$0xf]
      %s2475 = scalar_lea.vmem %s210, 320
      %v2476 = vld [vmem:[%s2475] sm:$0xf]
      %v2477 = vld [vmem:[%s2475 + $0x4] sm:$0xf]
      %v2478 = vld [vmem:[%s2475 + $0x8] sm:$0xf]
      %v2479 = vld [vmem:[%s2475 + $0xc] sm:$0xf]
      %v2480 = vld [vmem:[%s2475 + $0x10] sm:$0xf]
      %v2481 = vld [vmem:[%s2475 + $0x14] sm:$0xf]
      %v2482 = vld [vmem:[%s2475 + $0x18] sm:$0xf]
      %v2483 = vld [vmem:[%s2475 + $0x1c] sm:$0xf]
      %v2484 = vld [vmem:[%s2475 + $0x20] sm:$0xf]
      %v2485 = vld [vmem:[%s2475 + $0x24] sm:$0xf]
      %v2486 = vld [vmem:[%s2475 + $0x28] sm:$0xf]
      %v2487 = vld [vmem:[%s2475 + $0x2c] sm:$0xf]
      %v2488 = vld [vmem:[%s2475 + $0x30] sm:$0xf]
      %v2489 = vld [vmem:[%s2475 + $0x34] sm:$0xf]
      %v2490 = vld [vmem:[%s2475 + $0x38] sm:$0xf]
      %v2491 = vld [vmem:[%s2475 + $0x3c] sm:$0xf]
      %v2520 = vunpack.c.l.b16 %v2447
      %v2521 = vunpack.c.l.b16 %v2448
      %v2522 = vunpack.c.l.b16 %v2449
      %v2523 = vunpack.c.l.b16 %v2450
      %v2524 = vunpack.c.l.b16 %v2451
      %v2525 = vunpack.c.l.b16 %v2452
      %v2526 = vunpack.c.l.b16 %v2453
      %v2527 = vunpack.c.l.b16 %v2454
      %v2528 = vunpack.c.l.b16 %v2455
      %v2529 = vunpack.c.l.b16 %v2456
      %v2530 = vunpack.c.l.b16 %v2457
      %v2531 = vunpack.c.l.b16 %v2458
      %v2532 = vunpack.c.l.b16 %v2459
      %v2533 = vunpack.c.l.b16 %v2460
      %v2534 = vunpack.c.l.b16 %v2461
      %v2535 = vunpack.c.l.b16 %v2462
      %v2536 = vunpack.c.l.b16 %v2463
      %v2537 = vunpack.c.l.b16 %v2464
      %v2538 = vunpack.c.l.b16 %v2465
      %v2539 = vunpack.c.l.b16 %v2466
      %v2540 = vunpack.c.l.b16 %v2467
      %v2541 = vunpack.c.l.b16 %v2468
      %v2542 = vunpack.c.l.b16 %v2469
      %v2543 = vunpack.c.l.b16 %v2470
      %v2544 = vunpack.c.l.b16 %v2471
      %v2545 = vunpack.c.l.b16 %v2472
      %v2546 = vunpack.c.l.b16 %v2473
      %v2547 = vunpack.c.l.b16 %v2474
      %v2548 = vpack.c.b16 %v2521, %v2520
      %v2549 = vpack.c.b16 %v2523, %v2522
      %v2550 = vpack.c.b16 %v2525, %v2524
      %v2551 = vpack.c.b16 %v2527, %v2526
      %v2552 = vpack.c.b16 %v2529, %v2528
      %v2553 = vpack.c.b16 %v2531, %v2530
      %v2554 = vpack.c.b16 %v2533, %v2532
      %v2555 = vpack.c.b16 %v2535, %v2534
      %v2556 = vpack.c.b16 %v2537, %v2536
      %v2557 = vpack.c.b16 %v2539, %v2538
      %v2558 = vpack.c.b16 %v2541, %v2540
      %v2559 = vpack.c.b16 %v2543, %v2542
      %v2560 = vpack.c.b16 %v2545, %v2544
      %v2561 = vpack.c.b16 %v2547, %v2546
      %v2562 = vrot.slane %v2548, 1
      %v2563 = vrot.slane %v2549, 1
      %v2564 = vsel %vm1205, %v2562, %v2563
      %v2565 = vrot.slane %v2550, 1
      %v2566 = vsel %vm1205, %v2563, %v2565
      %v2567 = vrot.slane %v2551, 1
      %v2568 = vsel %vm1205, %v2565, %v2567
      %v2569 = vrot.slane %v2552, 1
      %v2570 = vsel %vm1205, %v2567, %v2569
      %v2571 = vrot.slane %v2553, 1
      %v2572 = vsel %vm1205, %v2569, %v2571
      %v2573 = vrot.slane %v2554, 1
      %v2574 = vsel %vm1205, %v2571, %v2573
      %v2575 = vrot.slane %v2555, 1
      %v2576 = vsel %vm1205, %v2573, %v2575
      %v2577 = vrot.slane %v2556, 1
      %v2578 = vsel %vm1205, %v2575, %v2577
      %v2579 = vrot.slane %v2557, 1
      %v2580 = vsel %vm1205, %v2577, %v2579
      %v2581 = vrot.slane %v2558, 1
      %v2582 = vsel %vm1205, %v2579, %v2581
      %v2583 = vrot.slane %v2559, 1
      %v2584 = vsel %vm1205, %v2581, %v2583
      %v2585 = vrot.slane %v2560, 1
      %v2586 = vsel %vm1205, %v2583, %v2585
      %v2587 = vrot.slane %v2561, 1
      %v2588 = vsel %vm1205, %v2585, %v2587
      %v2619 = vunpack.c.l.b16 %v2476
      %v2620 = vunpack.c.l.b16 %v2477
      %v2621 = vunpack.c.l.b16 %v2478
      %v2622 = vunpack.c.l.b16 %v2479
      %v2623 = vunpack.c.l.b16 %v2480
      %v2624 = vunpack.c.l.b16 %v2481
      %v2625 = vunpack.c.l.b16 %v2482
      %v2626 = vunpack.c.l.b16 %v2483
      %v2627 = vunpack.c.l.b16 %v2484
      %v2628 = vunpack.c.l.b16 %v2485
      %v2629 = vunpack.c.l.b16 %v2486
      %v2630 = vunpack.c.l.b16 %v2487
      %v2631 = vunpack.c.l.b16 %v2488
      %v2632 = vunpack.c.l.b16 %v2489
      %v2633 = vunpack.c.l.b16 %v2490
      %v2634 = vunpack.c.l.b16 %v2491
      %v2635 = vpack.c.b16 %v2620, %v2619
      %v2636 = vpack.c.b16 %v2622, %v2621
      %v2637 = vpack.c.b16 %v2624, %v2623
      %v2638 = vpack.c.b16 %v2626, %v2625
      %v2639 = vpack.c.b16 %v2628, %v2627
      %v2640 = vpack.c.b16 %v2630, %v2629
      %v2641 = vpack.c.b16 %v2632, %v2631
      %v2642 = vpack.c.b16 %v2634, %v2633
      %2651 = vmatprep.subr.bf16.mxu0 0
      %2652 = vmatpush1.bf16.msra.mxu0 %v2642
      %2653 = vmatprep.subr.bf16.mxu0 0
      %2654 = vmatpush1.bf16.msra.mxu0 %v2641
      %2655 = vmatprep.subr.bf16.mxu0 0
      %2656 = vmatpush1.bf16.msra.mxu0 %v2640
      %2657 = vmatprep.subr.bf16.mxu0 0
      %2658 = vmatpush1.bf16.msra.mxu0 %v2639
      %2659 = vmatprep.subr.bf16.mxu0 0
      %2660 = vmatpush1.bf16.msra.mxu0 %v2638
      %2661 = vmatprep.subr.bf16.mxu0 0
      %2662 = vmatpush1.bf16.msra.mxu0 %v2637
      %2663 = vmatprep.subr.bf16.mxu0 0
      %2664 = vmatpush1.bf16.msra.mxu0 %v2636
      %2665 = vmatprep.subr.bf16.mxu0 0
      %2666 = vmatpush1.bf16.msra.mxu0 %v2635
      %2667 = vmatprep.subr.bf16.mxu0 0
      %2668 = vmatpush2.bf16.msra.mxu0 0
      %2669 = vmatprep.subr.bf16.mxu0 0
      %2670 = vmatpush2.bf16.msra.mxu0 0
      %2671 = vmatprep.subr.bf16.mxu0 0
      %2672 = vmatpush2.bf16.msra.mxu0 0
      %2673 = vmatprep.subr.bf16.mxu0 0
      %2674 = vmatpush2.bf16.msra.mxu0 0
      %2675 = vmatprep.subr.bf16.mxu0 0
      %2676 = vmatpush2.bf16.msra.mxu0 0
      %2677 = vmatprep.subr.bf16.mxu0 0
      %2678 = vmatpush2.bf16.msra.mxu0 0
      %2679 = vmatprep.subr.bf16.mxu0 0
      %2680 = vmatpush2.bf16.msra.mxu0 0
      %2681 = vmatprep.subr.bf16.mxu0 0
      %2682 = vmatpush2.bf16.msra.mxu0 0
      %2683 = vmatprep.mubr.bf16.mxu0 0
      %2684 = vmatmul.mubr.bf16.gmra.mxu0 %v2564
      %v2685 = vpop.f32.mrf.mxu0
      %v2686 = vadd.f32 0.0, %v2685
      %v2687 = vpop.f32.mrf.mxu0
      %v2688 = vpop.f32.mrf.mxu0
      %v2689 = vadd.f32 0.0, %v2688
      %v2690 = vpop.f32.mrf.mxu0
      %2691 = vmatprep.mubr.bf16.mxu0 0
      %2692 = vmatmul.mubr.bf16.gmra.mxu0 %v2566
      %v2693 = vpop.f32.mrf.mxu0
      %v2694 = vadd.f32 0.0, %v2693
      %v2695 = vpop.f32.mrf.mxu0
      %v2696 = vpop.f32.mrf.mxu0
      %v2697 = vadd.f32 0.0, %v2696
      %v2698 = vpop.f32.mrf.mxu0
      %2699 = vmatprep.mubr.bf16.mxu0 0
      %2700 = vmatmul.mubr.bf16.gmra.mxu0 %v2568
      %v2701 = vpop.f32.mrf.mxu0
      %v2702 = vadd.f32 0.0, %v2701
      %v2703 = vpop.f32.mrf.mxu0
      %v2704 = vpop.f32.mrf.mxu0
      %v2705 = vadd.f32 0.0, %v2704
      %v2706 = vpop.f32.mrf.mxu0
      %2707 = vmatprep.mubr.bf16.mxu0 0
      %2708 = vmatmul.mubr.bf16.gmra.mxu0 %v2570
      %v2709 = vpop.f32.mrf.mxu0
      %v2710 = vadd.f32 0.0, %v2709
      %v2711 = vpop.f32.mrf.mxu0
      %v2712 = vpop.f32.mrf.mxu0
      %v2713 = vadd.f32 0.0, %v2712
      %v2714 = vpop.f32.mrf.mxu0
      %2715 = vmatprep.mubr.bf16.mxu0 0
      %2716 = vmatmul.mubr.bf16.gmra.mxu0 %v2572
      %v2717 = vpop.f32.mrf.mxu0
      %v2718 = vadd.f32 0.0, %v2717
      %v2719 = vpop.f32.mrf.mxu0
      %v2720 = vpop.f32.mrf.mxu0
      %v2721 = vadd.f32 0.0, %v2720
      %v2722 = vpop.f32.mrf.mxu0
      %2723 = vmatprep.mubr.bf16.mxu0 0
      %2724 = vmatmul.mubr.bf16.gmra.mxu0 %v2574
      %v2725 = vpop.f32.mrf.mxu0
      %v2726 = vadd.f32 0.0, %v2725
      %v2727 = vpop.f32.mrf.mxu0
      %v2728 = vpop.f32.mrf.mxu0
      %v2729 = vadd.f32 0.0, %v2728
      %v2730 = vpop.f32.mrf.mxu0
      %2731 = vmatprep.mubr.bf16.mxu0 0
      %2732 = vmatmul.mubr.bf16.gmra.mxu0 %v2576
      %v2733 = vpop.f32.mrf.mxu0
      %v2734 = vadd.f32 0.0, %v2733
      %v2735 = vpop.f32.mrf.mxu0
      %v2736 = vpop.f32.mrf.mxu0
      %v2737 = vadd.f32 0.0, %v2736
      %v2738 = vpop.f32.mrf.mxu0
      %2739 = vmatprep.mubr.bf16.mxu0 0
      %2740 = vmatmul.mubr.bf16.gmra.mxu0 %v2578
      %v2741 = vpop.f32.mrf.mxu0
      %v2742 = vadd.f32 0.0, %v2741
      %v2743 = vpop.f32.mrf.mxu0
      %v2744 = vpop.f32.mrf.mxu0
      %v2745 = vadd.f32 0.0, %v2744
      %v2746 = vpop.f32.mrf.mxu0
      %2747 = vmatprep.mubr.bf16.mxu0 0
      %2748 = vmatmul.mubr.bf16.gmra.mxu0 %v2580
      %v2749 = vpop.f32.mrf.mxu0
      %v2750 = vadd.f32 0.0, %v2749
      %v2751 = vpop.f32.mrf.mxu0
      %v2752 = vpop.f32.mrf.mxu0
      %v2753 = vadd.f32 0.0, %v2752
      %v2754 = vpop.f32.mrf.mxu0
      %2755 = vmatprep.mubr.bf16.mxu0 0
      %2756 = vmatmul.mubr.bf16.gmra.mxu0 %v2582
      %v2757 = vpop.f32.mrf.mxu0
      %v2758 = vadd.f32 0.0, %v2757
      %v2759 = vpop.f32.mrf.mxu0
      %v2760 = vpop.f32.mrf.mxu0
      %v2761 = vadd.f32 0.0, %v2760
      %v2762 = vpop.f32.mrf.mxu0
      %2763 = vmatprep.mubr.bf16.mxu0 0
      %2764 = vmatmul.mubr.bf16.gmra.mxu0 %v2584
      %v2765 = vpop.f32.mrf.mxu0
      %v2766 = vadd.f32 0.0, %v2765
      %v2767 = vpop.f32.mrf.mxu0
      %v2768 = vpop.f32.mrf.mxu0
      %v2769 = vadd.f32 0.0, %v2768
      %v2770 = vpop.f32.mrf.mxu0
      %2771 = vmatprep.mubr.bf16.mxu0 0
      %2772 = vmatmul.mubr.bf16.gmra.mxu0 %v2586
      %v2773 = vpop.f32.mrf.mxu0
      %v2774 = vadd.f32 0.0, %v2773
      %v2775 = vpop.f32.mrf.mxu0
      %v2776 = vpop.f32.mrf.mxu0
      %v2777 = vadd.f32 0.0, %v2776
      %v2778 = vpop.f32.mrf.mxu0
      %2779 = vmatprep.mubr.bf16.mxu0 0
      %2780 = vmatmul.mubr.bf16.gmra.mxu0 %v2588
      %v2781 = vpop.f32.mrf.mxu0
      %v2782 = vadd.f32 0.0, %v2781
      %v2783 = vpop.f32.mrf.mxu0
      %v2784 = vpop.f32.mrf.mxu0
      %v2785 = vadd.f32 0.0, %v2784
      %v2786 = vpop.f32.mrf.mxu0
      %2787 = vmatprep.mubr.bf16.mxu0 0
      %2788 = vmatmul.mubr.bf16.gmra.mxu0 %v2587
      %v2789 = vpop.f32.mrf.mxu0
      %v2790 = vadd.f32 0.0, %v2789
      %v2791 = vpop.f32.mrf.mxu0
      %v2792 = vpop.f32.mrf.mxu0
      %v2793 = vadd.f32 0.0, %v2792
      %v2794 = vpop.f32.mrf.mxu0
      %2795 = vdwg.mxu0
      %v2796 = vld [vmem:[#allocation2] sm:$0xff]
      %v2797 = vld [vmem:[#allocation2 + $0x8] sm:$0xff]
      %v2798 = vld [vmem:[#allocation2 + $0x10] sm:$0xff]
      %v2799 = vld [vmem:[#allocation2 + $0x18] sm:$0xff]
      %v2800 = vld [vmem:[#allocation2 + $0x20] sm:$0xff]
      %v2801 = vld [vmem:[#allocation2 + $0x28] sm:$0xff]
      %v2802 = vld [vmem:[#allocation2 + $0x30] sm:$0xff]
      %v2803 = vld [vmem:[#allocation2 + $0x38] sm:$0xff]
      %v2804 = vld [vmem:[#allocation2 + $0x40] sm:$0xff]
      %v2805 = vld [vmem:[#allocation2 + $0x48] sm:$0xff]
      %v2806 = vld [vmem:[#allocation2 + $0x50] sm:$0xff]
      %v2807 = vld [vmem:[#allocation2 + $0x58] sm:$0xff]
      %v2808 = vld [vmem:[#allocation2 + $0x60] sm:$0xff]
      %v2809 = vld [vmem:[#allocation2 + $0x68] sm:$0xff]
      %v2810 = vld [vmem:[#allocation2 + $0x70] sm:$0xff]
      %v2811 = vld [vmem:[#allocation2 + $0x78] sm:$0xff]
      %v2812 = vld [vmem:[#allocation2 + $0x80] sm:$0xff]
      %v2813 = vld [vmem:[#allocation2 + $0x88] sm:$0xff]
      %v2814 = vld [vmem:[#allocation2 + $0x90] sm:$0xff]
      %v2815 = vld [vmem:[#allocation2 + $0x98] sm:$0xff]
      %v2816 = vld [vmem:[#allocation2 + $0xa0] sm:$0xff]
      %v2817 = vld [vmem:[#allocation2 + $0xa8] sm:$0xff]
      %v2818 = vld [vmem:[#allocation2 + $0xb0] sm:$0xff]
      %v2819 = vld [vmem:[#allocation2 + $0xb8] sm:$0xff]
      %v2820 = vld [vmem:[#allocation2 + $0xc0] sm:$0xff]
      %v2821 = vld [vmem:[#allocation2 + $0xc8] sm:$0xff]
      %v2822 = vld [vmem:[#allocation2 + $0xd0] sm:$0xff]
      %v2823 = vld [vmem:[#allocation2 + $0xd8] sm:$0x3f]
      %v2824 = vadd.f32 %v2796, %v2686
      %v2825 = vadd.f32 %v2797, %v2689
      %v2826 = vadd.f32 %v2798, %v2694
      %v2827 = vadd.f32 %v2799, %v2697
      %v2828 = vadd.f32 %v2800, %v2702
      %v2829 = vadd.f32 %v2801, %v2705
      %v2830 = vadd.f32 %v2802, %v2710
      %v2831 = vadd.f32 %v2803, %v2713
      %v2832 = vadd.f32 %v2804, %v2718
      %v2833 = vadd.f32 %v2805, %v2721
      %v2834 = vadd.f32 %v2806, %v2726
      %v2835 = vadd.f32 %v2807, %v2729
      %v2836 = vadd.f32 %v2808, %v2734
      %v2837 = vadd.f32 %v2809, %v2737
      %v2838 = vadd.f32 %v2810, %v2742
      %v2839 = vadd.f32 %v2811, %v2745
      %v2840 = vadd.f32 %v2812, %v2750
      %v2841 = vadd.f32 %v2813, %v2753
      %v2842 = vadd.f32 %v2814, %v2758
      %v2843 = vadd.f32 %v2815, %v2761
      %v2844 = vadd.f32 %v2816, %v2766
      %v2845 = vadd.f32 %v2817, %v2769
      %v2846 = vadd.f32 %v2818, %v2774
      %v2847 = vadd.f32 %v2819, %v2777
      %v2848 = vadd.f32 %v2820, %v2782
      %v2849 = vadd.f32 %v2821, %v2785
      %v2850 = vadd.f32 %v2822, %v2790
      %v2851 = vadd.f32 %v2823, %v2793
      %2852 = vst [vmem:[#allocation2] sm:$0xff] %v2824
      %2853 = vst [vmem:[#allocation2 + $0x8] sm:$0xff] %v2825
      %2854 = vst [vmem:[#allocation2 + $0x10] sm:$0xff] %v2826
      %2855 = vst [vmem:[#allocation2 + $0x18] sm:$0xff] %v2827
      %2856 = vst [vmem:[#allocation2 + $0x20] sm:$0xff] %v2828
      %2857 = vst [vmem:[#allocation2 + $0x28] sm:$0xff] %v2829
      %2858 = vst [vmem:[#allocation2 + $0x30] sm:$0xff] %v2830
      %2859 = vst [vmem:[#allocation2 + $0x38] sm:$0xff] %v2831
      %2860 = vst [vmem:[#allocation2 + $0x40] sm:$0xff] %v2832
      %2861 = vst [vmem:[#allocation2 + $0x48] sm:$0xff] %v2833
      %2862 = vst [vmem:[#allocation2 + $0x50] sm:$0xff] %v2834
      %2863 = vst [vmem:[#allocation2 + $0x58] sm:$0xff] %v2835
      %2864 = vst [vmem:[#allocation2 + $0x60] sm:$0xff] %v2836
      %2865 = vst [vmem:[#allocation2 + $0x68] sm:$0xff] %v2837
      %2866 = vst [vmem:[#allocation2 + $0x70] sm:$0xff] %v2838
      %2867 = vst [vmem:[#allocation2 + $0x78] sm:$0xff] %v2839
      %2868 = vst [vmem:[#allocation2 + $0x80] sm:$0xff] %v2840
      %2869 = vst [vmem:[#allocation2 + $0x88] sm:$0xff] %v2841
      %2870 = vst [vmem:[#allocation2 + $0x90] sm:$0xff] %v2842
      %2871 = vst [vmem:[#allocation2 + $0x98] sm:$0xff] %v2843
      %2872 = vst [vmem:[#allocation2 + $0xa0] sm:$0xff] %v2844
      %2873 = vst [vmem:[#allocation2 + $0xa8] sm:$0xff] %v2845
      %2874 = vst [vmem:[#allocation2 + $0xb0] sm:$0xff] %v2846
      %2875 = vst [vmem:[#allocation2 + $0xb8] sm:$0xff] %v2847
      %2876 = vst [vmem:[#allocation2 + $0xc0] sm:$0xff] %v2848
      %2877 = vst [vmem:[#allocation2 + $0xc8] sm:$0xff] %v2849
      %2878 = vst [vmem:[#allocation2 + $0xd0] sm:$0xff] %v2850
      %2879 = vst [vmem:[#allocation2 + $0xd8] sm:$0x3f] %v2851
      %v2880 = vld [vmem:[%s206 + $0x10] sm:$0xf]
      %v2881 = vld [vmem:[%s206 + $0x14] sm:$0xf]
      %v2882 = vld [vmem:[%s206 + $0x18] sm:$0xf]
      %v2883 = vld [vmem:[%s206 + $0x1c] sm:$0xf]
      %v2884 = vld [vmem:[%s206 + $0x20] sm:$0xf]
      %v2885 = vld [vmem:[%s206 + $0x24] sm:$0xf]
      %v2886 = vld [vmem:[%s206 + $0x28] sm:$0xf]
      %v2887 = vld [vmem:[%s206 + $0x2c] sm:$0xf]
      %v2888 = vld [vmem:[%s206 + $0x30] sm:$0xf]
      %v2889 = vld [vmem:[%s206 + $0x34] sm:$0xf]
      %v2890 = vld [vmem:[%s206 + $0x38] sm:$0xf]
      %v2891 = vld [vmem:[%s206 + $0x3c] sm:$0xf]
      %v2892 = vld [vmem:[%s206 + $0x40] sm:$0xf]
      %v2893 = vld [vmem:[%s206 + $0x44] sm:$0xf]
      %v2894 = vld [vmem:[%s206 + $0x48] sm:$0xf]
      %v2895 = vld [vmem:[%s206 + $0x4c] sm:$0xf]
      %v2896 = vld [vmem:[%s206 + $0x50] sm:$0xf]
      %v2897 = vld [vmem:[%s206 + $0x54] sm:$0xf]
      %v2898 = vld [vmem:[%s206 + $0x58] sm:$0xf]
      %v2899 = vld [vmem:[%s206 + $0x5c] sm:$0xf]
      %v2900 = vld [vmem:[%s206 + $0x60] sm:$0xf]
      %v2901 = vld [vmem:[%s206 + $0x64] sm:$0xf]
      %v2902 = vld [vmem:[%s206 + $0x68] sm:$0xf]
      %v2903 = vld [vmem:[%s206 + $0x6c] sm:$0xf]
      %v2904 = vld [vmem:[%s206 + $0x70] sm:$0xf]
      %v2905 = vld [vmem:[%s206 + $0x74] sm:$0xf]
      %v2906 = vld [vmem:[%s206 + $0x78] sm:$0xf]
      %v2907 = vld [vmem:[%s206 + $0x7c] sm:$0x7]
      %s2908 = scalar_lea.vmem %s210, 384
      %v2909 = vld [vmem:[%s2908] sm:$0xf]
      %v2910 = vld [vmem:[%s2908 + $0x4] sm:$0xf]
      %v2911 = vld [vmem:[%s2908 + $0x8] sm:$0xf]
      %v2912 = vld [vmem:[%s2908 + $0xc] sm:$0xf]
      %v2913 = vld [vmem:[%s2908 + $0x10] sm:$0xf]
      %v2914 = vld [vmem:[%s2908 + $0x14] sm:$0xf]
      %v2915 = vld [vmem:[%s2908 + $0x18] sm:$0xf]
      %v2916 = vld [vmem:[%s2908 + $0x1c] sm:$0xf]
      %v2917 = vld [vmem:[%s2908 + $0x20] sm:$0xf]
      %v2918 = vld [vmem:[%s2908 + $0x24] sm:$0xf]
      %v2919 = vld [vmem:[%s2908 + $0x28] sm:$0xf]
      %v2920 = vld [vmem:[%s2908 + $0x2c] sm:$0xf]
      %v2921 = vld [vmem:[%s2908 + $0x30] sm:$0xf]
      %v2922 = vld [vmem:[%s2908 + $0x34] sm:$0xf]
      %v2923 = vld [vmem:[%s2908 + $0x38] sm:$0xf]
      %v2924 = vld [vmem:[%s2908 + $0x3c] sm:$0xf]
      %v2953 = vunpack.c.l.b16 %v2880
      %v2954 = vunpack.c.l.b16 %v2881
      %v2955 = vunpack.c.l.b16 %v2882
      %v2956 = vunpack.c.l.b16 %v2883
      %v2957 = vunpack.c.l.b16 %v2884
      %v2958 = vunpack.c.l.b16 %v2885
      %v2959 = vunpack.c.l.b16 %v2886
      %v2960 = vunpack.c.l.b16 %v2887
      %v2961 = vunpack.c.l.b16 %v2888
      %v2962 = vunpack.c.l.b16 %v2889
      %v2963 = vunpack.c.l.b16 %v2890
      %v2964 = vunpack.c.l.b16 %v2891
      %v2965 = vunpack.c.l.b16 %v2892
      %v2966 = vunpack.c.l.b16 %v2893
      %v2967 = vunpack.c.l.b16 %v2894
      %v2968 = vunpack.c.l.b16 %v2895
      %v2969 = vunpack.c.l.b16 %v2896
      %v2970 = vunpack.c.l.b16 %v2897
      %v2971 = vunpack.c.l.b16 %v2898
      %v2972 = vunpack.c.l.b16 %v2899
      %v2973 = vunpack.c.l.b16 %v2900
      %v2974 = vunpack.c.l.b16 %v2901
      %v2975 = vunpack.c.l.b16 %v2902
      %v2976 = vunpack.c.l.b16 %v2903
      %v2977 = vunpack.c.l.b16 %v2904
      %v2978 = vunpack.c.l.b16 %v2905
      %v2979 = vunpack.c.l.b16 %v2906
      %v2980 = vunpack.c.l.b16 %v2907
      %v2981 = vpack.c.b16 %v2954, %v2953
      %v2982 = vpack.c.b16 %v2956, %v2955
      %v2983 = vpack.c.b16 %v2958, %v2957
      %v2984 = vpack.c.b16 %v2960, %v2959
      %v2985 = vpack.c.b16 %v2962, %v2961
      %v2986 = vpack.c.b16 %v2964, %v2963
      %v2987 = vpack.c.b16 %v2966, %v2965
      %v2988 = vpack.c.b16 %v2968, %v2967
      %v2989 = vpack.c.b16 %v2970, %v2969
      %v2990 = vpack.c.b16 %v2972, %v2971
      %v2991 = vpack.c.b16 %v2974, %v2973
      %v2992 = vpack.c.b16 %v2976, %v2975
      %v2993 = vpack.c.b16 %v2978, %v2977
      %v2994 = vpack.c.b16 %v2980, %v2979
      %v3025 = vunpack.c.l.b16 %v2909
      %v3026 = vunpack.c.l.b16 %v2910
      %v3027 = vunpack.c.l.b16 %v2911
      %v3028 = vunpack.c.l.b16 %v2912
      %v3029 = vunpack.c.l.b16 %v2913
      %v3030 = vunpack.c.l.b16 %v2914
      %v3031 = vunpack.c.l.b16 %v2915
      %v3032 = vunpack.c.l.b16 %v2916
      %v3033 = vunpack.c.l.b16 %v2917
      %v3034 = vunpack.c.l.b16 %v2918
      %v3035 = vunpack.c.l.b16 %v2919
      %v3036 = vunpack.c.l.b16 %v2920
      %v3037 = vunpack.c.l.b16 %v2921
      %v3038 = vunpack.c.l.b16 %v2922
      %v3039 = vunpack.c.l.b16 %v2923
      %v3040 = vunpack.c.l.b16 %v2924
      %v3041 = vpack.c.b16 %v3026, %v3025
      %v3042 = vpack.c.b16 %v3028, %v3027
      %v3043 = vpack.c.b16 %v3030, %v3029
      %v3044 = vpack.c.b16 %v3032, %v3031
      %v3045 = vpack.c.b16 %v3034, %v3033
      %v3046 = vpack.c.b16 %v3036, %v3035
      %v3047 = vpack.c.b16 %v3038, %v3037
      %v3048 = vpack.c.b16 %v3040, %v3039
      %3057 = vmatprep.subr.bf16.mxu0 0
      %3058 = vmatpush1.bf16.msra.mxu0 %v3048
      %3059 = vmatprep.subr.bf16.mxu0 0
      %3060 = vmatpush1.bf16.msra.mxu0 %v3047
      %3061 = vmatprep.subr.bf16.mxu0 0
      %3062 = vmatpush1.bf16.msra.mxu0 %v3046
      %3063 = vmatprep.subr.bf16.mxu0 0
      %3064 = vmatpush1.bf16.msra.mxu0 %v3045
      %3065 = vmatprep.subr.bf16.mxu0 0
      %3066 = vmatpush1.bf16.msra.mxu0 %v3044
      %3067 = vmatprep.subr.bf16.mxu0 0
      %3068 = vmatpush1.bf16.msra.mxu0 %v3043
      %3069 = vmatprep.subr.bf16.mxu0 0
      %3070 = vmatpush1.bf16.msra.mxu0 %v3042
      %3071 = vmatprep.subr.bf16.mxu0 0
      %3072 = vmatpush1.bf16.msra.mxu0 %v3041
      %3073 = vmatprep.subr.bf16.mxu0 0
      %3074 = vmatpush2.bf16.msra.mxu0 0
      %3075 = vmatprep.subr.bf16.mxu0 0
      %3076 = vmatpush2.bf16.msra.mxu0 0
      %3077 = vmatprep.subr.bf16.mxu0 0
      %3078 = vmatpush2.bf16.msra.mxu0 0
      %3079 = vmatprep.subr.bf16.mxu0 0
      %3080 = vmatpush2.bf16.msra.mxu0 0
      %3081 = vmatprep.subr.bf16.mxu0 0
      %3082 = vmatpush2.bf16.msra.mxu0 0
      %3083 = vmatprep.subr.bf16.mxu0 0
      %3084 = vmatpush2.bf16.msra.mxu0 0
      %3085 = vmatprep.subr.bf16.mxu0 0
      %3086 = vmatpush2.bf16.msra.mxu0 0
      %3087 = vmatprep.subr.bf16.mxu0 0
      %3088 = vmatpush2.bf16.msra.mxu0 0
      %3089 = vmatprep.mubr.bf16.mxu0 0
      %3090 = vmatmul.mubr.bf16.gmra.mxu0 %v2981
      %v3091 = vpop.f32.mrf.mxu0
      %v3092 = vadd.f32 0.0, %v3091
      %v3093 = vpop.f32.mrf.mxu0
      %v3094 = vpop.f32.mrf.mxu0
      %v3095 = vadd.f32 0.0, %v3094
      %v3096 = vpop.f32.mrf.mxu0
      %3097 = vmatprep.mubr.bf16.mxu0 0
      %3098 = vmatmul.mubr.bf16.gmra.mxu0 %v2982
      %v3099 = vpop.f32.mrf.mxu0
      %v3100 = vadd.f32 0.0, %v3099
      %v3101 = vpop.f32.mrf.mxu0
      %v3102 = vpop.f32.mrf.mxu0
      %v3103 = vadd.f32 0.0, %v3102
      %v3104 = vpop.f32.mrf.mxu0
      %3105 = vmatprep.mubr.bf16.mxu0 0
      %3106 = vmatmul.mubr.bf16.gmra.mxu0 %v2983
      %v3107 = vpop.f32.mrf.mxu0
      %v3108 = vadd.f32 0.0, %v3107
      %v3109 = vpop.f32.mrf.mxu0
      %v3110 = vpop.f32.mrf.mxu0
      %v3111 = vadd.f32 0.0, %v3110
      %v3112 = vpop.f32.mrf.mxu0
      %3113 = vmatprep.mubr.bf16.mxu0 0
      %3114 = vmatmul.mubr.bf16.gmra.mxu0 %v2984
      %v3115 = vpop.f32.mrf.mxu0
      %v3116 = vadd.f32 0.0, %v3115
      %v3117 = vpop.f32.mrf.mxu0
      %v3118 = vpop.f32.mrf.mxu0
      %v3119 = vadd.f32 0.0, %v3118
      %v3120 = vpop.f32.mrf.mxu0
      %3121 = vmatprep.mubr.bf16.mxu0 0
      %3122 = vmatmul.mubr.bf16.gmra.mxu0 %v2985
      %v3123 = vpop.f32.mrf.mxu0
      %v3124 = vadd.f32 0.0, %v3123
      %v3125 = vpop.f32.mrf.mxu0
      %v3126 = vpop.f32.mrf.mxu0
      %v3127 = vadd.f32 0.0, %v3126
      %v3128 = vpop.f32.mrf.mxu0
      %3129 = vmatprep.mubr.bf16.mxu0 0
      %3130 = vmatmul.mubr.bf16.gmra.mxu0 %v2986
      %v3131 = vpop.f32.mrf.mxu0
      %v3132 = vadd.f32 0.0, %v3131
      %v3133 = vpop.f32.mrf.mxu0
      %v3134 = vpop.f32.mrf.mxu0
      %v3135 = vadd.f32 0.0, %v3134
      %v3136 = vpop.f32.mrf.mxu0
      %3137 = vmatprep.mubr.bf16.mxu0 0
      %3138 = vmatmul.mubr.bf16.gmra.mxu0 %v2987
      %v3139 = vpop.f32.mrf.mxu0
      %v3140 = vadd.f32 0.0, %v3139
      %v3141 = vpop.f32.mrf.mxu0
      %v3142 = vpop.f32.mrf.mxu0
      %v3143 = vadd.f32 0.0, %v3142
      %v3144 = vpop.f32.mrf.mxu0
      %3145 = vmatprep.mubr.bf16.mxu0 0
      %3146 = vmatmul.mubr.bf16.gmra.mxu0 %v2988
      %v3147 = vpop.f32.mrf.mxu0
      %v3148 = vadd.f32 0.0, %v3147
      %v3149 = vpop.f32.mrf.mxu0
      %v3150 = vpop.f32.mrf.mxu0
      %v3151 = vadd.f32 0.0, %v3150
      %v3152 = vpop.f32.mrf.mxu0
      %3153 = vmatprep.mubr.bf16.mxu0 0
      %3154 = vmatmul.mubr.bf16.gmra.mxu0 %v2989
      %v3155 = vpop.f32.mrf.mxu0
      %v3156 = vadd.f32 0.0, %v3155
      %v3157 = vpop.f32.mrf.mxu0
      %v3158 = vpop.f32.mrf.mxu0
      %v3159 = vadd.f32 0.0, %v3158
      %v3160 = vpop.f32.mrf.mxu0
      %3161 = vmatprep.mubr.bf16.mxu0 0
      %3162 = vmatmul.mubr.bf16.gmra.mxu0 %v2990
      %v3163 = vpop.f32.mrf.mxu0
      %v3164 = vadd.f32 0.0, %v3163
      %v3165 = vpop.f32.mrf.mxu0
      %v3166 = vpop.f32.mrf.mxu0
      %v3167 = vadd.f32 0.0, %v3166
      %v3168 = vpop.f32.mrf.mxu0
      %3169 = vmatprep.mubr.bf16.mxu0 0
      %3170 = vmatmul.mubr.bf16.gmra.mxu0 %v2991
      %v3171 = vpop.f32.mrf.mxu0
      %v3172 = vadd.f32 0.0, %v3171
      %v3173 = vpop.f32.mrf.mxu0
      %v3174 = vpop.f32.mrf.mxu0
      %v3175 = vadd.f32 0.0, %v3174
      %v3176 = vpop.f32.mrf.mxu0
      %3177 = vmatprep.mubr.bf16.mxu0 0
      %3178 = vmatmul.mubr.bf16.gmra.mxu0 %v2992
      %v3179 = vpop.f32.mrf.mxu0
      %v3180 = vadd.f32 0.0, %v3179
      %v3181 = vpop.f32.mrf.mxu0
      %v3182 = vpop.f32.mrf.mxu0
      %v3183 = vadd.f32 0.0, %v3182
      %v3184 = vpop.f32.mrf.mxu0
      %3185 = vmatprep.mubr.bf16.mxu0 0
      %3186 = vmatmul.mubr.bf16.gmra.mxu0 %v2993
      %v3187 = vpop.f32.mrf.mxu0
      %v3188 = vadd.f32 0.0, %v3187
      %v3189 = vpop.f32.mrf.mxu0
      %v3190 = vpop.f32.mrf.mxu0
      %v3191 = vadd.f32 0.0, %v3190
      %v3192 = vpop.f32.mrf.mxu0
      %3193 = vmatprep.mubr.bf16.mxu0 0
      %3194 = vmatmul.mubr.bf16.gmra.mxu0 %v2994
      %v3195 = vpop.f32.mrf.mxu0
      %v3196 = vadd.f32 0.0, %v3195
      %v3197 = vpop.f32.mrf.mxu0
      %v3198 = vpop.f32.mrf.mxu0
      %v3199 = vadd.f32 0.0, %v3198
      %v3200 = vpop.f32.mrf.mxu0
      %3201 = vdwg.mxu0
      %v3202 = vld [vmem:[#allocation2] sm:$0xff]
      %v3203 = vld [vmem:[#allocation2 + $0x8] sm:$0xff]
      %v3204 = vld [vmem:[#allocation2 + $0x10] sm:$0xff]
      %v3205 = vld [vmem:[#allocation2 + $0x18] sm:$0xff]
      %v3206 = vld [vmem:[#allocation2 + $0x20] sm:$0xff]
      %v3207 = vld [vmem:[#allocation2 + $0x28] sm:$0xff]
      %v3208 = vld [vmem:[#allocation2 + $0x30] sm:$0xff]
      %v3209 = vld [vmem:[#allocation2 + $0x38] sm:$0xff]
      %v3210 = vld [vmem:[#allocation2 + $0x40] sm:$0xff]
      %v3211 = vld [vmem:[#allocation2 + $0x48] sm:$0xff]
      %v3212 = vld [vmem:[#allocation2 + $0x50] sm:$0xff]
      %v3213 = vld [vmem:[#allocation2 + $0x58] sm:$0xff]
      %v3214 = vld [vmem:[#allocation2 + $0x60] sm:$0xff]
      %v3215 = vld [vmem:[#allocation2 + $0x68] sm:$0xff]
      %v3216 = vld [vmem:[#allocation2 + $0x70] sm:$0xff]
      %v3217 = vld [vmem:[#allocation2 + $0x78] sm:$0xff]
      %v3218 = vld [vmem:[#allocation2 + $0x80] sm:$0xff]
      %v3219 = vld [vmem:[#allocation2 + $0x88] sm:$0xff]
      %v3220 = vld [vmem:[#allocation2 + $0x90] sm:$0xff]
      %v3221 = vld [vmem:[#allocation2 + $0x98] sm:$0xff]
      %v3222 = vld [vmem:[#allocation2 + $0xa0] sm:$0xff]
      %v3223 = vld [vmem:[#allocation2 + $0xa8] sm:$0xff]
      %v3224 = vld [vmem:[#allocation2 + $0xb0] sm:$0xff]
      %v3225 = vld [vmem:[#allocation2 + $0xb8] sm:$0xff]
      %v3226 = vld [vmem:[#allocation2 + $0xc0] sm:$0xff]
      %v3227 = vld [vmem:[#allocation2 + $0xc8] sm:$0xff]
      %v3228 = vld [vmem:[#allocation2 + $0xd0] sm:$0xff]
      %v3229 = vld [vmem:[#allocation2 + $0xd8] sm:$0x3f]
      %v3230 = vadd.f32 %v3202, %v3092
      %v3231 = vadd.f32 %v3203, %v3095
      %v3232 = vadd.f32 %v3204, %v3100
      %v3233 = vadd.f32 %v3205, %v3103
      %v3234 = vadd.f32 %v3206, %v3108
      %v3235 = vadd.f32 %v3207, %v3111
      %v3236 = vadd.f32 %v3208, %v3116
      %v3237 = vadd.f32 %v3209, %v3119
      %v3238 = vadd.f32 %v3210, %v3124
      %v3239 = vadd.f32 %v3211, %v3127
      %v3240 = vadd.f32 %v3212, %v3132
      %v3241 = vadd.f32 %v3213, %v3135
      %v3242 = vadd.f32 %v3214, %v3140
      %v3243 = vadd.f32 %v3215, %v3143
      %v3244 = vadd.f32 %v3216, %v3148
      %v3245 = vadd.f32 %v3217, %v3151
      %v3246 = vadd.f32 %v3218, %v3156
      %v3247 = vadd.f32 %v3219, %v3159
      %v3248 = vadd.f32 %v3220, %v3164
      %v3249 = vadd.f32 %v3221, %v3167
      %v3250 = vadd.f32 %v3222, %v3172
      %v3251 = vadd.f32 %v3223, %v3175
      %v3252 = vadd.f32 %v3224, %v3180
      %v3253 = vadd.f32 %v3225, %v3183
      %v3254 = vadd.f32 %v3226, %v3188
      %v3255 = vadd.f32 %v3227, %v3191
      %v3256 = vadd.f32 %v3228, %v3196
      %v3257 = vadd.f32 %v3229, %v3199
      %3258 = vst [vmem:[#allocation2] sm:$0xff] %v3230
      %3259 = vst [vmem:[#allocation2 + $0x8] sm:$0xff] %v3231
      %3260 = vst [vmem:[#allocation2 + $0x10] sm:$0xff] %v3232
      %3261 = vst [vmem:[#allocation2 + $0x18] sm:$0xff] %v3233
      %3262 = vst [vmem:[#allocation2 + $0x20] sm:$0xff] %v3234
      %3263 = vst [vmem:[#allocation2 + $0x28] sm:$0xff] %v3235
      %3264 = vst [vmem:[#allocation2 + $0x30] sm:$0xff] %v3236
      %3265 = vst [vmem:[#allocation2 + $0x38] sm:$0xff] %v3237
      %3266 = vst [vmem:[#allocation2 + $0x40] sm:$0xff] %v3238
      %3267 = vst [vmem:[#allocation2 + $0x48] sm:$0xff] %v3239
      %3268 = vst [vmem:[#allocation2 + $0x50] sm:$0xff] %v3240
      %3269 = vst [vmem:[#allocation2 + $0x58] sm:$0xff] %v3241
      %3270 = vst [vmem:[#allocation2 + $0x60] sm:$0xff] %v3242
      %3271 = vst [vmem:[#allocation2 + $0x68] sm:$0xff] %v3243
      %3272 = vst [vmem:[#allocation2 + $0x70] sm:$0xff] %v3244
      %3273 = vst [vmem:[#allocation2 + $0x78] sm:$0xff] %v3245
      %3274 = vst [vmem:[#allocation2 + $0x80] sm:$0xff] %v3246
      %3275 = vst [vmem:[#allocation2 + $0x88] sm:$0xff] %v3247
      %3276 = vst [vmem:[#allocation2 + $0x90] sm:$0xff] %v3248
      %3277 = vst [vmem:[#allocation2 + $0x98] sm:$0xff] %v3249
      %3278 = vst [vmem:[#allocation2 + $0xa0] sm:$0xff] %v3250
      %3279 = vst [vmem:[#allocation2 + $0xa8] sm:$0xff] %v3251
      %3280 = vst [vmem:[#allocation2 + $0xb0] sm:$0xff] %v3252
      %3281 = vst [vmem:[#allocation2 + $0xb8] sm:$0xff] %v3253
      %3282 = vst [vmem:[#allocation2 + $0xc0] sm:$0xff] %v3254
      %3283 = vst [vmem:[#allocation2 + $0xc8] sm:$0xff] %v3255
      %3284 = vst [vmem:[#allocation2 + $0xd0] sm:$0xff] %v3256
      %3285 = vst [vmem:[#allocation2 + $0xd8] sm:$0x3f] %v3257
      %v3286 = vld [vmem:[%s206 + $0x10] sm:$0xf]
      %v3287 = vld [vmem:[%s206 + $0x14] sm:$0xf]
      %v3288 = vld [vmem:[%s206 + $0x18] sm:$0xf]
      %v3289 = vld [vmem:[%s206 + $0x1c] sm:$0xf]
      %v3290 = vld [vmem:[%s206 + $0x20] sm:$0xf]
      %v3291 = vld [vmem:[%s206 + $0x24] sm:$0xf]
      %v3292 = vld [vmem:[%s206 + $0x28] sm:$0xf]
      %v3293 = vld [vmem:[%s206 + $0x2c] sm:$0xf]
      %v3294 = vld [vmem:[%s206 + $0x30] sm:$0xf]
      %v3295 = vld [vmem:[%s206 + $0x34] sm:$0xf]
      %v3296 = vld [vmem:[%s206 + $0x38] sm:$0xf]
      %v3297 = vld [vmem:[%s206 + $0x3c] sm:$0xf]
      %v3298 = vld [vmem:[%s206 + $0x40] sm:$0xf]
      %v3299 = vld [vmem:[%s206 + $0x44] sm:$0xf]
      %v3300 = vld [vmem:[%s206 + $0x48] sm:$0xf]
      %v3301 = vld [vmem:[%s206 + $0x4c] sm:$0xf]
      %v3302 = vld [vmem:[%s206 + $0x50] sm:$0xf]
      %v3303 = vld [vmem:[%s206 + $0x54] sm:$0xf]
      %v3304 = vld [vmem:[%s206 + $0x58] sm:$0xf]
      %v3305 = vld [vmem:[%s206 + $0x5c] sm:$0xf]
      %v3306 = vld [vmem:[%s206 + $0x60] sm:$0xf]
      %v3307 = vld [vmem:[%s206 + $0x64] sm:$0xf]
      %v3308 = vld [vmem:[%s206 + $0x68] sm:$0xf]
      %v3309 = vld [vmem:[%s206 + $0x6c] sm:$0xf]
      %v3310 = vld [vmem:[%s206 + $0x70] sm:$0xf]
      %v3311 = vld [vmem:[%s206 + $0x74] sm:$0xf]
      %v3312 = vld [vmem:[%s206 + $0x78] sm:$0xf]
      %v3313 = vld [vmem:[%s206 + $0x7c] sm:$0xf]
      %s3314 = scalar_lea.vmem %s210, 448
      %v3315 = vld [vmem:[%s3314] sm:$0xf]
      %v3316 = vld [vmem:[%s3314 + $0x4] sm:$0xf]
      %v3317 = vld [vmem:[%s3314 + $0x8] sm:$0xf]
      %v3318 = vld [vmem:[%s3314 + $0xc] sm:$0xf]
      %v3319 = vld [vmem:[%s3314 + $0x10] sm:$0xf]
      %v3320 = vld [vmem:[%s3314 + $0x14] sm:$0xf]
      %v3321 = vld [vmem:[%s3314 + $0x18] sm:$0xf]
      %v3322 = vld [vmem:[%s3314 + $0x1c] sm:$0xf]
      %v3323 = vld [vmem:[%s3314 + $0x20] sm:$0xf]
      %v3324 = vld [vmem:[%s3314 + $0x24] sm:$0xf]
      %v3325 = vld [vmem:[%s3314 + $0x28] sm:$0xf]
      %v3326 = vld [vmem:[%s3314 + $0x2c] sm:$0xf]
      %v3327 = vld [vmem:[%s3314 + $0x30] sm:$0xf]
      %v3328 = vld [vmem:[%s3314 + $0x34] sm:$0xf]
      %v3329 = vld [vmem:[%s3314 + $0x38] sm:$0xf]
      %v3330 = vld [vmem:[%s3314 + $0x3c] sm:$0xf]
      %v3359 = vunpack.c.l.b16 %v3286
      %v3360 = vunpack.c.l.b16 %v3287
      %v3361 = vunpack.c.l.b16 %v3288
      %v3362 = vunpack.c.l.b16 %v3289
      %v3363 = vunpack.c.l.b16 %v3290
      %v3364 = vunpack.c.l.b16 %v3291
      %v3365 = vunpack.c.l.b16 %v3292
      %v3366 = vunpack.c.l.b16 %v3293
      %v3367 = vunpack.c.l.b16 %v3294
      %v3368 = vunpack.c.l.b16 %v3295
      %v3369 = vunpack.c.l.b16 %v3296
      %v3370 = vunpack.c.l.b16 %v3297
      %v3371 = vunpack.c.l.b16 %v3298
      %v3372 = vunpack.c.l.b16 %v3299
      %v3373 = vunpack.c.l.b16 %v3300
      %v3374 = vunpack.c.l.b16 %v3301
      %v3375 = vunpack.c.l.b16 %v3302
      %v3376 = vunpack.c.l.b16 %v3303
      %v3377 = vunpack.c.l.b16 %v3304
      %v3378 = vunpack.c.l.b16 %v3305
      %v3379 = vunpack.c.l.b16 %v3306
      %v3380 = vunpack.c.l.b16 %v3307
      %v3381 = vunpack.c.l.b16 %v3308
      %v3382 = vunpack.c.l.b16 %v3309
      %v3383 = vunpack.c.l.b16 %v3310
      %v3384 = vunpack.c.l.b16 %v3311
      %v3385 = vunpack.c.l.b16 %v3312
      %v3386 = vunpack.c.l.b16 %v3313
      %v3387 = vpack.c.b16 %v3360, %v3359
      %v3388 = vpack.c.b16 %v3362, %v3361
      %v3389 = vpack.c.b16 %v3364, %v3363
      %v3390 = vpack.c.b16 %v3366, %v3365
      %v3391 = vpack.c.b16 %v3368, %v3367
      %v3392 = vpack.c.b16 %v3370, %v3369
      %v3393 = vpack.c.b16 %v3372, %v3371
      %v3394 = vpack.c.b16 %v3374, %v3373
      %v3395 = vpack.c.b16 %v3376, %v3375
      %v3396 = vpack.c.b16 %v3378, %v3377
      %v3397 = vpack.c.b16 %v3380, %v3379
      %v3398 = vpack.c.b16 %v3382, %v3381
      %v3399 = vpack.c.b16 %v3384, %v3383
      %v3400 = vpack.c.b16 %v3386, %v3385
      %v3402 = vshrl.u32 %v3387, 16
      %v3404 = vshll.u32 %v3387, 16
      %v3406 = vrot.slane %v3404, 1
      %v3407 = vor.u32 %v3402, %v3406
      %v3409 = vshll.u32 %v3388, 16
      %v3411 = vrot.slane %v3409, 1
      %v3412 = vsel %vm687, %v3407, %v3411
      %v3413 = vshrl.u32 %v3388, 16
      %v3415 = vor.u32 %v3413, %v3411
      %v3417 = vshll.u32 %v3389, 16
      %v3419 = vrot.slane %v3417, 1
      %v3420 = vsel %vm687, %v3415, %v3419
      %v3421 = vshrl.u32 %v3389, 16
      %v3423 = vor.u32 %v3421, %v3419
      %v3425 = vshll.u32 %v3390, 16
      %v3427 = vrot.slane %v3425, 1
      %v3428 = vsel %vm687, %v3423, %v3427
      %v3429 = vshrl.u32 %v3390, 16
      %v3431 = vor.u32 %v3429, %v3427
      %v3433 = vshll.u32 %v3391, 16
      %v3435 = vrot.slane %v3433, 1
      %v3436 = vsel %vm687, %v3431, %v3435
      %v3437 = vshrl.u32 %v3391, 16
      %v3439 = vor.u32 %v3437, %v3435
      %v3441 = vshll.u32 %v3392, 16
      %v3443 = vrot.slane %v3441, 1
      %v3444 = vsel %vm687, %v3439, %v3443
      %v3445 = vshrl.u32 %v3392, 16
      %v3447 = vor.u32 %v3445, %v3443
      %v3449 = vshll.u32 %v3393, 16
      %v3451 = vrot.slane %v3449, 1
      %v3452 = vsel %vm687, %v3447, %v3451
      %v3453 = vshrl.u32 %v3393, 16
      %v3455 = vor.u32 %v3453, %v3451
      %v3457 = vshll.u32 %v3394, 16
      %v3459 = vrot.slane %v3457, 1
      %v3460 = vsel %vm687, %v3455, %v3459
      %v3461 = vshrl.u32 %v3394, 16
      %v3463 = vor.u32 %v3461, %v3459
      %v3465 = vshll.u32 %v3395, 16
      %v3467 = vrot.slane %v3465, 1
      %v3468 = vsel %vm687, %v3463, %v3467
      %v3469 = vshrl.u32 %v3395, 16
      %v3471 = vor.u32 %v3469, %v3467
      %v3473 = vshll.u32 %v3396, 16
      %v3475 = vrot.slane %v3473, 1
      %v3476 = vsel %vm687, %v3471, %v3475
      %v3477 = vshrl.u32 %v3396, 16
      %v3479 = vor.u32 %v3477, %v3475
      %v3481 = vshll.u32 %v3397, 16
      %v3483 = vrot.slane %v3481, 1
      %v3484 = vsel %vm687, %v3479, %v3483
      %v3485 = vshrl.u32 %v3397, 16
      %v3487 = vor.u32 %v3485, %v3483
      %v3489 = vshll.u32 %v3398, 16
      %v3491 = vrot.slane %v3489, 1
      %v3492 = vsel %vm687, %v3487, %v3491
      %v3493 = vshrl.u32 %v3398, 16
      %v3495 = vor.u32 %v3493, %v3491
      %v3497 = vshll.u32 %v3399, 16
      %v3499 = vrot.slane %v3497, 1
      %v3500 = vsel %vm687, %v3495, %v3499
      %v3501 = vshrl.u32 %v3399, 16
      %v3503 = vor.u32 %v3501, %v3499
      %v3505 = vshll.u32 %v3400, 16
      %v3507 = vrot.slane %v3505, 1
      %v3508 = vsel %vm687, %v3503, %v3507
      %v3509 = vshrl.u32 %v3400, 16
      %v3511 = vor.u32 %v3509, %v3507
      %v3542 = vunpack.c.l.b16 %v3315
      %v3543 = vunpack.c.l.b16 %v3316
      %v3544 = vunpack.c.l.b16 %v3317
      %v3545 = vunpack.c.l.b16 %v3318
      %v3546 = vunpack.c.l.b16 %v3319
      %v3547 = vunpack.c.l.b16 %v3320
      %v3548 = vunpack.c.l.b16 %v3321
      %v3549 = vunpack.c.l.b16 %v3322
      %v3550 = vunpack.c.l.b16 %v3323
      %v3551 = vunpack.c.l.b16 %v3324
      %v3552 = vunpack.c.l.b16 %v3325
      %v3553 = vunpack.c.l.b16 %v3326
      %v3554 = vunpack.c.l.b16 %v3327
      %v3555 = vunpack.c.l.b16 %v3328
      %v3556 = vunpack.c.l.b16 %v3329
      %v3557 = vunpack.c.l.b16 %v3330
      %v3558 = vpack.c.b16 %v3543, %v3542
      %v3559 = vpack.c.b16 %v3545, %v3544
      %v3560 = vpack.c.b16 %v3547, %v3546
      %v3561 = vpack.c.b16 %v3549, %v3548
      %v3562 = vpack.c.b16 %v3551, %v3550
      %v3563 = vpack.c.b16 %v3553, %v3552
      %v3564 = vpack.c.b16 %v3555, %v3554
      %v3565 = vpack.c.b16 %v3557, %v3556
      %3574 = vmatprep.subr.bf16.mxu0 0
      %3575 = vmatpush1.bf16.msra.mxu0 %v3565
      %3576 = vmatprep.subr.bf16.mxu0 0
      %3577 = vmatpush1.bf16.msra.mxu0 %v3564
      %3578 = vmatprep.subr.bf16.mxu0 0
      %3579 = vmatpush1.bf16.msra.mxu0 %v3563
      %3580 = vmatprep.subr.bf16.mxu0 0
      %3581 = vmatpush1.bf16.msra.mxu0 %v3562
      %3582 = vmatprep.subr.bf16.mxu0 0
      %3583 = vmatpush1.bf16.msra.mxu0 %v3561
      %3584 = vmatprep.subr.bf16.mxu0 0
      %3585 = vmatpush1.bf16.msra.mxu0 %v3560
      %3586 = vmatprep.subr.bf16.mxu0 0
      %3587 = vmatpush1.bf16.msra.mxu0 %v3559
      %3588 = vmatprep.subr.bf16.mxu0 0
      %3589 = vmatpush1.bf16.msra.mxu0 %v3558
      %3590 = vmatprep.subr.bf16.mxu0 0
      %3591 = vmatpush2.bf16.msra.mxu0 0
      %3592 = vmatprep.subr.bf16.mxu0 0
      %3593 = vmatpush2.bf16.msra.mxu0 0
      %3594 = vmatprep.subr.bf16.mxu0 0
      %3595 = vmatpush2.bf16.msra.mxu0 0
      %3596 = vmatprep.subr.bf16.mxu0 0
      %3597 = vmatpush2.bf16.msra.mxu0 0
      %3598 = vmatprep.subr.bf16.mxu0 0
      %3599 = vmatpush2.bf16.msra.mxu0 0
      %3600 = vmatprep.subr.bf16.mxu0 0
      %3601 = vmatpush2.bf16.msra.mxu0 0
      %3602 = vmatprep.subr.bf16.mxu0 0
      %3603 = vmatpush2.bf16.msra.mxu0 0
      %3604 = vmatprep.subr.bf16.mxu0 0
      %3605 = vmatpush2.bf16.msra.mxu0 0
      %3606 = vmatprep.mubr.bf16.mxu0 0
      %3607 = vmatmul.mubr.bf16.gmra.mxu0 %v3412
      %v3608 = vpop.f32.mrf.mxu0
      %v3609 = vadd.f32 0.0, %v3608
      %v3610 = vpop.f32.mrf.mxu0
      %v3611 = vpop.f32.mrf.mxu0
      %v3612 = vadd.f32 0.0, %v3611
      %v3613 = vpop.f32.mrf.mxu0
      %3614 = vmatprep.mubr.bf16.mxu0 0
      %3615 = vmatmul.mubr.bf16.gmra.mxu0 %v3420
      %v3616 = vpop.f32.mrf.mxu0
      %v3617 = vadd.f32 0.0, %v3616
      %v3618 = vpop.f32.mrf.mxu0
      %v3619 = vpop.f32.mrf.mxu0
      %v3620 = vadd.f32 0.0, %v3619
      %v3621 = vpop.f32.mrf.mxu0
      %3622 = vmatprep.mubr.bf16.mxu0 0
      %3623 = vmatmul.mubr.bf16.gmra.mxu0 %v3428
      %v3624 = vpop.f32.mrf.mxu0
      %v3625 = vadd.f32 0.0, %v3624
      %v3626 = vpop.f32.mrf.mxu0
      %v3627 = vpop.f32.mrf.mxu0
      %v3628 = vadd.f32 0.0, %v3627
      %v3629 = vpop.f32.mrf.mxu0
      %3630 = vmatprep.mubr.bf16.mxu0 0
      %3631 = vmatmul.mubr.bf16.gmra.mxu0 %v3436
      %v3632 = vpop.f32.mrf.mxu0
      %v3633 = vadd.f32 0.0, %v3632
      %v3634 = vpop.f32.mrf.mxu0
      %v3635 = vpop.f32.mrf.mxu0
      %v3636 = vadd.f32 0.0, %v3635
      %v3637 = vpop.f32.mrf.mxu0
      %3638 = vmatprep.mubr.bf16.mxu0 0
      %3639 = vmatmul.mubr.bf16.gmra.mxu0 %v3444
      %v3640 = vpop.f32.mrf.mxu0
      %v3641 = vadd.f32 0.0, %v3640
      %v3642 = vpop.f32.mrf.mxu0
      %v3643 = vpop.f32.mrf.mxu0
      %v3644 = vadd.f32 0.0, %v3643
      %v3645 = vpop.f32.mrf.mxu0
      %3646 = vmatprep.mubr.bf16.mxu0 0
      %3647 = vmatmul.mubr.bf16.gmra.mxu0 %v3452
      %v3648 = vpop.f32.mrf.mxu0
      %v3649 = vadd.f32 0.0, %v3648
      %v3650 = vpop.f32.mrf.mxu0
      %v3651 = vpop.f32.mrf.mxu0
      %v3652 = vadd.f32 0.0, %v3651
      %v3653 = vpop.f32.mrf.mxu0
      %3654 = vmatprep.mubr.bf16.mxu0 0
      %3655 = vmatmul.mubr.bf16.gmra.mxu0 %v3460
      %v3656 = vpop.f32.mrf.mxu0
      %v3657 = vadd.f32 0.0, %v3656
      %v3658 = vpop.f32.mrf.mxu0
      %v3659 = vpop.f32.mrf.mxu0
      %v3660 = vadd.f32 0.0, %v3659
      %v3661 = vpop.f32.mrf.mxu0
      %3662 = vmatprep.mubr.bf16.mxu0 0
      %3663 = vmatmul.mubr.bf16.gmra.mxu0 %v3468
      %v3664 = vpop.f32.mrf.mxu0
      %v3665 = vadd.f32 0.0, %v3664
      %v3666 = vpop.f32.mrf.mxu0
      %v3667 = vpop.f32.mrf.mxu0
      %v3668 = vadd.f32 0.0, %v3667
      %v3669 = vpop.f32.mrf.mxu0
      %3670 = vmatprep.mubr.bf16.mxu0 0
      %3671 = vmatmul.mubr.bf16.gmra.mxu0 %v3476
      %v3672 = vpop.f32.mrf.mxu0
      %v3673 = vadd.f32 0.0, %v3672
      %v3674 = vpop.f32.mrf.mxu0
      %v3675 = vpop.f32.mrf.mxu0
      %v3676 = vadd.f32 0.0, %v3675
      %v3677 = vpop.f32.mrf.mxu0
      %3678 = vmatprep.mubr.bf16.mxu0 0
      %3679 = vmatmul.mubr.bf16.gmra.mxu0 %v3484
      %v3680 = vpop.f32.mrf.mxu0
      %v3681 = vadd.f32 0.0, %v3680
      %v3682 = vpop.f32.mrf.mxu0
      %v3683 = vpop.f32.mrf.mxu0
      %v3684 = vadd.f32 0.0, %v3683
      %v3685 = vpop.f32.mrf.mxu0
      %3686 = vmatprep.mubr.bf16.mxu0 0
      %3687 = vmatmul.mubr.bf16.gmra.mxu0 %v3492
      %v3688 = vpop.f32.mrf.mxu0
      %v3689 = vadd.f32 0.0, %v3688
      %v3690 = vpop.f32.mrf.mxu0
      %v3691 = vpop.f32.mrf.mxu0
      %v3692 = vadd.f32 0.0, %v3691
      %v3693 = vpop.f32.mrf.mxu0
      %3694 = vmatprep.mubr.bf16.mxu0 0
      %3695 = vmatmul.mubr.bf16.gmra.mxu0 %v3500
      %v3696 = vpop.f32.mrf.mxu0
      %v3697 = vadd.f32 0.0, %v3696
      %v3698 = vpop.f32.mrf.mxu0
      %v3699 = vpop.f32.mrf.mxu0
      %v3700 = vadd.f32 0.0, %v3699
      %v3701 = vpop.f32.mrf.mxu0
      %3702 = vmatprep.mubr.bf16.mxu0 0
      %3703 = vmatmul.mubr.bf16.gmra.mxu0 %v3508
      %v3704 = vpop.f32.mrf.mxu0
      %v3705 = vadd.f32 0.0, %v3704
      %v3706 = vpop.f32.mrf.mxu0
      %v3707 = vpop.f32.mrf.mxu0
      %v3708 = vadd.f32 0.0, %v3707
      %v3709 = vpop.f32.mrf.mxu0
      %3710 = vmatprep.mubr.bf16.mxu0 0
      %3711 = vmatmul.mubr.bf16.gmra.mxu0 %v3511
      %v3712 = vpop.f32.mrf.mxu0
      %v3713 = vadd.f32 0.0, %v3712
      %v3714 = vpop.f32.mrf.mxu0
      %v3715 = vpop.f32.mrf.mxu0
      %v3716 = vadd.f32 0.0, %v3715
      %v3717 = vpop.f32.mrf.mxu0
      %3718 = vdwg.mxu0
      %v3719 = vld [vmem:[#allocation2] sm:$0xff]
      %v3720 = vld [vmem:[#allocation2 + $0x8] sm:$0xff]
      %v3721 = vld [vmem:[#allocation2 + $0x10] sm:$0xff]
      %v3722 = vld [vmem:[#allocation2 + $0x18] sm:$0xff]
      %v3723 = vld [vmem:[#allocation2 + $0x20] sm:$0xff]
      %v3724 = vld [vmem:[#allocation2 + $0x28] sm:$0xff]
      %v3725 = vld [vmem:[#allocation2 + $0x30] sm:$0xff]
      %v3726 = vld [vmem:[#allocation2 + $0x38] sm:$0xff]
      %v3727 = vld [vmem:[#allocation2 + $0x40] sm:$0xff]
      %v3728 = vld [vmem:[#allocation2 + $0x48] sm:$0xff]
      %v3729 = vld [vmem:[#allocation2 + $0x50] sm:$0xff]
      %v3730 = vld [vmem:[#allocation2 + $0x58] sm:$0xff]
      %v3731 = vld [vmem:[#allocation2 + $0x60] sm:$0xff]
      %v3732 = vld [vmem:[#allocation2 + $0x68] sm:$0xff]
      %v3733 = vld [vmem:[#allocation2 + $0x70] sm:$0xff]
      %v3734 = vld [vmem:[#allocation2 + $0x78] sm:$0xff]
      %v3735 = vld [vmem:[#allocation2 + $0x80] sm:$0xff]
      %v3736 = vld [vmem:[#allocation2 + $0x88] sm:$0xff]
      %v3737 = vld [vmem:[#allocation2 + $0x90] sm:$0xff]
      %v3738 = vld [vmem:[#allocation2 + $0x98] sm:$0xff]
      %v3739 = vld [vmem:[#allocation2 + $0xa0] sm:$0xff]
      %v3740 = vld [vmem:[#allocation2 + $0xa8] sm:$0xff]
      %v3741 = vld [vmem:[#allocation2 + $0xb0] sm:$0xff]
      %v3742 = vld [vmem:[#allocation2 + $0xb8] sm:$0xff]
      %v3743 = vld [vmem:[#allocation2 + $0xc0] sm:$0xff]
      %v3744 = vld [vmem:[#allocation2 + $0xc8] sm:$0xff]
      %v3745 = vld [vmem:[#allocation2 + $0xd0] sm:$0xff]
      %v3746 = vld [vmem:[#allocation2 + $0xd8] sm:$0x3f]
      %v3747 = vadd.f32 %v3719, %v3609
      %v3748 = vadd.f32 %v3720, %v3612
      %v3749 = vadd.f32 %v3721, %v3617
      %v3750 = vadd.f32 %v3722, %v3620
      %v3751 = vadd.f32 %v3723, %v3625
      %v3752 = vadd.f32 %v3724, %v3628
      %v3753 = vadd.f32 %v3725, %v3633
      %v3754 = vadd.f32 %v3726, %v3636
      %v3755 = vadd.f32 %v3727, %v3641
      %v3756 = vadd.f32 %v3728, %v3644
      %v3757 = vadd.f32 %v3729, %v3649
      %v3758 = vadd.f32 %v3730, %v3652
      %v3759 = vadd.f32 %v3731, %v3657
      %v3760 = vadd.f32 %v3732, %v3660
      %v3761 = vadd.f32 %v3733, %v3665
      %v3762 = vadd.f32 %v3734, %v3668
      %v3763 = vadd.f32 %v3735, %v3673
      %v3764 = vadd.f32 %v3736, %v3676
      %v3765 = vadd.f32 %v3737, %v3681
      %v3766 = vadd.f32 %v3738, %v3684
      %v3767 = vadd.f32 %v3739, %v3689
      %v3768 = vadd.f32 %v3740, %v3692
      %v3769 = vadd.f32 %v3741, %v3697
      %v3770 = vadd.f32 %v3742, %v3700
      %v3771 = vadd.f32 %v3743, %v3705
      %v3772 = vadd.f32 %v3744, %v3708
      %v3773 = vadd.f32 %v3745, %v3713
      %v3774 = vadd.f32 %v3746, %v3716
      %3775 = vst [vmem:[#allocation2] sm:$0xff] %v3747
      %3776 = vst [vmem:[#allocation2 + $0x8] sm:$0xff] %v3748
      %3777 = vst [vmem:[#allocation2 + $0x10] sm:$0xff] %v3749
      %3778 = vst [vmem:[#allocation2 + $0x18] sm:$0xff] %v3750
      %3779 = vst [vmem:[#allocation2 + $0x20] sm:$0xff] %v3751
      %3780 = vst [vmem:[#allocation2 + $0x28] sm:$0xff] %v3752
      %3781 = vst [vmem:[#allocation2 + $0x30] sm:$0xff] %v3753
      %3782 = vst [vmem:[#allocation2 + $0x38] sm:$0xff] %v3754
      %3783 = vst [vmem:[#allocation2 + $0x40] sm:$0xff] %v3755
      %3784 = vst [vmem:[#allocation2 + $0x48] sm:$0xff] %v3756
      %3785 = vst [vmem:[#allocation2 + $0x50] sm:$0xff] %v3757
      %3786 = vst [vmem:[#allocation2 + $0x58] sm:$0xff] %v3758
      %3787 = vst [vmem:[#allocation2 + $0x60] sm:$0xff] %v3759
      %3788 = vst [vmem:[#allocation2 + $0x68] sm:$0xff] %v3760
      %3789 = vst [vmem:[#allocation2 + $0x70] sm:$0xff] %v3761
      %3790 = vst [vmem:[#allocation2 + $0x78] sm:$0xff] %v3762
      %3791 = vst [vmem:[#allocation2 + $0x80] sm:$0xff] %v3763
      %3792 = vst [vmem:[#allocation2 + $0x88] sm:$0xff] %v3764
      %3793 = vst [vmem:[#allocation2 + $0x90] sm:$0xff] %v3765
      %3794 = vst [vmem:[#allocation2 + $0x98] sm:$0xff] %v3766
      %3795 = vst [vmem:[#allocation2 + $0xa0] sm:$0xff] %v3767
      %3796 = vst [vmem:[#allocation2 + $0xa8] sm:$0xff] %v3768
      %3797 = vst [vmem:[#allocation2 + $0xb0] sm:$0xff] %v3769
      %3798 = vst [vmem:[#allocation2 + $0xb8] sm:$0xff] %v3770
      %3799 = vst [vmem:[#allocation2 + $0xc0] sm:$0xff] %v3771
      %3800 = vst [vmem:[#allocation2 + $0xc8] sm:$0xff] %v3772
      %3801 = vst [vmem:[#allocation2 + $0xd0] sm:$0xff] %v3773
      %3802 = vst [vmem:[#allocation2 + $0xd8] sm:$0x3f] %v3774
      %v3803 = vld [vmem:[%s206 + $0x10] sm:$0xe]
      %v3804 = vld [vmem:[%s206 + $0x14] sm:$0xf]
      %v3805 = vld [vmem:[%s206 + $0x18] sm:$0xf]
      %v3806 = vld [vmem:[%s206 + $0x1c] sm:$0xf]
      %v3807 = vld [vmem:[%s206 + $0x20] sm:$0xf]
      %v3808 = vld [vmem:[%s206 + $0x24] sm:$0xf]
      %v3809 = vld [vmem:[%s206 + $0x28] sm:$0xf]
      %v3810 = vld [vmem:[%s206 + $0x2c] sm:$0xf]
      %v3811 = vld [vmem:[%s206 + $0x30] sm:$0xf]
      %v3812 = vld [vmem:[%s206 + $0x34] sm:$0xf]
      %v3813 = vld [vmem:[%s206 + $0x38] sm:$0xf]
      %v3814 = vld [vmem:[%s206 + $0x3c] sm:$0xf]
      %v3815 = vld [vmem:[%s206 + $0x40] sm:$0xf]
      %v3816 = vld [vmem:[%s206 + $0x44] sm:$0xf]
      %v3817 = vld [vmem:[%s206 + $0x48] sm:$0xf]
      %v3818 = vld [vmem:[%s206 + $0x4c] sm:$0xf]
      %v3819 = vld [vmem:[%s206 + $0x50] sm:$0xf]
      %v3820 = vld [vmem:[%s206 + $0x54] sm:$0xf]
      %v3821 = vld [vmem:[%s206 + $0x58] sm:$0xf]
      %v3822 = vld [vmem:[%s206 + $0x5c] sm:$0xf]
      %v3823 = vld [vmem:[%s206 + $0x60] sm:$0xf]
      %v3824 = vld [vmem:[%s206 + $0x64] sm:$0xf]
      %v3825 = vld [vmem:[%s206 + $0x68] sm:$0xf]
      %v3826 = vld [vmem:[%s206 + $0x6c] sm:$0xf]
      %v3827 = vld [vmem:[%s206 + $0x70] sm:$0xf]
      %v3828 = vld [vmem:[%s206 + $0x74] sm:$0xf]
      %v3829 = vld [vmem:[%s206 + $0x78] sm:$0xf]
      %v3830 = vld [vmem:[%s206 + $0x7c] sm:$0xf]
      %s3831 = scalar_lea.vmem %s210, 512
      %v3832 = vld [vmem:[%s3831] sm:$0xf]
      %v3833 = vld [vmem:[%s3831 + $0x4] sm:$0xf]
      %v3834 = vld [vmem:[%s3831 + $0x8] sm:$0xf]
      %v3835 = vld [vmem:[%s3831 + $0xc] sm:$0xf]
      %v3836 = vld [vmem:[%s3831 + $0x10] sm:$0xf]
      %v3837 = vld [vmem:[%s3831 + $0x14] sm:$0xf]
      %v3838 = vld [vmem:[%s3831 + $0x18] sm:$0xf]
      %v3839 = vld [vmem:[%s3831 + $0x1c] sm:$0xf]
      %v3840 = vld [vmem:[%s3831 + $0x20] sm:$0xf]
      %v3841 = vld [vmem:[%s3831 + $0x24] sm:$0xf]
      %v3842 = vld [vmem:[%s3831 + $0x28] sm:$0xf]
      %v3843 = vld [vmem:[%s3831 + $0x2c] sm:$0xf]
      %v3844 = vld [vmem:[%s3831 + $0x30] sm:$0xf]
      %v3845 = vld [vmem:[%s3831 + $0x34] sm:$0xf]
      %v3846 = vld [vmem:[%s3831 + $0x38] sm:$0xf]
      %v3847 = vld [vmem:[%s3831 + $0x3c] sm:$0xf]
      %v3876 = vunpack.c.l.b16 %v3803
      %v3877 = vunpack.c.l.b16 %v3804
      %v3878 = vunpack.c.l.b16 %v3805
      %v3879 = vunpack.c.l.b16 %v3806
      %v3880 = vunpack.c.l.b16 %v3807
      %v3881 = vunpack.c.l.b16 %v3808
      %v3882 = vunpack.c.l.b16 %v3809
      %v3883 = vunpack.c.l.b16 %v3810
      %v3884 = vunpack.c.l.b16 %v3811
      %v3885 = vunpack.c.l.b16 %v3812
      %v3886 = vunpack.c.l.b16 %v3813
      %v3887 = vunpack.c.l.b16 %v3814
      %v3888 = vunpack.c.l.b16 %v3815
      %v3889 = vunpack.c.l.b16 %v3816
      %v3890 = vunpack.c.l.b16 %v3817
      %v3891 = vunpack.c.l.b16 %v3818
      %v3892 = vunpack.c.l.b16 %v3819
      %v3893 = vunpack.c.l.b16 %v3820
      %v3894 = vunpack.c.l.b16 %v3821
      %v3895 = vunpack.c.l.b16 %v3822
      %v3896 = vunpack.c.l.b16 %v3823
      %v3897 = vunpack.c.l.b16 %v3824
      %v3898 = vunpack.c.l.b16 %v3825
      %v3899 = vunpack.c.l.b16 %v3826
      %v3900 = vunpack.c.l.b16 %v3827
      %v3901 = vunpack.c.l.b16 %v3828
      %v3902 = vunpack.c.l.b16 %v3829
      %v3903 = vunpack.c.l.b16 %v3830
      %v3904 = vpack.c.b16 %v3877, %v3876
      %v3905 = vpack.c.b16 %v3879, %v3878
      %v3906 = vpack.c.b16 %v3881, %v3880
      %v3907 = vpack.c.b16 %v3883, %v3882
      %v3908 = vpack.c.b16 %v3885, %v3884
      %v3909 = vpack.c.b16 %v3887, %v3886
      %v3910 = vpack.c.b16 %v3889, %v3888
      %v3911 = vpack.c.b16 %v3891, %v3890
      %v3912 = vpack.c.b16 %v3893, %v3892
      %v3913 = vpack.c.b16 %v3895, %v3894
      %v3914 = vpack.c.b16 %v3897, %v3896
      %v3915 = vpack.c.b16 %v3899, %v3898
      %v3916 = vpack.c.b16 %v3901, %v3900
      %v3917 = vpack.c.b16 %v3903, %v3902
      %v3918 = vrot.slane %v3904, 1
      %v3919 = vrot.slane %v3905, 1
      %v3920 = vsel %vm1205, %v3918, %v3919
      %v3921 = vrot.slane %v3906, 1
      %v3922 = vsel %vm1205, %v3919, %v3921
      %v3923 = vrot.slane %v3907, 1
      %v3924 = vsel %vm1205, %v3921, %v3923
      %v3925 = vrot.slane %v3908, 1
      %v3926 = vsel %vm1205, %v3923, %v3925
      %v3927 = vrot.slane %v3909, 1
      %v3928 = vsel %vm1205, %v3925, %v3927
      %v3929 = vrot.slane %v3910, 1
      %v3930 = vsel %vm1205, %v3927, %v3929
      %v3931 = vrot.slane %v3911, 1
      %v3932 = vsel %vm1205, %v3929, %v3931
      %v3933 = vrot.slane %v3912, 1
      %v3934 = vsel %vm1205, %v3931, %v3933
      %v3935 = vrot.slane %v3913, 1
      %v3936 = vsel %vm1205, %v3933, %v3935
      %v3937 = vrot.slane %v3914, 1
      %v3938 = vsel %vm1205, %v3935, %v3937
      %v3939 = vrot.slane %v3915, 1
      %v3940 = vsel %vm1205, %v3937, %v3939
      %v3941 = vrot.slane %v3916, 1
      %v3942 = vsel %vm1205, %v3939, %v3941
      %v3943 = vrot.slane %v3917, 1
      %v3944 = vsel %vm1205, %v3941, %v3943
      %v3975 = vunpack.c.l.b16 %v3832
      %v3976 = vunpack.c.l.b16 %v3833
      %v3977 = vunpack.c.l.b16 %v3834
      %v3978 = vunpack.c.l.b16 %v3835
      %v3979 = vunpack.c.l.b16 %v3836
      %v3980 = vunpack.c.l.b16 %v3837
      %v3981 = vunpack.c.l.b16 %v3838
      %v3982 = vunpack.c.l.b16 %v3839
      %v3983 = vunpack.c.l.b16 %v3840
      %v3984 = vunpack.c.l.b16 %v3841
      %v3985 = vunpack.c.l.b16 %v3842
      %v3986 = vunpack.c.l.b16 %v3843
      %v3987 = vunpack.c.l.b16 %v3844
      %v3988 = vunpack.c.l.b16 %v3845
      %v3989 = vunpack.c.l.b16 %v3846
      %v3990 = vunpack.c.l.b16 %v3847
      %v3991 = vpack.c.b16 %v3976, %v3975
      %v3992 = vpack.c.b16 %v3978, %v3977
      %v3993 = vpack.c.b16 %v3980, %v3979
      %v3994 = vpack.c.b16 %v3982, %v3981
      %v3995 = vpack.c.b16 %v3984, %v3983
      %v3996 = vpack.c.b16 %v3986, %v3985
      %v3997 = vpack.c.b16 %v3988, %v3987
      %v3998 = vpack.c.b16 %v3990, %v3989
      %4007 = vmatprep.subr.bf16.mxu0 0
      %4008 = vmatpush1.bf16.msra.mxu0 %v3998
      %4009 = vmatprep.subr.bf16.mxu0 0
      %4010 = vmatpush1.bf16.msra.mxu0 %v3997
      %4011 = vmatprep.subr.bf16.mxu0 0
      %4012 = vmatpush1.bf16.msra.mxu0 %v3996
      %4013 = vmatprep.subr.bf16.mxu0 0
      %4014 = vmatpush1.bf16.msra.mxu0 %v3995
      %4015 = vmatprep.subr.bf16.mxu0 0
      %4016 = vmatpush1.bf16.msra.mxu0 %v3994
      %4017 = vmatprep.subr.bf16.mxu0 0
      %4018 = vmatpush1.bf16.msra.mxu0 %v3993
      %4019 = vmatprep.subr.bf16.mxu0 0
      %4020 = vmatpush1.bf16.msra.mxu0 %v3992
      %4021 = vmatprep.subr.bf16.mxu0 0
      %4022 = vmatpush1.bf16.msra.mxu0 %v3991
      %4023 = vmatprep.subr.bf16.mxu0 0
      %4024 = vmatpush2.bf16.msra.mxu0 0
      %4025 = vmatprep.subr.bf16.mxu0 0
      %4026 = vmatpush2.bf16.msra.mxu0 0
      %4027 = vmatprep.subr.bf16.mxu0 0
      %4028 = vmatpush2.bf16.msra.mxu0 0
      %4029 = vmatprep.subr.bf16.mxu0 0
      %4030 = vmatpush2.bf16.msra.mxu0 0
      %4031 = vmatprep.subr.bf16.mxu0 0
      %4032 = vmatpush2.bf16.msra.mxu0 0
      %4033 = vmatprep.subr.bf16.mxu0 0
      %4034 = vmatpush2.bf16.msra.mxu0 0
      %4035 = vmatprep.subr.bf16.mxu0 0
      %4036 = vmatpush2.bf16.msra.mxu0 0
      %4037 = vmatprep.subr.bf16.mxu0 0
      %4038 = vmatpush2.bf16.msra.mxu0 0
      %4039 = vmatprep.mubr.bf16.mxu0 0
      %4040 = vmatmul.mubr.bf16.gmra.mxu0 %v3920
      %v4041 = vpop.f32.mrf.mxu0
      %v4042 = vadd.f32 0.0, %v4041
      %v4043 = vpop.f32.mrf.mxu0
      %v4044 = vpop.f32.mrf.mxu0
      %v4045 = vadd.f32 0.0, %v4044
      %v4046 = vpop.f32.mrf.mxu0
      %4047 = vmatprep.mubr.bf16.mxu0 0
      %4048 = vmatmul.mubr.bf16.gmra.mxu0 %v3922
      %v4049 = vpop.f32.mrf.mxu0
      %v4050 = vadd.f32 0.0, %v4049
      %v4051 = vpop.f32.mrf.mxu0
      %v4052 = vpop.f32.mrf.mxu0
      %v4053 = vadd.f32 0.0, %v4052
      %v4054 = vpop.f32.mrf.mxu0
      %4055 = vmatprep.mubr.bf16.mxu0 0
      %4056 = vmatmul.mubr.bf16.gmra.mxu0 %v3924
      %v4057 = vpop.f32.mrf.mxu0
      %v4058 = vadd.f32 0.0, %v4057
      %v4059 = vpop.f32.mrf.mxu0
      %v4060 = vpop.f32.mrf.mxu0
      %v4061 = vadd.f32 0.0, %v4060
      %v4062 = vpop.f32.mrf.mxu0
      %4063 = vmatprep.mubr.bf16.mxu0 0
      %4064 = vmatmul.mubr.bf16.gmra.mxu0 %v3926
      %v4065 = vpop.f32.mrf.mxu0
      %v4066 = vadd.f32 0.0, %v4065
      %v4067 = vpop.f32.mrf.mxu0
      %v4068 = vpop.f32.mrf.mxu0
      %v4069 = vadd.f32 0.0, %v4068
      %v4070 = vpop.f32.mrf.mxu0
      %4071 = vmatprep.mubr.bf16.mxu0 0
      %4072 = vmatmul.mubr.bf16.gmra.mxu0 %v3928
      %v4073 = vpop.f32.mrf.mxu0
      %v4074 = vadd.f32 0.0, %v4073
      %v4075 = vpop.f32.mrf.mxu0
      %v4076 = vpop.f32.mrf.mxu0
      %v4077 = vadd.f32 0.0, %v4076
      %v4078 = vpop.f32.mrf.mxu0
      %4079 = vmatprep.mubr.bf16.mxu0 0
      %4080 = vmatmul.mubr.bf16.gmra.mxu0 %v3930
      %v4081 = vpop.f32.mrf.mxu0
      %v4082 = vadd.f32 0.0, %v4081
      %v4083 = vpop.f32.mrf.mxu0
      %v4084 = vpop.f32.mrf.mxu0
      %v4085 = vadd.f32 0.0, %v4084
      %v4086 = vpop.f32.mrf.mxu0
      %4087 = vmatprep.mubr.bf16.mxu0 0
      %4088 = vmatmul.mubr.bf16.gmra.mxu0 %v3932
      %v4089 = vpop.f32.mrf.mxu0
      %v4090 = vadd.f32 0.0, %v4089
      %v4091 = vpop.f32.mrf.mxu0
      %v4092 = vpop.f32.mrf.mxu0
      %v4093 = vadd.f32 0.0, %v4092
      %v4094 = vpop.f32.mrf.mxu0
      %4095 = vmatprep.mubr.bf16.mxu0 0
      %4096 = vmatmul.mubr.bf16.gmra.mxu0 %v3934
      %v4097 = vpop.f32.mrf.mxu0
      %v4098 = vadd.f32 0.0, %v4097
      %v4099 = vpop.f32.mrf.mxu0
      %v4100 = vpop.f32.mrf.mxu0
      %v4101 = vadd.f32 0.0, %v4100
      %v4102 = vpop.f32.mrf.mxu0
      %4103 = vmatprep.mubr.bf16.mxu0 0
      %4104 = vmatmul.mubr.bf16.gmra.mxu0 %v3936
      %v4105 = vpop.f32.mrf.mxu0
      %v4106 = vadd.f32 0.0, %v4105
      %v4107 = vpop.f32.mrf.mxu0
      %v4108 = vpop.f32.mrf.mxu0
      %v4109 = vadd.f32 0.0, %v4108
      %v4110 = vpop.f32.mrf.mxu0
      %4111 = vmatprep.mubr.bf16.mxu0 0
      %4112 = vmatmul.mubr.bf16.gmra.mxu0 %v3938
      %v4113 = vpop.f32.mrf.mxu0
      %v4114 = vadd.f32 0.0, %v4113
      %v4115 = vpop.f32.mrf.mxu0
      %v4116 = vpop.f32.mrf.mxu0
      %v4117 = vadd.f32 0.0, %v4116
      %v4118 = vpop.f32.mrf.mxu0
      %4119 = vmatprep.mubr.bf16.mxu0 0
      %4120 = vmatmul.mubr.bf16.gmra.mxu0 %v3940
      %v4121 = vpop.f32.mrf.mxu0
      %v4122 = vadd.f32 0.0, %v4121
      %v4123 = vpop.f32.mrf.mxu0
      %v4124 = vpop.f32.mrf.mxu0
      %v4125 = vadd.f32 0.0, %v4124
      %v4126 = vpop.f32.mrf.mxu0
      %4127 = vmatprep.mubr.bf16.mxu0 0
      %4128 = vmatmul.mubr.bf16.gmra.mxu0 %v3942
      %v4129 = vpop.f32.mrf.mxu0
      %v4130 = vadd.f32 0.0, %v4129
      %v4131 = vpop.f32.mrf.mxu0
      %v4132 = vpop.f32.mrf.mxu0
      %v4133 = vadd.f32 0.0, %v4132
      %v4134 = vpop.f32.mrf.mxu0
      %4135 = vmatprep.mubr.bf16.mxu0 0
      %4136 = vmatmul.mubr.bf16.gmra.mxu0 %v3944
      %v4137 = vpop.f32.mrf.mxu0
      %v4138 = vadd.f32 0.0, %v4137
      %v4139 = vpop.f32.mrf.mxu0
      %v4140 = vpop.f32.mrf.mxu0
      %v4141 = vadd.f32 0.0, %v4140
      %v4142 = vpop.f32.mrf.mxu0
      %4143 = vmatprep.mubr.bf16.mxu0 0
      %4144 = vmatmul.mubr.bf16.gmra.mxu0 %v3943
      %v4145 = vpop.f32.mrf.mxu0
      %v4146 = vadd.f32 0.0, %v4145
      %v4147 = vpop.f32.mrf.mxu0
      %v4148 = vpop.f32.mrf.mxu0
      %v4149 = vadd.f32 0.0, %v4148
      %v4150 = vpop.f32.mrf.mxu0
      %4151 = vdwg.mxu0
      %v4152 = vld [vmem:[#allocation2] sm:$0xff]
      %v4153 = vld [vmem:[#allocation2 + $0x8] sm:$0xff]
      %v4154 = vld [vmem:[#allocation2 + $0x10] sm:$0xff]
      %v4155 = vld [vmem:[#allocation2 + $0x18] sm:$0xff]
      %v4156 = vld [vmem:[#allocation2 + $0x20] sm:$0xff]
      %v4157 = vld [vmem:[#allocation2 + $0x28] sm:$0xff]
      %v4158 = vld [vmem:[#allocation2 + $0x30] sm:$0xff]
      %v4159 = vld [vmem:[#allocation2 + $0x38] sm:$0xff]
      %v4160 = vld [vmem:[#allocation2 + $0x40] sm:$0xff]
      %v4161 = vld [vmem:[#allocation2 + $0x48] sm:$0xff]
      %v4162 = vld [vmem:[#allocation2 + $0x50] sm:$0xff]
      %v4163 = vld [vmem:[#allocation2 + $0x58] sm:$0xff]
      %v4164 = vld [vmem:[#allocation2 + $0x60] sm:$0xff]
      %v4165 = vld [vmem:[#allocation2 + $0x68] sm:$0xff]
      %v4166 = vld [vmem:[#allocation2 + $0x70] sm:$0xff]
      %v4167 = vld [vmem:[#allocation2 + $0x78] sm:$0xff]
      %v4168 = vld [vmem:[#allocation2 + $0x80] sm:$0xff]
      %v4169 = vld [vmem:[#allocation2 + $0x88] sm:$0xff]
      %v4170 = vld [vmem:[#allocation2 + $0x90] sm:$0xff]
      %v4171 = vld [vmem:[#allocation2 + $0x98] sm:$0xff]
      %v4172 = vld [vmem:[#allocation2 + $0xa0] sm:$0xff]
      %v4173 = vld [vmem:[#allocation2 + $0xa8] sm:$0xff]
      %v4174 = vld [vmem:[#allocation2 + $0xb0] sm:$0xff]
      %v4175 = vld [vmem:[#allocation2 + $0xb8] sm:$0xff]
      %v4176 = vld [vmem:[#allocation2 + $0xc0] sm:$0xff]
      %v4177 = vld [vmem:[#allocation2 + $0xc8] sm:$0xff]
      %v4178 = vld [vmem:[#allocation2 + $0xd0] sm:$0xff]
      %v4179 = vld [vmem:[#allocation2 + $0xd8] sm:$0x3f]
      %v4180 = vadd.f32 %v4152, %v4042
      %v4181 = vadd.f32 %v4153, %v4045
      %v4182 = vadd.f32 %v4154, %v4050
      %v4183 = vadd.f32 %v4155, %v4053
      %v4184 = vadd.f32 %v4156, %v4058
      %v4185 = vadd.f32 %v4157, %v4061
      %v4186 = vadd.f32 %v4158, %v4066
      %v4187 = vadd.f32 %v4159, %v4069
      %v4188 = vadd.f32 %v4160, %v4074
      %v4189 = vadd.f32 %v4161, %v4077
      %v4190 = vadd.f32 %v4162, %v4082
      %v4191 = vadd.f32 %v4163, %v4085
      %v4192 = vadd.f32 %v4164, %v4090
      %v4193 = vadd.f32 %v4165, %v4093
      %v4194 = vadd.f32 %v4166, %v4098
      %v4195 = vadd.f32 %v4167, %v4101
      %v4196 = vadd.f32 %v4168, %v4106
      %v4197 = vadd.f32 %v4169, %v4109
      %v4198 = vadd.f32 %v4170, %v4114
      %v4199 = vadd.f32 %v4171, %v4117
      %v4200 = vadd.f32 %v4172, %v4122
      %v4201 = vadd.f32 %v4173, %v4125
      %v4202 = vadd.f32 %v4174, %v4130
      %v4203 = vadd.f32 %v4175, %v4133
      %v4204 = vadd.f32 %v4176, %v4138
      %v4205 = vadd.f32 %v4177, %v4141
      %v4206 = vadd.f32 %v4178, %v4146
      %v4207 = vadd.f32 %v4179, %v4149
      %4208 = vst [vmem:[#allocation2] sm:$0xff] %v4180
      %4209 = vst [vmem:[#allocation2 + $0x8] sm:$0xff] %v4181
      %4210 = vst [vmem:[#allocation2 + $0x10] sm:$0xff] %v4182
      %4211 = vst [vmem:[#allocation2 + $0x18] sm:$0xff] %v4183
      %4212 = vst [vmem:[#allocation2 + $0x20] sm:$0xff] %v4184
      %4213 = vst [vmem:[#allocation2 + $0x28] sm:$0xff] %v4185
      %4214 = vst [vmem:[#allocation2 + $0x30] sm:$0xff] %v4186
      %4215 = vst [vmem:[#allocation2 + $0x38] sm:$0xff] %v4187
      %4216 = vst [vmem:[#allocation2 + $0x40] sm:$0xff] %v4188
      %4217 = vst [vmem:[#allocation2 + $0x48] sm:$0xff] %v4189
      %4218 = vst [vmem:[#allocation2 + $0x50] sm:$0xff] %v4190
      %4219 = vst [vmem:[#allocation2 + $0x58] sm:$0xff] %v4191
      %4220 = vst [vmem:[#allocation2 + $0x60] sm:$0xff] %v4192
      %4221 = vst [vmem:[#allocation2 + $0x68] sm:$0xff] %v4193
      %4222 = vst [vmem:[#allocation2 + $0x70] sm:$0xff] %v4194
      %4223 = vst [vmem:[#allocation2 + $0x78] sm:$0xff] %v4195
      %4224 = vst [vmem:[#allocation2 + $0x80] sm:$0xff] %v4196
      %4225 = vst [vmem:[#allocation2 + $0x88] sm:$0xff] %v4197
      %4226 = vst [vmem:[#allocation2 + $0x90] sm:$0xff] %v4198
      %4227 = vst [vmem:[#allocation2 + $0x98] sm:$0xff] %v4199
      %4228 = vst [vmem:[#allocation2 + $0xa0] sm:$0xff] %v4200
      %4229 = vst [vmem:[#allocation2 + $0xa8] sm:$0xff] %v4201
      %4230 = vst [vmem:[#allocation2 + $0xb0] sm:$0xff] %v4202
      %4231 = vst [vmem:[#allocation2 + $0xb8] sm:$0xff] %v4203
      %4232 = vst [vmem:[#allocation2 + $0xc0] sm:$0xff] %v4204
      %4233 = vst [vmem:[#allocation2 + $0xc8] sm:$0xff] %v4205
      %4234 = vst [vmem:[#allocation2 + $0xd0] sm:$0xff] %v4206
      %4235 = vst [vmem:[#allocation2 + $0xd8] sm:$0x3f] %v4207
      %v4236 = vld [vmem:[%s213] sm:$0x1]
      %v4237 = vld [vmem:[#allocation2] sm:$0xff]
      %v4238 = vld [vmem:[#allocation2 + $0x8] sm:$0x3f]
      %v4240 = vlaneseq
      %v4241 = vshrl.u32 %v4240, 7
      %v4242 = vsub.s32 0, %v4241
      %v4243 = vrot.slane %v4236, %v4242
      %v4245 = vadd.f32 %v4237, %v4243
      %v4246 = vadd.f32 %v4238, %v4243
      %v4247 = vmax.f32 %v4245, 0.0
      %v4248 = vmax.f32 %v4246, 0.0
      %v4249 = vpack.c.bf16 %v4248, %v4247
      %v4251 = vunpack.c.l.b16 %v4249
      %v4252 = vunpack.c.h.b16 %v4249
      %v4253 = vpack.c.b16 %v4251, %v4251
      %v4254 = vpack.c.b16 %v4252, %v4252
      %4257 = vst [vmem:[%s221] sm:$0xf] %v4253
      %4258 = vst [vmem:[%s221 + $0x4] sm:$0x7] %v4254
      %v4259 = vld [vmem:[#allocation2 + $0x10] sm:$0xff]
      %v4260 = vld [vmem:[#allocation2 + $0x18] sm:$0x3f]
      %v4261 = vadd.f32 %v4259, %v4243
      %v4262 = vadd.f32 %v4260, %v4243
      %v4263 = vmax.f32 %v4261, 0.0
      %v4264 = vmax.f32 %v4262, 0.0
      %v4265 = vpack.c.bf16 %v4264, %v4263
      %v4267 = vunpack.c.l.b16 %v4265
      %v4268 = vunpack.c.h.b16 %v4265
      %v4269 = vpack.c.b16 %v4267, %v4267
      %v4270 = vpack.c.b16 %v4268, %v4268
      %s4273 = scalar_lea.vmem %s221, 8
      %4274 = vst [vmem:[%s4273] sm:$0xf] %v4269
      %4275 = vst [vmem:[%s4273 + $0x4] sm:$0x7] %v4270
      %v4276 = vld [vmem:[#allocation2 + $0x20] sm:$0xff]
      %v4277 = vld [vmem:[#allocation2 + $0x28] sm:$0x3f]
      %v4278 = vadd.f32 %v4276, %v4243
      %v4279 = vadd.f32 %v4277, %v4243
      %v4280 = vmax.f32 %v4278, 0.0
      %v4281 = vmax.f32 %v4279, 0.0
      %v4282 = vpack.c.bf16 %v4281, %v4280
      %v4284 = vunpack.c.l.b16 %v4282
      %v4285 = vunpack.c.h.b16 %v4282
      %v4286 = vpack.c.b16 %v4284, %v4284
      %v4287 = vpack.c.b16 %v4285, %v4285
      %s4290 = scalar_lea.vmem %s221, 16
      %4291 = vst [vmem:[%s4290] sm:$0xf] %v4286
      %4292 = vst [vmem:[%s4290 + $0x4] sm:$0x7] %v4287
      %v4293 = vld [vmem:[#allocation2 + $0x30] sm:$0xff]
      %v4294 = vld [vmem:[#allocation2 + $0x38] sm:$0x3f]
      %v4295 = vadd.f32 %v4293, %v4243
      %v4296 = vadd.f32 %v4294, %v4243
      %v4297 = vmax.f32 %v4295, 0.0
      %v4298 = vmax.f32 %v4296, 0.0
      %v4299 = vpack.c.bf16 %v4298, %v4297
      %v4301 = vunpack.c.l.b16 %v4299
      %v4302 = vunpack.c.h.b16 %v4299
      %v4303 = vpack.c.b16 %v4301, %v4301
      %v4304 = vpack.c.b16 %v4302, %v4302
      %s4307 = scalar_lea.vmem %s221, 24
      %4308 = vst [vmem:[%s4307] sm:$0xf] %v4303
      %4309 = vst [vmem:[%s4307 + $0x4] sm:$0x7] %v4304
      %v4310 = vld [vmem:[#allocation2 + $0x40] sm:$0xff]
      %v4311 = vld [vmem:[#allocation2 + $0x48] sm:$0x3f]
      %v4312 = vadd.f32 %v4310, %v4243
      %v4313 = vadd.f32 %v4311, %v4243
      %v4314 = vmax.f32 %v4312, 0.0
      %v4315 = vmax.f32 %v4313, 0.0
      %v4316 = vpack.c.bf16 %v4315, %v4314
      %v4318 = vunpack.c.l.b16 %v4316
      %v4319 = vunpack.c.h.b16 %v4316
      %v4320 = vpack.c.b16 %v4318, %v4318
      %v4321 = vpack.c.b16 %v4319, %v4319
      %s4324 = scalar_lea.vmem %s221, 32
      %4325 = vst [vmem:[%s4324] sm:$0xf] %v4320
      %4326 = vst [vmem:[%s4324 + $0x4] sm:$0x7] %v4321
      %v4327 = vld [vmem:[#allocation2 + $0x50] sm:$0xff]
      %v4328 = vld [vmem:[#allocation2 + $0x58] sm:$0x3f]
      %v4329 = vadd.f32 %v4327, %v4243
      %v4330 = vadd.f32 %v4328, %v4243
      %v4331 = vmax.f32 %v4329, 0.0
      %v4332 = vmax.f32 %v4330, 0.0
      %v4333 = vpack.c.bf16 %v4332, %v4331
      %v4335 = vunpack.c.l.b16 %v4333
      %v4336 = vunpack.c.h.b16 %v4333
      %v4337 = vpack.c.b16 %v4335, %v4335
      %v4338 = vpack.c.b16 %v4336, %v4336
      %s4341 = scalar_lea.vmem %s221, 40
      %4342 = vst [vmem:[%s4341] sm:$0xf] %v4337
      %4343 = vst [vmem:[%s4341 + $0x4] sm:$0x7] %v4338
      %v4344 = vld [vmem:[#allocation2 + $0x60] sm:$0xff]
      %v4345 = vld [vmem:[#allocation2 + $0x68] sm:$0x3f]
      %v4346 = vadd.f32 %v4344, %v4243
      %v4347 = vadd.f32 %v4345, %v4243
      %v4348 = vmax.f32 %v4346, 0.0
      %v4349 = vmax.f32 %v4347, 0.0
      %v4350 = vpack.c.bf16 %v4349, %v4348
      %v4352 = vunpack.c.l.b16 %v4350
      %v4353 = vunpack.c.h.b16 %v4350
      %v4354 = vpack.c.b16 %v4352, %v4352
      %v4355 = vpack.c.b16 %v4353, %v4353
      %s4358 = scalar_lea.vmem %s221, 48
      %4359 = vst [vmem:[%s4358] sm:$0xf] %v4354
      %4360 = vst [vmem:[%s4358 + $0x4] sm:$0x7] %v4355
      %v4361 = vld [vmem:[#allocation2 + $0x70] sm:$0xff]
      %v4362 = vld [vmem:[#allocation2 + $0x78] sm:$0x3f]
      %v4363 = vadd.f32 %v4361, %v4243
      %v4364 = vadd.f32 %v4362, %v4243
      %v4365 = vmax.f32 %v4363, 0.0
      %v4366 = vmax.f32 %v4364, 0.0
      %v4367 = vpack.c.bf16 %v4366, %v4365
      %v4369 = vunpack.c.l.b16 %v4367
      %v4370 = vunpack.c.h.b16 %v4367
      %v4371 = vpack.c.b16 %v4369, %v4369
      %v4372 = vpack.c.b16 %v4370, %v4370
      %s4375 = scalar_lea.vmem %s221, 56
      %4376 = vst [vmem:[%s4375] sm:$0xf] %v4371
      %4377 = vst [vmem:[%s4375 + $0x4] sm:$0x7] %v4372
      %v4378 = vld [vmem:[#allocation2 + $0x80] sm:$0xff]
      %v4379 = vld [vmem:[#allocation2 + $0x88] sm:$0x3f]
      %v4380 = vadd.f32 %v4378, %v4243
      %v4381 = vadd.f32 %v4379, %v4243
      %v4382 = vmax.f32 %v4380, 0.0
      %v4383 = vmax.f32 %v4381, 0.0
      %v4384 = vpack.c.bf16 %v4383, %v4382
      %v4386 = vunpack.c.l.b16 %v4384
      %v4387 = vunpack.c.h.b16 %v4384
      %v4388 = vpack.c.b16 %v4386, %v4386
      %v4389 = vpack.c.b16 %v4387, %v4387
      %s4392 = scalar_lea.vmem %s221, 64
      %4393 = vst [vmem:[%s4392] sm:$0xf] %v4388
      %4394 = vst [vmem:[%s4392 + $0x4] sm:$0x7] %v4389
      %v4395 = vld [vmem:[#allocation2 + $0x90] sm:$0xff]
      %v4396 = vld [vmem:[#allocation2 + $0x98] sm:$0x3f]
      %v4397 = vadd.f32 %v4395, %v4243
      %v4398 = vadd.f32 %v4396, %v4243
      %v4399 = vmax.f32 %v4397, 0.0
      %v4400 = vmax.f32 %v4398, 0.0
      %v4401 = vpack.c.bf16 %v4400, %v4399
      %v4403 = vunpack.c.l.b16 %v4401
      %v4404 = vunpack.c.h.b16 %v4401
      %v4405 = vpack.c.b16 %v4403, %v4403
      %v4406 = vpack.c.b16 %v4404, %v4404
      %s4409 = scalar_lea.vmem %s221, 72
      %4410 = vst [vmem:[%s4409] sm:$0xf] %v4405
      %4411 = vst [vmem:[%s4409 + $0x4] sm:$0x7] %v4406
      %v4412 = vld [vmem:[#allocation2 + $0xa0] sm:$0xff]
      %v4413 = vld [vmem:[#allocation2 + $0xa8] sm:$0x3f]
      %v4414 = vadd.f32 %v4412, %v4243
      %v4415 = vadd.f32 %v4413, %v4243
      %v4416 = vmax.f32 %v4414, 0.0
      %v4417 = vmax.f32 %v4415, 0.0
      %v4418 = vpack.c.bf16 %v4417, %v4416
      %v4420 = vunpack.c.l.b16 %v4418
      %v4421 = vunpack.c.h.b16 %v4418
      %v4422 = vpack.c.b16 %v4420, %v4420
      %v4423 = vpack.c.b16 %v4421, %v4421
      %s4426 = scalar_lea.vmem %s221, 80
      %4427 = vst [vmem:[%s4426] sm:$0xf] %v4422
      %4428 = vst [vmem:[%s4426 + $0x4] sm:$0x7] %v4423
      %v4429 = vld [vmem:[#allocation2 + $0xb0] sm:$0xff]
      %v4430 = vld [vmem:[#allocation2 + $0xb8] sm:$0x3f]
      %v4431 = vadd.f32 %v4429, %v4243
      %v4432 = vadd.f32 %v4430, %v4243
      %v4433 = vmax.f32 %v4431, 0.0
      %v4434 = vmax.f32 %v4432, 0.0
      %v4435 = vpack.c.bf16 %v4434, %v4433
      %v4437 = vunpack.c.l.b16 %v4435
      %v4438 = vunpack.c.h.b16 %v4435
      %v4439 = vpack.c.b16 %v4437, %v4437
      %v4440 = vpack.c.b16 %v4438, %v4438
      %s4443 = scalar_lea.vmem %s221, 88
      %4444 = vst [vmem:[%s4443] sm:$0xf] %v4439
      %4445 = vst [vmem:[%s4443 + $0x4] sm:$0x7] %v4440
      %v4446 = vld [vmem:[#allocation2 + $0xc0] sm:$0xff]
      %v4447 = vld [vmem:[#allocation2 + $0xc8] sm:$0x3f]
      %v4448 = vadd.f32 %v4446, %v4243
      %v4449 = vadd.f32 %v4447, %v4243
      %v4450 = vmax.f32 %v4448, 0.0
      %v4451 = vmax.f32 %v4449, 0.0
      %v4452 = vpack.c.bf16 %v4451, %v4450
      %v4454 = vunpack.c.l.b16 %v4452
      %v4455 = vunpack.c.h.b16 %v4452
      %v4456 = vpack.c.b16 %v4454, %v4454
      %v4457 = vpack.c.b16 %v4455, %v4455
      %s4460 = scalar_lea.vmem %s221, 96
      %4461 = vst [vmem:[%s4460] sm:$0xf] %v4456
      %4462 = vst [vmem:[%s4460 + $0x4] sm:$0x7] %v4457
      %v4463 = vld [vmem:[#allocation2 + $0xd0] sm:$0xff]
      %v4464 = vld [vmem:[#allocation2 + $0xd8] sm:$0x3f]
      %v4465 = vadd.f32 %v4463, %v4243
      %v4466 = vadd.f32 %v4464, %v4243
      %v4467 = vmax.f32 %v4465, 0.0
      %v4468 = vmax.f32 %v4466, 0.0
      %v4469 = vpack.c.bf16 %v4468, %v4467
      %v4471 = vunpack.c.l.b16 %v4469
      %v4472 = vunpack.c.h.b16 %v4469
      %v4473 = vpack.c.b16 %v4471, %v4471
      %v4474 = vpack.c.b16 %v4472, %v4472
      %s4477 = scalar_lea.vmem %s221, 104
      %4478 = vst [vmem:[%s4477] sm:$0xf] %v4473
      %4479 = vst [vmem:[%s4477 + $0x4] sm:$0x7] %v4474
      %p4480 = scmp.lt.s32.totalorder %s18, 1
      %s4481 = scalar_select %p4480, %s18, 1
      %p4482 = scmp.lt.s32.totalorder %s19, 0
      %s4483 = scalar_select %p4482, %s19, 0
      %s4484 = smul.addr %s4481, 28
      %s4485 = sadd.s32 %s4483, %s4484
      %s4486 = smul.addr %s4485, 4
      %s4487 = scalar_lea.vmem %s3, %s4486
      // Predicated region
      $region33: #{_lambda_.5} parent=31 // pred_check
        %p4488 = pneg %p124
      $region34: #{_lambda_.5} parent=31 // pred_check_branch
        %4490 = sbr.rel (%p4488) target = $region36
      $region35: #{_lambda_.5} parent=31 // pred_region
        _
      $region36: #{_lambda_.5} parent=31 // pred_fallthru
        _
    $region32: #{_lambda_.5} parent=5 // pred_fallthru
      _
    %p4491 = scmp.le.s32.totalorder 2, %s9
    // Predicated region
    $region37: #{_lambda_.5} parent=5 // pred_check
      %p4492 = pneg %p4491
    $region38: #{_lambda_.5} parent=5 // pred_check_branch
      %4494 = sbr.rel (%p4492) target = $region40
    $region39: #{_lambda_.5} parent=5 // pred_region
      %s4495 = ssub.s32 %s9, 2
      // Predicated region
      $region41: #{_lambda_.5} parent=39 // pred_check
        %p4496 = pneg %p130
      $region42: #{_lambda_.5} parent=39 // pred_check_branch
        %4498 = sbr.rel (%p4496) target = $region44
      $region43: #{_lambda_.5} parent=39 // pred_region
        %p4499 = scmp.lt.s32.totalorder %s20, 1
        %s4500 = scalar_select %p4499, %s20, 1
        %p4501 = scmp.lt.s32.totalorder %s21, 0
        %s4502 = scalar_select %p4501, %s21, 0
        %s4503 = smul.addr %s4500, 28
        %s4504 = sadd.s32 %s4502, %s4503
        %s4505 = smul.addr %s4504, 4
        %s4506 = scalar_lea.vmem %s3, %s4505
      $region44: #{_lambda_.5} parent=39 // pred_fallthru
        _
    $region40: #{_lambda_.5} parent=5 // pred_fallthru
      _
  $region6: #{_lambda_.5} parent=0 // loop_footer
    %s13 = sadd.s32 1, %s9
  $region7: #{_lambda_.5} parent=0 // loop_footer_branch
    %8 = sbr.rel target = $region3
  $region8: #{_lambda_.5} parent=0 // loop_exit
    _

</llo_original>
